<compile_context>
chip_gen: v7x
topology: tpu7x:2x2x1
jax: 0.10.0
libtpu: 0.0.40
codegen_flags: <defaults>
</compile_context>

<pallas_src>
import functools

import jax
import jax.numpy as jnp
from jax import lax
from jax.experimental import pallas as pl
from jax.experimental.pallas import tpu as pltpu

_VMEM_LIMIT = 32 * 1024 * 1024


# ----------------------------------------------------------------------------
# Helpers
# ----------------------------------------------------------------------------
def _const_spec(a):
    """Full-array block whose index does not depend on the grid position."""
    n = a.ndim
    return pl.BlockSpec(a.shape, lambda *_, n=n: (0,) * n)


def _num_batch_blocks(B):
    # Two grid blocks when possible so both v7x TensorCores get work
    # (neutral on single-TC v5e / v6e).
    return 2 if (B >= 2 and B % 2 == 0) else 1


# ----------------------------------------------------------------------------
# Kernel 1: fused multi-layer bidirectional LSTM (both directions in one
#           recurrence; one hoisted 8H-wide input projection per layer)
#
#   x_ref          : (bt, T, Din)   batch-major input block
#   per layer l    : w_ih (Din_l, 8H) bf16   cols = [fwd i,f,o,g | rev i,f,o,g]
#                    w_hh (2H, 8H)   bf16   block-diagonal (fwd rows / rev rows)
#                    b    (1, 8H)    f32    b_ih + b_hh, same column layout
#   out_ref        : (bt, T, 2H)    [forward | reverse] features, batch-major
# ----------------------------------------------------------------------------
def bilstm_kernel(*refs, num_layers, seq_len, hidden):
    x_ref = refs[0]
    w_refs = refs[1:1 + 3 * num_layers]
    out_ref = refs[1 + 3 * num_layers]
    xtm, gx, seqf, seqr, h_ref, cf_ref, cr_ref = refs[2 + 3 * num_layers:]

    T = seq_len
    H = hidden
    H2, H3, H4 = 2 * H, 3 * H, 4 * H

    # batch-major -> time-major staging copy (static loop, off the serial path),
    # pre-cast to bf16 for the MXU.
    for t in range(T):
        xtm[t] = x_ref[:, t, :].astype(jnp.bfloat16)

    def recurrence(w_hh):
        h_ref[...] = jnp.zeros_like(h_ref)
        cf_ref[...] = jnp.zeros_like(cf_ref)
        cr_ref[...] = jnp.zeros_like(cr_ref)

        def step(t, carry):
            # ONE MXU push for both directions (128-lane gate slab at H=16)
            hh = jnp.dot(h_ref[...].astype(jnp.bfloat16), w_hh,
                         preferred_element_type=jnp.float32)          # (bt, 8H)
            gf = hh[:, :H4] + gx[t][:, :H4]           # fwd gates, time t
            gr = hh[:, H4:] + gx[T - 1 - t][:, H4:]   # rev gates, time T-1-t
            # per-direction gate layout [i | f | o | g]:
            # one sigmoid over 3H lanes + one tanh per direction.
            af = jax.nn.sigmoid(gf[:, :H3])
            ggf = jnp.tanh(gf[:, H3:])
            ar = jax.nn.sigmoid(gr[:, :H3])
            ggr = jnp.tanh(gr[:, H3:])
            cf_new = af[:, H:H2] * cf_ref[...] + af[:, :H] * ggf
            cr_new = ar[:, H:H2] * cr_ref[...] + ar[:, :H] * ggr
            hf_new = af[:, H2:H3] * jnp.tanh(cf_new)
            hr_new = ar[:, H2:H3] * jnp.tanh(cr_new)
            cf_ref[...] = cf_new
            cr_ref[...] = cr_new
            h_ref[:, :H] = hf_new
            h_ref[:, H:] = hr_new
            seqf[t] = hf_new
            seqr[T - 1 - t] = hr_new
            return carry

        # full unroll for short sequences, partial unroll (code-size / vreg
        # pressure) for long ones.
        lax.fori_loop(0, T, step, 0, unroll=(T if T <= 16 else 4))

    for l in range(num_layers):
        w_ih_ref, w_hh_ref, b_ref = w_refs[3 * l:3 * l + 3]
        if l == 0:
            # ONE hoisted (T*bt, Din) @ (Din, 8H) projection (both directions,
            # all four gates, folded biases) off the serial path.
            gx[...] = jnp.einsum('tbd,dg->tbg', xtm[...], w_ih_ref[...],
                                 preferred_element_type=jnp.float32) + b_ref[...]
        else:
            # layer input is [fwd | rev] features; split the contraction so no
            # lane-dim concat of seqf/seqr is ever materialized.
            w_ih = w_ih_ref[...]                       # (2H, 8H) bf16
            gx[...] = (jnp.einsum('tbh,hg->tbg',
                                  seqf[...].astype(jnp.bfloat16), w_ih[:H, :],
                                  preferred_element_type=jnp.float32)
                       + jnp.einsum('tbh,hg->tbg',
                                    seqr[...].astype(jnp.bfloat16), w_ih[H:, :],
                                    preferred_element_type=jnp.float32)
                       + b_ref[...])
        # dropout between LSTM layers is identity in eval mode
        recurrence(w_hh_ref[...])

    # Emit (bt, T, 2H) batch-major directly (no wrapper transpose / extra HBM
    # round trip).  Static loop -> static sublane-slice stores.
    for t in range(T):
        out_ref[:, t, 0:H] = seqf[t]
        out_ref[:, t, H:H2] = seqr[t]


def bilstm(x, lstm_params, hidden_dim):
    B, T, Din = x.shape
    H = hidden_dim
    num_layers = len(lstm_params)
    nb = _num_batch_blocks(B)
    bt = B // nb

    args = [x]
    for p in lstm_params:
        args += [p['w_ih'], p['w_hh'], p['b']]

    in_specs = [pl.BlockSpec((bt, T, Din), lambda b: (b, 0, 0))]
    in_specs += [_const_spec(a) for a in args[1:]]

    kernel = functools.partial(bilstm_kernel, num_layers=num_layers,
                               seq_len=T, hidden=H)
    return pl.pallas_call(
        kernel,
        grid=(nb,),
        out_shape=jax.ShapeDtypeStruct((B, T, 2 * H), jnp.float32),
        in_specs=in_specs,
        out_specs=pl.BlockSpec((bt, T, 2 * H), lambda b: (b, 0, 0)),
        scratch_shapes=[
            pltpu.VMEM((T, bt, Din), jnp.bfloat16),     # xtm  (time-major input)
            pltpu.VMEM((T, bt, 8 * H), jnp.float32),    # gx   (hoisted gates)
            pltpu.VMEM((T, bt, H), jnp.float32),        # seqf (fwd hidden states)
            pltpu.VMEM((T, bt, H), jnp.float32),        # seqr (rev hidden states)
            pltpu.VMEM((bt, 2 * H), jnp.float32),       # h    [fwd | rev]
            pltpu.VMEM((bt, H), jnp.float32),           # c fwd
            pltpu.VMEM((bt, H), jnp.float32),           # c rev
        ],
        compiler_params=pltpu.CompilerParams(
            dimension_semantics=("parallel",),
            vmem_limit_bytes=_VMEM_LIMIT),
    )(*args)


# ----------------------------------------------------------------------------
# Kernel 2: fused transformer encoder stack + last-timestep select + fc head
#   x_ref : (bt, T, E)      stacked per-layer transformer weights (L, ...)
#   out   : (bt, 1, C)      logits for the selected head
# ----------------------------------------------------------------------------
def transformer_head_kernel(x_ref, wqkv_ref, bqkv_ref, wo_ref, bo_ref,
                            ln1g_ref, ln1b_ref, w1_ref, b1_ref,
                            w2_ref, b2_ref, ln2g_ref, ln2b_ref,
                            fcw_ref, fcb_ref, out_ref, *, nhead, eps=1e-5):
    x = x_ref[...]                                   # (bt, T, E) f32
    bt, T, E = x.shape
    L = wqkv_ref.shape[0]
    hd = E // nhead
    scale = 1.0 / (hd ** 0.5)

    def bf(v):
        return v.astype(jnp.bfloat16)

    def layernorm(z, g, b):
        # one-pass variance: E[x^2] - E[x]^2  (one fewer XLU reduction pass)
        mu = jnp.mean(z, axis=-1, keepdims=True)
        ms = jnp.mean(z * z, axis=-1, keepdims=True)
        var = ms - mu * mu
        return (z - mu) * lax.rsqrt(var + eps) * g + b

    def softmax_lastdim(s):
        s = s - jnp.max(s, axis=-1, keepdims=True)
        p = jnp.exp(s)
        # exact reciprocal (review correctness concern about approx=True)
        return p * pl.reciprocal(jnp.sum(p, axis=-1, keepdims=True), approx=False)

    for l in range(L):
        last = (l == L - 1)
        wqkv = wqkv_ref[l]                           # (E, 3E) bf16
        bqkv = bqkv_ref[l]                           # (1, 3E) f32

        if last:
            # Only z[:, -1, :] feeds the classifier -> compute Q / residual /
            # FFN of the final layer for the last timestep only, and only
            # project Wq for that row (Wq / Wkv split).
            x_res = x[:, T - 1:T, :]                                 # (bt,1,E)
            q = jnp.einsum('bqe,ef->bqf', bf(x_res), wqkv[:, :E],
                           preferred_element_type=jnp.float32) + bqkv[:, :E]
            kv = jnp.einsum('bte,ef->btf', bf(x), wqkv[:, E:],
                            preferred_element_type=jnp.float32) + bqkv[:, E:]
            k = kv[..., :E]
            v = kv[..., E:]
        else:
            x_res = x
            qkv = jnp.einsum('bte,ef->btf', bf(x), wqkv,
                             preferred_element_type=jnp.float32) + bqkv
            q = qkv[..., 0:E]
            k = qkv[..., E:2 * E]
            v = qkv[..., 2 * E:]

        # fold the 1/sqrt(hd) scale into q once (not per-head score tensors)
        q = q * scale

        # per-head softmax contexts, then ONE full-E output projection
        # TODO(synk): head-batched 4-D attention einsum skipped (nhead is tiny
        # here; the reshape/transpose relayout risk outweighs the gain).
        head_ctx = []
        for hi in range(nhead):
            sl = slice(hi * hd, (hi + 1) * hd)
            s = jnp.einsum('bqd,bkd->bqk', bf(q[..., sl]), bf(k[..., sl]),
                           preferred_element_type=jnp.float32)
            p = softmax_lastdim(s)
            head_ctx.append(jnp.einsum('bqk,bkd->bqd', bf(p), bf(v[..., sl]),
                                       preferred_element_type=jnp.float32))
        ctx = jnp.concatenate(head_ctx, axis=-1)     # (bt, Tq, E)
        attn = jnp.einsum('bqe,ef->bqf', bf(ctx), wo_ref[l],
                          preferred_element_type=jnp.float32) + bo_ref[l]

        # post-norm encoder layer (norm_first=False), ReLU FFN
        y = layernorm(x_res + attn, ln1g_ref[l], ln1b_ref[l])
        hdn = jnp.maximum(
            jnp.einsum('bqe,ef->bqf', bf(y), w1_ref[l],
                       preferred_element_type=jnp.float32) + b1_ref[l], 0.0)
        ff = jnp.einsum('bqf,fe->bqe', bf(hdn), w2_ref[l],
                        preferred_element_type=jnp.float32) + b2_ref[l]
        x = layernorm(y + ff, ln2g_ref[l], ln2b_ref[l])

    if L == 0:
        x = x[:, T - 1:T, :]

    # fused final linear head; x is (bt, 1, E) here
    out_ref[...] = (jnp.einsum('bqe,ec->bqc', bf(x), fcw_ref[...],
                               preferred_element_type=jnp.float32)
                    + fcb_ref[...])


def transformer_head(x, tp, fc_w, fc_b, *, nhead):
    B, T, E = x.shape
    C = fc_w.shape[1]
    nb = _num_batch_blocks(B)
    bt = B // nb

    args = (x, tp['wqkv'], tp['bqkv'], tp['wo'], tp['bo'],
            tp['ln1_g'], tp['ln1_b'], tp['w1'], tp['b1'],
            tp['w2'], tp['b2'], tp['ln2_g'], tp['ln2_b'], fc_w, fc_b)

    in_specs = [pl.BlockSpec((bt, T, E), lambda b: (b, 0, 0))]
    in_specs += [_const_spec(a) for a in args[1:]]

    kernel = functools.partial(transformer_head_kernel, nhead=nhead)
    return pl.pallas_call(
        kernel,
        grid=(nb,),
        out_shape=jax.ShapeDtypeStruct((B, 1, C), jnp.float32),
        in_specs=in_specs,
        out_specs=pl.BlockSpec((bt, 1, C), lambda b: (b, 0, 0)),
        compiler_params=pltpu.CompilerParams(
            dimension_semantics=("parallel",),
            vmem_limit_bytes=_VMEM_LIMIT),
    )(*args)


# ----------------------------------------------------------------------------
# Forward pass glue (matches PyTorch module forward) — 2 pallas_calls, no
# wrapper-level transposes / concats of the activation tensors.
# ----------------------------------------------------------------------------
def forward(x, params, *, hidden_dim, nhead, target='class'):
    z = bilstm(x, params['lstm'], hidden_dim)            # (B, T, 2H)

    heads = {'class': ('fc_cls_w', 'fc_cls_b'),
             'Vp': ('fc_vp_w', 'fc_vp_b'),
             'Vs': ('fc_vs_w', 'fc_vs_b'),
             'Ratio': ('fc_ratio_w', 'fc_ratio_b'),
             'mile': ('fc_mile_w', 'fc_mile_b')}
    wk, bk = heads[target]
    logits = transformer_head(z, params['transformer'],
                              params[wk], params[bk], nhead=nhead)  # (B,1,C)
    return logits[:, 0, :]


# ----------------------------------------------------------------------------
# Parameter construction: raw PyTorch-layout LSTM weights are fused into the
# kernel layout (direction-concatenated gate columns, per-direction [i,f,o,g]
# permutation, block-diagonal W_hh, folded b_ih + b_hh, bf16 matmul weights).
# ----------------------------------------------------------------------------
def _fuse_lstm_dir_weights(w_ih_f, w_hh_f, b_f, w_ih_r, w_hh_r, b_r):
    def reorder(wt):  # columns in PyTorch order [i, f, g, o] -> [i, f, o, g]
        i, f, g, o = jnp.split(wt, 4, axis=-1)
        return jnp.concatenate([i, f, o, g], axis=-1)

    wih_f = reorder(w_ih_f.T)                 # (Din, 4H)
    wih_r = reorder(w_ih_r.T)
    whh_f = reorder(w_hh_f.T)                 # (H, 4H)
    whh_r = reorder(w_hh_r.T)
    zeros = jnp.zeros_like(whh_f)

    w_ih_cat = jnp.concatenate([wih_f, wih_r], axis=-1)          # (Din, 8H)
    w_hh_cat = jnp.concatenate(
        [jnp.concatenate([whh_f, zeros], axis=-1),
         jnp.concatenate([zeros, whh_r], axis=-1)], axis=0)      # (2H, 8H)
    b_cat = jnp.concatenate([reorder(b_f[None, :]),
                             reorder(b_r[None, :])], axis=-1)    # (1, 8H)
    return (w_ih_cat.astype(jnp.bfloat16),
            w_hh_cat.astype(jnp.bfloat16),
            b_cat.astype(jnp.float32))


def init_params(key, *, input_dim, hidden_dim, lstm_layers, nhead,
                transformer_layers, num_classes):
    H = hidden_dim
    E = 2 * H
    F = 4 * H

    def uni(k, shape, bound):
        return jax.random.uniform(k, shape, jnp.float32, -bound, bound)

    kidx = [0]

    def nk():
        kidx[0] += 1
        return jax.random.fold_in(key, kidx[0])

    params = {'lstm': []}

    # LSTM params generated in PyTorch layout (rows i,f,g,o), then fused.
    kl = 1.0 / (H ** 0.5)
    for l in range(lstm_layers):
        din = input_dim if l == 0 else 2 * H
        w_ih_f = uni(nk(), (4 * H, din), kl)
        w_hh_f = uni(nk(), (4 * H, H), kl)
        b_f = uni(nk(), (4 * H,), kl) + uni(nk(), (4 * H,), kl)   # b_ih + b_hh
        w_ih_r = uni(nk(), (4 * H, din), kl)
        w_hh_r = uni(nk(), (4 * H, H), kl)
        b_r = uni(nk(), (4 * H,), kl) + uni(nk(), (4 * H,), kl)
        w_ih_cat, w_hh_cat, b_cat = _fuse_lstm_dir_weights(
            w_ih_f, w_hh_f, b_f, w_ih_r, w_hh_r, b_r)
        params['lstm'].append({'w_ih': w_ih_cat, 'w_hh': w_hh_cat, 'b': b_cat})

    # Transformer encoder layers (stacked along a leading layer axis);
    # matmul weights stored in bf16, biases / LN params in f32.
    L = transformer_layers
    ke = 1.0 / (E ** 0.5)
    kf = 1.0 / (F ** 0.5)

    def stackL(make, dtype=jnp.bfloat16):
        return jnp.stack([make() for _ in range(L)]).astype(dtype)

    params['transformer'] = {
        'wqkv': stackL(lambda: uni(nk(), (E, 3 * E), ke)),
        'bqkv': jnp.zeros((L, 1, 3 * E), jnp.float32),
        'wo':   stackL(lambda: uni(nk(), (E, E), ke)),
        'bo':   jnp.zeros((L, 1, E), jnp.float32),
        'ln1_g': jnp.ones((L, 1, E), jnp.float32),
        'ln1_b': jnp.zeros((L, 1, E), jnp.float32),
        'w1':   stackL(lambda: uni(nk(), (E, F), ke)),
        'b1':   jnp.stack([uni(nk(), (1, F), ke) for _ in range(L)]),
        'w2':   stackL(lambda: uni(nk(), (F, E), kf)),
        'b2':   jnp.stack([uni(nk(), (1, E), kf) for _ in range(L)]),
        'ln2_g': jnp.ones((L, 1, E), jnp.float32),
        'ln2_b': jnp.zeros((L, 1, E), jnp.float32),
    }

    # Output heads (nn.Linear(2H, ...)): uniform(-1/sqrt(2H), 1/sqrt(2H))
    kfc = 1.0 / (E ** 0.5)
    params['fc_cls_w'] = uni(nk(), (E, num_classes), kfc).astype(jnp.bfloat16)
    params['fc_cls_b'] = uni(nk(), (1, num_classes), kfc)
    for name in ('vp', 'vs', 'ratio', 'mile'):
        params[f'fc_{name}_w'] = uni(nk(), (E, 1), kfc).astype(jnp.bfloat16)
        params[f'fc_{name}_b'] = uni(nk(), (1, 1), kfc)
    return params


# ----------------------------------------------------------------------------
if __name__ == "__main__":
    INPUT_DIM = 8
    HIDDEN_DIM = 16
    LSTM_LAYERS = 2
    N_HEADS = 2
    TF_LAYERS = 2
    NUM_CLASSES = 4
    BATCH = 2
    SEQ = 8

    key = jax.random.PRNGKey(0)
    pkey, xkey = jax.random.split(key)

    params = init_params(pkey,
                         input_dim=INPUT_DIM, hidden_dim=HIDDEN_DIM,
                         lstm_layers=LSTM_LAYERS, nhead=N_HEADS,
                         transformer_layers=TF_LAYERS, num_classes=NUM_CLASSES)

    x = jax.random.normal(xkey, (BATCH, SEQ, INPUT_DIM), jnp.float32)

    fwd = jax.jit(functools.partial(forward, hidden_dim=HIDDEN_DIM,
                                    nhead=N_HEADS, target='class'))
    logits = jax.block_until_ready(fwd(x, params))

    assert logits.shape == (BATCH, NUM_CLASSES)
    assert bool(jnp.all(jnp.isfinite(logits)))
    print("KERNEL_OK")
</pallas_src>

<mosaic_0001>
module attributes {stable_mosaic.version = 11 : i64} {
  func.func @transformer_head_kernel(%arg0: i32, %arg1: memref<1x8x32xf32, #tpu.memory_space<vmem>>, %arg2: memref<2x32x96xbf16, #tpu.memory_space<vmem>>, %arg3: memref<2x1x96xf32, #tpu.memory_space<vmem>>, %arg4: memref<2x32x32xbf16, #tpu.memory_space<vmem>>, %arg5: memref<2x1x32xf32, #tpu.memory_space<vmem>>, %arg6: memref<2x1x32xf32, #tpu.memory_space<vmem>>, %arg7: memref<2x1x32xf32, #tpu.memory_space<vmem>>, %arg8: memref<2x32x64xbf16, #tpu.memory_space<vmem>>, %arg9: memref<2x1x64xf32, #tpu.memory_space<vmem>>, %arg10: memref<2x64x32xbf16, #tpu.memory_space<vmem>>, %arg11: memref<2x1x32xf32, #tpu.memory_space<vmem>>, %arg12: memref<2x1x32xf32, #tpu.memory_space<vmem>>, %arg13: memref<2x1x32xf32, #tpu.memory_space<vmem>>, %arg14: memref<32x4xbf16, #tpu.memory_space<vmem>>, %arg15: memref<1x4xf32, #tpu.memory_space<vmem>>, %arg16: memref<1x1x4xf32, #tpu.memory_space<vmem>>) attributes {dimension_semantics = [#tpu.dimension_semantics<parallel>], iteration_bounds = array<i64: 2>, scalar_prefetch = 0 : i64, scratch_operands = 0 : i64, tpu.core_type = #tpu.core_type<tc>, window_params = [{transform_indices = @transform_0, window_bounds = array<i64: 1, 8, 32>}, {pipeline_mode = #tpu.pipeline_mode<synchronous>, transform_indices = @transform_1, window_bounds = array<i64: 2, 32, 96>}, {pipeline_mode = #tpu.pipeline_mode<synchronous>, transform_indices = @transform_2, window_bounds = array<i64: 2, 1, 96>}, {pipeline_mode = #tpu.pipeline_mode<synchronous>, transform_indices = @transform_3, window_bounds = array<i64: 2, 32, 32>}, {pipeline_mode = #tpu.pipeline_mode<synchronous>, transform_indices = @transform_4, window_bounds = array<i64: 2, 1, 32>}, {pipeline_mode = #tpu.pipeline_mode<synchronous>, transform_indices = @transform_5, window_bounds = array<i64: 2, 1, 32>}, {pipeline_mode = #tpu.pipeline_mode<synchronous>, transform_indices = @transform_6, window_bounds = array<i64: 2, 1, 32>}, {pipeline_mode = #tpu.pipeline_mode<synchronous>, transform_indices = @transform_7, window_bounds = array<i64: 2, 32, 64>}, {pipeline_mode = #tpu.pipeline_mode<synchronous>, transform_indices = @transform_8, window_bounds = array<i64: 2, 1, 64>}, {pipeline_mode = #tpu.pipeline_mode<synchronous>, transform_indices = @transform_9, window_bounds = array<i64: 2, 64, 32>}, {pipeline_mode = #tpu.pipeline_mode<synchronous>, transform_indices = @transform_10, window_bounds = array<i64: 2, 1, 32>}, {pipeline_mode = #tpu.pipeline_mode<synchronous>, transform_indices = @transform_11, window_bounds = array<i64: 2, 1, 32>}, {pipeline_mode = #tpu.pipeline_mode<synchronous>, transform_indices = @transform_12, window_bounds = array<i64: 2, 1, 32>}, {pipeline_mode = #tpu.pipeline_mode<synchronous>, transform_indices = @transform_13, window_bounds = array<i64: 32, 4>}, {pipeline_mode = #tpu.pipeline_mode<synchronous>, transform_indices = @transform_14, window_bounds = array<i64: 1, 4>}, {transform_indices = @transform_15, window_bounds = array<i64: 1, 1, 4>}]} {
    %c0 = arith.constant 0 : index
    %c0_0 = arith.constant 0 : index
    %c0_1 = arith.constant 0 : index
    %0 = vector.load %arg1[%c0, %c0_0, %c0_1] : memref<1x8x32xf32, #tpu.memory_space<vmem>>, vector<1x8x32xf32>
    %c0_2 = arith.constant 0 : index
    %c0_3 = arith.constant 0 : index
    %c0_4 = arith.constant 0 : index
    %1 = vector.load %arg2[%c0_2, %c0_3, %c0_4] : memref<2x32x96xbf16, #tpu.memory_space<vmem>>, vector<1x32x96xbf16>
    %2 = vector.shape_cast %1 : vector<1x32x96xbf16> to vector<32x96xbf16>
    %c0_5 = arith.constant 0 : index
    %c0_6 = arith.constant 0 : index
    %c0_7 = arith.constant 0 : index
    %3 = vector.load %arg3[%c0_5, %c0_6, %c0_7] : memref<2x1x96xf32, #tpu.memory_space<vmem>>, vector<1x1x96xf32>
    %4 = vector.shape_cast %3 : vector<1x1x96xf32> to vector<1x96xf32>
    %5 = arith.truncf %0 : vector<1x8x32xf32> to vector<1x8x32xbf16>
    "tpu.trace_start"() <{level = 10 : i32, message = "bte,ef->btf"}> : () -> ()
    %cst = arith.constant dense<0.000000e+00> : vector<1x8x96xf32>
    %6 = tpu.matmul %5, %2, %cst {dimension_numbers = #tpu.dot_dimension_numbers<[2], [0], [0, 1], [1], [0, 0, 0, 1, 1, 1], [], []>} : vector<1x8x32xbf16>, vector<32x96xbf16>, vector<1x8x96xf32> -> vector<1x8x96xf32>
    "tpu.trace_stop"() : () -> ()
    %7 = vector.shape_cast %4 : vector<1x96xf32> to vector<1x1x96xf32>
    %8 = vector.broadcast %7 : vector<1x1x96xf32> to vector<1x8x96xf32>
    %9 = arith.addf %6, %8 : vector<1x8x96xf32>
    %10 = vector.extract_strided_slice %9 {offsets = [0, 0, 0], sizes = [1, 8, 32], strides = [1, 1, 1]} : vector<1x8x96xf32> to vector<1x8x32xf32>
    %11 = vector.extract_strided_slice %9 {offsets = [0, 0, 32], sizes = [1, 8, 32], strides = [1, 1, 1]} : vector<1x8x96xf32> to vector<1x8x32xf32>
    %12 = vector.extract_strided_slice %9 {offsets = [0, 0, 64], sizes = [1, 8, 32], strides = [1, 1, 1]} : vector<1x8x96xf32> to vector<1x8x32xf32>
    %cst_8 = arith.constant 2.500000e-01 : f32
    %13 = vector.broadcast %cst_8 : f32 to vector<1x8x32xf32>
    %14 = arith.mulf %10, %13 : vector<1x8x32xf32>
    %15 = vector.extract_strided_slice %14 {offsets = [0, 0, 0], sizes = [1, 8, 16], strides = [1, 1, 1]} : vector<1x8x32xf32> to vector<1x8x16xf32>
    %16 = arith.truncf %15 : vector<1x8x16xf32> to vector<1x8x16xbf16>
    %17 = vector.extract_strided_slice %11 {offsets = [0, 0, 0], sizes = [1, 8, 16], strides = [1, 1, 1]} : vector<1x8x32xf32> to vector<1x8x16xf32>
    %18 = arith.truncf %17 : vector<1x8x16xf32> to vector<1x8x16xbf16>
    "tpu.trace_start"() <{level = 10 : i32, message = "bqd,bkd->bqk"}> : () -> ()
    %cst_9 = arith.constant dense<0.000000e+00> : vector<1x8x8xf32>
    %19 = tpu.matmul %16, %18, %cst_9 {dimension_numbers = #tpu.dot_dimension_numbers<[2], [2], [1], [1], [0, 0, 0, 1, 1, 1], [0], [0]>} : vector<1x8x16xbf16>, vector<1x8x16xbf16>, vector<1x8x8xf32> -> vector<1x8x8xf32>
    "tpu.trace_stop"() : () -> ()
    %cst_10 = arith.constant dense<0xFF800000> : vector<1x8xf32>
    %20 = vector.multi_reduction <maximumf>, %19, %cst_10 [2] : vector<1x8x8xf32> to vector<1x8xf32>
    %21 = vector.shape_cast %20 : vector<1x8xf32> to vector<1x8x1xf32>
    %22 = vector.broadcast %21 : vector<1x8x1xf32> to vector<1x8x8xf32>
    %23 = arith.subf %19, %22 : vector<1x8x8xf32>
    %24 = math.exp %23 : vector<1x8x8xf32>
    %cst_11 = arith.constant dense<0.000000e+00> : vector<1x8xf32>
    %25 = vector.multi_reduction <add>, %24, %cst_11 [2] : vector<1x8x8xf32> to vector<1x8xf32>
    %26 = vector.shape_cast %25 : vector<1x8xf32> to vector<1x8x1xf32>
    %27 = tpu.reciprocal %26 : vector<1x8x1xf32> -> vector<1x8x1xf32>
    %28 = vector.broadcast %27 : vector<1x8x1xf32> to vector<1x8x8xf32>
    %29 = arith.mulf %24, %28 : vector<1x8x8xf32>
    %30 = arith.truncf %29 : vector<1x8x8xf32> to vector<1x8x8xbf16>
    %31 = vector.extract_strided_slice %12 {offsets = [0, 0, 0], sizes = [1, 8, 16], strides = [1, 1, 1]} : vector<1x8x32xf32> to vector<1x8x16xf32>
    %32 = arith.truncf %31 : vector<1x8x16xf32> to vector<1x8x16xbf16>
    "tpu.trace_start"() <{level = 10 : i32, message = "bqk,bkd->bqd"}> : () -> ()
    %cst_12 = arith.constant dense<0.000000e+00> : vector<1x8x16xf32>
    %33 = tpu.matmul %30, %32, %cst_12 {dimension_numbers = #tpu.dot_dimension_numbers<[2], [1], [1], [2], [0, 0, 0, 1, 1, 2], [0], [0]>} : vector<1x8x8xbf16>, vector<1x8x16xbf16>, vector<1x8x16xf32> -> vector<1x8x16xf32>
    "tpu.trace_stop"() : () -> ()
    %34 = vector.extract_strided_slice %14 {offsets = [0, 0, 16], sizes = [1, 8, 16], strides = [1, 1, 1]} : vector<1x8x32xf32> to vector<1x8x16xf32>
    %35 = arith.truncf %34 : vector<1x8x16xf32> to vector<1x8x16xbf16>
    %36 = vector.extract_strided_slice %11 {offsets = [0, 0, 16], sizes = [1, 8, 16], strides = [1, 1, 1]} : vector<1x8x32xf32> to vector<1x8x16xf32>
    %37 = arith.truncf %36 : vector<1x8x16xf32> to vector<1x8x16xbf16>
    "tpu.trace_start"() <{level = 10 : i32, message = "bqd,bkd->bqk"}> : () -> ()
    %cst_13 = arith.constant dense<0.000000e+00> : vector<1x8x8xf32>
    %38 = tpu.matmul %35, %37, %cst_13 {dimension_numbers = #tpu.dot_dimension_numbers<[2], [2], [1], [1], [0, 0, 0, 1, 1, 1], [0], [0]>} : vector<1x8x16xbf16>, vector<1x8x16xbf16>, vector<1x8x8xf32> -> vector<1x8x8xf32>
    "tpu.trace_stop"() : () -> ()
    %cst_14 = arith.constant dense<0xFF800000> : vector<1x8xf32>
    %39 = vector.multi_reduction <maximumf>, %38, %cst_14 [2] : vector<1x8x8xf32> to vector<1x8xf32>
    %40 = vector.shape_cast %39 : vector<1x8xf32> to vector<1x8x1xf32>
    %41 = vector.broadcast %40 : vector<1x8x1xf32> to vector<1x8x8xf32>
    %42 = arith.subf %38, %41 : vector<1x8x8xf32>
    %43 = math.exp %42 : vector<1x8x8xf32>
    %cst_15 = arith.constant dense<0.000000e+00> : vector<1x8xf32>
    %44 = vector.multi_reduction <add>, %43, %cst_15 [2] : vector<1x8x8xf32> to vector<1x8xf32>
    %45 = vector.shape_cast %44 : vector<1x8xf32> to vector<1x8x1xf32>
    %46 = tpu.reciprocal %45 : vector<1x8x1xf32> -> vector<1x8x1xf32>
    %47 = vector.broadcast %46 : vector<1x8x1xf32> to vector<1x8x8xf32>
    %48 = arith.mulf %43, %47 : vector<1x8x8xf32>
    %49 = arith.truncf %48 : vector<1x8x8xf32> to vector<1x8x8xbf16>
    %50 = vector.extract_strided_slice %12 {offsets = [0, 0, 16], sizes = [1, 8, 16], strides = [1, 1, 1]} : vector<1x8x32xf32> to vector<1x8x16xf32>
    %51 = arith.truncf %50 : vector<1x8x16xf32> to vector<1x8x16xbf16>
    "tpu.trace_start"() <{level = 10 : i32, message = "bqk,bkd->bqd"}> : () -> ()
    %cst_16 = arith.constant dense<0.000000e+00> : vector<1x8x16xf32>
    %52 = tpu.matmul %49, %51, %cst_16 {dimension_numbers = #tpu.dot_dimension_numbers<[2], [1], [1], [2], [0, 0, 0, 1, 1, 2], [0], [0]>} : vector<1x8x8xbf16>, vector<1x8x16xbf16>, vector<1x8x16xf32> -> vector<1x8x16xf32>
    "tpu.trace_stop"() : () -> ()
    %53 = tpu.concatenate %33, %52 in 2 : vector<1x8x16xf32>, vector<1x8x16xf32> -> vector<1x8x32xf32>
    %54 = arith.truncf %53 : vector<1x8x32xf32> to vector<1x8x32xbf16>
    %c0_17 = arith.constant 0 : index
    %c0_18 = arith.constant 0 : index
    %c0_19 = arith.constant 0 : index
    %55 = vector.load %arg4[%c0_17, %c0_18, %c0_19] : memref<2x32x32xbf16, #tpu.memory_space<vmem>>, vector<1x32x32xbf16>
    %56 = vector.shape_cast %55 : vector<1x32x32xbf16> to vector<32x32xbf16>
    "tpu.trace_start"() <{level = 10 : i32, message = "bqe,ef->bqf"}> : () -> ()
    %cst_20 = arith.constant dense<0.000000e+00> : vector<1x8x32xf32>
    %57 = tpu.matmul %54, %56, %cst_20 {dimension_numbers = #tpu.dot_dimension_numbers<[2], [0], [0, 1], [1], [0, 0, 0, 1, 1, 1], [], []>} : vector<1x8x32xbf16>, vector<32x32xbf16>, vector<1x8x32xf32> -> vector<1x8x32xf32>
    "tpu.trace_stop"() : () -> ()
    %c0_21 = arith.constant 0 : index
    %c0_22 = arith.constant 0 : index
    %c0_23 = arith.constant 0 : index
    %58 = vector.load %arg5[%c0_21, %c0_22, %c0_23] : memref<2x1x32xf32, #tpu.memory_space<vmem>>, vector<1x1x32xf32>
    %59 = vector.shape_cast %58 : vector<1x1x32xf32> to vector<1x32xf32>
    %60 = vector.shape_cast %59 : vector<1x32xf32> to vector<1x1x32xf32>
    %61 = vector.broadcast %60 : vector<1x1x32xf32> to vector<1x8x32xf32>
    %62 = arith.addf %57, %61 : vector<1x8x32xf32>
    %63 = arith.addf %0, %62 : vector<1x8x32xf32>
    %c0_24 = arith.constant 0 : index
    %c0_25 = arith.constant 0 : index
    %c0_26 = arith.constant 0 : index
    %64 = vector.load %arg6[%c0_24, %c0_25, %c0_26] : memref<2x1x32xf32, #tpu.memory_space<vmem>>, vector<1x1x32xf32>
    %65 = vector.shape_cast %64 : vector<1x1x32xf32> to vector<1x32xf32>
    %c0_27 = arith.constant 0 : index
    %c0_28 = arith.constant 0 : index
    %c0_29 = arith.constant 0 : index
    %66 = vector.load %arg7[%c0_27, %c0_28, %c0_29] : memref<2x1x32xf32, #tpu.memory_space<vmem>>, vector<1x1x32xf32>
    %67 = vector.shape_cast %66 : vector<1x1x32xf32> to vector<1x32xf32>
    %cst_30 = arith.constant dense<0.000000e+00> : vector<1x8xf32>
    %68 = vector.multi_reduction <add>, %63, %cst_30 [2] : vector<1x8x32xf32> to vector<1x8xf32>
    %69 = vector.shape_cast %68 : vector<1x8xf32> to vector<1x8x1xf32>
    %cst_31 = arith.constant 3.200000e+01 : f32
    %70 = vector.broadcast %cst_31 : f32 to vector<1x8x1xf32>
    %71 = arith.divf %69, %70 : vector<1x8x1xf32>
    %72 = arith.mulf %63, %63 : vector<1x8x32xf32>
    %cst_32 = arith.constant dense<0.000000e+00> : vector<1x8xf32>
    %73 = vector.multi_reduction <add>, %72, %cst_32 [2] : vector<1x8x32xf32> to vector<1x8xf32>
    %74 = vector.shape_cast %73 : vector<1x8xf32> to vector<1x8x1xf32>
    %cst_33 = arith.constant 3.200000e+01 : f32
    %75 = vector.broadcast %cst_33 : f32 to vector<1x8x1xf32>
    %76 = arith.divf %74, %75 : vector<1x8x1xf32>
    %77 = arith.mulf %71, %71 : vector<1x8x1xf32>
    %78 = arith.subf %76, %77 : vector<1x8x1xf32>
    %79 = vector.broadcast %71 : vector<1x8x1xf32> to vector<1x8x32xf32>
    %80 = arith.subf %63, %79 : vector<1x8x32xf32>
    %cst_34 = arith.constant 9.99999974E-6 : f32
    %81 = vector.broadcast %cst_34 : f32 to vector<1x8x1xf32>
    %82 = arith.addf %78, %81 : vector<1x8x1xf32>
    %83 = math.rsqrt %82 : vector<1x8x1xf32>
    %84 = vector.broadcast %83 : vector<1x8x1xf32> to vector<1x8x32xf32>
    %85 = arith.mulf %80, %84 : vector<1x8x32xf32>
    %86 = vector.shape_cast %65 : vector<1x32xf32> to vector<1x1x32xf32>
    %87 = vector.broadcast %86 : vector<1x1x32xf32> to vector<1x8x32xf32>
    %88 = arith.mulf %85, %87 : vector<1x8x32xf32>
    %89 = vector.shape_cast %67 : vector<1x32xf32> to vector<1x1x32xf32>
    %90 = vector.broadcast %89 : vector<1x1x32xf32> to vector<1x8x32xf32>
    %91 = arith.addf %88, %90 : vector<1x8x32xf32>
    %92 = arith.truncf %91 : vector<1x8x32xf32> to vector<1x8x32xbf16>
    %c0_35 = arith.constant 0 : index
    %c0_36 = arith.constant 0 : index
    %c0_37 = arith.constant 0 : index
    %93 = vector.load %arg8[%c0_35, %c0_36, %c0_37] : memref<2x32x64xbf16, #tpu.memory_space<vmem>>, vector<1x32x64xbf16>
    %94 = vector.shape_cast %93 : vector<1x32x64xbf16> to vector<32x64xbf16>
    "tpu.trace_start"() <{level = 10 : i32, message = "bqe,ef->bqf"}> : () -> ()
    %cst_38 = arith.constant dense<0.000000e+00> : vector<1x8x64xf32>
    %95 = tpu.matmul %92, %94, %cst_38 {dimension_numbers = #tpu.dot_dimension_numbers<[2], [0], [0, 1], [1], [0, 0, 0, 1, 1, 1], [], []>} : vector<1x8x32xbf16>, vector<32x64xbf16>, vector<1x8x64xf32> -> vector<1x8x64xf32>
    "tpu.trace_stop"() : () -> ()
    %c0_39 = arith.constant 0 : index
    %c0_40 = arith.constant 0 : index
    %c0_41 = arith.constant 0 : index
    %96 = vector.load %arg9[%c0_39, %c0_40, %c0_41] : memref<2x1x64xf32, #tpu.memory_space<vmem>>, vector<1x1x64xf32>
    %97 = vector.shape_cast %96 : vector<1x1x64xf32> to vector<1x64xf32>
    %98 = vector.shape_cast %97 : vector<1x64xf32> to vector<1x1x64xf32>
    %99 = vector.broadcast %98 : vector<1x1x64xf32> to vector<1x8x64xf32>
    %100 = arith.addf %95, %99 : vector<1x8x64xf32>
    %cst_42 = arith.constant 0.000000e+00 : f32
    %101 = vector.broadcast %cst_42 : f32 to vector<1x8x64xf32>
    %102 = arith.maximumf %100, %101 : vector<1x8x64xf32>
    %103 = arith.truncf %102 : vector<1x8x64xf32> to vector<1x8x64xbf16>
    %c0_43 = arith.constant 0 : index
    %c0_44 = arith.constant 0 : index
    %c0_45 = arith.constant 0 : index
    %104 = vector.load %arg10[%c0_43, %c0_44, %c0_45] : memref<2x64x32xbf16, #tpu.memory_space<vmem>>, vector<1x64x32xbf16>
    %105 = vector.shape_cast %104 : vector<1x64x32xbf16> to vector<64x32xbf16>
    "tpu.trace_start"() <{level = 10 : i32, message = "bqf,fe->bqe"}> : () -> ()
    %cst_46 = arith.constant dense<0.000000e+00> : vector<1x8x32xf32>
    %106 = tpu.matmul %103, %105, %cst_46 {dimension_numbers = #tpu.dot_dimension_numbers<[2], [0], [0, 1], [1], [0, 0, 0, 1, 1, 1], [], []>} : vector<1x8x64xbf16>, vector<64x32xbf16>, vector<1x8x32xf32> -> vector<1x8x32xf32>
    "tpu.trace_stop"() : () -> ()
    %c0_47 = arith.constant 0 : index
    %c0_48 = arith.constant 0 : index
    %c0_49 = arith.constant 0 : index
    %107 = vector.load %arg11[%c0_47, %c0_48, %c0_49] : memref<2x1x32xf32, #tpu.memory_space<vmem>>, vector<1x1x32xf32>
    %108 = vector.shape_cast %107 : vector<1x1x32xf32> to vector<1x32xf32>
    %109 = vector.shape_cast %108 : vector<1x32xf32> to vector<1x1x32xf32>
    %110 = vector.broadcast %109 : vector<1x1x32xf32> to vector<1x8x32xf32>
    %111 = arith.addf %106, %110 : vector<1x8x32xf32>
    %112 = arith.addf %91, %111 : vector<1x8x32xf32>
    %c0_50 = arith.constant 0 : index
    %c0_51 = arith.constant 0 : index
    %c0_52 = arith.constant 0 : index
    %113 = vector.load %arg12[%c0_50, %c0_51, %c0_52] : memref<2x1x32xf32, #tpu.memory_space<vmem>>, vector<1x1x32xf32>
    %114 = vector.shape_cast %113 : vector<1x1x32xf32> to vector<1x32xf32>
    %c0_53 = arith.constant 0 : index
    %c0_54 = arith.constant 0 : index
    %c0_55 = arith.constant 0 : index
    %115 = vector.load %arg13[%c0_53, %c0_54, %c0_55] : memref<2x1x32xf32, #tpu.memory_space<vmem>>, vector<1x1x32xf32>
    %116 = vector.shape_cast %115 : vector<1x1x32xf32> to vector<1x32xf32>
    %cst_56 = arith.constant dense<0.000000e+00> : vector<1x8xf32>
    %117 = vector.multi_reduction <add>, %112, %cst_56 [2] : vector<1x8x32xf32> to vector<1x8xf32>
    %118 = vector.shape_cast %117 : vector<1x8xf32> to vector<1x8x1xf32>
    %cst_57 = arith.constant 3.200000e+01 : f32
    %119 = vector.broadcast %cst_57 : f32 to vector<1x8x1xf32>
    %120 = arith.divf %118, %119 : vector<1x8x1xf32>
    %121 = arith.mulf %112, %112 : vector<1x8x32xf32>
    %cst_58 = arith.constant dense<0.000000e+00> : vector<1x8xf32>
    %122 = vector.multi_reduction <add>, %121, %cst_58 [2] : vector<1x8x32xf32> to vector<1x8xf32>
    %123 = vector.shape_cast %122 : vector<1x8xf32> to vector<1x8x1xf32>
    %cst_59 = arith.constant 3.200000e+01 : f32
    %124 = vector.broadcast %cst_59 : f32 to vector<1x8x1xf32>
    %125 = arith.divf %123, %124 : vector<1x8x1xf32>
    %126 = arith.mulf %120, %120 : vector<1x8x1xf32>
    %127 = arith.subf %125, %126 : vector<1x8x1xf32>
    %128 = vector.broadcast %120 : vector<1x8x1xf32> to vector<1x8x32xf32>
    %129 = arith.subf %112, %128 : vector<1x8x32xf32>
    %cst_60 = arith.constant 9.99999974E-6 : f32
    %130 = vector.broadcast %cst_60 : f32 to vector<1x8x1xf32>
    %131 = arith.addf %127, %130 : vector<1x8x1xf32>
    %132 = math.rsqrt %131 : vector<1x8x1xf32>
    %133 = vector.broadcast %132 : vector<1x8x1xf32> to vector<1x8x32xf32>
    %134 = arith.mulf %129, %133 : vector<1x8x32xf32>
    %135 = vector.shape_cast %114 : vector<1x32xf32> to vector<1x1x32xf32>
    %136 = vector.broadcast %135 : vector<1x1x32xf32> to vector<1x8x32xf32>
    %137 = arith.mulf %134, %136 : vector<1x8x32xf32>
    %138 = vector.shape_cast %116 : vector<1x32xf32> to vector<1x1x32xf32>
    %139 = vector.broadcast %138 : vector<1x1x32xf32> to vector<1x8x32xf32>
    %140 = arith.addf %137, %139 : vector<1x8x32xf32>
    %c1 = arith.constant 1 : index
    %c0_61 = arith.constant 0 : index
    %c0_62 = arith.constant 0 : index
    %141 = vector.load %arg2[%c1, %c0_61, %c0_62] : memref<2x32x96xbf16, #tpu.memory_space<vmem>>, vector<1x32x96xbf16>
    %142 = vector.shape_cast %141 : vector<1x32x96xbf16> to vector<32x96xbf16>
    %c1_63 = arith.constant 1 : index
    %c0_64 = arith.constant 0 : index
    %c0_65 = arith.constant 0 : index
    %143 = vector.load %arg3[%c1_63, %c0_64, %c0_65] : memref<2x1x96xf32, #tpu.memory_space<vmem>>, vector<1x1x96xf32>
    %144 = vector.shape_cast %143 : vector<1x1x96xf32> to vector<1x96xf32>
    %145 = vector.extract_strided_slice %140 {offsets = [0, 7, 0], sizes = [1, 1, 32], strides = [1, 1, 1]} : vector<1x8x32xf32> to vector<1x1x32xf32>
    %146 = arith.truncf %145 : vector<1x1x32xf32> to vector<1x1x32xbf16>
    %147 = vector.extract_strided_slice %142 {offsets = [0, 0], sizes = [32, 32], strides = [1, 1]} : vector<32x96xbf16> to vector<32x32xbf16>
    "tpu.trace_start"() <{level = 10 : i32, message = "bqe,ef->bqf"}> : () -> ()
    %cst_66 = arith.constant dense<0.000000e+00> : vector<1x1x32xf32>
    %148 = tpu.matmul %146, %147, %cst_66 {dimension_numbers = #tpu.dot_dimension_numbers<[2], [0], [0, 1], [1], [0, 0, 0, 1, 1, 1], [], []>} : vector<1x1x32xbf16>, vector<32x32xbf16>, vector<1x1x32xf32> -> vector<1x1x32xf32>
    "tpu.trace_stop"() : () -> ()
    %149 = vector.extract_strided_slice %144 {offsets = [0, 0], sizes = [1, 32], strides = [1, 1]} : vector<1x96xf32> to vector<1x32xf32>
    %150 = vector.shape_cast %149 : vector<1x32xf32> to vector<1x1x32xf32>
    %151 = arith.addf %148, %150 : vector<1x1x32xf32>
    %152 = arith.truncf %140 : vector<1x8x32xf32> to vector<1x8x32xbf16>
    %153 = vector.extract_strided_slice %142 {offsets = [0, 32], sizes = [32, 64], strides = [1, 1]} : vector<32x96xbf16> to vector<32x64xbf16>
    "tpu.trace_start"() <{level = 10 : i32, message = "bte,ef->btf"}> : () -> ()
    %cst_67 = arith.constant dense<0.000000e+00> : vector<1x8x64xf32>
    %154 = tpu.matmul %152, %153, %cst_67 {dimension_numbers = #tpu.dot_dimension_numbers<[2], [0], [0, 1], [1], [0, 0, 0, 1, 1, 1], [], []>} : vector<1x8x32xbf16>, vector<32x64xbf16>, vector<1x8x64xf32> -> vector<1x8x64xf32>
    "tpu.trace_stop"() : () -> ()
    %155 = vector.extract_strided_slice %144 {offsets = [0, 32], sizes = [1, 64], strides = [1, 1]} : vector<1x96xf32> to vector<1x64xf32>
    %156 = vector.shape_cast %155 : vector<1x64xf32> to vector<1x1x64xf32>
    %157 = vector.broadcast %156 : vector<1x1x64xf32> to vector<1x8x64xf32>
    %158 = arith.addf %154, %157 : vector<1x8x64xf32>
    %159 = vector.extract_strided_slice %158 {offsets = [0, 0, 0], sizes = [1, 8, 32], strides = [1, 1, 1]} : vector<1x8x64xf32> to vector<1x8x32xf32>
    %160 = vector.extract_strided_slice %158 {offsets = [0, 0, 32], sizes = [1, 8, 32], strides = [1, 1, 1]} : vector<1x8x64xf32> to vector<1x8x32xf32>
    %cst_68 = arith.constant 2.500000e-01 : f32
    %161 = vector.broadcast %cst_68 : f32 to vector<1x1x32xf32>
    %162 = arith.mulf %151, %161 : vector<1x1x32xf32>
    %163 = vector.extract_strided_slice %162 {offsets = [0, 0, 0], sizes = [1, 1, 16], strides = [1, 1, 1]} : vector<1x1x32xf32> to vector<1x1x16xf32>
    %164 = arith.truncf %163 : vector<1x1x16xf32> to vector<1x1x16xbf16>
    %165 = vector.extract_strided_slice %159 {offsets = [0, 0, 0], sizes = [1, 8, 16], strides = [1, 1, 1]} : vector<1x8x32xf32> to vector<1x8x16xf32>
    %166 = arith.truncf %165 : vector<1x8x16xf32> to vector<1x8x16xbf16>
    "tpu.trace_start"() <{level = 10 : i32, message = "bqd,bkd->bqk"}> : () -> ()
    %cst_69 = arith.constant dense<0.000000e+00> : vector<1x1x8xf32>
    %167 = tpu.matmul %164, %166, %cst_69 {dimension_numbers = #tpu.dot_dimension_numbers<[2], [2], [1], [1], [0, 0, 0, 1, 1, 1], [0], [0]>} : vector<1x1x16xbf16>, vector<1x8x16xbf16>, vector<1x1x8xf32> -> vector<1x1x8xf32>
    "tpu.trace_stop"() : () -> ()
    %cst_70 = arith.constant dense<0xFF800000> : vector<1x1xf32>
    %168 = vector.multi_reduction <maximumf>, %167, %cst_70 [2] : vector<1x1x8xf32> to vector<1x1xf32>
    %169 = vector.shape_cast %168 : vector<1x1xf32> to vector<1x1x1xf32>
    %170 = vector.broadcast %169 : vector<1x1x1xf32> to vector<1x1x8xf32>
    %171 = arith.subf %167, %170 : vector<1x1x8xf32>
    %172 = math.exp %171 : vector<1x1x8xf32>
    %cst_71 = arith.constant dense<0.000000e+00> : vector<1x1xf32>
    %173 = vector.multi_reduction <add>, %172, %cst_71 [2] : vector<1x1x8xf32> to vector<1x1xf32>
    %174 = vector.shape_cast %173 : vector<1x1xf32> to vector<1x1x1xf32>
    %175 = tpu.reciprocal %174 : vector<1x1x1xf32> -> vector<1x1x1xf32>
    %176 = vector.broadcast %175 : vector<1x1x1xf32> to vector<1x1x8xf32>
    %177 = arith.mulf %172, %176 : vector<1x1x8xf32>
    %178 = arith.truncf %177 : vector<1x1x8xf32> to vector<1x1x8xbf16>
    %179 = vector.extract_strided_slice %160 {offsets = [0, 0, 0], sizes = [1, 8, 16], strides = [1, 1, 1]} : vector<1x8x32xf32> to vector<1x8x16xf32>
    %180 = arith.truncf %179 : vector<1x8x16xf32> to vector<1x8x16xbf16>
    "tpu.trace_start"() <{level = 10 : i32, message = "bqk,bkd->bqd"}> : () -> ()
    %cst_72 = arith.constant dense<0.000000e+00> : vector<1x1x16xf32>
    %181 = tpu.matmul %178, %180, %cst_72 {dimension_numbers = #tpu.dot_dimension_numbers<[2], [1], [1], [2], [0, 0, 0, 1, 1, 2], [0], [0]>} : vector<1x1x8xbf16>, vector<1x8x16xbf16>, vector<1x1x16xf32> -> vector<1x1x16xf32>
    "tpu.trace_stop"() : () -> ()
    %182 = vector.extract_strided_slice %162 {offsets = [0, 0, 16], sizes = [1, 1, 16], strides = [1, 1, 1]} : vector<1x1x32xf32> to vector<1x1x16xf32>
    %183 = arith.truncf %182 : vector<1x1x16xf32> to vector<1x1x16xbf16>
    %184 = vector.extract_strided_slice %159 {offsets = [0, 0, 16], sizes = [1, 8, 16], strides = [1, 1, 1]} : vector<1x8x32xf32> to vector<1x8x16xf32>
    %185 = arith.truncf %184 : vector<1x8x16xf32> to vector<1x8x16xbf16>
    "tpu.trace_start"() <{level = 10 : i32, message = "bqd,bkd->bqk"}> : () -> ()
    %cst_73 = arith.constant dense<0.000000e+00> : vector<1x1x8xf32>
    %186 = tpu.matmul %183, %185, %cst_73 {dimension_numbers = #tpu.dot_dimension_numbers<[2], [2], [1], [1], [0, 0, 0, 1, 1, 1], [0], [0]>} : vector<1x1x16xbf16>, vector<1x8x16xbf16>, vector<1x1x8xf32> -> vector<1x1x8xf32>
    "tpu.trace_stop"() : () -> ()
    %cst_74 = arith.constant dense<0xFF800000> : vector<1x1xf32>
    %187 = vector.multi_reduction <maximumf>, %186, %cst_74 [2] : vector<1x1x8xf32> to vector<1x1xf32>
    %188 = vector.shape_cast %187 : vector<1x1xf32> to vector<1x1x1xf32>
    %189 = vector.broadcast %188 : vector<1x1x1xf32> to vector<1x1x8xf32>
    %190 = arith.subf %186, %189 : vector<1x1x8xf32>
    %191 = math.exp %190 : vector<1x1x8xf32>
    %cst_75 = arith.constant dense<0.000000e+00> : vector<1x1xf32>
    %192 = vector.multi_reduction <add>, %191, %cst_75 [2] : vector<1x1x8xf32> to vector<1x1xf32>
    %193 = vector.shape_cast %192 : vector<1x1xf32> to vector<1x1x1xf32>
    %194 = tpu.reciprocal %193 : vector<1x1x1xf32> -> vector<1x1x1xf32>
    %195 = vector.broadcast %194 : vector<1x1x1xf32> to vector<1x1x8xf32>
    %196 = arith.mulf %191, %195 : vector<1x1x8xf32>
    %197 = arith.truncf %196 : vector<1x1x8xf32> to vector<1x1x8xbf16>
    %198 = vector.extract_strided_slice %160 {offsets = [0, 0, 16], sizes = [1, 8, 16], strides = [1, 1, 1]} : vector<1x8x32xf32> to vector<1x8x16xf32>
    %199 = arith.truncf %198 : vector<1x8x16xf32> to vector<1x8x16xbf16>
    "tpu.trace_start"() <{level = 10 : i32, message = "bqk,bkd->bqd"}> : () -> ()
    %cst_76 = arith.constant dense<0.000000e+00> : vector<1x1x16xf32>
    %200 = tpu.matmul %197, %199, %cst_76 {dimension_numbers = #tpu.dot_dimension_numbers<[2], [1], [1], [2], [0, 0, 0, 1, 1, 2], [0], [0]>} : vector<1x1x8xbf16>, vector<1x8x16xbf16>, vector<1x1x16xf32> -> vector<1x1x16xf32>
    "tpu.trace_stop"() : () -> ()
    %201 = tpu.concatenate %181, %200 in 2 : vector<1x1x16xf32>, vector<1x1x16xf32> -> vector<1x1x32xf32>
    %202 = arith.truncf %201 : vector<1x1x32xf32> to vector<1x1x32xbf16>
    %c1_77 = arith.constant 1 : index
    %c0_78 = arith.constant 0 : index
    %c0_79 = arith.constant 0 : index
    %203 = vector.load %arg4[%c1_77, %c0_78, %c0_79] : memref<2x32x32xbf16, #tpu.memory_space<vmem>>, vector<1x32x32xbf16>
    %204 = vector.shape_cast %203 : vector<1x32x32xbf16> to vector<32x32xbf16>
    "tpu.trace_start"() <{level = 10 : i32, message = "bqe,ef->bqf"}> : () -> ()
    %cst_80 = arith.constant dense<0.000000e+00> : vector<1x1x32xf32>
    %205 = tpu.matmul %202, %204, %cst_80 {dimension_numbers = #tpu.dot_dimension_numbers<[2], [0], [0, 1], [1], [0, 0, 0, 1, 1, 1], [], []>} : vector<1x1x32xbf16>, vector<32x32xbf16>, vector<1x1x32xf32> -> vector<1x1x32xf32>
    "tpu.trace_stop"() : () -> ()
    %c1_81 = arith.constant 1 : index
    %c0_82 = arith.constant 0 : index
    %c0_83 = arith.constant 0 : index
    %206 = vector.load %arg5[%c1_81, %c0_82, %c0_83] : memref<2x1x32xf32, #tpu.memory_space<vmem>>, vector<1x1x32xf32>
    %207 = vector.shape_cast %206 : vector<1x1x32xf32> to vector<1x32xf32>
    %208 = vector.shape_cast %207 : vector<1x32xf32> to vector<1x1x32xf32>
    %209 = arith.addf %205, %208 : vector<1x1x32xf32>
    %210 = arith.addf %145, %209 : vector<1x1x32xf32>
    %c1_84 = arith.constant 1 : index
    %c0_85 = arith.constant 0 : index
    %c0_86 = arith.constant 0 : index
    %211 = vector.load %arg6[%c1_84, %c0_85, %c0_86] : memref<2x1x32xf32, #tpu.memory_space<vmem>>, vector<1x1x32xf32>
    %212 = vector.shape_cast %211 : vector<1x1x32xf32> to vector<1x32xf32>
    %c1_87 = arith.constant 1 : index
    %c0_88 = arith.constant 0 : index
    %c0_89 = arith.constant 0 : index
    %213 = vector.load %arg7[%c1_87, %c0_88, %c0_89] : memref<2x1x32xf32, #tpu.memory_space<vmem>>, vector<1x1x32xf32>
    %214 = vector.shape_cast %213 : vector<1x1x32xf32> to vector<1x32xf32>
    %cst_90 = arith.constant dense<0.000000e+00> : vector<1x1xf32>
    %215 = vector.multi_reduction <add>, %210, %cst_90 [2] : vector<1x1x32xf32> to vector<1x1xf32>
    %216 = vector.shape_cast %215 : vector<1x1xf32> to vector<1x1x1xf32>
    %cst_91 = arith.constant 3.200000e+01 : f32
    %217 = vector.broadcast %cst_91 : f32 to vector<1x1x1xf32>
    %218 = arith.divf %216, %217 : vector<1x1x1xf32>
    %219 = arith.mulf %210, %210 : vector<1x1x32xf32>
    %cst_92 = arith.constant dense<0.000000e+00> : vector<1x1xf32>
    %220 = vector.multi_reduction <add>, %219, %cst_92 [2] : vector<1x1x32xf32> to vector<1x1xf32>
    %221 = vector.shape_cast %220 : vector<1x1xf32> to vector<1x1x1xf32>
    %cst_93 = arith.constant 3.200000e+01 : f32
    %222 = vector.broadcast %cst_93 : f32 to vector<1x1x1xf32>
    %223 = arith.divf %221, %222 : vector<1x1x1xf32>
    %224 = arith.mulf %218, %218 : vector<1x1x1xf32>
    %225 = arith.subf %223, %224 : vector<1x1x1xf32>
    %226 = vector.broadcast %218 : vector<1x1x1xf32> to vector<1x1x32xf32>
    %227 = arith.subf %210, %226 : vector<1x1x32xf32>
    %cst_94 = arith.constant 9.99999974E-6 : f32
    %228 = vector.broadcast %cst_94 : f32 to vector<1x1x1xf32>
    %229 = arith.addf %225, %228 : vector<1x1x1xf32>
    %230 = math.rsqrt %229 : vector<1x1x1xf32>
    %231 = vector.broadcast %230 : vector<1x1x1xf32> to vector<1x1x32xf32>
    %232 = arith.mulf %227, %231 : vector<1x1x32xf32>
    %233 = vector.shape_cast %212 : vector<1x32xf32> to vector<1x1x32xf32>
    %234 = arith.mulf %232, %233 : vector<1x1x32xf32>
    %235 = vector.shape_cast %214 : vector<1x32xf32> to vector<1x1x32xf32>
    %236 = arith.addf %234, %235 : vector<1x1x32xf32>
    %237 = arith.truncf %236 : vector<1x1x32xf32> to vector<1x1x32xbf16>
    %c1_95 = arith.constant 1 : index
    %c0_96 = arith.constant 0 : index
    %c0_97 = arith.constant 0 : index
    %238 = vector.load %arg8[%c1_95, %c0_96, %c0_97] : memref<2x32x64xbf16, #tpu.memory_space<vmem>>, vector<1x32x64xbf16>
    %239 = vector.shape_cast %238 : vector<1x32x64xbf16> to vector<32x64xbf16>
    "tpu.trace_start"() <{level = 10 : i32, message = "bqe,ef->bqf"}> : () -> ()
    %cst_98 = arith.constant dense<0.000000e+00> : vector<1x1x64xf32>
    %240 = tpu.matmul %237, %239, %cst_98 {dimension_numbers = #tpu.dot_dimension_numbers<[2], [0], [0, 1], [1], [0, 0, 0, 1, 1, 1], [], []>} : vector<1x1x32xbf16>, vector<32x64xbf16>, vector<1x1x64xf32> -> vector<1x1x64xf32>
    "tpu.trace_stop"() : () -> ()
    %c1_99 = arith.constant 1 : index
    %c0_100 = arith.constant 0 : index
    %c0_101 = arith.constant 0 : index
    %241 = vector.load %arg9[%c1_99, %c0_100, %c0_101] : memref<2x1x64xf32, #tpu.memory_space<vmem>>, vector<1x1x64xf32>
    %242 = vector.shape_cast %241 : vector<1x1x64xf32> to vector<1x64xf32>
    %243 = vector.shape_cast %242 : vector<1x64xf32> to vector<1x1x64xf32>
    %244 = arith.addf %240, %243 : vector<1x1x64xf32>
    %cst_102 = arith.constant 0.000000e+00 : f32
    %245 = vector.broadcast %cst_102 : f32 to vector<1x1x64xf32>
    %246 = arith.maximumf %244, %245 : vector<1x1x64xf32>
    %247 = arith.truncf %246 : vector<1x1x64xf32> to vector<1x1x64xbf16>
    %c1_103 = arith.constant 1 : index
    %c0_104 = arith.constant 0 : index
    %c0_105 = arith.constant 0 : index
    %248 = vector.load %arg10[%c1_103, %c0_104, %c0_105] : memref<2x64x32xbf16, #tpu.memory_space<vmem>>, vector<1x64x32xbf16>
    %249 = vector.shape_cast %248 : vector<1x64x32xbf16> to vector<64x32xbf16>
    "tpu.trace_start"() <{level = 10 : i32, message = "bqf,fe->bqe"}> : () -> ()
    %cst_106 = arith.constant dense<0.000000e+00> : vector<1x1x32xf32>
    %250 = tpu.matmul %247, %249, %cst_106 {dimension_numbers = #tpu.dot_dimension_numbers<[2], [0], [0, 1], [1], [0, 0, 0, 1, 1, 1], [], []>} : vector<1x1x64xbf16>, vector<64x32xbf16>, vector<1x1x32xf32> -> vector<1x1x32xf32>
    "tpu.trace_stop"() : () -> ()
    %c1_107 = arith.constant 1 : index
    %c0_108 = arith.constant 0 : index
    %c0_109 = arith.constant 0 : index
    %251 = vector.load %arg11[%c1_107, %c0_108, %c0_109] : memref<2x1x32xf32, #tpu.memory_space<vmem>>, vector<1x1x32xf32>
    %252 = vector.shape_cast %251 : vector<1x1x32xf32> to vector<1x32xf32>
    %253 = vector.shape_cast %252 : vector<1x32xf32> to vector<1x1x32xf32>
    %254 = arith.addf %250, %253 : vector<1x1x32xf32>
    %255 = arith.addf %236, %254 : vector<1x1x32xf32>
    %c1_110 = arith.constant 1 : index
    %c0_111 = arith.constant 0 : index
    %c0_112 = arith.constant 0 : index
    %256 = vector.load %arg12[%c1_110, %c0_111, %c0_112] : memref<2x1x32xf32, #tpu.memory_space<vmem>>, vector<1x1x32xf32>
    %257 = vector.shape_cast %256 : vector<1x1x32xf32> to vector<1x32xf32>
    %c1_113 = arith.constant 1 : index
    %c0_114 = arith.constant 0 : index
    %c0_115 = arith.constant 0 : index
    %258 = vector.load %arg13[%c1_113, %c0_114, %c0_115] : memref<2x1x32xf32, #tpu.memory_space<vmem>>, vector<1x1x32xf32>
    %259 = vector.shape_cast %258 : vector<1x1x32xf32> to vector<1x32xf32>
    %cst_116 = arith.constant dense<0.000000e+00> : vector<1x1xf32>
    %260 = vector.multi_reduction <add>, %255, %cst_116 [2] : vector<1x1x32xf32> to vector<1x1xf32>
    %261 = vector.shape_cast %260 : vector<1x1xf32> to vector<1x1x1xf32>
    %cst_117 = arith.constant 3.200000e+01 : f32
    %262 = vector.broadcast %cst_117 : f32 to vector<1x1x1xf32>
    %263 = arith.divf %261, %262 : vector<1x1x1xf32>
    %264 = arith.mulf %255, %255 : vector<1x1x32xf32>
    %cst_118 = arith.constant dense<0.000000e+00> : vector<1x1xf32>
    %265 = vector.multi_reduction <add>, %264, %cst_118 [2] : vector<1x1x32xf32> to vector<1x1xf32>
    %266 = vector.shape_cast %265 : vector<1x1xf32> to vector<1x1x1xf32>
    %cst_119 = arith.constant 3.200000e+01 : f32
    %267 = vector.broadcast %cst_119 : f32 to vector<1x1x1xf32>
    %268 = arith.divf %266, %267 : vector<1x1x1xf32>
    %269 = arith.mulf %263, %263 : vector<1x1x1xf32>
    %270 = arith.subf %268, %269 : vector<1x1x1xf32>
    %271 = vector.broadcast %263 : vector<1x1x1xf32> to vector<1x1x32xf32>
    %272 = arith.subf %255, %271 : vector<1x1x32xf32>
    %cst_120 = arith.constant 9.99999974E-6 : f32
    %273 = vector.broadcast %cst_120 : f32 to vector<1x1x1xf32>
    %274 = arith.addf %270, %273 : vector<1x1x1xf32>
    %275 = math.rsqrt %274 : vector<1x1x1xf32>
    %276 = vector.broadcast %275 : vector<1x1x1xf32> to vector<1x1x32xf32>
    %277 = arith.mulf %272, %276 : vector<1x1x32xf32>
    %278 = vector.shape_cast %257 : vector<1x32xf32> to vector<1x1x32xf32>
    %279 = arith.mulf %277, %278 : vector<1x1x32xf32>
    %280 = vector.shape_cast %259 : vector<1x32xf32> to vector<1x1x32xf32>
    %281 = arith.addf %279, %280 : vector<1x1x32xf32>
    %282 = arith.truncf %281 : vector<1x1x32xf32> to vector<1x1x32xbf16>
    %c0_121 = arith.constant 0 : index
    %c0_122 = arith.constant 0 : index
    %283 = vector.load %arg14[%c0_121, %c0_122] : memref<32x4xbf16, #tpu.memory_space<vmem>>, vector<32x4xbf16>
    "tpu.trace_start"() <{level = 10 : i32, message = "bqe,ec->bqc"}> : () -> ()
    %cst_123 = arith.constant dense<0.000000e+00> : vector<1x1x4xf32>
    %284 = tpu.matmul %282, %283, %cst_123 {dimension_numbers = #tpu.dot_dimension_numbers<[2], [0], [0, 1], [1], [0, 0, 0, 1, 1, 1], [], []>} : vector<1x1x32xbf16>, vector<32x4xbf16>, vector<1x1x4xf32> -> vector<1x1x4xf32>
    "tpu.trace_stop"() : () -> ()
    %c0_124 = arith.constant 0 : index
    %c0_125 = arith.constant 0 : index
    %285 = vector.load %arg15[%c0_124, %c0_125] : memref<1x4xf32, #tpu.memory_space<vmem>>, vector<1x4xf32>
    %286 = vector.shape_cast %285 : vector<1x4xf32> to vector<1x1x4xf32>
    %287 = arith.addf %284, %286 : vector<1x1x4xf32>
    %c0_126 = arith.constant 0 : index
    %c0_127 = arith.constant 0 : index
    %c0_128 = arith.constant 0 : index
    %288 = vector.load %arg16[%c0_126, %c0_127, %c0_128] : memref<1x1x4xf32, #tpu.memory_space<vmem>>, vector<1x1x4xf32>
    tpu.vector_store %arg16[%c0_126, %c0_127, %c0_128], %287 {strides = array<i32>} : memref<1x1x4xf32, #tpu.memory_space<vmem>>, vector<1x1x4xf32>,
    return
  }
  func.func @transform_0(%arg0: i32) -> (i32, i32, i32) {
    %c0_i32 = arith.constant 0 : i32
    %c0_i32_0 = arith.constant 0 : i32
    %c0_i32_1 = arith.constant 0 : i32
    return %arg0, %c0_i32, %c0_i32_0 : i32, i32, i32
  }
  func.func @transform_1(%arg0: i32) -> (i32, i32, i32) {
    %c0_i32 = arith.constant 0 : i32
    %c0_i32_0 = arith.constant 0 : i32
    %c0_i32_1 = arith.constant 0 : i32
    %c0_i32_2 = arith.constant 0 : i32
    return %c0_i32, %c0_i32_0, %c0_i32_1 : i32, i32, i32
  }
  func.func @transform_2(%arg0: i32) -> (i32, i32, i32) {
    %c0_i32 = arith.constant 0 : i32
    %c0_i32_0 = arith.constant 0 : i32
    %c0_i32_1 = arith.constant 0 : i32
    %c0_i32_2 = arith.constant 0 : i32
    return %c0_i32, %c0_i32_0, %c0_i32_1 : i32, i32, i32
  }
  func.func @transform_3(%arg0: i32) -> (i32, i32, i32) {
    %c0_i32 = arith.constant 0 : i32
    %c0_i32_0 = arith.constant 0 : i32
    %c0_i32_1 = arith.constant 0 : i32
    %c0_i32_2 = arith.constant 0 : i32
    return %c0_i32, %c0_i32_0, %c0_i32_1 : i32, i32, i32
  }
  func.func @transform_4(%arg0: i32) -> (i32, i32, i32) {
    %c0_i32 = arith.constant 0 : i32
    %c0_i32_0 = arith.constant 0 : i32
    %c0_i32_1 = arith.constant 0 : i32
    %c0_i32_2 = arith.constant 0 : i32
    return %c0_i32, %c0_i32_0, %c0_i32_1 : i32, i32, i32
  }
  func.func @transform_5(%arg0: i32) -> (i32, i32, i32) {
    %c0_i32 = arith.constant 0 : i32
    %c0_i32_0 = arith.constant 0 : i32
    %c0_i32_1 = arith.constant 0 : i32
    %c0_i32_2 = arith.constant 0 : i32
    return %c0_i32, %c0_i32_0, %c0_i32_1 : i32, i32, i32
  }
  func.func @transform_6(%arg0: i32) -> (i32, i32, i32) {
    %c0_i32 = arith.constant 0 : i32
    %c0_i32_0 = arith.constant 0 : i32
    %c0_i32_1 = arith.constant 0 : i32
    %c0_i32_2 = arith.constant 0 : i32
    return %c0_i32, %c0_i32_0, %c0_i32_1 : i32, i32, i32
  }
  func.func @transform_7(%arg0: i32) -> (i32, i32, i32) {
    %c0_i32 = arith.constant 0 : i32
    %c0_i32_0 = arith.constant 0 : i32
    %c0_i32_1 = arith.constant 0 : i32
    %c0_i32_2 = arith.constant 0 : i32
    return %c0_i32, %c0_i32_0, %c0_i32_1 : i32, i32, i32
  }
  func.func @transform_8(%arg0: i32) -> (i32, i32, i32) {
    %c0_i32 = arith.constant 0 : i32
    %c0_i32_0 = arith.constant 0 : i32
    %c0_i32_1 = arith.constant 0 : i32
    %c0_i32_2 = arith.constant 0 : i32
    return %c0_i32, %c0_i32_0, %c0_i32_1 : i32, i32, i32
  }
  func.func @transform_9(%arg0: i32) -> (i32, i32, i32) {
    %c0_i32 = arith.constant 0 : i32
    %c0_i32_0 = arith.constant 0 : i32
    %c0_i32_1 = arith.constant 0 : i32
    %c0_i32_2 = arith.constant 0 : i32
    return %c0_i32, %c0_i32_0, %c0_i32_1 : i32, i32, i32
  }
  func.func @transform_10(%arg0: i32) -> (i32, i32, i32) {
    %c0_i32 = arith.constant 0 : i32
    %c0_i32_0 = arith.constant 0 : i32
    %c0_i32_1 = arith.constant 0 : i32
    %c0_i32_2 = arith.constant 0 : i32
    return %c0_i32, %c0_i32_0, %c0_i32_1 : i32, i32, i32
  }
  func.func @transform_11(%arg0: i32) -> (i32, i32, i32) {
    %c0_i32 = arith.constant 0 : i32
    %c0_i32_0 = arith.constant 0 : i32
    %c0_i32_1 = arith.constant 0 : i32
    %c0_i32_2 = arith.constant 0 : i32
    return %c0_i32, %c0_i32_0, %c0_i32_1 : i32, i32, i32
  }
  func.func @transform_12(%arg0: i32) -> (i32, i32, i32) {
    %c0_i32 = arith.constant 0 : i32
    %c0_i32_0 = arith.constant 0 : i32
    %c0_i32_1 = arith.constant 0 : i32
    %c0_i32_2 = arith.constant 0 : i32
    return %c0_i32, %c0_i32_0, %c0_i32_1 : i32, i32, i32
  }
  func.func @transform_13(%arg0: i32) -> (i32, i32) {
    %c0_i32 = arith.constant 0 : i32
    %c0_i32_0 = arith.constant 0 : i32
    %c0_i32_1 = arith.constant 0 : i32
    return %c0_i32, %c0_i32_0 : i32, i32
  }
  func.func @transform_14(%arg0: i32) -> (i32, i32) {
    %c0_i32 = arith.constant 0 : i32
    %c0_i32_0 = arith.constant 0 : i32
    %c0_i32_1 = arith.constant 0 : i32
    return %c0_i32, %c0_i32_0 : i32, i32
  }
  func.func @transform_15(%arg0: i32) -> (i32, i32, i32) {
    %c0_i32 = arith.constant 0 : i32
    %c0_i32_0 = arith.constant 0 : i32
    %c0_i32_1 = arith.constant 0 : i32
    return %arg0, %c0_i32, %c0_i32_0 : i32, i32, i32
  }
}

module attributes {stable_mosaic.version = 11 : i64} {
  func.func @bilstm_kernel(%arg0: i32, %arg1: memref<1x8x8xf32, #tpu.memory_space<vmem>>, %arg2: memref<8x128xbf16, #tpu.memory_space<vmem>>, %arg3: memref<32x128xbf16, #tpu.memory_space<vmem>>, %arg4: memref<1x128xf32, #tpu.memory_space<vmem>>, %arg5: memref<32x128xbf16, #tpu.memory_space<vmem>>, %arg6: memref<32x128xbf16, #tpu.memory_space<vmem>>, %arg7: memref<1x128xf32, #tpu.memory_space<vmem>>, %arg8: memref<1x8x32xf32, #tpu.memory_space<vmem>>, %arg9: memref<8x1x8xbf16, #tpu.memory_space<vmem>>, %arg10: memref<8x1x128xf32, #tpu.memory_space<vmem>>, %arg11: memref<8x1x16xf32, #tpu.memory_space<vmem>>, %arg12: memref<8x1x16xf32, #tpu.memory_space<vmem>>, %arg13: memref<1x32xf32, #tpu.memory_space<vmem>>, %arg14: memref<1x16xf32, #tpu.memory_space<vmem>>, %arg15: memref<1x16xf32, #tpu.memory_space<vmem>>) attributes {dimension_semantics = [#tpu.dimension_semantics<parallel>], iteration_bounds = array<i64: 2>, scalar_prefetch = 0 : i64, scratch_operands = 7 : i64, tpu.core_type = #tpu.core_type<tc>, window_params = [{transform_indices = @transform_0, window_bounds = array<i64: 1, 8, 8>}, {pipeline_mode = #tpu.pipeline_mode<synchronous>, transform_indices = @transform_1, window_bounds = array<i64: 8, 128>}, {pipeline_mode = #tpu.pipeline_mode<synchronous>, transform_indices = @transform_2, window_bounds = array<i64: 32, 128>}, {pipeline_mode = #tpu.pipeline_mode<synchronous>, transform_indices = @transform_3, window_bounds = array<i64: 1, 128>}, {pipeline_mode = #tpu.pipeline_mode<synchronous>, transform_indices = @transform_4, window_bounds = array<i64: 32, 128>}, {pipeline_mode = #tpu.pipeline_mode<synchronous>, transform_indices = @transform_5, window_bounds = array<i64: 32, 128>}, {pipeline_mode = #tpu.pipeline_mode<synchronous>, transform_indices = @transform_6, window_bounds = array<i64: 1, 128>}, {transform_indices = @transform_7, window_bounds = array<i64: 1, 8, 32>}]} {
    %c0 = arith.constant 0 : index
    %c0_0 = arith.constant 0 : index
    %c0_1 = arith.constant 0 : index
    %0 = vector.load %arg1[%c0, %c0_0, %c0_1] : memref<1x8x8xf32, #tpu.memory_space<vmem>>, vector<1x1x8xf32>
    %1 = vector.shape_cast %0 : vector<1x1x8xf32> to vector<1x8xf32>
    %2 = arith.truncf %1 : vector<1x8xf32> to vector<1x8xbf16>
    %c0_2 = arith.constant 0 : index
    %c0_3 = arith.constant 0 : index
    %c0_4 = arith.constant 0 : index
    %3 = vector.load %arg9[%c0_2, %c0_3, %c0_4] : memref<8x1x8xbf16, #tpu.memory_space<vmem>>, vector<1x1x8xbf16>
    %4 = vector.shape_cast %3 : vector<1x1x8xbf16> to vector<1x8xbf16>
    %5 = vector.shape_cast %2 : vector<1x8xbf16> to vector<1x1x8xbf16>
    tpu.vector_store %arg9[%c0_2, %c0_3, %c0_4], %5 {strides = array<i32>} : memref<8x1x8xbf16, #tpu.memory_space<vmem>>, vector<1x1x8xbf16>,
    %c0_5 = arith.constant 0 : index
    %c1 = arith.constant 1 : index
    %c0_6 = arith.constant 0 : index
    %6 = vector.load %arg1[%c0_5, %c1, %c0_6] : memref<1x8x8xf32, #tpu.memory_space<vmem>>, vector<1x1x8xf32>
    %7 = vector.shape_cast %6 : vector<1x1x8xf32> to vector<1x8xf32>
    %8 = arith.truncf %7 : vector<1x8xf32> to vector<1x8xbf16>
    %c1_7 = arith.constant 1 : index
    %c0_8 = arith.constant 0 : index
    %c0_9 = arith.constant 0 : index
    %9 = vector.load %arg9[%c1_7, %c0_8, %c0_9] : memref<8x1x8xbf16, #tpu.memory_space<vmem>>, vector<1x1x8xbf16>
    %10 = vector.shape_cast %9 : vector<1x1x8xbf16> to vector<1x8xbf16>
    %11 = vector.shape_cast %8 : vector<1x8xbf16> to vector<1x1x8xbf16>
    tpu.vector_store %arg9[%c1_7, %c0_8, %c0_9], %11 {strides = array<i32>} : memref<8x1x8xbf16, #tpu.memory_space<vmem>>, vector<1x1x8xbf16>,
    %c0_10 = arith.constant 0 : index
    %c2 = arith.constant 2 : index
    %c0_11 = arith.constant 0 : index
    %12 = vector.load %arg1[%c0_10, %c2, %c0_11] : memref<1x8x8xf32, #tpu.memory_space<vmem>>, vector<1x1x8xf32>
    %13 = vector.shape_cast %12 : vector<1x1x8xf32> to vector<1x8xf32>
    %14 = arith.truncf %13 : vector<1x8xf32> to vector<1x8xbf16>
    %c2_12 = arith.constant 2 : index
    %c0_13 = arith.constant 0 : index
    %c0_14 = arith.constant 0 : index
    %15 = vector.load %arg9[%c2_12, %c0_13, %c0_14] : memref<8x1x8xbf16, #tpu.memory_space<vmem>>, vector<1x1x8xbf16>
    %16 = vector.shape_cast %15 : vector<1x1x8xbf16> to vector<1x8xbf16>
    %17 = vector.shape_cast %14 : vector<1x8xbf16> to vector<1x1x8xbf16>
    tpu.vector_store %arg9[%c2_12, %c0_13, %c0_14], %17 {strides = array<i32>} : memref<8x1x8xbf16, #tpu.memory_space<vmem>>, vector<1x1x8xbf16>,
    %c0_15 = arith.constant 0 : index
    %c3 = arith.constant 3 : index
    %c0_16 = arith.constant 0 : index
    %18 = vector.load %arg1[%c0_15, %c3, %c0_16] : memref<1x8x8xf32, #tpu.memory_space<vmem>>, vector<1x1x8xf32>
    %19 = vector.shape_cast %18 : vector<1x1x8xf32> to vector<1x8xf32>
    %20 = arith.truncf %19 : vector<1x8xf32> to vector<1x8xbf16>
    %c3_17 = arith.constant 3 : index
    %c0_18 = arith.constant 0 : index
    %c0_19 = arith.constant 0 : index
    %21 = vector.load %arg9[%c3_17, %c0_18, %c0_19] : memref<8x1x8xbf16, #tpu.memory_space<vmem>>, vector<1x1x8xbf16>
    %22 = vector.shape_cast %21 : vector<1x1x8xbf16> to vector<1x8xbf16>
    %23 = vector.shape_cast %20 : vector<1x8xbf16> to vector<1x1x8xbf16>
    tpu.vector_store %arg9[%c3_17, %c0_18, %c0_19], %23 {strides = array<i32>} : memref<8x1x8xbf16, #tpu.memory_space<vmem>>, vector<1x1x8xbf16>,
    %c0_20 = arith.constant 0 : index
    %c4 = arith.constant 4 : index
    %c0_21 = arith.constant 0 : index
    %24 = vector.load %arg1[%c0_20, %c4, %c0_21] : memref<1x8x8xf32, #tpu.memory_space<vmem>>, vector<1x1x8xf32>
    %25 = vector.shape_cast %24 : vector<1x1x8xf32> to vector<1x8xf32>
    %26 = arith.truncf %25 : vector<1x8xf32> to vector<1x8xbf16>
    %c4_22 = arith.constant 4 : index
    %c0_23 = arith.constant 0 : index
    %c0_24 = arith.constant 0 : index
    %27 = vector.load %arg9[%c4_22, %c0_23, %c0_24] : memref<8x1x8xbf16, #tpu.memory_space<vmem>>, vector<1x1x8xbf16>
    %28 = vector.shape_cast %27 : vector<1x1x8xbf16> to vector<1x8xbf16>
    %29 = vector.shape_cast %26 : vector<1x8xbf16> to vector<1x1x8xbf16>
    tpu.vector_store %arg9[%c4_22, %c0_23, %c0_24], %29 {strides = array<i32>} : memref<8x1x8xbf16, #tpu.memory_space<vmem>>, vector<1x1x8xbf16>,
    %c0_25 = arith.constant 0 : index
    %c5 = arith.constant 5 : index
    %c0_26 = arith.constant 0 : index
    %30 = vector.load %arg1[%c0_25, %c5, %c0_26] : memref<1x8x8xf32, #tpu.memory_space<vmem>>, vector<1x1x8xf32>
    %31 = vector.shape_cast %30 : vector<1x1x8xf32> to vector<1x8xf32>
    %32 = arith.truncf %31 : vector<1x8xf32> to vector<1x8xbf16>
    %c5_27 = arith.constant 5 : index
    %c0_28 = arith.constant 0 : index
    %c0_29 = arith.constant 0 : index
    %33 = vector.load %arg9[%c5_27, %c0_28, %c0_29] : memref<8x1x8xbf16, #tpu.memory_space<vmem>>, vector<1x1x8xbf16>
    %34 = vector.shape_cast %33 : vector<1x1x8xbf16> to vector<1x8xbf16>
    %35 = vector.shape_cast %32 : vector<1x8xbf16> to vector<1x1x8xbf16>
    tpu.vector_store %arg9[%c5_27, %c0_28, %c0_29], %35 {strides = array<i32>} : memref<8x1x8xbf16, #tpu.memory_space<vmem>>, vector<1x1x8xbf16>,
    %c0_30 = arith.constant 0 : index
    %c6 = arith.constant 6 : index
    %c0_31 = arith.constant 0 : index
    %36 = vector.load %arg1[%c0_30, %c6, %c0_31] : memref<1x8x8xf32, #tpu.memory_space<vmem>>, vector<1x1x8xf32>
    %37 = vector.shape_cast %36 : vector<1x1x8xf32> to vector<1x8xf32>
    %38 = arith.truncf %37 : vector<1x8xf32> to vector<1x8xbf16>
    %c6_32 = arith.constant 6 : index
    %c0_33 = arith.constant 0 : index
    %c0_34 = arith.constant 0 : index
    %39 = vector.load %arg9[%c6_32, %c0_33, %c0_34] : memref<8x1x8xbf16, #tpu.memory_space<vmem>>, vector<1x1x8xbf16>
    %40 = vector.shape_cast %39 : vector<1x1x8xbf16> to vector<1x8xbf16>
    %41 = vector.shape_cast %38 : vector<1x8xbf16> to vector<1x1x8xbf16>
    tpu.vector_store %arg9[%c6_32, %c0_33, %c0_34], %41 {strides = array<i32>} : memref<8x1x8xbf16, #tpu.memory_space<vmem>>, vector<1x1x8xbf16>,
    %c0_35 = arith.constant 0 : index
    %c7 = arith.constant 7 : index
    %c0_36 = arith.constant 0 : index
    %42 = vector.load %arg1[%c0_35, %c7, %c0_36] : memref<1x8x8xf32, #tpu.memory_space<vmem>>, vector<1x1x8xf32>
    %43 = vector.shape_cast %42 : vector<1x1x8xf32> to vector<1x8xf32>
    %44 = arith.truncf %43 : vector<1x8xf32> to vector<1x8xbf16>
    %c7_37 = arith.constant 7 : index
    %c0_38 = arith.constant 0 : index
    %c0_39 = arith.constant 0 : index
    %45 = vector.load %arg9[%c7_37, %c0_38, %c0_39] : memref<8x1x8xbf16, #tpu.memory_space<vmem>>, vector<1x1x8xbf16>
    %46 = vector.shape_cast %45 : vector<1x1x8xbf16> to vector<1x8xbf16>
    %47 = vector.shape_cast %44 : vector<1x8xbf16> to vector<1x1x8xbf16>
    tpu.vector_store %arg9[%c7_37, %c0_38, %c0_39], %47 {strides = array<i32>} : memref<8x1x8xbf16, #tpu.memory_space<vmem>>, vector<1x1x8xbf16>,
    %c0_40 = arith.constant 0 : index
    %c0_41 = arith.constant 0 : index
    %c0_42 = arith.constant 0 : index
    %48 = vector.load %arg9[%c0_40, %c0_41, %c0_42] : memref<8x1x8xbf16, #tpu.memory_space<vmem>>, vector<8x1x8xbf16>
    %c0_43 = arith.constant 0 : index
    %c0_44 = arith.constant 0 : index
    %49 = vector.load %arg2[%c0_43, %c0_44] : memref<8x128xbf16, #tpu.memory_space<vmem>>, vector<8x128xbf16>
    "tpu.trace_start"() <{level = 10 : i32, message = "tbd,dg->tbg"}> : () -> ()
    %cst = arith.constant dense<0.000000e+00> : vector<8x1x128xf32>
    %50 = tpu.matmul %48, %49, %cst {dimension_numbers = #tpu.dot_dimension_numbers<[2], [0], [0, 1], [1], [0, 0, 0, 1, 1, 1], [], []>} : vector<8x1x8xbf16>, vector<8x128xbf16>, vector<8x1x128xf32> -> vector<8x1x128xf32>
    "tpu.trace_stop"() : () -> ()
    %c0_45 = arith.constant 0 : index
    %c0_46 = arith.constant 0 : index
    %51 = vector.load %arg4[%c0_45, %c0_46] : memref<1x128xf32, #tpu.memory_space<vmem>>, vector<1x128xf32>
    %52 = vector.shape_cast %51 : vector<1x128xf32> to vector<1x1x128xf32>
    %53 = vector.broadcast %52 : vector<1x1x128xf32> to vector<8x1x128xf32>
    %54 = arith.addf %50, %53 : vector<8x1x128xf32>
    %c0_47 = arith.constant 0 : index
    %c0_48 = arith.constant 0 : index
    %c0_49 = arith.constant 0 : index
    %55 = vector.load %arg10[%c0_47, %c0_48, %c0_49] : memref<8x1x128xf32, #tpu.memory_space<vmem>>, vector<8x1x128xf32>
    tpu.vector_store %arg10[%c0_47, %c0_48, %c0_49], %54 {strides = array<i32>} : memref<8x1x128xf32, #tpu.memory_space<vmem>>, vector<8x1x128xf32>,
    %c0_50 = arith.constant 0 : index
    %c0_51 = arith.constant 0 : index
    %56 = vector.load %arg3[%c0_50, %c0_51] : memref<32x128xbf16, #tpu.memory_space<vmem>>, vector<32x128xbf16>
    %cst_52 = arith.constant 0.000000e+00 : f32
    %57 = vector.broadcast %cst_52 : f32 to vector<1x32xf32>
    %c0_53 = arith.constant 0 : index
    %c0_54 = arith.constant 0 : index
    %58 = vector.load %arg13[%c0_53, %c0_54] : memref<1x32xf32, #tpu.memory_space<vmem>>, vector<1x32xf32>
    tpu.vector_store %arg13[%c0_53, %c0_54], %57 {strides = array<i32>} : memref<1x32xf32, #tpu.memory_space<vmem>>, vector<1x32xf32>,
    %cst_55 = arith.constant 0.000000e+00 : f32
    %59 = vector.broadcast %cst_55 : f32 to vector<1x16xf32>
    %c0_56 = arith.constant 0 : index
    %c0_57 = arith.constant 0 : index
    %60 = vector.load %arg14[%c0_56, %c0_57] : memref<1x16xf32, #tpu.memory_space<vmem>>, vector<1x16xf32>
    tpu.vector_store %arg14[%c0_56, %c0_57], %59 {strides = array<i32>} : memref<1x16xf32, #tpu.memory_space<vmem>>, vector<1x16xf32>,
    %cst_58 = arith.constant 0.000000e+00 : f32
    %61 = vector.broadcast %cst_58 : f32 to vector<1x16xf32>
    %c0_59 = arith.constant 0 : index
    %c0_60 = arith.constant 0 : index
    %62 = vector.load %arg15[%c0_59, %c0_60] : memref<1x16xf32, #tpu.memory_space<vmem>>, vector<1x16xf32>
    tpu.vector_store %arg15[%c0_59, %c0_60], %61 {strides = array<i32>} : memref<1x16xf32, #tpu.memory_space<vmem>>, vector<1x16xf32>,
    %c0_i32 = arith.constant 0 : i32
    %c0_61 = arith.constant 0 : index
    %c0_62 = arith.constant 0 : index
    %63 = vector.load %arg13[%c0_61, %c0_62] : memref<1x32xf32, #tpu.memory_space<vmem>>, vector<1x32xf32>
    %64 = arith.truncf %63 : vector<1x32xf32> to vector<1x32xbf16>
    %cst_63 = arith.constant dense<0.000000e+00> : vector<1x128xf32>
    %65 = tpu.matmul %64, %56, %cst_63 {dimension_numbers = #tpu.dot_dimension_numbers<[1], [0], [0], [1], [0, 0, 1, 1], [], []>} : vector<1x32xbf16>, vector<32x128xbf16>, vector<1x128xf32> -> vector<1x128xf32>
    %66 = vector.extract_strided_slice %65 {offsets = [0, 0], sizes = [1, 64], strides = [1, 1]} : vector<1x128xf32> to vector<1x64xf32>
    %67 = arith.index_cast %c0_i32 : i32 to index
    %c0_64 = arith.constant 0 : index
    %c0_65 = arith.constant 0 : index
    %68 = vector.load %arg10[%67, %c0_64, %c0_65] : memref<8x1x128xf32, #tpu.memory_space<vmem>>, vector<1x1x128xf32>
    %69 = vector.shape_cast %68 : vector<1x1x128xf32> to vector<1x128xf32>
    %70 = vector.extract_strided_slice %69 {offsets = [0, 0], sizes = [1, 64], strides = [1, 1]} : vector<1x128xf32> to vector<1x64xf32>
    %71 = arith.addf %66, %70 : vector<1x64xf32>
    %72 = vector.extract_strided_slice %65 {offsets = [0, 64], sizes = [1, 64], strides = [1, 1]} : vector<1x128xf32> to vector<1x64xf32>
    %c7_i32 = arith.constant 7 : i32
    %73 = arith.subi %c7_i32, %c0_i32 : i32
    %74 = arith.index_cast %73 : i32 to index
    %c0_66 = arith.constant 0 : index
    %c0_67 = arith.constant 0 : index
    %75 = vector.load %arg10[%74, %c0_66, %c0_67] : memref<8x1x128xf32, #tpu.memory_space<vmem>>, vector<1x1x128xf32>
    %76 = vector.shape_cast %75 : vector<1x1x128xf32> to vector<1x128xf32>
    %77 = vector.extract_strided_slice %76 {offsets = [0, 64], sizes = [1, 64], strides = [1, 1]} : vector<1x128xf32> to vector<1x64xf32>
    %78 = arith.addf %72, %77 : vector<1x64xf32>
    %79 = vector.extract_strided_slice %71 {offsets = [0, 0], sizes = [1, 48], strides = [1, 1]} : vector<1x64xf32> to vector<1x48xf32>
    %80 = arith.negf %79 : vector<1x48xf32>
    %81 = math.exp %80 : vector<1x48xf32>
    %cst_68 = arith.constant 1.000000e+00 : f32
    %82 = vector.broadcast %cst_68 : f32 to vector<1x48xf32>
    %83 = arith.addf %82, %81 : vector<1x48xf32>
    %84 = arith.divf %82, %83 : vector<1x48xf32>
    %85 = vector.extract_strided_slice %71 {offsets = [0, 48], sizes = [1, 16], strides = [1, 1]} : vector<1x64xf32> to vector<1x16xf32>
    %86 = math.tanh %85 : vector<1x16xf32>
    %87 = vector.extract_strided_slice %78 {offsets = [0, 0], sizes = [1, 48], strides = [1, 1]} : vector<1x64xf32> to vector<1x48xf32>
    %88 = arith.negf %87 : vector<1x48xf32>
    %89 = math.exp %88 : vector<1x48xf32>
    %cst_69 = arith.constant 1.000000e+00 : f32
    %90 = vector.broadcast %cst_69 : f32 to vector<1x48xf32>
    %91 = arith.addf %90, %89 : vector<1x48xf32>
    %92 = arith.divf %90, %91 : vector<1x48xf32>
    %93 = vector.extract_strided_slice %78 {offsets = [0, 48], sizes = [1, 16], strides = [1, 1]} : vector<1x64xf32> to vector<1x16xf32>
    %94 = math.tanh %93 : vector<1x16xf32>
    %95 = vector.extract_strided_slice %84 {offsets = [0, 16], sizes = [1, 16], strides = [1, 1]} : vector<1x48xf32> to vector<1x16xf32>
    %c0_70 = arith.constant 0 : index
    %c0_71 = arith.constant 0 : index
    %96 = vector.load %arg14[%c0_70, %c0_71] : memref<1x16xf32, #tpu.memory_space<vmem>>, vector<1x16xf32>
    %97 = arith.mulf %95, %96 : vector<1x16xf32>
    %98 = vector.extract_strided_slice %84 {offsets = [0, 0], sizes = [1, 16], strides = [1, 1]} : vector<1x48xf32> to vector<1x16xf32>
    %99 = arith.mulf %98, %86 : vector<1x16xf32>
    %100 = arith.addf %97, %99 : vector<1x16xf32>
    %101 = vector.extract_strided_slice %92 {offsets = [0, 16], sizes = [1, 16], strides = [1, 1]} : vector<1x48xf32> to vector<1x16xf32>
    %c0_72 = arith.constant 0 : index
    %c0_73 = arith.constant 0 : index
    %102 = vector.load %arg15[%c0_72, %c0_73] : memref<1x16xf32, #tpu.memory_space<vmem>>, vector<1x16xf32>
    %103 = arith.mulf %101, %102 : vector<1x16xf32>
    %104 = vector.extract_strided_slice %92 {offsets = [0, 0], sizes = [1, 16], strides = [1, 1]} : vector<1x48xf32> to vector<1x16xf32>
    %105 = arith.mulf %104, %94 : vector<1x16xf32>
    %106 = arith.addf %103, %105 : vector<1x16xf32>
    %107 = vector.extract_strided_slice %84 {offsets = [0, 32], sizes = [1, 16], strides = [1, 1]} : vector<1x48xf32> to vector<1x16xf32>
    %108 = math.tanh %100 : vector<1x16xf32>
    %109 = arith.mulf %107, %108 : vector<1x16xf32>
    %110 = vector.extract_strided_slice %92 {offsets = [0, 32], sizes = [1, 16], strides = [1, 1]} : vector<1x48xf32> to vector<1x16xf32>
    %111 = math.tanh %106 : vector<1x16xf32>
    %112 = arith.mulf %110, %111 : vector<1x16xf32>
    %c0_74 = arith.constant 0 : index
    %c0_75 = arith.constant 0 : index
    %113 = vector.load %arg14[%c0_74, %c0_75] : memref<1x16xf32, #tpu.memory_space<vmem>>, vector<1x16xf32>
    tpu.vector_store %arg14[%c0_74, %c0_75], %100 {strides = array<i32>} : memref<1x16xf32, #tpu.memory_space<vmem>>, vector<1x16xf32>,
    %c0_76 = arith.constant 0 : index
    %c0_77 = arith.constant 0 : index
    %114 = vector.load %arg15[%c0_76, %c0_77] : memref<1x16xf32, #tpu.memory_space<vmem>>, vector<1x16xf32>
    tpu.vector_store %arg15[%c0_76, %c0_77], %106 {strides = array<i32>} : memref<1x16xf32, #tpu.memory_space<vmem>>, vector<1x16xf32>,
    %c0_78 = arith.constant 0 : index
    %c0_79 = arith.constant 0 : index
    %115 = vector.load %arg13[%c0_78, %c0_79] : memref<1x32xf32, #tpu.memory_space<vmem>>, vector<1x16xf32>
    tpu.vector_store %arg13[%c0_78, %c0_79], %109 {strides = array<i32>} : memref<1x32xf32, #tpu.memory_space<vmem>>, vector<1x16xf32>,
    %c0_80 = arith.constant 0 : index
    %c16 = arith.constant 16 : index
    %116 = vector.load %arg13[%c0_80, %c16] : memref<1x32xf32, #tpu.memory_space<vmem>>, vector<1x16xf32>
    tpu.vector_store %arg13[%c0_80, %c16], %112 {strides = array<i32>} : memref<1x32xf32, #tpu.memory_space<vmem>>, vector<1x16xf32>,
    %117 = arith.index_cast %c0_i32 : i32 to index
    %c0_81 = arith.constant 0 : index
    %c0_82 = arith.constant 0 : index
    %118 = vector.load %arg11[%117, %c0_81, %c0_82] : memref<8x1x16xf32, #tpu.memory_space<vmem>>, vector<1x1x16xf32>
    %119 = vector.shape_cast %118 : vector<1x1x16xf32> to vector<1x16xf32>
    %120 = vector.shape_cast %109 : vector<1x16xf32> to vector<1x1x16xf32>
    tpu.vector_store %arg11[%117, %c0_81, %c0_82], %120 {strides = array<i32>} : memref<8x1x16xf32, #tpu.memory_space<vmem>>, vector<1x1x16xf32>,
    %c7_i32_83 = arith.constant 7 : i32
    %121 = arith.subi %c7_i32_83, %c0_i32 : i32
    %122 = arith.index_cast %121 : i32 to index
    %c0_84 = arith.constant 0 : index
    %c0_85 = arith.constant 0 : index
    %123 = vector.load %arg12[%122, %c0_84, %c0_85] : memref<8x1x16xf32, #tpu.memory_space<vmem>>, vector<1x1x16xf32>
    %124 = vector.shape_cast %123 : vector<1x1x16xf32> to vector<1x16xf32>
    %125 = vector.shape_cast %112 : vector<1x16xf32> to vector<1x1x16xf32>
    tpu.vector_store %arg12[%122, %c0_84, %c0_85], %125 {strides = array<i32>} : memref<8x1x16xf32, #tpu.memory_space<vmem>>, vector<1x1x16xf32>,
    %c1_i32 = arith.constant 1 : i32
    %c0_86 = arith.constant 0 : index
    %c0_87 = arith.constant 0 : index
    %126 = vector.load %arg13[%c0_86, %c0_87] : memref<1x32xf32, #tpu.memory_space<vmem>>, vector<1x32xf32>
    %127 = arith.truncf %126 : vector<1x32xf32> to vector<1x32xbf16>
    %cst_88 = arith.constant dense<0.000000e+00> : vector<1x128xf32>
    %128 = tpu.matmul %127, %56, %cst_88 {dimension_numbers = #tpu.dot_dimension_numbers<[1], [0], [0], [1], [0, 0, 1, 1], [], []>} : vector<1x32xbf16>, vector<32x128xbf16>, vector<1x128xf32> -> vector<1x128xf32>
    %129 = vector.extract_strided_slice %128 {offsets = [0, 0], sizes = [1, 64], strides = [1, 1]} : vector<1x128xf32> to vector<1x64xf32>
    %130 = arith.index_cast %c1_i32 : i32 to index
    %c0_89 = arith.constant 0 : index
    %c0_90 = arith.constant 0 : index
    %131 = vector.load %arg10[%130, %c0_89, %c0_90] : memref<8x1x128xf32, #tpu.memory_space<vmem>>, vector<1x1x128xf32>
    %132 = vector.shape_cast %131 : vector<1x1x128xf32> to vector<1x128xf32>
    %133 = vector.extract_strided_slice %132 {offsets = [0, 0], sizes = [1, 64], strides = [1, 1]} : vector<1x128xf32> to vector<1x64xf32>
    %134 = arith.addf %129, %133 : vector<1x64xf32>
    %135 = vector.extract_strided_slice %128 {offsets = [0, 64], sizes = [1, 64], strides = [1, 1]} : vector<1x128xf32> to vector<1x64xf32>
    %c7_i32_91 = arith.constant 7 : i32
    %136 = arith.subi %c7_i32_91, %c1_i32 : i32
    %137 = arith.index_cast %136 : i32 to index
    %c0_92 = arith.constant 0 : index
    %c0_93 = arith.constant 0 : index
    %138 = vector.load %arg10[%137, %c0_92, %c0_93] : memref<8x1x128xf32, #tpu.memory_space<vmem>>, vector<1x1x128xf32>
    %139 = vector.shape_cast %138 : vector<1x1x128xf32> to vector<1x128xf32>
    %140 = vector.extract_strided_slice %139 {offsets = [0, 64], sizes = [1, 64], strides = [1, 1]} : vector<1x128xf32> to vector<1x64xf32>
    %141 = arith.addf %135, %140 : vector<1x64xf32>
    %142 = vector.extract_strided_slice %134 {offsets = [0, 0], sizes = [1, 48], strides = [1, 1]} : vector<1x64xf32> to vector<1x48xf32>
    %143 = arith.negf %142 : vector<1x48xf32>
    %144 = math.exp %143 : vector<1x48xf32>
    %cst_94 = arith.constant 1.000000e+00 : f32
    %145 = vector.broadcast %cst_94 : f32 to vector<1x48xf32>
    %146 = arith.addf %145, %144 : vector<1x48xf32>
    %147 = arith.divf %145, %146 : vector<1x48xf32>
    %148 = vector.extract_strided_slice %134 {offsets = [0, 48], sizes = [1, 16], strides = [1, 1]} : vector<1x64xf32> to vector<1x16xf32>
    %149 = math.tanh %148 : vector<1x16xf32>
    %150 = vector.extract_strided_slice %141 {offsets = [0, 0], sizes = [1, 48], strides = [1, 1]} : vector<1x64xf32> to vector<1x48xf32>
    %151 = arith.negf %150 : vector<1x48xf32>
    %152 = math.exp %151 : vector<1x48xf32>
    %cst_95 = arith.constant 1.000000e+00 : f32
    %153 = vector.broadcast %cst_95 : f32 to vector<1x48xf32>
    %154 = arith.addf %153, %152 : vector<1x48xf32>
    %155 = arith.divf %153, %154 : vector<1x48xf32>
    %156 = vector.extract_strided_slice %141 {offsets = [0, 48], sizes = [1, 16], strides = [1, 1]} : vector<1x64xf32> to vector<1x16xf32>
    %157 = math.tanh %156 : vector<1x16xf32>
    %158 = vector.extract_strided_slice %147 {offsets = [0, 16], sizes = [1, 16], strides = [1, 1]} : vector<1x48xf32> to vector<1x16xf32>
    %c0_96 = arith.constant 0 : index
    %c0_97 = arith.constant 0 : index
    %159 = vector.load %arg14[%c0_96, %c0_97] : memref<1x16xf32, #tpu.memory_space<vmem>>, vector<1x16xf32>
    %160 = arith.mulf %158, %159 : vector<1x16xf32>
    %161 = vector.extract_strided_slice %147 {offsets = [0, 0], sizes = [1, 16], strides = [1, 1]} : vector<1x48xf32> to vector<1x16xf32>
    %162 = arith.mulf %161, %149 : vector<1x16xf32>
    %163 = arith.addf %160, %162 : vector<1x16xf32>
    %164 = vector.extract_strided_slice %155 {offsets = [0, 16], sizes = [1, 16], strides = [1, 1]} : vector<1x48xf32> to vector<1x16xf32>
    %c0_98 = arith.constant 0 : index
    %c0_99 = arith.constant 0 : index
    %165 = vector.load %arg15[%c0_98, %c0_99] : memref<1x16xf32, #tpu.memory_space<vmem>>, vector<1x16xf32>
    %166 = arith.mulf %164, %165 : vector<1x16xf32>
    %167 = vector.extract_strided_slice %155 {offsets = [0, 0], sizes = [1, 16], strides = [1, 1]} : vector<1x48xf32> to vector<1x16xf32>
    %168 = arith.mulf %167, %157 : vector<1x16xf32>
    %169 = arith.addf %166, %168 : vector<1x16xf32>
    %170 = vector.extract_strided_slice %147 {offsets = [0, 32], sizes = [1, 16], strides = [1, 1]} : vector<1x48xf32> to vector<1x16xf32>
    %171 = math.tanh %163 : vector<1x16xf32>
    %172 = arith.mulf %170, %171 : vector<1x16xf32>
    %173 = vector.extract_strided_slice %155 {offsets = [0, 32], sizes = [1, 16], strides = [1, 1]} : vector<1x48xf32> to vector<1x16xf32>
    %174 = math.tanh %169 : vector<1x16xf32>
    %175 = arith.mulf %173, %174 : vector<1x16xf32>
    %c0_100 = arith.constant 0 : index
    %c0_101 = arith.constant 0 : index
    %176 = vector.load %arg14[%c0_100, %c0_101] : memref<1x16xf32, #tpu.memory_space<vmem>>, vector<1x16xf32>
    tpu.vector_store %arg14[%c0_100, %c0_101], %163 {strides = array<i32>} : memref<1x16xf32, #tpu.memory_space<vmem>>, vector<1x16xf32>,
    %c0_102 = arith.constant 0 : index
    %c0_103 = arith.constant 0 : index
    %177 = vector.load %arg15[%c0_102, %c0_103] : memref<1x16xf32, #tpu.memory_space<vmem>>, vector<1x16xf32>
    tpu.vector_store %arg15[%c0_102, %c0_103], %169 {strides = array<i32>} : memref<1x16xf32, #tpu.memory_space<vmem>>, vector<1x16xf32>,
    %c0_104 = arith.constant 0 : index
    %c0_105 = arith.constant 0 : index
    %178 = vector.load %arg13[%c0_104, %c0_105] : memref<1x32xf32, #tpu.memory_space<vmem>>, vector<1x16xf32>
    tpu.vector_store %arg13[%c0_104, %c0_105], %172 {strides = array<i32>} : memref<1x32xf32, #tpu.memory_space<vmem>>, vector<1x16xf32>,
    %c0_106 = arith.constant 0 : index
    %c16_107 = arith.constant 16 : index
    %179 = vector.load %arg13[%c0_106, %c16_107] : memref<1x32xf32, #tpu.memory_space<vmem>>, vector<1x16xf32>
    tpu.vector_store %arg13[%c0_106, %c16_107], %175 {strides = array<i32>} : memref<1x32xf32, #tpu.memory_space<vmem>>, vector<1x16xf32>,
    %180 = arith.index_cast %c1_i32 : i32 to index
    %c0_108 = arith.constant 0 : index
    %c0_109 = arith.constant 0 : index
    %181 = vector.load %arg11[%180, %c0_108, %c0_109] : memref<8x1x16xf32, #tpu.memory_space<vmem>>, vector<1x1x16xf32>
    %182 = vector.shape_cast %181 : vector<1x1x16xf32> to vector<1x16xf32>
    %183 = vector.shape_cast %172 : vector<1x16xf32> to vector<1x1x16xf32>
    tpu.vector_store %arg11[%180, %c0_108, %c0_109], %183 {strides = array<i32>} : memref<8x1x16xf32, #tpu.memory_space<vmem>>, vector<1x1x16xf32>,
    %c7_i32_110 = arith.constant 7 : i32
    %184 = arith.subi %c7_i32_110, %c1_i32 : i32
    %185 = arith.index_cast %184 : i32 to index
    %c0_111 = arith.constant 0 : index
    %c0_112 = arith.constant 0 : index
    %186 = vector.load %arg12[%185, %c0_111, %c0_112] : memref<8x1x16xf32, #tpu.memory_space<vmem>>, vector<1x1x16xf32>
    %187 = vector.shape_cast %186 : vector<1x1x16xf32> to vector<1x16xf32>
    %188 = vector.shape_cast %175 : vector<1x16xf32> to vector<1x1x16xf32>
    tpu.vector_store %arg12[%185, %c0_111, %c0_112], %188 {strides = array<i32>} : memref<8x1x16xf32, #tpu.memory_space<vmem>>, vector<1x1x16xf32>,
    %c2_i32 = arith.constant 2 : i32
    %c0_113 = arith.constant 0 : index
    %c0_114 = arith.constant 0 : index
    %189 = vector.load %arg13[%c0_113, %c0_114] : memref<1x32xf32, #tpu.memory_space<vmem>>, vector<1x32xf32>
    %190 = arith.truncf %189 : vector<1x32xf32> to vector<1x32xbf16>
    %cst_115 = arith.constant dense<0.000000e+00> : vector<1x128xf32>
    %191 = tpu.matmul %190, %56, %cst_115 {dimension_numbers = #tpu.dot_dimension_numbers<[1], [0], [0], [1], [0, 0, 1, 1], [], []>} : vector<1x32xbf16>, vector<32x128xbf16>, vector<1x128xf32> -> vector<1x128xf32>
    %192 = vector.extract_strided_slice %191 {offsets = [0, 0], sizes = [1, 64], strides = [1, 1]} : vector<1x128xf32> to vector<1x64xf32>
    %193 = arith.index_cast %c2_i32 : i32 to index
    %c0_116 = arith.constant 0 : index
    %c0_117 = arith.constant 0 : index
    %194 = vector.load %arg10[%193, %c0_116, %c0_117] : memref<8x1x128xf32, #tpu.memory_space<vmem>>, vector<1x1x128xf32>
    %195 = vector.shape_cast %194 : vector<1x1x128xf32> to vector<1x128xf32>
    %196 = vector.extract_strided_slice %195 {offsets = [0, 0], sizes = [1, 64], strides = [1, 1]} : vector<1x128xf32> to vector<1x64xf32>
    %197 = arith.addf %192, %196 : vector<1x64xf32>
    %198 = vector.extract_strided_slice %191 {offsets = [0, 64], sizes = [1, 64], strides = [1, 1]} : vector<1x128xf32> to vector<1x64xf32>
    %c7_i32_118 = arith.constant 7 : i32
    %199 = arith.subi %c7_i32_118, %c2_i32 : i32
    %200 = arith.index_cast %199 : i32 to index
    %c0_119 = arith.constant 0 : index
    %c0_120 = arith.constant 0 : index
    %201 = vector.load %arg10[%200, %c0_119, %c0_120] : memref<8x1x128xf32, #tpu.memory_space<vmem>>, vector<1x1x128xf32>
    %202 = vector.shape_cast %201 : vector<1x1x128xf32> to vector<1x128xf32>
    %203 = vector.extract_strided_slice %202 {offsets = [0, 64], sizes = [1, 64], strides = [1, 1]} : vector<1x128xf32> to vector<1x64xf32>
    %204 = arith.addf %198, %203 : vector<1x64xf32>
    %205 = vector.extract_strided_slice %197 {offsets = [0, 0], sizes = [1, 48], strides = [1, 1]} : vector<1x64xf32> to vector<1x48xf32>
    %206 = arith.negf %205 : vector<1x48xf32>
    %207 = math.exp %206 : vector<1x48xf32>
    %cst_121 = arith.constant 1.000000e+00 : f32
    %208 = vector.broadcast %cst_121 : f32 to vector<1x48xf32>
    %209 = arith.addf %208, %207 : vector<1x48xf32>
    %210 = arith.divf %208, %209 : vector<1x48xf32>
    %211 = vector.extract_strided_slice %197 {offsets = [0, 48], sizes = [1, 16], strides = [1, 1]} : vector<1x64xf32> to vector<1x16xf32>
    %212 = math.tanh %211 : vector<1x16xf32>
    %213 = vector.extract_strided_slice %204 {offsets = [0, 0], sizes = [1, 48], strides = [1, 1]} : vector<1x64xf32> to vector<1x48xf32>
    %214 = arith.negf %213 : vector<1x48xf32>
    %215 = math.exp %214 : vector<1x48xf32>
    %cst_122 = arith.constant 1.000000e+00 : f32
    %216 = vector.broadcast %cst_122 : f32 to vector<1x48xf32>
    %217 = arith.addf %216, %215 : vector<1x48xf32>
    %218 = arith.divf %216, %217 : vector<1x48xf32>
    %219 = vector.extract_strided_slice %204 {offsets = [0, 48], sizes = [1, 16], strides = [1, 1]} : vector<1x64xf32> to vector<1x16xf32>
    %220 = math.tanh %219 : vector<1x16xf32>
    %221 = vector.extract_strided_slice %210 {offsets = [0, 16], sizes = [1, 16], strides = [1, 1]} : vector<1x48xf32> to vector<1x16xf32>
    %c0_123 = arith.constant 0 : index
    %c0_124 = arith.constant 0 : index
    %222 = vector.load %arg14[%c0_123, %c0_124] : memref<1x16xf32, #tpu.memory_space<vmem>>, vector<1x16xf32>
    %223 = arith.mulf %221, %222 : vector<1x16xf32>
    %224 = vector.extract_strided_slice %210 {offsets = [0, 0], sizes = [1, 16], strides = [1, 1]} : vector<1x48xf32> to vector<1x16xf32>
    %225 = arith.mulf %224, %212 : vector<1x16xf32>
    %226 = arith.addf %223, %225 : vector<1x16xf32>
    %227 = vector.extract_strided_slice %218 {offsets = [0, 16], sizes = [1, 16], strides = [1, 1]} : vector<1x48xf32> to vector<1x16xf32>
    %c0_125 = arith.constant 0 : index
    %c0_126 = arith.constant 0 : index
    %228 = vector.load %arg15[%c0_125, %c0_126] : memref<1x16xf32, #tpu.memory_space<vmem>>, vector<1x16xf32>
    %229 = arith.mulf %227, %228 : vector<1x16xf32>
    %230 = vector.extract_strided_slice %218 {offsets = [0, 0], sizes = [1, 16], strides = [1, 1]} : vector<1x48xf32> to vector<1x16xf32>
    %231 = arith.mulf %230, %220 : vector<1x16xf32>
    %232 = arith.addf %229, %231 : vector<1x16xf32>
    %233 = vector.extract_strided_slice %210 {offsets = [0, 32], sizes = [1, 16], strides = [1, 1]} : vector<1x48xf32> to vector<1x16xf32>
    %234 = math.tanh %226 : vector<1x16xf32>
    %235 = arith.mulf %233, %234 : vector<1x16xf32>
    %236 = vector.extract_strided_slice %218 {offsets = [0, 32], sizes = [1, 16], strides = [1, 1]} : vector<1x48xf32> to vector<1x16xf32>
    %237 = math.tanh %232 : vector<1x16xf32>
    %238 = arith.mulf %236, %237 : vector<1x16xf32>
    %c0_127 = arith.constant 0 : index
    %c0_128 = arith.constant 0 : index
    %239 = vector.load %arg14[%c0_127, %c0_128] : memref<1x16xf32, #tpu.memory_space<vmem>>, vector<1x16xf32>
    tpu.vector_store %arg14[%c0_127, %c0_128], %226 {strides = array<i32>} : memref<1x16xf32, #tpu.memory_space<vmem>>, vector<1x16xf32>,
    %c0_129 = arith.constant 0 : index
    %c0_130 = arith.constant 0 : index
    %240 = vector.load %arg15[%c0_129, %c0_130] : memref<1x16xf32, #tpu.memory_space<vmem>>, vector<1x16xf32>
    tpu.vector_store %arg15[%c0_129, %c0_130], %232 {strides = array<i32>} : memref<1x16xf32, #tpu.memory_space<vmem>>, vector<1x16xf32>,
    %c0_131 = arith.constant 0 : index
    %c0_132 = arith.constant 0 : index
    %241 = vector.load %arg13[%c0_131, %c0_132] : memref<1x32xf32, #tpu.memory_space<vmem>>, vector<1x16xf32>
    tpu.vector_store %arg13[%c0_131, %c0_132], %235 {strides = array<i32>} : memref<1x32xf32, #tpu.memory_space<vmem>>, vector<1x16xf32>,
    %c0_133 = arith.constant 0 : index
    %c16_134 = arith.constant 16 : index
    %242 = vector.load %arg13[%c0_133, %c16_134] : memref<1x32xf32, #tpu.memory_space<vmem>>, vector<1x16xf32>
    tpu.vector_store %arg13[%c0_133, %c16_134], %238 {strides = array<i32>} : memref<1x32xf32, #tpu.memory_space<vmem>>, vector<1x16xf32>,
    %243 = arith.index_cast %c2_i32 : i32 to index
    %c0_135 = arith.constant 0 : index
    %c0_136 = arith.constant 0 : index
    %244 = vector.load %arg11[%243, %c0_135, %c0_136] : memref<8x1x16xf32, #tpu.memory_space<vmem>>, vector<1x1x16xf32>
    %245 = vector.shape_cast %244 : vector<1x1x16xf32> to vector<1x16xf32>
    %246 = vector.shape_cast %235 : vector<1x16xf32> to vector<1x1x16xf32>
    tpu.vector_store %arg11[%243, %c0_135, %c0_136], %246 {strides = array<i32>} : memref<8x1x16xf32, #tpu.memory_space<vmem>>, vector<1x1x16xf32>,
    %c7_i32_137 = arith.constant 7 : i32
    %247 = arith.subi %c7_i32_137, %c2_i32 : i32
    %248 = arith.index_cast %247 : i32 to index
    %c0_138 = arith.constant 0 : index
    %c0_139 = arith.constant 0 : index
    %249 = vector.load %arg12[%248, %c0_138, %c0_139] : memref<8x1x16xf32, #tpu.memory_space<vmem>>, vector<1x1x16xf32>
    %250 = vector.shape_cast %249 : vector<1x1x16xf32> to vector<1x16xf32>
    %251 = vector.shape_cast %238 : vector<1x16xf32> to vector<1x1x16xf32>
    tpu.vector_store %arg12[%248, %c0_138, %c0_139], %251 {strides = array<i32>} : memref<8x1x16xf32, #tpu.memory_space<vmem>>, vector<1x1x16xf32>,
    %c3_i32 = arith.constant 3 : i32
    %c0_140 = arith.constant 0 : index
    %c0_141 = arith.constant 0 : index
    %252 = vector.load %arg13[%c0_140, %c0_141] : memref<1x32xf32, #tpu.memory_space<vmem>>, vector<1x32xf32>
    %253 = arith.truncf %252 : vector<1x32xf32> to vector<1x32xbf16>
    %cst_142 = arith.constant dense<0.000000e+00> : vector<1x128xf32>
    %254 = tpu.matmul %253, %56, %cst_142 {dimension_numbers = #tpu.dot_dimension_numbers<[1], [0], [0], [1], [0, 0, 1, 1], [], []>} : vector<1x32xbf16>, vector<32x128xbf16>, vector<1x128xf32> -> vector<1x128xf32>
    %255 = vector.extract_strided_slice %254 {offsets = [0, 0], sizes = [1, 64], strides = [1, 1]} : vector<1x128xf32> to vector<1x64xf32>
    %256 = arith.index_cast %c3_i32 : i32 to index
    %c0_143 = arith.constant 0 : index
    %c0_144 = arith.constant 0 : index
    %257 = vector.load %arg10[%256, %c0_143, %c0_144] : memref<8x1x128xf32, #tpu.memory_space<vmem>>, vector<1x1x128xf32>
    %258 = vector.shape_cast %257 : vector<1x1x128xf32> to vector<1x128xf32>
    %259 = vector.extract_strided_slice %258 {offsets = [0, 0], sizes = [1, 64], strides = [1, 1]} : vector<1x128xf32> to vector<1x64xf32>
    %260 = arith.addf %255, %259 : vector<1x64xf32>
    %261 = vector.extract_strided_slice %254 {offsets = [0, 64], sizes = [1, 64], strides = [1, 1]} : vector<1x128xf32> to vector<1x64xf32>
    %c7_i32_145 = arith.constant 7 : i32
    %262 = arith.subi %c7_i32_145, %c3_i32 : i32
    %263 = arith.index_cast %262 : i32 to index
    %c0_146 = arith.constant 0 : index
    %c0_147 = arith.constant 0 : index
    %264 = vector.load %arg10[%263, %c0_146, %c0_147] : memref<8x1x128xf32, #tpu.memory_space<vmem>>, vector<1x1x128xf32>
    %265 = vector.shape_cast %264 : vector<1x1x128xf32> to vector<1x128xf32>
    %266 = vector.extract_strided_slice %265 {offsets = [0, 64], sizes = [1, 64], strides = [1, 1]} : vector<1x128xf32> to vector<1x64xf32>
    %267 = arith.addf %261, %266 : vector<1x64xf32>
    %268 = vector.extract_strided_slice %260 {offsets = [0, 0], sizes = [1, 48], strides = [1, 1]} : vector<1x64xf32> to vector<1x48xf32>
    %269 = arith.negf %268 : vector<1x48xf32>
    %270 = math.exp %269 : vector<1x48xf32>
    %cst_148 = arith.constant 1.000000e+00 : f32
    %271 = vector.broadcast %cst_148 : f32 to vector<1x48xf32>
    %272 = arith.addf %271, %270 : vector<1x48xf32>
    %273 = arith.divf %271, %272 : vector<1x48xf32>
    %274 = vector.extract_strided_slice %260 {offsets = [0, 48], sizes = [1, 16], strides = [1, 1]} : vector<1x64xf32> to vector<1x16xf32>
    %275 = math.tanh %274 : vector<1x16xf32>
    %276 = vector.extract_strided_slice %267 {offsets = [0, 0], sizes = [1, 48], strides = [1, 1]} : vector<1x64xf32> to vector<1x48xf32>
    %277 = arith.negf %276 : vector<1x48xf32>
    %278 = math.exp %277 : vector<1x48xf32>
    %cst_149 = arith.constant 1.000000e+00 : f32
    %279 = vector.broadcast %cst_149 : f32 to vector<1x48xf32>
    %280 = arith.addf %279, %278 : vector<1x48xf32>
    %281 = arith.divf %279, %280 : vector<1x48xf32>
    %282 = vector.extract_strided_slice %267 {offsets = [0, 48], sizes = [1, 16], strides = [1, 1]} : vector<1x64xf32> to vector<1x16xf32>
    %283 = math.tanh %282 : vector<1x16xf32>
    %284 = vector.extract_strided_slice %273 {offsets = [0, 16], sizes = [1, 16], strides = [1, 1]} : vector<1x48xf32> to vector<1x16xf32>
    %c0_150 = arith.constant 0 : index
    %c0_151 = arith.constant 0 : index
    %285 = vector.load %arg14[%c0_150, %c0_151] : memref<1x16xf32, #tpu.memory_space<vmem>>, vector<1x16xf32>
    %286 = arith.mulf %284, %285 : vector<1x16xf32>
    %287 = vector.extract_strided_slice %273 {offsets = [0, 0], sizes = [1, 16], strides = [1, 1]} : vector<1x48xf32> to vector<1x16xf32>
    %288 = arith.mulf %287, %275 : vector<1x16xf32>
    %289 = arith.addf %286, %288 : vector<1x16xf32>
    %290 = vector.extract_strided_slice %281 {offsets = [0, 16], sizes = [1, 16], strides = [1, 1]} : vector<1x48xf32> to vector<1x16xf32>
    %c0_152 = arith.constant 0 : index
    %c0_153 = arith.constant 0 : index
    %291 = vector.load %arg15[%c0_152, %c0_153] : memref<1x16xf32, #tpu.memory_space<vmem>>, vector<1x16xf32>
    %292 = arith.mulf %290, %291 : vector<1x16xf32>
    %293 = vector.extract_strided_slice %281 {offsets = [0, 0], sizes = [1, 16], strides = [1, 1]} : vector<1x48xf32> to vector<1x16xf32>
    %294 = arith.mulf %293, %283 : vector<1x16xf32>
    %295 = arith.addf %292, %294 : vector<1x16xf32>
    %296 = vector.extract_strided_slice %273 {offsets = [0, 32], sizes = [1, 16], strides = [1, 1]} : vector<1x48xf32> to vector<1x16xf32>
    %297 = math.tanh %289 : vector<1x16xf32>
    %298 = arith.mulf %296, %297 : vector<1x16xf32>
    %299 = vector.extract_strided_slice %281 {offsets = [0, 32], sizes = [1, 16], strides = [1, 1]} : vector<1x48xf32> to vector<1x16xf32>
    %300 = math.tanh %295 : vector<1x16xf32>
    %301 = arith.mulf %299, %300 : vector<1x16xf32>
    %c0_154 = arith.constant 0 : index
    %c0_155 = arith.constant 0 : index
    %302 = vector.load %arg14[%c0_154, %c0_155] : memref<1x16xf32, #tpu.memory_space<vmem>>, vector<1x16xf32>
    tpu.vector_store %arg14[%c0_154, %c0_155], %289 {strides = array<i32>} : memref<1x16xf32, #tpu.memory_space<vmem>>, vector<1x16xf32>,
    %c0_156 = arith.constant 0 : index
    %c0_157 = arith.constant 0 : index
    %303 = vector.load %arg15[%c0_156, %c0_157] : memref<1x16xf32, #tpu.memory_space<vmem>>, vector<1x16xf32>
    tpu.vector_store %arg15[%c0_156, %c0_157], %295 {strides = array<i32>} : memref<1x16xf32, #tpu.memory_space<vmem>>, vector<1x16xf32>,
    %c0_158 = arith.constant 0 : index
    %c0_159 = arith.constant 0 : index
    %304 = vector.load %arg13[%c0_158, %c0_159] : memref<1x32xf32, #tpu.memory_space<vmem>>, vector<1x16xf32>
    tpu.vector_store %arg13[%c0_158, %c0_159], %298 {strides = array<i32>} : memref<1x32xf32, #tpu.memory_space<vmem>>, vector<1x16xf32>,
    %c0_160 = arith.constant 0 : index
    %c16_161 = arith.constant 16 : index
    %305 = vector.load %arg13[%c0_160, %c16_161] : memref<1x32xf32, #tpu.memory_space<vmem>>, vector<1x16xf32>
    tpu.vector_store %arg13[%c0_160, %c16_161], %301 {strides = array<i32>} : memref<1x32xf32, #tpu.memory_space<vmem>>, vector<1x16xf32>,
    %306 = arith.index_cast %c3_i32 : i32 to index
    %c0_162 = arith.constant 0 : index
    %c0_163 = arith.constant 0 : index
    %307 = vector.load %arg11[%306, %c0_162, %c0_163] : memref<8x1x16xf32, #tpu.memory_space<vmem>>, vector<1x1x16xf32>
    %308 = vector.shape_cast %307 : vector<1x1x16xf32> to vector<1x16xf32>
    %309 = vector.shape_cast %298 : vector<1x16xf32> to vector<1x1x16xf32>
    tpu.vector_store %arg11[%306, %c0_162, %c0_163], %309 {strides = array<i32>} : memref<8x1x16xf32, #tpu.memory_space<vmem>>, vector<1x1x16xf32>,
    %c7_i32_164 = arith.constant 7 : i32
    %310 = arith.subi %c7_i32_164, %c3_i32 : i32
    %311 = arith.index_cast %310 : i32 to index
    %c0_165 = arith.constant 0 : index
    %c0_166 = arith.constant 0 : index
    %312 = vector.load %arg12[%311, %c0_165, %c0_166] : memref<8x1x16xf32, #tpu.memory_space<vmem>>, vector<1x1x16xf32>
    %313 = vector.shape_cast %312 : vector<1x1x16xf32> to vector<1x16xf32>
    %314 = vector.shape_cast %301 : vector<1x16xf32> to vector<1x1x16xf32>
    tpu.vector_store %arg12[%311, %c0_165, %c0_166], %314 {strides = array<i32>} : memref<8x1x16xf32, #tpu.memory_space<vmem>>, vector<1x1x16xf32>,
    %c4_i32 = arith.constant 4 : i32
    %c0_167 = arith.constant 0 : index
    %c0_168 = arith.constant 0 : index
    %315 = vector.load %arg13[%c0_167, %c0_168] : memref<1x32xf32, #tpu.memory_space<vmem>>, vector<1x32xf32>
    %316 = arith.truncf %315 : vector<1x32xf32> to vector<1x32xbf16>
    %cst_169 = arith.constant dense<0.000000e+00> : vector<1x128xf32>
    %317 = tpu.matmul %316, %56, %cst_169 {dimension_numbers = #tpu.dot_dimension_numbers<[1], [0], [0], [1], [0, 0, 1, 1], [], []>} : vector<1x32xbf16>, vector<32x128xbf16>, vector<1x128xf32> -> vector<1x128xf32>
    %318 = vector.extract_strided_slice %317 {offsets = [0, 0], sizes = [1, 64], strides = [1, 1]} : vector<1x128xf32> to vector<1x64xf32>
    %319 = arith.index_cast %c4_i32 : i32 to index
    %c0_170 = arith.constant 0 : index
    %c0_171 = arith.constant 0 : index
    %320 = vector.load %arg10[%319, %c0_170, %c0_171] : memref<8x1x128xf32, #tpu.memory_space<vmem>>, vector<1x1x128xf32>
    %321 = vector.shape_cast %320 : vector<1x1x128xf32> to vector<1x128xf32>
    %322 = vector.extract_strided_slice %321 {offsets = [0, 0], sizes = [1, 64], strides = [1, 1]} : vector<1x128xf32> to vector<1x64xf32>
    %323 = arith.addf %318, %322 : vector<1x64xf32>
    %324 = vector.extract_strided_slice %317 {offsets = [0, 64], sizes = [1, 64], strides = [1, 1]} : vector<1x128xf32> to vector<1x64xf32>
    %c7_i32_172 = arith.constant 7 : i32
    %325 = arith.subi %c7_i32_172, %c4_i32 : i32
    %326 = arith.index_cast %325 : i32 to index
    %c0_173 = arith.constant 0 : index
    %c0_174 = arith.constant 0 : index
    %327 = vector.load %arg10[%326, %c0_173, %c0_174] : memref<8x1x128xf32, #tpu.memory_space<vmem>>, vector<1x1x128xf32>
    %328 = vector.shape_cast %327 : vector<1x1x128xf32> to vector<1x128xf32>
    %329 = vector.extract_strided_slice %328 {offsets = [0, 64], sizes = [1, 64], strides = [1, 1]} : vector<1x128xf32> to vector<1x64xf32>
    %330 = arith.addf %324, %329 : vector<1x64xf32>
    %331 = vector.extract_strided_slice %323 {offsets = [0, 0], sizes = [1, 48], strides = [1, 1]} : vector<1x64xf32> to vector<1x48xf32>
    %332 = arith.negf %331 : vector<1x48xf32>
    %333 = math.exp %332 : vector<1x48xf32>
    %cst_175 = arith.constant 1.000000e+00 : f32
    %334 = vector.broadcast %cst_175 : f32 to vector<1x48xf32>
    %335 = arith.addf %334, %333 : vector<1x48xf32>
    %336 = arith.divf %334, %335 : vector<1x48xf32>
    %337 = vector.extract_strided_slice %323 {offsets = [0, 48], sizes = [1, 16], strides = [1, 1]} : vector<1x64xf32> to vector<1x16xf32>
    %338 = math.tanh %337 : vector<1x16xf32>
    %339 = vector.extract_strided_slice %330 {offsets = [0, 0], sizes = [1, 48], strides = [1, 1]} : vector<1x64xf32> to vector<1x48xf32>
    %340 = arith.negf %339 : vector<1x48xf32>
    %341 = math.exp %340 : vector<1x48xf32>
    %cst_176 = arith.constant 1.000000e+00 : f32
    %342 = vector.broadcast %cst_176 : f32 to vector<1x48xf32>
    %343 = arith.addf %342, %341 : vector<1x48xf32>
    %344 = arith.divf %342, %343 : vector<1x48xf32>
    %345 = vector.extract_strided_slice %330 {offsets = [0, 48], sizes = [1, 16], strides = [1, 1]} : vector<1x64xf32> to vector<1x16xf32>
    %346 = math.tanh %345 : vector<1x16xf32>
    %347 = vector.extract_strided_slice %336 {offsets = [0, 16], sizes = [1, 16], strides = [1, 1]} : vector<1x48xf32> to vector<1x16xf32>
    %c0_177 = arith.constant 0 : index
    %c0_178 = arith.constant 0 : index
    %348 = vector.load %arg14[%c0_177, %c0_178] : memref<1x16xf32, #tpu.memory_space<vmem>>, vector<1x16xf32>
    %349 = arith.mulf %347, %348 : vector<1x16xf32>
    %350 = vector.extract_strided_slice %336 {offsets = [0, 0], sizes = [1, 16], strides = [1, 1]} : vector<1x48xf32> to vector<1x16xf32>
    %351 = arith.mulf %350, %338 : vector<1x16xf32>
    %352 = arith.addf %349, %351 : vector<1x16xf32>
    %353 = vector.extract_strided_slice %344 {offsets = [0, 16], sizes = [1, 16], strides = [1, 1]} : vector<1x48xf32> to vector<1x16xf32>
    %c0_179 = arith.constant 0 : index
    %c0_180 = arith.constant 0 : index
    %354 = vector.load %arg15[%c0_179, %c0_180] : memref<1x16xf32, #tpu.memory_space<vmem>>, vector<1x16xf32>
    %355 = arith.mulf %353, %354 : vector<1x16xf32>
    %356 = vector.extract_strided_slice %344 {offsets = [0, 0], sizes = [1, 16], strides = [1, 1]} : vector<1x48xf32> to vector<1x16xf32>
    %357 = arith.mulf %356, %346 : vector<1x16xf32>
    %358 = arith.addf %355, %357 : vector<1x16xf32>
    %359 = vector.extract_strided_slice %336 {offsets = [0, 32], sizes = [1, 16], strides = [1, 1]} : vector<1x48xf32> to vector<1x16xf32>
    %360 = math.tanh %352 : vector<1x16xf32>
    %361 = arith.mulf %359, %360 : vector<1x16xf32>
    %362 = vector.extract_strided_slice %344 {offsets = [0, 32], sizes = [1, 16], strides = [1, 1]} : vector<1x48xf32> to vector<1x16xf32>
    %363 = math.tanh %358 : vector<1x16xf32>
    %364 = arith.mulf %362, %363 : vector<1x16xf32>
    %c0_181 = arith.constant 0 : index
    %c0_182 = arith.constant 0 : index
    %365 = vector.load %arg14[%c0_181, %c0_182] : memref<1x16xf32, #tpu.memory_space<vmem>>, vector<1x16xf32>
    tpu.vector_store %arg14[%c0_181, %c0_182], %352 {strides = array<i32>} : memref<1x16xf32, #tpu.memory_space<vmem>>, vector<1x16xf32>,
    %c0_183 = arith.constant 0 : index
    %c0_184 = arith.constant 0 : index
    %366 = vector.load %arg15[%c0_183, %c0_184] : memref<1x16xf32, #tpu.memory_space<vmem>>, vector<1x16xf32>
    tpu.vector_store %arg15[%c0_183, %c0_184], %358 {strides = array<i32>} : memref<1x16xf32, #tpu.memory_space<vmem>>, vector<1x16xf32>,
    %c0_185 = arith.constant 0 : index
    %c0_186 = arith.constant 0 : index
    %367 = vector.load %arg13[%c0_185, %c0_186] : memref<1x32xf32, #tpu.memory_space<vmem>>, vector<1x16xf32>
    tpu.vector_store %arg13[%c0_185, %c0_186], %361 {strides = array<i32>} : memref<1x32xf32, #tpu.memory_space<vmem>>, vector<1x16xf32>,
    %c0_187 = arith.constant 0 : index
    %c16_188 = arith.constant 16 : index
    %368 = vector.load %arg13[%c0_187, %c16_188] : memref<1x32xf32, #tpu.memory_space<vmem>>, vector<1x16xf32>
    tpu.vector_store %arg13[%c0_187, %c16_188], %364 {strides = array<i32>} : memref<1x32xf32, #tpu.memory_space<vmem>>, vector<1x16xf32>,
    %369 = arith.index_cast %c4_i32 : i32 to index
    %c0_189 = arith.constant 0 : index
    %c0_190 = arith.constant 0 : index
    %370 = vector.load %arg11[%369, %c0_189, %c0_190] : memref<8x1x16xf32, #tpu.memory_space<vmem>>, vector<1x1x16xf32>
    %371 = vector.shape_cast %370 : vector<1x1x16xf32> to vector<1x16xf32>
    %372 = vector.shape_cast %361 : vector<1x16xf32> to vector<1x1x16xf32>
    tpu.vector_store %arg11[%369, %c0_189, %c0_190], %372 {strides = array<i32>} : memref<8x1x16xf32, #tpu.memory_space<vmem>>, vector<1x1x16xf32>,
    %c7_i32_191 = arith.constant 7 : i32
    %373 = arith.subi %c7_i32_191, %c4_i32 : i32
    %374 = arith.index_cast %373 : i32 to index
    %c0_192 = arith.constant 0 : index
    %c0_193 = arith.constant 0 : index
    %375 = vector.load %arg12[%374, %c0_192, %c0_193] : memref<8x1x16xf32, #tpu.memory_space<vmem>>, vector<1x1x16xf32>
    %376 = vector.shape_cast %375 : vector<1x1x16xf32> to vector<1x16xf32>
    %377 = vector.shape_cast %364 : vector<1x16xf32> to vector<1x1x16xf32>
    tpu.vector_store %arg12[%374, %c0_192, %c0_193], %377 {strides = array<i32>} : memref<8x1x16xf32, #tpu.memory_space<vmem>>, vector<1x1x16xf32>,
    %c5_i32 = arith.constant 5 : i32
    %c0_194 = arith.constant 0 : index
    %c0_195 = arith.constant 0 : index
    %378 = vector.load %arg13[%c0_194, %c0_195] : memref<1x32xf32, #tpu.memory_space<vmem>>, vector<1x32xf32>
    %379 = arith.truncf %378 : vector<1x32xf32> to vector<1x32xbf16>
    %cst_196 = arith.constant dense<0.000000e+00> : vector<1x128xf32>
    %380 = tpu.matmul %379, %56, %cst_196 {dimension_numbers = #tpu.dot_dimension_numbers<[1], [0], [0], [1], [0, 0, 1, 1], [], []>} : vector<1x32xbf16>, vector<32x128xbf16>, vector<1x128xf32> -> vector<1x128xf32>
    %381 = vector.extract_strided_slice %380 {offsets = [0, 0], sizes = [1, 64], strides = [1, 1]} : vector<1x128xf32> to vector<1x64xf32>
    %382 = arith.index_cast %c5_i32 : i32 to index
    %c0_197 = arith.constant 0 : index
    %c0_198 = arith.constant 0 : index
    %383 = vector.load %arg10[%382, %c0_197, %c0_198] : memref<8x1x128xf32, #tpu.memory_space<vmem>>, vector<1x1x128xf32>
    %384 = vector.shape_cast %383 : vector<1x1x128xf32> to vector<1x128xf32>
    %385 = vector.extract_strided_slice %384 {offsets = [0, 0], sizes = [1, 64], strides = [1, 1]} : vector<1x128xf32> to vector<1x64xf32>
    %386 = arith.addf %381, %385 : vector<1x64xf32>
    %387 = vector.extract_strided_slice %380 {offsets = [0, 64], sizes = [1, 64], strides = [1, 1]} : vector<1x128xf32> to vector<1x64xf32>
    %c7_i32_199 = arith.constant 7 : i32
    %388 = arith.subi %c7_i32_199, %c5_i32 : i32
    %389 = arith.index_cast %388 : i32 to index
    %c0_200 = arith.constant 0 : index
    %c0_201 = arith.constant 0 : index
    %390 = vector.load %arg10[%389, %c0_200, %c0_201] : memref<8x1x128xf32, #tpu.memory_space<vmem>>, vector<1x1x128xf32>
    %391 = vector.shape_cast %390 : vector<1x1x128xf32> to vector<1x128xf32>
    %392 = vector.extract_strided_slice %391 {offsets = [0, 64], sizes = [1, 64], strides = [1, 1]} : vector<1x128xf32> to vector<1x64xf32>
    %393 = arith.addf %387, %392 : vector<1x64xf32>
    %394 = vector.extract_strided_slice %386 {offsets = [0, 0], sizes = [1, 48], strides = [1, 1]} : vector<1x64xf32> to vector<1x48xf32>
    %395 = arith.negf %394 : vector<1x48xf32>
    %396 = math.exp %395 : vector<1x48xf32>
    %cst_202 = arith.constant 1.000000e+00 : f32
    %397 = vector.broadcast %cst_202 : f32 to vector<1x48xf32>
    %398 = arith.addf %397, %396 : vector<1x48xf32>
    %399 = arith.divf %397, %398 : vector<1x48xf32>
    %400 = vector.extract_strided_slice %386 {offsets = [0, 48], sizes = [1, 16], strides = [1, 1]} : vector<1x64xf32> to vector<1x16xf32>
    %401 = math.tanh %400 : vector<1x16xf32>
    %402 = vector.extract_strided_slice %393 {offsets = [0, 0], sizes = [1, 48], strides = [1, 1]} : vector<1x64xf32> to vector<1x48xf32>
    %403 = arith.negf %402 : vector<1x48xf32>
    %404 = math.exp %403 : vector<1x48xf32>
    %cst_203 = arith.constant 1.000000e+00 : f32
    %405 = vector.broadcast %cst_203 : f32 to vector<1x48xf32>
    %406 = arith.addf %405, %404 : vector<1x48xf32>
    %407 = arith.divf %405, %406 : vector<1x48xf32>
    %408 = vector.extract_strided_slice %393 {offsets = [0, 48], sizes = [1, 16], strides = [1, 1]} : vector<1x64xf32> to vector<1x16xf32>
    %409 = math.tanh %408 : vector<1x16xf32>
    %410 = vector.extract_strided_slice %399 {offsets = [0, 16], sizes = [1, 16], strides = [1, 1]} : vector<1x48xf32> to vector<1x16xf32>
    %c0_204 = arith.constant 0 : index
    %c0_205 = arith.constant 0 : index
    %411 = vector.load %arg14[%c0_204, %c0_205] : memref<1x16xf32, #tpu.memory_space<vmem>>, vector<1x16xf32>
    %412 = arith.mulf %410, %411 : vector<1x16xf32>
    %413 = vector.extract_strided_slice %399 {offsets = [0, 0], sizes = [1, 16], strides = [1, 1]} : vector<1x48xf32> to vector<1x16xf32>
    %414 = arith.mulf %413, %401 : vector<1x16xf32>
    %415 = arith.addf %412, %414 : vector<1x16xf32>
    %416 = vector.extract_strided_slice %407 {offsets = [0, 16], sizes = [1, 16], strides = [1, 1]} : vector<1x48xf32> to vector<1x16xf32>
    %c0_206 = arith.constant 0 : index
    %c0_207 = arith.constant 0 : index
    %417 = vector.load %arg15[%c0_206, %c0_207] : memref<1x16xf32, #tpu.memory_space<vmem>>, vector<1x16xf32>
    %418 = arith.mulf %416, %417 : vector<1x16xf32>
    %419 = vector.extract_strided_slice %407 {offsets = [0, 0], sizes = [1, 16], strides = [1, 1]} : vector<1x48xf32> to vector<1x16xf32>
    %420 = arith.mulf %419, %409 : vector<1x16xf32>
    %421 = arith.addf %418, %420 : vector<1x16xf32>
    %422 = vector.extract_strided_slice %399 {offsets = [0, 32], sizes = [1, 16], strides = [1, 1]} : vector<1x48xf32> to vector<1x16xf32>
    %423 = math.tanh %415 : vector<1x16xf32>
    %424 = arith.mulf %422, %423 : vector<1x16xf32>
    %425 = vector.extract_strided_slice %407 {offsets = [0, 32], sizes = [1, 16], strides = [1, 1]} : vector<1x48xf32> to vector<1x16xf32>
    %426 = math.tanh %421 : vector<1x16xf32>
    %427 = arith.mulf %425, %426 : vector<1x16xf32>
    %c0_208 = arith.constant 0 : index
    %c0_209 = arith.constant 0 : index
    %428 = vector.load %arg14[%c0_208, %c0_209] : memref<1x16xf32, #tpu.memory_space<vmem>>, vector<1x16xf32>
    tpu.vector_store %arg14[%c0_208, %c0_209], %415 {strides = array<i32>} : memref<1x16xf32, #tpu.memory_space<vmem>>, vector<1x16xf32>,
    %c0_210 = arith.constant 0 : index
    %c0_211 = arith.constant 0 : index
    %429 = vector.load %arg15[%c0_210, %c0_211] : memref<1x16xf32, #tpu.memory_space<vmem>>, vector<1x16xf32>
    tpu.vector_store %arg15[%c0_210, %c0_211], %421 {strides = array<i32>} : memref<1x16xf32, #tpu.memory_space<vmem>>, vector<1x16xf32>,
    %c0_212 = arith.constant 0 : index
    %c0_213 = arith.constant 0 : index
    %430 = vector.load %arg13[%c0_212, %c0_213] : memref<1x32xf32, #tpu.memory_space<vmem>>, vector<1x16xf32>
    tpu.vector_store %arg13[%c0_212, %c0_213], %424 {strides = array<i32>} : memref<1x32xf32, #tpu.memory_space<vmem>>, vector<1x16xf32>,
    %c0_214 = arith.constant 0 : index
    %c16_215 = arith.constant 16 : index
    %431 = vector.load %arg13[%c0_214, %c16_215] : memref<1x32xf32, #tpu.memory_space<vmem>>, vector<1x16xf32>
    tpu.vector_store %arg13[%c0_214, %c16_215], %427 {strides = array<i32>} : memref<1x32xf32, #tpu.memory_space<vmem>>, vector<1x16xf32>,
    %432 = arith.index_cast %c5_i32 : i32 to index
    %c0_216 = arith.constant 0 : index
    %c0_217 = arith.constant 0 : index
    %433 = vector.load %arg11[%432, %c0_216, %c0_217] : memref<8x1x16xf32, #tpu.memory_space<vmem>>, vector<1x1x16xf32>
    %434 = vector.shape_cast %433 : vector<1x1x16xf32> to vector<1x16xf32>
    %435 = vector.shape_cast %424 : vector<1x16xf32> to vector<1x1x16xf32>
    tpu.vector_store %arg11[%432, %c0_216, %c0_217], %435 {strides = array<i32>} : memref<8x1x16xf32, #tpu.memory_space<vmem>>, vector<1x1x16xf32>,
    %c7_i32_218 = arith.constant 7 : i32
    %436 = arith.subi %c7_i32_218, %c5_i32 : i32
    %437 = arith.index_cast %436 : i32 to index
    %c0_219 = arith.constant 0 : index
    %c0_220 = arith.constant 0 : index
    %438 = vector.load %arg12[%437, %c0_219, %c0_220] : memref<8x1x16xf32, #tpu.memory_space<vmem>>, vector<1x1x16xf32>
    %439 = vector.shape_cast %438 : vector<1x1x16xf32> to vector<1x16xf32>
    %440 = vector.shape_cast %427 : vector<1x16xf32> to vector<1x1x16xf32>
    tpu.vector_store %arg12[%437, %c0_219, %c0_220], %440 {strides = array<i32>} : memref<8x1x16xf32, #tpu.memory_space<vmem>>, vector<1x1x16xf32>,
    %c6_i32 = arith.constant 6 : i32
    %c0_221 = arith.constant 0 : index
    %c0_222 = arith.constant 0 : index
    %441 = vector.load %arg13[%c0_221, %c0_222] : memref<1x32xf32, #tpu.memory_space<vmem>>, vector<1x32xf32>
    %442 = arith.truncf %441 : vector<1x32xf32> to vector<1x32xbf16>
    %cst_223 = arith.constant dense<0.000000e+00> : vector<1x128xf32>
    %443 = tpu.matmul %442, %56, %cst_223 {dimension_numbers = #tpu.dot_dimension_numbers<[1], [0], [0], [1], [0, 0, 1, 1], [], []>} : vector<1x32xbf16>, vector<32x128xbf16>, vector<1x128xf32> -> vector<1x128xf32>
    %444 = vector.extract_strided_slice %443 {offsets = [0, 0], sizes = [1, 64], strides = [1, 1]} : vector<1x128xf32> to vector<1x64xf32>
    %445 = arith.index_cast %c6_i32 : i32 to index
    %c0_224 = arith.constant 0 : index
    %c0_225 = arith.constant 0 : index
    %446 = vector.load %arg10[%445, %c0_224, %c0_225] : memref<8x1x128xf32, #tpu.memory_space<vmem>>, vector<1x1x128xf32>
    %447 = vector.shape_cast %446 : vector<1x1x128xf32> to vector<1x128xf32>
    %448 = vector.extract_strided_slice %447 {offsets = [0, 0], sizes = [1, 64], strides = [1, 1]} : vector<1x128xf32> to vector<1x64xf32>
    %449 = arith.addf %444, %448 : vector<1x64xf32>
    %450 = vector.extract_strided_slice %443 {offsets = [0, 64], sizes = [1, 64], strides = [1, 1]} : vector<1x128xf32> to vector<1x64xf32>
    %c7_i32_226 = arith.constant 7 : i32
    %451 = arith.subi %c7_i32_226, %c6_i32 : i32
    %452 = arith.index_cast %451 : i32 to index
    %c0_227 = arith.constant 0 : index
    %c0_228 = arith.constant 0 : index
    %453 = vector.load %arg10[%452, %c0_227, %c0_228] : memref<8x1x128xf32, #tpu.memory_space<vmem>>, vector<1x1x128xf32>
    %454 = vector.shape_cast %453 : vector<1x1x128xf32> to vector<1x128xf32>
    %455 = vector.extract_strided_slice %454 {offsets = [0, 64], sizes = [1, 64], strides = [1, 1]} : vector<1x128xf32> to vector<1x64xf32>
    %456 = arith.addf %450, %455 : vector<1x64xf32>
    %457 = vector.extract_strided_slice %449 {offsets = [0, 0], sizes = [1, 48], strides = [1, 1]} : vector<1x64xf32> to vector<1x48xf32>
    %458 = arith.negf %457 : vector<1x48xf32>
    %459 = math.exp %458 : vector<1x48xf32>
    %cst_229 = arith.constant 1.000000e+00 : f32
    %460 = vector.broadcast %cst_229 : f32 to vector<1x48xf32>
    %461 = arith.addf %460, %459 : vector<1x48xf32>
    %462 = arith.divf %460, %461 : vector<1x48xf32>
    %463 = vector.extract_strided_slice %449 {offsets = [0, 48], sizes = [1, 16], strides = [1, 1]} : vector<1x64xf32> to vector<1x16xf32>
    %464 = math.tanh %463 : vector<1x16xf32>
    %465 = vector.extract_strided_slice %456 {offsets = [0, 0], sizes = [1, 48], strides = [1, 1]} : vector<1x64xf32> to vector<1x48xf32>
    %466 = arith.negf %465 : vector<1x48xf32>
    %467 = math.exp %466 : vector<1x48xf32>
    %cst_230 = arith.constant 1.000000e+00 : f32
    %468 = vector.broadcast %cst_230 : f32 to vector<1x48xf32>
    %469 = arith.addf %468, %467 : vector<1x48xf32>
    %470 = arith.divf %468, %469 : vector<1x48xf32>
    %471 = vector.extract_strided_slice %456 {offsets = [0, 48], sizes = [1, 16], strides = [1, 1]} : vector<1x64xf32> to vector<1x16xf32>
    %472 = math.tanh %471 : vector<1x16xf32>
    %473 = vector.extract_strided_slice %462 {offsets = [0, 16], sizes = [1, 16], strides = [1, 1]} : vector<1x48xf32> to vector<1x16xf32>
    %c0_231 = arith.constant 0 : index
    %c0_232 = arith.constant 0 : index
    %474 = vector.load %arg14[%c0_231, %c0_232] : memref<1x16xf32, #tpu.memory_space<vmem>>, vector<1x16xf32>
    %475 = arith.mulf %473, %474 : vector<1x16xf32>
    %476 = vector.extract_strided_slice %462 {offsets = [0, 0], sizes = [1, 16], strides = [1, 1]} : vector<1x48xf32> to vector<1x16xf32>
    %477 = arith.mulf %476, %464 : vector<1x16xf32>
    %478 = arith.addf %475, %477 : vector<1x16xf32>
    %479 = vector.extract_strided_slice %470 {offsets = [0, 16], sizes = [1, 16], strides = [1, 1]} : vector<1x48xf32> to vector<1x16xf32>
    %c0_233 = arith.constant 0 : index
    %c0_234 = arith.constant 0 : index
    %480 = vector.load %arg15[%c0_233, %c0_234] : memref<1x16xf32, #tpu.memory_space<vmem>>, vector<1x16xf32>
    %481 = arith.mulf %479, %480 : vector<1x16xf32>
    %482 = vector.extract_strided_slice %470 {offsets = [0, 0], sizes = [1, 16], strides = [1, 1]} : vector<1x48xf32> to vector<1x16xf32>
    %483 = arith.mulf %482, %472 : vector<1x16xf32>
    %484 = arith.addf %481, %483 : vector<1x16xf32>
    %485 = vector.extract_strided_slice %462 {offsets = [0, 32], sizes = [1, 16], strides = [1, 1]} : vector<1x48xf32> to vector<1x16xf32>
    %486 = math.tanh %478 : vector<1x16xf32>
    %487 = arith.mulf %485, %486 : vector<1x16xf32>
    %488 = vector.extract_strided_slice %470 {offsets = [0, 32], sizes = [1, 16], strides = [1, 1]} : vector<1x48xf32> to vector<1x16xf32>
    %489 = math.tanh %484 : vector<1x16xf32>
    %490 = arith.mulf %488, %489 : vector<1x16xf32>
    %c0_235 = arith.constant 0 : index
    %c0_236 = arith.constant 0 : index
    %491 = vector.load %arg14[%c0_235, %c0_236] : memref<1x16xf32, #tpu.memory_space<vmem>>, vector<1x16xf32>
    tpu.vector_store %arg14[%c0_235, %c0_236], %478 {strides = array<i32>} : memref<1x16xf32, #tpu.memory_space<vmem>>, vector<1x16xf32>,
    %c0_237 = arith.constant 0 : index
    %c0_238 = arith.constant 0 : index
    %492 = vector.load %arg15[%c0_237, %c0_238] : memref<1x16xf32, #tpu.memory_space<vmem>>, vector<1x16xf32>
    tpu.vector_store %arg15[%c0_237, %c0_238], %484 {strides = array<i32>} : memref<1x16xf32, #tpu.memory_space<vmem>>, vector<1x16xf32>,
    %c0_239 = arith.constant 0 : index
    %c0_240 = arith.constant 0 : index
    %493 = vector.load %arg13[%c0_239, %c0_240] : memref<1x32xf32, #tpu.memory_space<vmem>>, vector<1x16xf32>
    tpu.vector_store %arg13[%c0_239, %c0_240], %487 {strides = array<i32>} : memref<1x32xf32, #tpu.memory_space<vmem>>, vector<1x16xf32>,
    %c0_241 = arith.constant 0 : index
    %c16_242 = arith.constant 16 : index
    %494 = vector.load %arg13[%c0_241, %c16_242] : memref<1x32xf32, #tpu.memory_space<vmem>>, vector<1x16xf32>
    tpu.vector_store %arg13[%c0_241, %c16_242], %490 {strides = array<i32>} : memref<1x32xf32, #tpu.memory_space<vmem>>, vector<1x16xf32>,
    %495 = arith.index_cast %c6_i32 : i32 to index
    %c0_243 = arith.constant 0 : index
    %c0_244 = arith.constant 0 : index
    %496 = vector.load %arg11[%495, %c0_243, %c0_244] : memref<8x1x16xf32, #tpu.memory_space<vmem>>, vector<1x1x16xf32>
    %497 = vector.shape_cast %496 : vector<1x1x16xf32> to vector<1x16xf32>
    %498 = vector.shape_cast %487 : vector<1x16xf32> to vector<1x1x16xf32>
    tpu.vector_store %arg11[%495, %c0_243, %c0_244], %498 {strides = array<i32>} : memref<8x1x16xf32, #tpu.memory_space<vmem>>, vector<1x1x16xf32>,
    %c7_i32_245 = arith.constant 7 : i32
    %499 = arith.subi %c7_i32_245, %c6_i32 : i32
    %500 = arith.index_cast %499 : i32 to index
    %c0_246 = arith.constant 0 : index
    %c0_247 = arith.constant 0 : index
    %501 = vector.load %arg12[%500, %c0_246, %c0_247] : memref<8x1x16xf32, #tpu.memory_space<vmem>>, vector<1x1x16xf32>
    %502 = vector.shape_cast %501 : vector<1x1x16xf32> to vector<1x16xf32>
    %503 = vector.shape_cast %490 : vector<1x16xf32> to vector<1x1x16xf32>
    tpu.vector_store %arg12[%500, %c0_246, %c0_247], %503 {strides = array<i32>} : memref<8x1x16xf32, #tpu.memory_space<vmem>>, vector<1x1x16xf32>,
    %c7_i32_248 = arith.constant 7 : i32
    %c0_249 = arith.constant 0 : index
    %c0_250 = arith.constant 0 : index
    %504 = vector.load %arg13[%c0_249, %c0_250] : memref<1x32xf32, #tpu.memory_space<vmem>>, vector<1x32xf32>
    %505 = arith.truncf %504 : vector<1x32xf32> to vector<1x32xbf16>
    %cst_251 = arith.constant dense<0.000000e+00> : vector<1x128xf32>
    %506 = tpu.matmul %505, %56, %cst_251 {dimension_numbers = #tpu.dot_dimension_numbers<[1], [0], [0], [1], [0, 0, 1, 1], [], []>} : vector<1x32xbf16>, vector<32x128xbf16>, vector<1x128xf32> -> vector<1x128xf32>
    %507 = vector.extract_strided_slice %506 {offsets = [0, 0], sizes = [1, 64], strides = [1, 1]} : vector<1x128xf32> to vector<1x64xf32>
    %508 = arith.index_cast %c7_i32_248 : i32 to index
    %c0_252 = arith.constant 0 : index
    %c0_253 = arith.constant 0 : index
    %509 = vector.load %arg10[%508, %c0_252, %c0_253] : memref<8x1x128xf32, #tpu.memory_space<vmem>>, vector<1x1x128xf32>
    %510 = vector.shape_cast %509 : vector<1x1x128xf32> to vector<1x128xf32>
    %511 = vector.extract_strided_slice %510 {offsets = [0, 0], sizes = [1, 64], strides = [1, 1]} : vector<1x128xf32> to vector<1x64xf32>
    %512 = arith.addf %507, %511 : vector<1x64xf32>
    %513 = vector.extract_strided_slice %506 {offsets = [0, 64], sizes = [1, 64], strides = [1, 1]} : vector<1x128xf32> to vector<1x64xf32>
    %c7_i32_254 = arith.constant 7 : i32
    %514 = arith.subi %c7_i32_254, %c7_i32_248 : i32
    %515 = arith.index_cast %514 : i32 to index
    %c0_255 = arith.constant 0 : index
    %c0_256 = arith.constant 0 : index
    %516 = vector.load %arg10[%515, %c0_255, %c0_256] : memref<8x1x128xf32, #tpu.memory_space<vmem>>, vector<1x1x128xf32>
    %517 = vector.shape_cast %516 : vector<1x1x128xf32> to vector<1x128xf32>
    %518 = vector.extract_strided_slice %517 {offsets = [0, 64], sizes = [1, 64], strides = [1, 1]} : vector<1x128xf32> to vector<1x64xf32>
    %519 = arith.addf %513, %518 : vector<1x64xf32>
    %520 = vector.extract_strided_slice %512 {offsets = [0, 0], sizes = [1, 48], strides = [1, 1]} : vector<1x64xf32> to vector<1x48xf32>
    %521 = arith.negf %520 : vector<1x48xf32>
    %522 = math.exp %521 : vector<1x48xf32>
    %cst_257 = arith.constant 1.000000e+00 : f32
    %523 = vector.broadcast %cst_257 : f32 to vector<1x48xf32>
    %524 = arith.addf %523, %522 : vector<1x48xf32>
    %525 = arith.divf %523, %524 : vector<1x48xf32>
    %526 = vector.extract_strided_slice %512 {offsets = [0, 48], sizes = [1, 16], strides = [1, 1]} : vector<1x64xf32> to vector<1x16xf32>
    %527 = math.tanh %526 : vector<1x16xf32>
    %528 = vector.extract_strided_slice %519 {offsets = [0, 0], sizes = [1, 48], strides = [1, 1]} : vector<1x64xf32> to vector<1x48xf32>
    %529 = arith.negf %528 : vector<1x48xf32>
    %530 = math.exp %529 : vector<1x48xf32>
    %cst_258 = arith.constant 1.000000e+00 : f32
    %531 = vector.broadcast %cst_258 : f32 to vector<1x48xf32>
    %532 = arith.addf %531, %530 : vector<1x48xf32>
    %533 = arith.divf %531, %532 : vector<1x48xf32>
    %534 = vector.extract_strided_slice %519 {offsets = [0, 48], sizes = [1, 16], strides = [1, 1]} : vector<1x64xf32> to vector<1x16xf32>
    %535 = math.tanh %534 : vector<1x16xf32>
    %536 = vector.extract_strided_slice %525 {offsets = [0, 16], sizes = [1, 16], strides = [1, 1]} : vector<1x48xf32> to vector<1x16xf32>
    %c0_259 = arith.constant 0 : index
    %c0_260 = arith.constant 0 : index
    %537 = vector.load %arg14[%c0_259, %c0_260] : memref<1x16xf32, #tpu.memory_space<vmem>>, vector<1x16xf32>
    %538 = arith.mulf %536, %537 : vector<1x16xf32>
    %539 = vector.extract_strided_slice %525 {offsets = [0, 0], sizes = [1, 16], strides = [1, 1]} : vector<1x48xf32> to vector<1x16xf32>
    %540 = arith.mulf %539, %527 : vector<1x16xf32>
    %541 = arith.addf %538, %540 : vector<1x16xf32>
    %542 = vector.extract_strided_slice %533 {offsets = [0, 16], sizes = [1, 16], strides = [1, 1]} : vector<1x48xf32> to vector<1x16xf32>
    %c0_261 = arith.constant 0 : index
    %c0_262 = arith.constant 0 : index
    %543 = vector.load %arg15[%c0_261, %c0_262] : memref<1x16xf32, #tpu.memory_space<vmem>>, vector<1x16xf32>
    %544 = arith.mulf %542, %543 : vector<1x16xf32>
    %545 = vector.extract_strided_slice %533 {offsets = [0, 0], sizes = [1, 16], strides = [1, 1]} : vector<1x48xf32> to vector<1x16xf32>
    %546 = arith.mulf %545, %535 : vector<1x16xf32>
    %547 = arith.addf %544, %546 : vector<1x16xf32>
    %548 = vector.extract_strided_slice %525 {offsets = [0, 32], sizes = [1, 16], strides = [1, 1]} : vector<1x48xf32> to vector<1x16xf32>
    %549 = math.tanh %541 : vector<1x16xf32>
    %550 = arith.mulf %548, %549 : vector<1x16xf32>
    %551 = vector.extract_strided_slice %533 {offsets = [0, 32], sizes = [1, 16], strides = [1, 1]} : vector<1x48xf32> to vector<1x16xf32>
    %552 = math.tanh %547 : vector<1x16xf32>
    %553 = arith.mulf %551, %552 : vector<1x16xf32>
    %c0_263 = arith.constant 0 : index
    %c0_264 = arith.constant 0 : index
    %554 = vector.load %arg14[%c0_263, %c0_264] : memref<1x16xf32, #tpu.memory_space<vmem>>, vector<1x16xf32>
    tpu.vector_store %arg14[%c0_263, %c0_264], %541 {strides = array<i32>} : memref<1x16xf32, #tpu.memory_space<vmem>>, vector<1x16xf32>,
    %c0_265 = arith.constant 0 : index
    %c0_266 = arith.constant 0 : index
    %555 = vector.load %arg15[%c0_265, %c0_266] : memref<1x16xf32, #tpu.memory_space<vmem>>, vector<1x16xf32>
    tpu.vector_store %arg15[%c0_265, %c0_266], %547 {strides = array<i32>} : memref<1x16xf32, #tpu.memory_space<vmem>>, vector<1x16xf32>,
    %c0_267 = arith.constant 0 : index
    %c0_268 = arith.constant 0 : index
    %556 = vector.load %arg13[%c0_267, %c0_268] : memref<1x32xf32, #tpu.memory_space<vmem>>, vector<1x16xf32>
    tpu.vector_store %arg13[%c0_267, %c0_268], %550 {strides = array<i32>} : memref<1x32xf32, #tpu.memory_space<vmem>>, vector<1x16xf32>,
    %c0_269 = arith.constant 0 : index
    %c16_270 = arith.constant 16 : index
    %557 = vector.load %arg13[%c0_269, %c16_270] : memref<1x32xf32, #tpu.memory_space<vmem>>, vector<1x16xf32>
    tpu.vector_store %arg13[%c0_269, %c16_270], %553 {strides = array<i32>} : memref<1x32xf32, #tpu.memory_space<vmem>>, vector<1x16xf32>,
    %558 = arith.index_cast %c7_i32_248 : i32 to index
    %c0_271 = arith.constant 0 : index
    %c0_272 = arith.constant 0 : index
    %559 = vector.load %arg11[%558, %c0_271, %c0_272] : memref<8x1x16xf32, #tpu.memory_space<vmem>>, vector<1x1x16xf32>
    %560 = vector.shape_cast %559 : vector<1x1x16xf32> to vector<1x16xf32>
    %561 = vector.shape_cast %550 : vector<1x16xf32> to vector<1x1x16xf32>
    tpu.vector_store %arg11[%558, %c0_271, %c0_272], %561 {strides = array<i32>} : memref<8x1x16xf32, #tpu.memory_space<vmem>>, vector<1x1x16xf32>,
    %c7_i32_273 = arith.constant 7 : i32
    %562 = arith.subi %c7_i32_273, %c7_i32_248 : i32
    %563 = arith.index_cast %562 : i32 to index
    %c0_274 = arith.constant 0 : index
    %c0_275 = arith.constant 0 : index
    %564 = vector.load %arg12[%563, %c0_274, %c0_275] : memref<8x1x16xf32, #tpu.memory_space<vmem>>, vector<1x1x16xf32>
    %565 = vector.shape_cast %564 : vector<1x1x16xf32> to vector<1x16xf32>
    %566 = vector.shape_cast %553 : vector<1x16xf32> to vector<1x1x16xf32>
    tpu.vector_store %arg12[%563, %c0_274, %c0_275], %566 {strides = array<i32>} : memref<8x1x16xf32, #tpu.memory_space<vmem>>, vector<1x1x16xf32>,
    %c8_i32 = arith.constant 8 : i32
    %c0_276 = arith.constant 0 : index
    %c0_277 = arith.constant 0 : index
    %567 = vector.load %arg5[%c0_276, %c0_277] : memref<32x128xbf16, #tpu.memory_space<vmem>>, vector<32x128xbf16>
    %c0_278 = arith.constant 0 : index
    %c0_279 = arith.constant 0 : index
    %c0_280 = arith.constant 0 : index
    %568 = vector.load %arg11[%c0_278, %c0_279, %c0_280] : memref<8x1x16xf32, #tpu.memory_space<vmem>>, vector<8x1x16xf32>
    %569 = arith.truncf %568 : vector<8x1x16xf32> to vector<8x1x16xbf16>
    %570 = vector.extract_strided_slice %567 {offsets = [0, 0], sizes = [16, 128], strides = [1, 1]} : vector<32x128xbf16> to vector<16x128xbf16>
    "tpu.trace_start"() <{level = 10 : i32, message = "tbh,hg->tbg"}> : () -> ()
    %cst_281 = arith.constant dense<0.000000e+00> : vector<8x1x128xf32>
    %571 = tpu.matmul %569, %570, %cst_281 {dimension_numbers = #tpu.dot_dimension_numbers<[2], [0], [0, 1], [1], [0, 0, 0, 1, 1, 1], [], []>} : vector<8x1x16xbf16>, vector<16x128xbf16>, vector<8x1x128xf32> -> vector<8x1x128xf32>
    "tpu.trace_stop"() : () -> ()
    %c0_282 = arith.constant 0 : index
    %c0_283 = arith.constant 0 : index
    %c0_284 = arith.constant 0 : index
    %572 = vector.load %arg12[%c0_282, %c0_283, %c0_284] : memref<8x1x16xf32, #tpu.memory_space<vmem>>, vector<8x1x16xf32>
    %573 = arith.truncf %572 : vector<8x1x16xf32> to vector<8x1x16xbf16>
    %574 = vector.extract_strided_slice %567 {offsets = [16, 0], sizes = [16, 128], strides = [1, 1]} : vector<32x128xbf16> to vector<16x128xbf16>
    "tpu.trace_start"() <{level = 10 : i32, message = "tbh,hg->tbg"}> : () -> ()
    %cst_285 = arith.constant dense<0.000000e+00> : vector<8x1x128xf32>
    %575 = tpu.matmul %573, %574, %cst_285 {dimension_numbers = #tpu.dot_dimension_numbers<[2], [0], [0, 1], [1], [0, 0, 0, 1, 1, 1], [], []>} : vector<8x1x16xbf16>, vector<16x128xbf16>, vector<8x1x128xf32> -> vector<8x1x128xf32>
    "tpu.trace_stop"() : () -> ()
    %576 = arith.addf %571, %575 : vector<8x1x128xf32>
    %c0_286 = arith.constant 0 : index
    %c0_287 = arith.constant 0 : index
    %577 = vector.load %arg7[%c0_286, %c0_287] : memref<1x128xf32, #tpu.memory_space<vmem>>, vector<1x128xf32>
    %578 = vector.shape_cast %577 : vector<1x128xf32> to vector<1x1x128xf32>
    %579 = vector.broadcast %578 : vector<1x1x128xf32> to vector<8x1x128xf32>
    %580 = arith.addf %576, %579 : vector<8x1x128xf32>
    %c0_288 = arith.constant 0 : index
    %c0_289 = arith.constant 0 : index
    %c0_290 = arith.constant 0 : index
    %581 = vector.load %arg10[%c0_288, %c0_289, %c0_290] : memref<8x1x128xf32, #tpu.memory_space<vmem>>, vector<8x1x128xf32>
    tpu.vector_store %arg10[%c0_288, %c0_289, %c0_290], %580 {strides = array<i32>} : memref<8x1x128xf32, #tpu.memory_space<vmem>>, vector<8x1x128xf32>,
    %c0_291 = arith.constant 0 : index
    %c0_292 = arith.constant 0 : index
    %582 = vector.load %arg6[%c0_291, %c0_292] : memref<32x128xbf16, #tpu.memory_space<vmem>>, vector<32x128xbf16>
    %cst_293 = arith.constant 0.000000e+00 : f32
    %583 = vector.broadcast %cst_293 : f32 to vector<1x32xf32>
    %c0_294 = arith.constant 0 : index
    %c0_295 = arith.constant 0 : index
    %584 = vector.load %arg13[%c0_294, %c0_295] : memref<1x32xf32, #tpu.memory_space<vmem>>, vector<1x32xf32>
    tpu.vector_store %arg13[%c0_294, %c0_295], %583 {strides = array<i32>} : memref<1x32xf32, #tpu.memory_space<vmem>>, vector<1x32xf32>,
    %cst_296 = arith.constant 0.000000e+00 : f32
    %585 = vector.broadcast %cst_296 : f32 to vector<1x16xf32>
    %c0_297 = arith.constant 0 : index
    %c0_298 = arith.constant 0 : index
    %586 = vector.load %arg14[%c0_297, %c0_298] : memref<1x16xf32, #tpu.memory_space<vmem>>, vector<1x16xf32>
    tpu.vector_store %arg14[%c0_297, %c0_298], %585 {strides = array<i32>} : memref<1x16xf32, #tpu.memory_space<vmem>>, vector<1x16xf32>,
    %cst_299 = arith.constant 0.000000e+00 : f32
    %587 = vector.broadcast %cst_299 : f32 to vector<1x16xf32>
    %c0_300 = arith.constant 0 : index
    %c0_301 = arith.constant 0 : index
    %588 = vector.load %arg15[%c0_300, %c0_301] : memref<1x16xf32, #tpu.memory_space<vmem>>, vector<1x16xf32>
    tpu.vector_store %arg15[%c0_300, %c0_301], %587 {strides = array<i32>} : memref<1x16xf32, #tpu.memory_space<vmem>>, vector<1x16xf32>,
    %c0_i32_302 = arith.constant 0 : i32
    %c0_303 = arith.constant 0 : index
    %c0_304 = arith.constant 0 : index
    %589 = vector.load %arg13[%c0_303, %c0_304] : memref<1x32xf32, #tpu.memory_space<vmem>>, vector<1x32xf32>
    %590 = arith.truncf %589 : vector<1x32xf32> to vector<1x32xbf16>
    %cst_305 = arith.constant dense<0.000000e+00> : vector<1x128xf32>
    %591 = tpu.matmul %590, %582, %cst_305 {dimension_numbers = #tpu.dot_dimension_numbers<[1], [0], [0], [1], [0, 0, 1, 1], [], []>} : vector<1x32xbf16>, vector<32x128xbf16>, vector<1x128xf32> -> vector<1x128xf32>
    %592 = vector.extract_strided_slice %591 {offsets = [0, 0], sizes = [1, 64], strides = [1, 1]} : vector<1x128xf32> to vector<1x64xf32>
    %593 = arith.index_cast %c0_i32_302 : i32 to index
    %c0_306 = arith.constant 0 : index
    %c0_307 = arith.constant 0 : index
    %594 = vector.load %arg10[%593, %c0_306, %c0_307] : memref<8x1x128xf32, #tpu.memory_space<vmem>>, vector<1x1x128xf32>
    %595 = vector.shape_cast %594 : vector<1x1x128xf32> to vector<1x128xf32>
    %596 = vector.extract_strided_slice %595 {offsets = [0, 0], sizes = [1, 64], strides = [1, 1]} : vector<1x128xf32> to vector<1x64xf32>
    %597 = arith.addf %592, %596 : vector<1x64xf32>
    %598 = vector.extract_strided_slice %591 {offsets = [0, 64], sizes = [1, 64], strides = [1, 1]} : vector<1x128xf32> to vector<1x64xf32>
    %c7_i32_308 = arith.constant 7 : i32
    %599 = arith.subi %c7_i32_308, %c0_i32_302 : i32
    %600 = arith.index_cast %599 : i32 to index
    %c0_309 = arith.constant 0 : index
    %c0_310 = arith.constant 0 : index
    %601 = vector.load %arg10[%600, %c0_309, %c0_310] : memref<8x1x128xf32, #tpu.memory_space<vmem>>, vector<1x1x128xf32>
    %602 = vector.shape_cast %601 : vector<1x1x128xf32> to vector<1x128xf32>
    %603 = vector.extract_strided_slice %602 {offsets = [0, 64], sizes = [1, 64], strides = [1, 1]} : vector<1x128xf32> to vector<1x64xf32>
    %604 = arith.addf %598, %603 : vector<1x64xf32>
    %605 = vector.extract_strided_slice %597 {offsets = [0, 0], sizes = [1, 48], strides = [1, 1]} : vector<1x64xf32> to vector<1x48xf32>
    %606 = arith.negf %605 : vector<1x48xf32>
    %607 = math.exp %606 : vector<1x48xf32>
    %cst_311 = arith.constant 1.000000e+00 : f32
    %608 = vector.broadcast %cst_311 : f32 to vector<1x48xf32>
    %609 = arith.addf %608, %607 : vector<1x48xf32>
    %610 = arith.divf %608, %609 : vector<1x48xf32>
    %611 = vector.extract_strided_slice %597 {offsets = [0, 48], sizes = [1, 16], strides = [1, 1]} : vector<1x64xf32> to vector<1x16xf32>
    %612 = math.tanh %611 : vector<1x16xf32>
    %613 = vector.extract_strided_slice %604 {offsets = [0, 0], sizes = [1, 48], strides = [1, 1]} : vector<1x64xf32> to vector<1x48xf32>
    %614 = arith.negf %613 : vector<1x48xf32>
    %615 = math.exp %614 : vector<1x48xf32>
    %cst_312 = arith.constant 1.000000e+00 : f32
    %616 = vector.broadcast %cst_312 : f32 to vector<1x48xf32>
    %617 = arith.addf %616, %615 : vector<1x48xf32>
    %618 = arith.divf %616, %617 : vector<1x48xf32>
    %619 = vector.extract_strided_slice %604 {offsets = [0, 48], sizes = [1, 16], strides = [1, 1]} : vector<1x64xf32> to vector<1x16xf32>
    %620 = math.tanh %619 : vector<1x16xf32>
    %621 = vector.extract_strided_slice %610 {offsets = [0, 16], sizes = [1, 16], strides = [1, 1]} : vector<1x48xf32> to vector<1x16xf32>
    %c0_313 = arith.constant 0 : index
    %c0_314 = arith.constant 0 : index
    %622 = vector.load %arg14[%c0_313, %c0_314] : memref<1x16xf32, #tpu.memory_space<vmem>>, vector<1x16xf32>
    %623 = arith.mulf %621, %622 : vector<1x16xf32>
    %624 = vector.extract_strided_slice %610 {offsets = [0, 0], sizes = [1, 16], strides = [1, 1]} : vector<1x48xf32> to vector<1x16xf32>
    %625 = arith.mulf %624, %612 : vector<1x16xf32>
    %626 = arith.addf %623, %625 : vector<1x16xf32>
    %627 = vector.extract_strided_slice %618 {offsets = [0, 16], sizes = [1, 16], strides = [1, 1]} : vector<1x48xf32> to vector<1x16xf32>
    %c0_315 = arith.constant 0 : index
    %c0_316 = arith.constant 0 : index
    %628 = vector.load %arg15[%c0_315, %c0_316] : memref<1x16xf32, #tpu.memory_space<vmem>>, vector<1x16xf32>
    %629 = arith.mulf %627, %628 : vector<1x16xf32>
    %630 = vector.extract_strided_slice %618 {offsets = [0, 0], sizes = [1, 16], strides = [1, 1]} : vector<1x48xf32> to vector<1x16xf32>
    %631 = arith.mulf %630, %620 : vector<1x16xf32>
    %632 = arith.addf %629, %631 : vector<1x16xf32>
    %633 = vector.extract_strided_slice %610 {offsets = [0, 32], sizes = [1, 16], strides = [1, 1]} : vector<1x48xf32> to vector<1x16xf32>
    %634 = math.tanh %626 : vector<1x16xf32>
    %635 = arith.mulf %633, %634 : vector<1x16xf32>
    %636 = vector.extract_strided_slice %618 {offsets = [0, 32], sizes = [1, 16], strides = [1, 1]} : vector<1x48xf32> to vector<1x16xf32>
    %637 = math.tanh %632 : vector<1x16xf32>
    %638 = arith.mulf %636, %637 : vector<1x16xf32>
    %c0_317 = arith.constant 0 : index
    %c0_318 = arith.constant 0 : index
    %639 = vector.load %arg14[%c0_317, %c0_318] : memref<1x16xf32, #tpu.memory_space<vmem>>, vector<1x16xf32>
    tpu.vector_store %arg14[%c0_317, %c0_318], %626 {strides = array<i32>} : memref<1x16xf32, #tpu.memory_space<vmem>>, vector<1x16xf32>,
    %c0_319 = arith.constant 0 : index
    %c0_320 = arith.constant 0 : index
    %640 = vector.load %arg15[%c0_319, %c0_320] : memref<1x16xf32, #tpu.memory_space<vmem>>, vector<1x16xf32>
    tpu.vector_store %arg15[%c0_319, %c0_320], %632 {strides = array<i32>} : memref<1x16xf32, #tpu.memory_space<vmem>>, vector<1x16xf32>,
    %c0_321 = arith.constant 0 : index
    %c0_322 = arith.constant 0 : index
    %641 = vector.load %arg13[%c0_321, %c0_322] : memref<1x32xf32, #tpu.memory_space<vmem>>, vector<1x16xf32>
    tpu.vector_store %arg13[%c0_321, %c0_322], %635 {strides = array<i32>} : memref<1x32xf32, #tpu.memory_space<vmem>>, vector<1x16xf32>,
    %c0_323 = arith.constant 0 : index
    %c16_324 = arith.constant 16 : index
    %642 = vector.load %arg13[%c0_323, %c16_324] : memref<1x32xf32, #tpu.memory_space<vmem>>, vector<1x16xf32>
    tpu.vector_store %arg13[%c0_323, %c16_324], %638 {strides = array<i32>} : memref<1x32xf32, #tpu.memory_space<vmem>>, vector<1x16xf32>,
    %643 = arith.index_cast %c0_i32_302 : i32 to index
    %c0_325 = arith.constant 0 : index
    %c0_326 = arith.constant 0 : index
    %644 = vector.load %arg11[%643, %c0_325, %c0_326] : memref<8x1x16xf32, #tpu.memory_space<vmem>>, vector<1x1x16xf32>
    %645 = vector.shape_cast %644 : vector<1x1x16xf32> to vector<1x16xf32>
    %646 = vector.shape_cast %635 : vector<1x16xf32> to vector<1x1x16xf32>
    tpu.vector_store %arg11[%643, %c0_325, %c0_326], %646 {strides = array<i32>} : memref<8x1x16xf32, #tpu.memory_space<vmem>>, vector<1x1x16xf32>,
    %c7_i32_327 = arith.constant 7 : i32
    %647 = arith.subi %c7_i32_327, %c0_i32_302 : i32
    %648 = arith.index_cast %647 : i32 to index
    %c0_328 = arith.constant 0 : index
    %c0_329 = arith.constant 0 : index
    %649 = vector.load %arg12[%648, %c0_328, %c0_329] : memref<8x1x16xf32, #tpu.memory_space<vmem>>, vector<1x1x16xf32>
    %650 = vector.shape_cast %649 : vector<1x1x16xf32> to vector<1x16xf32>
    %651 = vector.shape_cast %638 : vector<1x16xf32> to vector<1x1x16xf32>
    tpu.vector_store %arg12[%648, %c0_328, %c0_329], %651 {strides = array<i32>} : memref<8x1x16xf32, #tpu.memory_space<vmem>>, vector<1x1x16xf32>,
    %c1_i32_330 = arith.constant 1 : i32
    %c0_331 = arith.constant 0 : index
    %c0_332 = arith.constant 0 : index
    %652 = vector.load %arg13[%c0_331, %c0_332] : memref<1x32xf32, #tpu.memory_space<vmem>>, vector<1x32xf32>
    %653 = arith.truncf %652 : vector<1x32xf32> to vector<1x32xbf16>
    %cst_333 = arith.constant dense<0.000000e+00> : vector<1x128xf32>
    %654 = tpu.matmul %653, %582, %cst_333 {dimension_numbers = #tpu.dot_dimension_numbers<[1], [0], [0], [1], [0, 0, 1, 1], [], []>} : vector<1x32xbf16>, vector<32x128xbf16>, vector<1x128xf32> -> vector<1x128xf32>
    %655 = vector.extract_strided_slice %654 {offsets = [0, 0], sizes = [1, 64], strides = [1, 1]} : vector<1x128xf32> to vector<1x64xf32>
    %656 = arith.index_cast %c1_i32_330 : i32 to index
    %c0_334 = arith.constant 0 : index
    %c0_335 = arith.constant 0 : index
    %657 = vector.load %arg10[%656, %c0_334, %c0_335] : memref<8x1x128xf32, #tpu.memory_space<vmem>>, vector<1x1x128xf32>
    %658 = vector.shape_cast %657 : vector<1x1x128xf32> to vector<1x128xf32>
    %659 = vector.extract_strided_slice %658 {offsets = [0, 0], sizes = [1, 64], strides = [1, 1]} : vector<1x128xf32> to vector<1x64xf32>
    %660 = arith.addf %655, %659 : vector<1x64xf32>
    %661 = vector.extract_strided_slice %654 {offsets = [0, 64], sizes = [1, 64], strides = [1, 1]} : vector<1x128xf32> to vector<1x64xf32>
    %c7_i32_336 = arith.constant 7 : i32
    %662 = arith.subi %c7_i32_336, %c1_i32_330 : i32
    %663 = arith.index_cast %662 : i32 to index
    %c0_337 = arith.constant 0 : index
    %c0_338 = arith.constant 0 : index
    %664 = vector.load %arg10[%663, %c0_337, %c0_338] : memref<8x1x128xf32, #tpu.memory_space<vmem>>, vector<1x1x128xf32>
    %665 = vector.shape_cast %664 : vector<1x1x128xf32> to vector<1x128xf32>
    %666 = vector.extract_strided_slice %665 {offsets = [0, 64], sizes = [1, 64], strides = [1, 1]} : vector<1x128xf32> to vector<1x64xf32>
    %667 = arith.addf %661, %666 : vector<1x64xf32>
    %668 = vector.extract_strided_slice %660 {offsets = [0, 0], sizes = [1, 48], strides = [1, 1]} : vector<1x64xf32> to vector<1x48xf32>
    %669 = arith.negf %668 : vector<1x48xf32>
    %670 = math.exp %669 : vector<1x48xf32>
    %cst_339 = arith.constant 1.000000e+00 : f32
    %671 = vector.broadcast %cst_339 : f32 to vector<1x48xf32>
    %672 = arith.addf %671, %670 : vector<1x48xf32>
    %673 = arith.divf %671, %672 : vector<1x48xf32>
    %674 = vector.extract_strided_slice %660 {offsets = [0, 48], sizes = [1, 16], strides = [1, 1]} : vector<1x64xf32> to vector<1x16xf32>
    %675 = math.tanh %674 : vector<1x16xf32>
    %676 = vector.extract_strided_slice %667 {offsets = [0, 0], sizes = [1, 48], strides = [1, 1]} : vector<1x64xf32> to vector<1x48xf32>
    %677 = arith.negf %676 : vector<1x48xf32>
    %678 = math.exp %677 : vector<1x48xf32>
    %cst_340 = arith.constant 1.000000e+00 : f32
    %679 = vector.broadcast %cst_340 : f32 to vector<1x48xf32>
    %680 = arith.addf %679, %678 : vector<1x48xf32>
    %681 = arith.divf %679, %680 : vector<1x48xf32>
    %682 = vector.extract_strided_slice %667 {offsets = [0, 48], sizes = [1, 16], strides = [1, 1]} : vector<1x64xf32> to vector<1x16xf32>
    %683 = math.tanh %682 : vector<1x16xf32>
    %684 = vector.extract_strided_slice %673 {offsets = [0, 16], sizes = [1, 16], strides = [1, 1]} : vector<1x48xf32> to vector<1x16xf32>
    %c0_341 = arith.constant 0 : index
    %c0_342 = arith.constant 0 : index
    %685 = vector.load %arg14[%c0_341, %c0_342] : memref<1x16xf32, #tpu.memory_space<vmem>>, vector<1x16xf32>
    %686 = arith.mulf %684, %685 : vector<1x16xf32>
    %687 = vector.extract_strided_slice %673 {offsets = [0, 0], sizes = [1, 16], strides = [1, 1]} : vector<1x48xf32> to vector<1x16xf32>
    %688 = arith.mulf %687, %675 : vector<1x16xf32>
    %689 = arith.addf %686, %688 : vector<1x16xf32>
    %690 = vector.extract_strided_slice %681 {offsets = [0, 16], sizes = [1, 16], strides = [1, 1]} : vector<1x48xf32> to vector<1x16xf32>
    %c0_343 = arith.constant 0 : index
    %c0_344 = arith.constant 0 : index
    %691 = vector.load %arg15[%c0_343, %c0_344] : memref<1x16xf32, #tpu.memory_space<vmem>>, vector<1x16xf32>
    %692 = arith.mulf %690, %691 : vector<1x16xf32>
    %693 = vector.extract_strided_slice %681 {offsets = [0, 0], sizes = [1, 16], strides = [1, 1]} : vector<1x48xf32> to vector<1x16xf32>
    %694 = arith.mulf %693, %683 : vector<1x16xf32>
    %695 = arith.addf %692, %694 : vector<1x16xf32>
    %696 = vector.extract_strided_slice %673 {offsets = [0, 32], sizes = [1, 16], strides = [1, 1]} : vector<1x48xf32> to vector<1x16xf32>
    %697 = math.tanh %689 : vector<1x16xf32>
    %698 = arith.mulf %696, %697 : vector<1x16xf32>
    %699 = vector.extract_strided_slice %681 {offsets = [0, 32], sizes = [1, 16], strides = [1, 1]} : vector<1x48xf32> to vector<1x16xf32>
    %700 = math.tanh %695 : vector<1x16xf32>
    %701 = arith.mulf %699, %700 : vector<1x16xf32>
    %c0_345 = arith.constant 0 : index
    %c0_346 = arith.constant 0 : index
    %702 = vector.load %arg14[%c0_345, %c0_346] : memref<1x16xf32, #tpu.memory_space<vmem>>, vector<1x16xf32>
    tpu.vector_store %arg14[%c0_345, %c0_346], %689 {strides = array<i32>} : memref<1x16xf32, #tpu.memory_space<vmem>>, vector<1x16xf32>,
    %c0_347 = arith.constant 0 : index
    %c0_348 = arith.constant 0 : index
    %703 = vector.load %arg15[%c0_347, %c0_348] : memref<1x16xf32, #tpu.memory_space<vmem>>, vector<1x16xf32>
    tpu.vector_store %arg15[%c0_347, %c0_348], %695 {strides = array<i32>} : memref<1x16xf32, #tpu.memory_space<vmem>>, vector<1x16xf32>,
    %c0_349 = arith.constant 0 : index
    %c0_350 = arith.constant 0 : index
    %704 = vector.load %arg13[%c0_349, %c0_350] : memref<1x32xf32, #tpu.memory_space<vmem>>, vector<1x16xf32>
    tpu.vector_store %arg13[%c0_349, %c0_350], %698 {strides = array<i32>} : memref<1x32xf32, #tpu.memory_space<vmem>>, vector<1x16xf32>,
    %c0_351 = arith.constant 0 : index
    %c16_352 = arith.constant 16 : index
    %705 = vector.load %arg13[%c0_351, %c16_352] : memref<1x32xf32, #tpu.memory_space<vmem>>, vector<1x16xf32>
    tpu.vector_store %arg13[%c0_351, %c16_352], %701 {strides = array<i32>} : memref<1x32xf32, #tpu.memory_space<vmem>>, vector<1x16xf32>,
    %706 = arith.index_cast %c1_i32_330 : i32 to index
    %c0_353 = arith.constant 0 : index
    %c0_354 = arith.constant 0 : index
    %707 = vector.load %arg11[%706, %c0_353, %c0_354] : memref<8x1x16xf32, #tpu.memory_space<vmem>>, vector<1x1x16xf32>
    %708 = vector.shape_cast %707 : vector<1x1x16xf32> to vector<1x16xf32>
    %709 = vector.shape_cast %698 : vector<1x16xf32> to vector<1x1x16xf32>
    tpu.vector_store %arg11[%706, %c0_353, %c0_354], %709 {strides = array<i32>} : memref<8x1x16xf32, #tpu.memory_space<vmem>>, vector<1x1x16xf32>,
    %c7_i32_355 = arith.constant 7 : i32
    %710 = arith.subi %c7_i32_355, %c1_i32_330 : i32
    %711 = arith.index_cast %710 : i32 to index
    %c0_356 = arith.constant 0 : index
    %c0_357 = arith.constant 0 : index
    %712 = vector.load %arg12[%711, %c0_356, %c0_357] : memref<8x1x16xf32, #tpu.memory_space<vmem>>, vector<1x1x16xf32>
    %713 = vector.shape_cast %712 : vector<1x1x16xf32> to vector<1x16xf32>
    %714 = vector.shape_cast %701 : vector<1x16xf32> to vector<1x1x16xf32>
    tpu.vector_store %arg12[%711, %c0_356, %c0_357], %714 {strides = array<i32>} : memref<8x1x16xf32, #tpu.memory_space<vmem>>, vector<1x1x16xf32>,
    %c2_i32_358 = arith.constant 2 : i32
    %c0_359 = arith.constant 0 : index
    %c0_360 = arith.constant 0 : index
    %715 = vector.load %arg13[%c0_359, %c0_360] : memref<1x32xf32, #tpu.memory_space<vmem>>, vector<1x32xf32>
    %716 = arith.truncf %715 : vector<1x32xf32> to vector<1x32xbf16>
    %cst_361 = arith.constant dense<0.000000e+00> : vector<1x128xf32>
    %717 = tpu.matmul %716, %582, %cst_361 {dimension_numbers = #tpu.dot_dimension_numbers<[1], [0], [0], [1], [0, 0, 1, 1], [], []>} : vector<1x32xbf16>, vector<32x128xbf16>, vector<1x128xf32> -> vector<1x128xf32>
    %718 = vector.extract_strided_slice %717 {offsets = [0, 0], sizes = [1, 64], strides = [1, 1]} : vector<1x128xf32> to vector<1x64xf32>
    %719 = arith.index_cast %c2_i32_358 : i32 to index
    %c0_362 = arith.constant 0 : index
    %c0_363 = arith.constant 0 : index
    %720 = vector.load %arg10[%719, %c0_362, %c0_363] : memref<8x1x128xf32, #tpu.memory_space<vmem>>, vector<1x1x128xf32>
    %721 = vector.shape_cast %720 : vector<1x1x128xf32> to vector<1x128xf32>
    %722 = vector.extract_strided_slice %721 {offsets = [0, 0], sizes = [1, 64], strides = [1, 1]} : vector<1x128xf32> to vector<1x64xf32>
    %723 = arith.addf %718, %722 : vector<1x64xf32>
    %724 = vector.extract_strided_slice %717 {offsets = [0, 64], sizes = [1, 64], strides = [1, 1]} : vector<1x128xf32> to vector<1x64xf32>
    %c7_i32_364 = arith.constant 7 : i32
    %725 = arith.subi %c7_i32_364, %c2_i32_358 : i32
    %726 = arith.index_cast %725 : i32 to index
    %c0_365 = arith.constant 0 : index
    %c0_366 = arith.constant 0 : index
    %727 = vector.load %arg10[%726, %c0_365, %c0_366] : memref<8x1x128xf32, #tpu.memory_space<vmem>>, vector<1x1x128xf32>
    %728 = vector.shape_cast %727 : vector<1x1x128xf32> to vector<1x128xf32>
    %729 = vector.extract_strided_slice %728 {offsets = [0, 64], sizes = [1, 64], strides = [1, 1]} : vector<1x128xf32> to vector<1x64xf32>
    %730 = arith.addf %724, %729 : vector<1x64xf32>
    %731 = vector.extract_strided_slice %723 {offsets = [0, 0], sizes = [1, 48], strides = [1, 1]} : vector<1x64xf32> to vector<1x48xf32>
    %732 = arith.negf %731 : vector<1x48xf32>
    %733 = math.exp %732 : vector<1x48xf32>
    %cst_367 = arith.constant 1.000000e+00 : f32
    %734 = vector.broadcast %cst_367 : f32 to vector<1x48xf32>
    %735 = arith.addf %734, %733 : vector<1x48xf32>
    %736 = arith.divf %734, %735 : vector<1x48xf32>
    %737 = vector.extract_strided_slice %723 {offsets = [0, 48], sizes = [1, 16], strides = [1, 1]} : vector<1x64xf32> to vector<1x16xf32>
    %738 = math.tanh %737 : vector<1x16xf32>
    %739 = vector.extract_strided_slice %730 {offsets = [0, 0], sizes = [1, 48], strides = [1, 1]} : vector<1x64xf32> to vector<1x48xf32>
    %740 = arith.negf %739 : vector<1x48xf32>
    %741 = math.exp %740 : vector<1x48xf32>
    %cst_368 = arith.constant 1.000000e+00 : f32
    %742 = vector.broadcast %cst_368 : f32 to vector<1x48xf32>
    %743 = arith.addf %742, %741 : vector<1x48xf32>
    %744 = arith.divf %742, %743 : vector<1x48xf32>
    %745 = vector.extract_strided_slice %730 {offsets = [0, 48], sizes = [1, 16], strides = [1, 1]} : vector<1x64xf32> to vector<1x16xf32>
    %746 = math.tanh %745 : vector<1x16xf32>
    %747 = vector.extract_strided_slice %736 {offsets = [0, 16], sizes = [1, 16], strides = [1, 1]} : vector<1x48xf32> to vector<1x16xf32>
    %c0_369 = arith.constant 0 : index
    %c0_370 = arith.constant 0 : index
    %748 = vector.load %arg14[%c0_369, %c0_370] : memref<1x16xf32, #tpu.memory_space<vmem>>, vector<1x16xf32>
    %749 = arith.mulf %747, %748 : vector<1x16xf32>
    %750 = vector.extract_strided_slice %736 {offsets = [0, 0], sizes = [1, 16], strides = [1, 1]} : vector<1x48xf32> to vector<1x16xf32>
    %751 = arith.mulf %750, %738 : vector<1x16xf32>
    %752 = arith.addf %749, %751 : vector<1x16xf32>
    %753 = vector.extract_strided_slice %744 {offsets = [0, 16], sizes = [1, 16], strides = [1, 1]} : vector<1x48xf32> to vector<1x16xf32>
    %c0_371 = arith.constant 0 : index
    %c0_372 = arith.constant 0 : index
    %754 = vector.load %arg15[%c0_371, %c0_372] : memref<1x16xf32, #tpu.memory_space<vmem>>, vector<1x16xf32>
    %755 = arith.mulf %753, %754 : vector<1x16xf32>
    %756 = vector.extract_strided_slice %744 {offsets = [0, 0], sizes = [1, 16], strides = [1, 1]} : vector<1x48xf32> to vector<1x16xf32>
    %757 = arith.mulf %756, %746 : vector<1x16xf32>
    %758 = arith.addf %755, %757 : vector<1x16xf32>
    %759 = vector.extract_strided_slice %736 {offsets = [0, 32], sizes = [1, 16], strides = [1, 1]} : vector<1x48xf32> to vector<1x16xf32>
    %760 = math.tanh %752 : vector<1x16xf32>
    %761 = arith.mulf %759, %760 : vector<1x16xf32>
    %762 = vector.extract_strided_slice %744 {offsets = [0, 32], sizes = [1, 16], strides = [1, 1]} : vector<1x48xf32> to vector<1x16xf32>
    %763 = math.tanh %758 : vector<1x16xf32>
    %764 = arith.mulf %762, %763 : vector<1x16xf32>
    %c0_373 = arith.constant 0 : index
    %c0_374 = arith.constant 0 : index
    %765 = vector.load %arg14[%c0_373, %c0_374] : memref<1x16xf32, #tpu.memory_space<vmem>>, vector<1x16xf32>
    tpu.vector_store %arg14[%c0_373, %c0_374], %752 {strides = array<i32>} : memref<1x16xf32, #tpu.memory_space<vmem>>, vector<1x16xf32>,
    %c0_375 = arith.constant 0 : index
    %c0_376 = arith.constant 0 : index
    %766 = vector.load %arg15[%c0_375, %c0_376] : memref<1x16xf32, #tpu.memory_space<vmem>>, vector<1x16xf32>
    tpu.vector_store %arg15[%c0_375, %c0_376], %758 {strides = array<i32>} : memref<1x16xf32, #tpu.memory_space<vmem>>, vector<1x16xf32>,
    %c0_377 = arith.constant 0 : index
    %c0_378 = arith.constant 0 : index
    %767 = vector.load %arg13[%c0_377, %c0_378] : memref<1x32xf32, #tpu.memory_space<vmem>>, vector<1x16xf32>
    tpu.vector_store %arg13[%c0_377, %c0_378], %761 {strides = array<i32>} : memref<1x32xf32, #tpu.memory_space<vmem>>, vector<1x16xf32>,
    %c0_379 = arith.constant 0 : index
    %c16_380 = arith.constant 16 : index
    %768 = vector.load %arg13[%c0_379, %c16_380] : memref<1x32xf32, #tpu.memory_space<vmem>>, vector<1x16xf32>
    tpu.vector_store %arg13[%c0_379, %c16_380], %764 {strides = array<i32>} : memref<1x32xf32, #tpu.memory_space<vmem>>, vector<1x16xf32>,
    %769 = arith.index_cast %c2_i32_358 : i32 to index
    %c0_381 = arith.constant 0 : index
    %c0_382 = arith.constant 0 : index
    %770 = vector.load %arg11[%769, %c0_381, %c0_382] : memref<8x1x16xf32, #tpu.memory_space<vmem>>, vector<1x1x16xf32>
    %771 = vector.shape_cast %770 : vector<1x1x16xf32> to vector<1x16xf32>
    %772 = vector.shape_cast %761 : vector<1x16xf32> to vector<1x1x16xf32>
    tpu.vector_store %arg11[%769, %c0_381, %c0_382], %772 {strides = array<i32>} : memref<8x1x16xf32, #tpu.memory_space<vmem>>, vector<1x1x16xf32>,
    %c7_i32_383 = arith.constant 7 : i32
    %773 = arith.subi %c7_i32_383, %c2_i32_358 : i32
    %774 = arith.index_cast %773 : i32 to index
    %c0_384 = arith.constant 0 : index
    %c0_385 = arith.constant 0 : index
    %775 = vector.load %arg12[%774, %c0_384, %c0_385] : memref<8x1x16xf32, #tpu.memory_space<vmem>>, vector<1x1x16xf32>
    %776 = vector.shape_cast %775 : vector<1x1x16xf32> to vector<1x16xf32>
    %777 = vector.shape_cast %764 : vector<1x16xf32> to vector<1x1x16xf32>
    tpu.vector_store %arg12[%774, %c0_384, %c0_385], %777 {strides = array<i32>} : memref<8x1x16xf32, #tpu.memory_space<vmem>>, vector<1x1x16xf32>,
    %c3_i32_386 = arith.constant 3 : i32
    %c0_387 = arith.constant 0 : index
    %c0_388 = arith.constant 0 : index
    %778 = vector.load %arg13[%c0_387, %c0_388] : memref<1x32xf32, #tpu.memory_space<vmem>>, vector<1x32xf32>
    %779 = arith.truncf %778 : vector<1x32xf32> to vector<1x32xbf16>
    %cst_389 = arith.constant dense<0.000000e+00> : vector<1x128xf32>
    %780 = tpu.matmul %779, %582, %cst_389 {dimension_numbers = #tpu.dot_dimension_numbers<[1], [0], [0], [1], [0, 0, 1, 1], [], []>} : vector<1x32xbf16>, vector<32x128xbf16>, vector<1x128xf32> -> vector<1x128xf32>
    %781 = vector.extract_strided_slice %780 {offsets = [0, 0], sizes = [1, 64], strides = [1, 1]} : vector<1x128xf32> to vector<1x64xf32>
    %782 = arith.index_cast %c3_i32_386 : i32 to index
    %c0_390 = arith.constant 0 : index
    %c0_391 = arith.constant 0 : index
    %783 = vector.load %arg10[%782, %c0_390, %c0_391] : memref<8x1x128xf32, #tpu.memory_space<vmem>>, vector<1x1x128xf32>
    %784 = vector.shape_cast %783 : vector<1x1x128xf32> to vector<1x128xf32>
    %785 = vector.extract_strided_slice %784 {offsets = [0, 0], sizes = [1, 64], strides = [1, 1]} : vector<1x128xf32> to vector<1x64xf32>
    %786 = arith.addf %781, %785 : vector<1x64xf32>
    %787 = vector.extract_strided_slice %780 {offsets = [0, 64], sizes = [1, 64], strides = [1, 1]} : vector<1x128xf32> to vector<1x64xf32>
    %c7_i32_392 = arith.constant 7 : i32
    %788 = arith.subi %c7_i32_392, %c3_i32_386 : i32
    %789 = arith.index_cast %788 : i32 to index
    %c0_393 = arith.constant 0 : index
    %c0_394 = arith.constant 0 : index
    %790 = vector.load %arg10[%789, %c0_393, %c0_394] : memref<8x1x128xf32, #tpu.memory_space<vmem>>, vector<1x1x128xf32>
    %791 = vector.shape_cast %790 : vector<1x1x128xf32> to vector<1x128xf32>
    %792 = vector.extract_strided_slice %791 {offsets = [0, 64], sizes = [1, 64], strides = [1, 1]} : vector<1x128xf32> to vector<1x64xf32>
    %793 = arith.addf %787, %792 : vector<1x64xf32>
    %794 = vector.extract_strided_slice %786 {offsets = [0, 0], sizes = [1, 48], strides = [1, 1]} : vector<1x64xf32> to vector<1x48xf32>
    %795 = arith.negf %794 : vector<1x48xf32>
    %796 = math.exp %795 : vector<1x48xf32>
    %cst_395 = arith.constant 1.000000e+00 : f32
    %797 = vector.broadcast %cst_395 : f32 to vector<1x48xf32>
    %798 = arith.addf %797, %796 : vector<1x48xf32>
    %799 = arith.divf %797, %798 : vector<1x48xf32>
    %800 = vector.extract_strided_slice %786 {offsets = [0, 48], sizes = [1, 16], strides = [1, 1]} : vector<1x64xf32> to vector<1x16xf32>
    %801 = math.tanh %800 : vector<1x16xf32>
    %802 = vector.extract_strided_slice %793 {offsets = [0, 0], sizes = [1, 48], strides = [1, 1]} : vector<1x64xf32> to vector<1x48xf32>
    %803 = arith.negf %802 : vector<1x48xf32>
    %804 = math.exp %803 : vector<1x48xf32>
    %cst_396 = arith.constant 1.000000e+00 : f32
    %805 = vector.broadcast %cst_396 : f32 to vector<1x48xf32>
    %806 = arith.addf %805, %804 : vector<1x48xf32>
    %807 = arith.divf %805, %806 : vector<1x48xf32>
    %808 = vector.extract_strided_slice %793 {offsets = [0, 48], sizes = [1, 16], strides = [1, 1]} : vector<1x64xf32> to vector<1x16xf32>
    %809 = math.tanh %808 : vector<1x16xf32>
    %810 = vector.extract_strided_slice %799 {offsets = [0, 16], sizes = [1, 16], strides = [1, 1]} : vector<1x48xf32> to vector<1x16xf32>
    %c0_397 = arith.constant 0 : index
    %c0_398 = arith.constant 0 : index
    %811 = vector.load %arg14[%c0_397, %c0_398] : memref<1x16xf32, #tpu.memory_space<vmem>>, vector<1x16xf32>
    %812 = arith.mulf %810, %811 : vector<1x16xf32>
    %813 = vector.extract_strided_slice %799 {offsets = [0, 0], sizes = [1, 16], strides = [1, 1]} : vector<1x48xf32> to vector<1x16xf32>
    %814 = arith.mulf %813, %801 : vector<1x16xf32>
    %815 = arith.addf %812, %814 : vector<1x16xf32>
    %816 = vector.extract_strided_slice %807 {offsets = [0, 16], sizes = [1, 16], strides = [1, 1]} : vector<1x48xf32> to vector<1x16xf32>
    %c0_399 = arith.constant 0 : index
    %c0_400 = arith.constant 0 : index
    %817 = vector.load %arg15[%c0_399, %c0_400] : memref<1x16xf32, #tpu.memory_space<vmem>>, vector<1x16xf32>
    %818 = arith.mulf %816, %817 : vector<1x16xf32>
    %819 = vector.extract_strided_slice %807 {offsets = [0, 0], sizes = [1, 16], strides = [1, 1]} : vector<1x48xf32> to vector<1x16xf32>
    %820 = arith.mulf %819, %809 : vector<1x16xf32>
    %821 = arith.addf %818, %820 : vector<1x16xf32>
    %822 = vector.extract_strided_slice %799 {offsets = [0, 32], sizes = [1, 16], strides = [1, 1]} : vector<1x48xf32> to vector<1x16xf32>
    %823 = math.tanh %815 : vector<1x16xf32>
    %824 = arith.mulf %822, %823 : vector<1x16xf32>
    %825 = vector.extract_strided_slice %807 {offsets = [0, 32], sizes = [1, 16], strides = [1, 1]} : vector<1x48xf32> to vector<1x16xf32>
    %826 = math.tanh %821 : vector<1x16xf32>
    %827 = arith.mulf %825, %826 : vector<1x16xf32>
    %c0_401 = arith.constant 0 : index
    %c0_402 = arith.constant 0 : index
    %828 = vector.load %arg14[%c0_401, %c0_402] : memref<1x16xf32, #tpu.memory_space<vmem>>, vector<1x16xf32>
    tpu.vector_store %arg14[%c0_401, %c0_402], %815 {strides = array<i32>} : memref<1x16xf32, #tpu.memory_space<vmem>>, vector<1x16xf32>,
    %c0_403 = arith.constant 0 : index
    %c0_404 = arith.constant 0 : index
    %829 = vector.load %arg15[%c0_403, %c0_404] : memref<1x16xf32, #tpu.memory_space<vmem>>, vector<1x16xf32>
    tpu.vector_store %arg15[%c0_403, %c0_404], %821 {strides = array<i32>} : memref<1x16xf32, #tpu.memory_space<vmem>>, vector<1x16xf32>,
    %c0_405 = arith.constant 0 : index
    %c0_406 = arith.constant 0 : index
    %830 = vector.load %arg13[%c0_405, %c0_406] : memref<1x32xf32, #tpu.memory_space<vmem>>, vector<1x16xf32>
    tpu.vector_store %arg13[%c0_405, %c0_406], %824 {strides = array<i32>} : memref<1x32xf32, #tpu.memory_space<vmem>>, vector<1x16xf32>,
    %c0_407 = arith.constant 0 : index
    %c16_408 = arith.constant 16 : index
    %831 = vector.load %arg13[%c0_407, %c16_408] : memref<1x32xf32, #tpu.memory_space<vmem>>, vector<1x16xf32>
    tpu.vector_store %arg13[%c0_407, %c16_408], %827 {strides = array<i32>} : memref<1x32xf32, #tpu.memory_space<vmem>>, vector<1x16xf32>,
    %832 = arith.index_cast %c3_i32_386 : i32 to index
    %c0_409 = arith.constant 0 : index
    %c0_410 = arith.constant 0 : index
    %833 = vector.load %arg11[%832, %c0_409, %c0_410] : memref<8x1x16xf32, #tpu.memory_space<vmem>>, vector<1x1x16xf32>
    %834 = vector.shape_cast %833 : vector<1x1x16xf32> to vector<1x16xf32>
    %835 = vector.shape_cast %824 : vector<1x16xf32> to vector<1x1x16xf32>
    tpu.vector_store %arg11[%832, %c0_409, %c0_410], %835 {strides = array<i32>} : memref<8x1x16xf32, #tpu.memory_space<vmem>>, vector<1x1x16xf32>,
    %c7_i32_411 = arith.constant 7 : i32
    %836 = arith.subi %c7_i32_411, %c3_i32_386 : i32
    %837 = arith.index_cast %836 : i32 to index
    %c0_412 = arith.constant 0 : index
    %c0_413 = arith.constant 0 : index
    %838 = vector.load %arg12[%837, %c0_412, %c0_413] : memref<8x1x16xf32, #tpu.memory_space<vmem>>, vector<1x1x16xf32>
    %839 = vector.shape_cast %838 : vector<1x1x16xf32> to vector<1x16xf32>
    %840 = vector.shape_cast %827 : vector<1x16xf32> to vector<1x1x16xf32>
    tpu.vector_store %arg12[%837, %c0_412, %c0_413], %840 {strides = array<i32>} : memref<8x1x16xf32, #tpu.memory_space<vmem>>, vector<1x1x16xf32>,
    %c4_i32_414 = arith.constant 4 : i32
    %c0_415 = arith.constant 0 : index
    %c0_416 = arith.constant 0 : index
    %841 = vector.load %arg13[%c0_415, %c0_416] : memref<1x32xf32, #tpu.memory_space<vmem>>, vector<1x32xf32>
    %842 = arith.truncf %841 : vector<1x32xf32> to vector<1x32xbf16>
    %cst_417 = arith.constant dense<0.000000e+00> : vector<1x128xf32>
    %843 = tpu.matmul %842, %582, %cst_417 {dimension_numbers = #tpu.dot_dimension_numbers<[1], [0], [0], [1], [0, 0, 1, 1], [], []>} : vector<1x32xbf16>, vector<32x128xbf16>, vector<1x128xf32> -> vector<1x128xf32>
    %844 = vector.extract_strided_slice %843 {offsets = [0, 0], sizes = [1, 64], strides = [1, 1]} : vector<1x128xf32> to vector<1x64xf32>
    %845 = arith.index_cast %c4_i32_414 : i32 to index
    %c0_418 = arith.constant 0 : index
    %c0_419 = arith.constant 0 : index
    %846 = vector.load %arg10[%845, %c0_418, %c0_419] : memref<8x1x128xf32, #tpu.memory_space<vmem>>, vector<1x1x128xf32>
    %847 = vector.shape_cast %846 : vector<1x1x128xf32> to vector<1x128xf32>
    %848 = vector.extract_strided_slice %847 {offsets = [0, 0], sizes = [1, 64], strides = [1, 1]} : vector<1x128xf32> to vector<1x64xf32>
    %849 = arith.addf %844, %848 : vector<1x64xf32>
    %850 = vector.extract_strided_slice %843 {offsets = [0, 64], sizes = [1, 64], strides = [1, 1]} : vector<1x128xf32> to vector<1x64xf32>
    %c7_i32_420 = arith.constant 7 : i32
    %851 = arith.subi %c7_i32_420, %c4_i32_414 : i32
    %852 = arith.index_cast %851 : i32 to index
    %c0_421 = arith.constant 0 : index
    %c0_422 = arith.constant 0 : index
    %853 = vector.load %arg10[%852, %c0_421, %c0_422] : memref<8x1x128xf32, #tpu.memory_space<vmem>>, vector<1x1x128xf32>
    %854 = vector.shape_cast %853 : vector<1x1x128xf32> to vector<1x128xf32>
    %855 = vector.extract_strided_slice %854 {offsets = [0, 64], sizes = [1, 64], strides = [1, 1]} : vector<1x128xf32> to vector<1x64xf32>
    %856 = arith.addf %850, %855 : vector<1x64xf32>
    %857 = vector.extract_strided_slice %849 {offsets = [0, 0], sizes = [1, 48], strides = [1, 1]} : vector<1x64xf32> to vector<1x48xf32>
    %858 = arith.negf %857 : vector<1x48xf32>
    %859 = math.exp %858 : vector<1x48xf32>
    %cst_423 = arith.constant 1.000000e+00 : f32
    %860 = vector.broadcast %cst_423 : f32 to vector<1x48xf32>
    %861 = arith.addf %860, %859 : vector<1x48xf32>
    %862 = arith.divf %860, %861 : vector<1x48xf32>
    %863 = vector.extract_strided_slice %849 {offsets = [0, 48], sizes = [1, 16], strides = [1, 1]} : vector<1x64xf32> to vector<1x16xf32>
    %864 = math.tanh %863 : vector<1x16xf32>
    %865 = vector.extract_strided_slice %856 {offsets = [0, 0], sizes = [1, 48], strides = [1, 1]} : vector<1x64xf32> to vector<1x48xf32>
    %866 = arith.negf %865 : vector<1x48xf32>
    %867 = math.exp %866 : vector<1x48xf32>
    %cst_424 = arith.constant 1.000000e+00 : f32
    %868 = vector.broadcast %cst_424 : f32 to vector<1x48xf32>
    %869 = arith.addf %868, %867 : vector<1x48xf32>
    %870 = arith.divf %868, %869 : vector<1x48xf32>
    %871 = vector.extract_strided_slice %856 {offsets = [0, 48], sizes = [1, 16], strides = [1, 1]} : vector<1x64xf32> to vector<1x16xf32>
    %872 = math.tanh %871 : vector<1x16xf32>
    %873 = vector.extract_strided_slice %862 {offsets = [0, 16], sizes = [1, 16], strides = [1, 1]} : vector<1x48xf32> to vector<1x16xf32>
    %c0_425 = arith.constant 0 : index
    %c0_426 = arith.constant 0 : index
    %874 = vector.load %arg14[%c0_425, %c0_426] : memref<1x16xf32, #tpu.memory_space<vmem>>, vector<1x16xf32>
    %875 = arith.mulf %873, %874 : vector<1x16xf32>
    %876 = vector.extract_strided_slice %862 {offsets = [0, 0], sizes = [1, 16], strides = [1, 1]} : vector<1x48xf32> to vector<1x16xf32>
    %877 = arith.mulf %876, %864 : vector<1x16xf32>
    %878 = arith.addf %875, %877 : vector<1x16xf32>
    %879 = vector.extract_strided_slice %870 {offsets = [0, 16], sizes = [1, 16], strides = [1, 1]} : vector<1x48xf32> to vector<1x16xf32>
    %c0_427 = arith.constant 0 : index
    %c0_428 = arith.constant 0 : index
    %880 = vector.load %arg15[%c0_427, %c0_428] : memref<1x16xf32, #tpu.memory_space<vmem>>, vector<1x16xf32>
    %881 = arith.mulf %879, %880 : vector<1x16xf32>
    %882 = vector.extract_strided_slice %870 {offsets = [0, 0], sizes = [1, 16], strides = [1, 1]} : vector<1x48xf32> to vector<1x16xf32>
    %883 = arith.mulf %882, %872 : vector<1x16xf32>
    %884 = arith.addf %881, %883 : vector<1x16xf32>
    %885 = vector.extract_strided_slice %862 {offsets = [0, 32], sizes = [1, 16], strides = [1, 1]} : vector<1x48xf32> to vector<1x16xf32>
    %886 = math.tanh %878 : vector<1x16xf32>
    %887 = arith.mulf %885, %886 : vector<1x16xf32>
    %888 = vector.extract_strided_slice %870 {offsets = [0, 32], sizes = [1, 16], strides = [1, 1]} : vector<1x48xf32> to vector<1x16xf32>
    %889 = math.tanh %884 : vector<1x16xf32>
    %890 = arith.mulf %888, %889 : vector<1x16xf32>
    %c0_429 = arith.constant 0 : index
    %c0_430 = arith.constant 0 : index
    %891 = vector.load %arg14[%c0_429, %c0_430] : memref<1x16xf32, #tpu.memory_space<vmem>>, vector<1x16xf32>
    tpu.vector_store %arg14[%c0_429, %c0_430], %878 {strides = array<i32>} : memref<1x16xf32, #tpu.memory_space<vmem>>, vector<1x16xf32>,
    %c0_431 = arith.constant 0 : index
    %c0_432 = arith.constant 0 : index
    %892 = vector.load %arg15[%c0_431, %c0_432] : memref<1x16xf32, #tpu.memory_space<vmem>>, vector<1x16xf32>
    tpu.vector_store %arg15[%c0_431, %c0_432], %884 {strides = array<i32>} : memref<1x16xf32, #tpu.memory_space<vmem>>, vector<1x16xf32>,
    %c0_433 = arith.constant 0 : index
    %c0_434 = arith.constant 0 : index
    %893 = vector.load %arg13[%c0_433, %c0_434] : memref<1x32xf32, #tpu.memory_space<vmem>>, vector<1x16xf32>
    tpu.vector_store %arg13[%c0_433, %c0_434], %887 {strides = array<i32>} : memref<1x32xf32, #tpu.memory_space<vmem>>, vector<1x16xf32>,
    %c0_435 = arith.constant 0 : index
    %c16_436 = arith.constant 16 : index
    %894 = vector.load %arg13[%c0_435, %c16_436] : memref<1x32xf32, #tpu.memory_space<vmem>>, vector<1x16xf32>
    tpu.vector_store %arg13[%c0_435, %c16_436], %890 {strides = array<i32>} : memref<1x32xf32, #tpu.memory_space<vmem>>, vector<1x16xf32>,
    %895 = arith.index_cast %c4_i32_414 : i32 to index
    %c0_437 = arith.constant 0 : index
    %c0_438 = arith.constant 0 : index
    %896 = vector.load %arg11[%895, %c0_437, %c0_438] : memref<8x1x16xf32, #tpu.memory_space<vmem>>, vector<1x1x16xf32>
    %897 = vector.shape_cast %896 : vector<1x1x16xf32> to vector<1x16xf32>
    %898 = vector.shape_cast %887 : vector<1x16xf32> to vector<1x1x16xf32>
    tpu.vector_store %arg11[%895, %c0_437, %c0_438], %898 {strides = array<i32>} : memref<8x1x16xf32, #tpu.memory_space<vmem>>, vector<1x1x16xf32>,
    %c7_i32_439 = arith.constant 7 : i32
    %899 = arith.subi %c7_i32_439, %c4_i32_414 : i32
    %900 = arith.index_cast %899 : i32 to index
    %c0_440 = arith.constant 0 : index
    %c0_441 = arith.constant 0 : index
    %901 = vector.load %arg12[%900, %c0_440, %c0_441] : memref<8x1x16xf32, #tpu.memory_space<vmem>>, vector<1x1x16xf32>
    %902 = vector.shape_cast %901 : vector<1x1x16xf32> to vector<1x16xf32>
    %903 = vector.shape_cast %890 : vector<1x16xf32> to vector<1x1x16xf32>
    tpu.vector_store %arg12[%900, %c0_440, %c0_441], %903 {strides = array<i32>} : memref<8x1x16xf32, #tpu.memory_space<vmem>>, vector<1x1x16xf32>,
    %c5_i32_442 = arith.constant 5 : i32
    %c0_443 = arith.constant 0 : index
    %c0_444 = arith.constant 0 : index
    %904 = vector.load %arg13[%c0_443, %c0_444] : memref<1x32xf32, #tpu.memory_space<vmem>>, vector<1x32xf32>
    %905 = arith.truncf %904 : vector<1x32xf32> to vector<1x32xbf16>
    %cst_445 = arith.constant dense<0.000000e+00> : vector<1x128xf32>
    %906 = tpu.matmul %905, %582, %cst_445 {dimension_numbers = #tpu.dot_dimension_numbers<[1], [0], [0], [1], [0, 0, 1, 1], [], []>} : vector<1x32xbf16>, vector<32x128xbf16>, vector<1x128xf32> -> vector<1x128xf32>
    %907 = vector.extract_strided_slice %906 {offsets = [0, 0], sizes = [1, 64], strides = [1, 1]} : vector<1x128xf32> to vector<1x64xf32>
    %908 = arith.index_cast %c5_i32_442 : i32 to index
    %c0_446 = arith.constant 0 : index
    %c0_447 = arith.constant 0 : index
    %909 = vector.load %arg10[%908, %c0_446, %c0_447] : memref<8x1x128xf32, #tpu.memory_space<vmem>>, vector<1x1x128xf32>
    %910 = vector.shape_cast %909 : vector<1x1x128xf32> to vector<1x128xf32>
    %911 = vector.extract_strided_slice %910 {offsets = [0, 0], sizes = [1, 64], strides = [1, 1]} : vector<1x128xf32> to vector<1x64xf32>
    %912 = arith.addf %907, %911 : vector<1x64xf32>
    %913 = vector.extract_strided_slice %906 {offsets = [0, 64], sizes = [1, 64], strides = [1, 1]} : vector<1x128xf32> to vector<1x64xf32>
    %c7_i32_448 = arith.constant 7 : i32
    %914 = arith.subi %c7_i32_448, %c5_i32_442 : i32
    %915 = arith.index_cast %914 : i32 to index
    %c0_449 = arith.constant 0 : index
    %c0_450 = arith.constant 0 : index
    %916 = vector.load %arg10[%915, %c0_449, %c0_450] : memref<8x1x128xf32, #tpu.memory_space<vmem>>, vector<1x1x128xf32>
    %917 = vector.shape_cast %916 : vector<1x1x128xf32> to vector<1x128xf32>
    %918 = vector.extract_strided_slice %917 {offsets = [0, 64], sizes = [1, 64], strides = [1, 1]} : vector<1x128xf32> to vector<1x64xf32>
    %919 = arith.addf %913, %918 : vector<1x64xf32>
    %920 = vector.extract_strided_slice %912 {offsets = [0, 0], sizes = [1, 48], strides = [1, 1]} : vector<1x64xf32> to vector<1x48xf32>
    %921 = arith.negf %920 : vector<1x48xf32>
    %922 = math.exp %921 : vector<1x48xf32>
    %cst_451 = arith.constant 1.000000e+00 : f32
    %923 = vector.broadcast %cst_451 : f32 to vector<1x48xf32>
    %924 = arith.addf %923, %922 : vector<1x48xf32>
    %925 = arith.divf %923, %924 : vector<1x48xf32>
    %926 = vector.extract_strided_slice %912 {offsets = [0, 48], sizes = [1, 16], strides = [1, 1]} : vector<1x64xf32> to vector<1x16xf32>
    %927 = math.tanh %926 : vector<1x16xf32>
    %928 = vector.extract_strided_slice %919 {offsets = [0, 0], sizes = [1, 48], strides = [1, 1]} : vector<1x64xf32> to vector<1x48xf32>
    %929 = arith.negf %928 : vector<1x48xf32>
    %930 = math.exp %929 : vector<1x48xf32>
    %cst_452 = arith.constant 1.000000e+00 : f32
    %931 = vector.broadcast %cst_452 : f32 to vector<1x48xf32>
    %932 = arith.addf %931, %930 : vector<1x48xf32>
    %933 = arith.divf %931, %932 : vector<1x48xf32>
    %934 = vector.extract_strided_slice %919 {offsets = [0, 48], sizes = [1, 16], strides = [1, 1]} : vector<1x64xf32> to vector<1x16xf32>
    %935 = math.tanh %934 : vector<1x16xf32>
    %936 = vector.extract_strided_slice %925 {offsets = [0, 16], sizes = [1, 16], strides = [1, 1]} : vector<1x48xf32> to vector<1x16xf32>
    %c0_453 = arith.constant 0 : index
    %c0_454 = arith.constant 0 : index
    %937 = vector.load %arg14[%c0_453, %c0_454] : memref<1x16xf32, #tpu.memory_space<vmem>>, vector<1x16xf32>
    %938 = arith.mulf %936, %937 : vector<1x16xf32>
    %939 = vector.extract_strided_slice %925 {offsets = [0, 0], sizes = [1, 16], strides = [1, 1]} : vector<1x48xf32> to vector<1x16xf32>
    %940 = arith.mulf %939, %927 : vector<1x16xf32>
    %941 = arith.addf %938, %940 : vector<1x16xf32>
    %942 = vector.extract_strided_slice %933 {offsets = [0, 16], sizes = [1, 16], strides = [1, 1]} : vector<1x48xf32> to vector<1x16xf32>
    %c0_455 = arith.constant 0 : index
    %c0_456 = arith.constant 0 : index
    %943 = vector.load %arg15[%c0_455, %c0_456] : memref<1x16xf32, #tpu.memory_space<vmem>>, vector<1x16xf32>
    %944 = arith.mulf %942, %943 : vector<1x16xf32>
    %945 = vector.extract_strided_slice %933 {offsets = [0, 0], sizes = [1, 16], strides = [1, 1]} : vector<1x48xf32> to vector<1x16xf32>
    %946 = arith.mulf %945, %935 : vector<1x16xf32>
    %947 = arith.addf %944, %946 : vector<1x16xf32>
    %948 = vector.extract_strided_slice %925 {offsets = [0, 32], sizes = [1, 16], strides = [1, 1]} : vector<1x48xf32> to vector<1x16xf32>
    %949 = math.tanh %941 : vector<1x16xf32>
    %950 = arith.mulf %948, %949 : vector<1x16xf32>
    %951 = vector.extract_strided_slice %933 {offsets = [0, 32], sizes = [1, 16], strides = [1, 1]} : vector<1x48xf32> to vector<1x16xf32>
    %952 = math.tanh %947 : vector<1x16xf32>
    %953 = arith.mulf %951, %952 : vector<1x16xf32>
    %c0_457 = arith.constant 0 : index
    %c0_458 = arith.constant 0 : index
    %954 = vector.load %arg14[%c0_457, %c0_458] : memref<1x16xf32, #tpu.memory_space<vmem>>, vector<1x16xf32>
    tpu.vector_store %arg14[%c0_457, %c0_458], %941 {strides = array<i32>} : memref<1x16xf32, #tpu.memory_space<vmem>>, vector<1x16xf32>,
    %c0_459 = arith.constant 0 : index
    %c0_460 = arith.constant 0 : index
    %955 = vector.load %arg15[%c0_459, %c0_460] : memref<1x16xf32, #tpu.memory_space<vmem>>, vector<1x16xf32>
    tpu.vector_store %arg15[%c0_459, %c0_460], %947 {strides = array<i32>} : memref<1x16xf32, #tpu.memory_space<vmem>>, vector<1x16xf32>,
    %c0_461 = arith.constant 0 : index
    %c0_462 = arith.constant 0 : index
    %956 = vector.load %arg13[%c0_461, %c0_462] : memref<1x32xf32, #tpu.memory_space<vmem>>, vector<1x16xf32>
    tpu.vector_store %arg13[%c0_461, %c0_462], %950 {strides = array<i32>} : memref<1x32xf32, #tpu.memory_space<vmem>>, vector<1x16xf32>,
    %c0_463 = arith.constant 0 : index
    %c16_464 = arith.constant 16 : index
    %957 = vector.load %arg13[%c0_463, %c16_464] : memref<1x32xf32, #tpu.memory_space<vmem>>, vector<1x16xf32>
    tpu.vector_store %arg13[%c0_463, %c16_464], %953 {strides = array<i32>} : memref<1x32xf32, #tpu.memory_space<vmem>>, vector<1x16xf32>,
    %958 = arith.index_cast %c5_i32_442 : i32 to index
    %c0_465 = arith.constant 0 : index
    %c0_466 = arith.constant 0 : index
    %959 = vector.load %arg11[%958, %c0_465, %c0_466] : memref<8x1x16xf32, #tpu.memory_space<vmem>>, vector<1x1x16xf32>
    %960 = vector.shape_cast %959 : vector<1x1x16xf32> to vector<1x16xf32>
    %961 = vector.shape_cast %950 : vector<1x16xf32> to vector<1x1x16xf32>
    tpu.vector_store %arg11[%958, %c0_465, %c0_466], %961 {strides = array<i32>} : memref<8x1x16xf32, #tpu.memory_space<vmem>>, vector<1x1x16xf32>,
    %c7_i32_467 = arith.constant 7 : i32
    %962 = arith.subi %c7_i32_467, %c5_i32_442 : i32
    %963 = arith.index_cast %962 : i32 to index
    %c0_468 = arith.constant 0 : index
    %c0_469 = arith.constant 0 : index
    %964 = vector.load %arg12[%963, %c0_468, %c0_469] : memref<8x1x16xf32, #tpu.memory_space<vmem>>, vector<1x1x16xf32>
    %965 = vector.shape_cast %964 : vector<1x1x16xf32> to vector<1x16xf32>
    %966 = vector.shape_cast %953 : vector<1x16xf32> to vector<1x1x16xf32>
    tpu.vector_store %arg12[%963, %c0_468, %c0_469], %966 {strides = array<i32>} : memref<8x1x16xf32, #tpu.memory_space<vmem>>, vector<1x1x16xf32>,
    %c6_i32_470 = arith.constant 6 : i32
    %c0_471 = arith.constant 0 : index
    %c0_472 = arith.constant 0 : index
    %967 = vector.load %arg13[%c0_471, %c0_472] : memref<1x32xf32, #tpu.memory_space<vmem>>, vector<1x32xf32>
    %968 = arith.truncf %967 : vector<1x32xf32> to vector<1x32xbf16>
    %cst_473 = arith.constant dense<0.000000e+00> : vector<1x128xf32>
    %969 = tpu.matmul %968, %582, %cst_473 {dimension_numbers = #tpu.dot_dimension_numbers<[1], [0], [0], [1], [0, 0, 1, 1], [], []>} : vector<1x32xbf16>, vector<32x128xbf16>, vector<1x128xf32> -> vector<1x128xf32>
    %970 = vector.extract_strided_slice %969 {offsets = [0, 0], sizes = [1, 64], strides = [1, 1]} : vector<1x128xf32> to vector<1x64xf32>
    %971 = arith.index_cast %c6_i32_470 : i32 to index
    %c0_474 = arith.constant 0 : index
    %c0_475 = arith.constant 0 : index
    %972 = vector.load %arg10[%971, %c0_474, %c0_475] : memref<8x1x128xf32, #tpu.memory_space<vmem>>, vector<1x1x128xf32>
    %973 = vector.shape_cast %972 : vector<1x1x128xf32> to vector<1x128xf32>
    %974 = vector.extract_strided_slice %973 {offsets = [0, 0], sizes = [1, 64], strides = [1, 1]} : vector<1x128xf32> to vector<1x64xf32>
    %975 = arith.addf %970, %974 : vector<1x64xf32>
    %976 = vector.extract_strided_slice %969 {offsets = [0, 64], sizes = [1, 64], strides = [1, 1]} : vector<1x128xf32> to vector<1x64xf32>
    %c7_i32_476 = arith.constant 7 : i32
    %977 = arith.subi %c7_i32_476, %c6_i32_470 : i32
    %978 = arith.index_cast %977 : i32 to index
    %c0_477 = arith.constant 0 : index
    %c0_478 = arith.constant 0 : index
    %979 = vector.load %arg10[%978, %c0_477, %c0_478] : memref<8x1x128xf32, #tpu.memory_space<vmem>>, vector<1x1x128xf32>
    %980 = vector.shape_cast %979 : vector<1x1x128xf32> to vector<1x128xf32>
    %981 = vector.extract_strided_slice %980 {offsets = [0, 64], sizes = [1, 64], strides = [1, 1]} : vector<1x128xf32> to vector<1x64xf32>
    %982 = arith.addf %976, %981 : vector<1x64xf32>
    %983 = vector.extract_strided_slice %975 {offsets = [0, 0], sizes = [1, 48], strides = [1, 1]} : vector<1x64xf32> to vector<1x48xf32>
    %984 = arith.negf %983 : vector<1x48xf32>
    %985 = math.exp %984 : vector<1x48xf32>
    %cst_479 = arith.constant 1.000000e+00 : f32
    %986 = vector.broadcast %cst_479 : f32 to vector<1x48xf32>
    %987 = arith.addf %986, %985 : vector<1x48xf32>
    %988 = arith.divf %986, %987 : vector<1x48xf32>
    %989 = vector.extract_strided_slice %975 {offsets = [0, 48], sizes = [1, 16], strides = [1, 1]} : vector<1x64xf32> to vector<1x16xf32>
    %990 = math.tanh %989 : vector<1x16xf32>
    %991 = vector.extract_strided_slice %982 {offsets = [0, 0], sizes = [1, 48], strides = [1, 1]} : vector<1x64xf32> to vector<1x48xf32>
    %992 = arith.negf %991 : vector<1x48xf32>
    %993 = math.exp %992 : vector<1x48xf32>
    %cst_480 = arith.constant 1.000000e+00 : f32
    %994 = vector.broadcast %cst_480 : f32 to vector<1x48xf32>
    %995 = arith.addf %994, %993 : vector<1x48xf32>
    %996 = arith.divf %994, %995 : vector<1x48xf32>
    %997 = vector.extract_strided_slice %982 {offsets = [0, 48], sizes = [1, 16], strides = [1, 1]} : vector<1x64xf32> to vector<1x16xf32>
    %998 = math.tanh %997 : vector<1x16xf32>
    %999 = vector.extract_strided_slice %988 {offsets = [0, 16], sizes = [1, 16], strides = [1, 1]} : vector<1x48xf32> to vector<1x16xf32>
    %c0_481 = arith.constant 0 : index
    %c0_482 = arith.constant 0 : index
    %1000 = vector.load %arg14[%c0_481, %c0_482] : memref<1x16xf32, #tpu.memory_space<vmem>>, vector<1x16xf32>
    %1001 = arith.mulf %999, %1000 : vector<1x16xf32>
    %1002 = vector.extract_strided_slice %988 {offsets = [0, 0], sizes = [1, 16], strides = [1, 1]} : vector<1x48xf32> to vector<1x16xf32>
    %1003 = arith.mulf %1002, %990 : vector<1x16xf32>
    %1004 = arith.addf %1001, %1003 : vector<1x16xf32>
    %1005 = vector.extract_strided_slice %996 {offsets = [0, 16], sizes = [1, 16], strides = [1, 1]} : vector<1x48xf32> to vector<1x16xf32>
    %c0_483 = arith.constant 0 : index
    %c0_484 = arith.constant 0 : index
    %1006 = vector.load %arg15[%c0_483, %c0_484] : memref<1x16xf32, #tpu.memory_space<vmem>>, vector<1x16xf32>
    %1007 = arith.mulf %1005, %1006 : vector<1x16xf32>
    %1008 = vector.extract_strided_slice %996 {offsets = [0, 0], sizes = [1, 16], strides = [1, 1]} : vector<1x48xf32> to vector<1x16xf32>
    %1009 = arith.mulf %1008, %998 : vector<1x16xf32>
    %1010 = arith.addf %1007, %1009 : vector<1x16xf32>
    %1011 = vector.extract_strided_slice %988 {offsets = [0, 32], sizes = [1, 16], strides = [1, 1]} : vector<1x48xf32> to vector<1x16xf32>
    %1012 = math.tanh %1004 : vector<1x16xf32>
    %1013 = arith.mulf %1011, %1012 : vector<1x16xf32>
    %1014 = vector.extract_strided_slice %996 {offsets = [0, 32], sizes = [1, 16], strides = [1, 1]} : vector<1x48xf32> to vector<1x16xf32>
    %1015 = math.tanh %1010 : vector<1x16xf32>
    %1016 = arith.mulf %1014, %1015 : vector<1x16xf32>
    %c0_485 = arith.constant 0 : index
    %c0_486 = arith.constant 0 : index
    %1017 = vector.load %arg14[%c0_485, %c0_486] : memref<1x16xf32, #tpu.memory_space<vmem>>, vector<1x16xf32>
    tpu.vector_store %arg14[%c0_485, %c0_486], %1004 {strides = array<i32>} : memref<1x16xf32, #tpu.memory_space<vmem>>, vector<1x16xf32>,
    %c0_487 = arith.constant 0 : index
    %c0_488 = arith.constant 0 : index
    %1018 = vector.load %arg15[%c0_487, %c0_488] : memref<1x16xf32, #tpu.memory_space<vmem>>, vector<1x16xf32>
    tpu.vector_store %arg15[%c0_487, %c0_488], %1010 {strides = array<i32>} : memref<1x16xf32, #tpu.memory_space<vmem>>, vector<1x16xf32>,
    %c0_489 = arith.constant 0 : index
    %c0_490 = arith.constant 0 : index
    %1019 = vector.load %arg13[%c0_489, %c0_490] : memref<1x32xf32, #tpu.memory_space<vmem>>, vector<1x16xf32>
    tpu.vector_store %arg13[%c0_489, %c0_490], %1013 {strides = array<i32>} : memref<1x32xf32, #tpu.memory_space<vmem>>, vector<1x16xf32>,
    %c0_491 = arith.constant 0 : index
    %c16_492 = arith.constant 16 : index
    %1020 = vector.load %arg13[%c0_491, %c16_492] : memref<1x32xf32, #tpu.memory_space<vmem>>, vector<1x16xf32>
    tpu.vector_store %arg13[%c0_491, %c16_492], %1016 {strides = array<i32>} : memref<1x32xf32, #tpu.memory_space<vmem>>, vector<1x16xf32>,
    %1021 = arith.index_cast %c6_i32_470 : i32 to index
    %c0_493 = arith.constant 0 : index
    %c0_494 = arith.constant 0 : index
    %1022 = vector.load %arg11[%1021, %c0_493, %c0_494] : memref<8x1x16xf32, #tpu.memory_space<vmem>>, vector<1x1x16xf32>
    %1023 = vector.shape_cast %1022 : vector<1x1x16xf32> to vector<1x16xf32>
    %1024 = vector.shape_cast %1013 : vector<1x16xf32> to vector<1x1x16xf32>
    tpu.vector_store %arg11[%1021, %c0_493, %c0_494], %1024 {strides = array<i32>} : memref<8x1x16xf32, #tpu.memory_space<vmem>>, vector<1x1x16xf32>,
    %c7_i32_495 = arith.constant 7 : i32
    %1025 = arith.subi %c7_i32_495, %c6_i32_470 : i32
    %1026 = arith.index_cast %1025 : i32 to index
    %c0_496 = arith.constant 0 : index
    %c0_497 = arith.constant 0 : index
    %1027 = vector.load %arg12[%1026, %c0_496, %c0_497] : memref<8x1x16xf32, #tpu.memory_space<vmem>>, vector<1x1x16xf32>
    %1028 = vector.shape_cast %1027 : vector<1x1x16xf32> to vector<1x16xf32>
    %1029 = vector.shape_cast %1016 : vector<1x16xf32> to vector<1x1x16xf32>
    tpu.vector_store %arg12[%1026, %c0_496, %c0_497], %1029 {strides = array<i32>} : memref<8x1x16xf32, #tpu.memory_space<vmem>>, vector<1x1x16xf32>,
    %c7_i32_498 = arith.constant 7 : i32
    %c0_499 = arith.constant 0 : index
    %c0_500 = arith.constant 0 : index
    %1030 = vector.load %arg13[%c0_499, %c0_500] : memref<1x32xf32, #tpu.memory_space<vmem>>, vector<1x32xf32>
    %1031 = arith.truncf %1030 : vector<1x32xf32> to vector<1x32xbf16>
    %cst_501 = arith.constant dense<0.000000e+00> : vector<1x128xf32>
    %1032 = tpu.matmul %1031, %582, %cst_501 {dimension_numbers = #tpu.dot_dimension_numbers<[1], [0], [0], [1], [0, 0, 1, 1], [], []>} : vector<1x32xbf16>, vector<32x128xbf16>, vector<1x128xf32> -> vector<1x128xf32>
    %1033 = vector.extract_strided_slice %1032 {offsets = [0, 0], sizes = [1, 64], strides = [1, 1]} : vector<1x128xf32> to vector<1x64xf32>
    %1034 = arith.index_cast %c7_i32_498 : i32 to index
    %c0_502 = arith.constant 0 : index
    %c0_503 = arith.constant 0 : index
    %1035 = vector.load %arg10[%1034, %c0_502, %c0_503] : memref<8x1x128xf32, #tpu.memory_space<vmem>>, vector<1x1x128xf32>
    %1036 = vector.shape_cast %1035 : vector<1x1x128xf32> to vector<1x128xf32>
    %1037 = vector.extract_strided_slice %1036 {offsets = [0, 0], sizes = [1, 64], strides = [1, 1]} : vector<1x128xf32> to vector<1x64xf32>
    %1038 = arith.addf %1033, %1037 : vector<1x64xf32>
    %1039 = vector.extract_strided_slice %1032 {offsets = [0, 64], sizes = [1, 64], strides = [1, 1]} : vector<1x128xf32> to vector<1x64xf32>
    %c7_i32_504 = arith.constant 7 : i32
    %1040 = arith.subi %c7_i32_504, %c7_i32_498 : i32
    %1041 = arith.index_cast %1040 : i32 to index
    %c0_505 = arith.constant 0 : index
    %c0_506 = arith.constant 0 : index
    %1042 = vector.load %arg10[%1041, %c0_505, %c0_506] : memref<8x1x128xf32, #tpu.memory_space<vmem>>, vector<1x1x128xf32>
    %1043 = vector.shape_cast %1042 : vector<1x1x128xf32> to vector<1x128xf32>
    %1044 = vector.extract_strided_slice %1043 {offsets = [0, 64], sizes = [1, 64], strides = [1, 1]} : vector<1x128xf32> to vector<1x64xf32>
    %1045 = arith.addf %1039, %1044 : vector<1x64xf32>
    %1046 = vector.extract_strided_slice %1038 {offsets = [0, 0], sizes = [1, 48], strides = [1, 1]} : vector<1x64xf32> to vector<1x48xf32>
    %1047 = arith.negf %1046 : vector<1x48xf32>
    %1048 = math.exp %1047 : vector<1x48xf32>
    %cst_507 = arith.constant 1.000000e+00 : f32
    %1049 = vector.broadcast %cst_507 : f32 to vector<1x48xf32>
    %1050 = arith.addf %1049, %1048 : vector<1x48xf32>
    %1051 = arith.divf %1049, %1050 : vector<1x48xf32>
    %1052 = vector.extract_strided_slice %1038 {offsets = [0, 48], sizes = [1, 16], strides = [1, 1]} : vector<1x64xf32> to vector<1x16xf32>
    %1053 = math.tanh %1052 : vector<1x16xf32>
    %1054 = vector.extract_strided_slice %1045 {offsets = [0, 0], sizes = [1, 48], strides = [1, 1]} : vector<1x64xf32> to vector<1x48xf32>
    %1055 = arith.negf %1054 : vector<1x48xf32>
    %1056 = math.exp %1055 : vector<1x48xf32>
    %cst_508 = arith.constant 1.000000e+00 : f32
    %1057 = vector.broadcast %cst_508 : f32 to vector<1x48xf32>
    %1058 = arith.addf %1057, %1056 : vector<1x48xf32>
    %1059 = arith.divf %1057, %1058 : vector<1x48xf32>
    %1060 = vector.extract_strided_slice %1045 {offsets = [0, 48], sizes = [1, 16], strides = [1, 1]} : vector<1x64xf32> to vector<1x16xf32>
    %1061 = math.tanh %1060 : vector<1x16xf32>
    %1062 = vector.extract_strided_slice %1051 {offsets = [0, 16], sizes = [1, 16], strides = [1, 1]} : vector<1x48xf32> to vector<1x16xf32>
    %c0_509 = arith.constant 0 : index
    %c0_510 = arith.constant 0 : index
    %1063 = vector.load %arg14[%c0_509, %c0_510] : memref<1x16xf32, #tpu.memory_space<vmem>>, vector<1x16xf32>
    %1064 = arith.mulf %1062, %1063 : vector<1x16xf32>
    %1065 = vector.extract_strided_slice %1051 {offsets = [0, 0], sizes = [1, 16], strides = [1, 1]} : vector<1x48xf32> to vector<1x16xf32>
    %1066 = arith.mulf %1065, %1053 : vector<1x16xf32>
    %1067 = arith.addf %1064, %1066 : vector<1x16xf32>
    %1068 = vector.extract_strided_slice %1059 {offsets = [0, 16], sizes = [1, 16], strides = [1, 1]} : vector<1x48xf32> to vector<1x16xf32>
    %c0_511 = arith.constant 0 : index
    %c0_512 = arith.constant 0 : index
    %1069 = vector.load %arg15[%c0_511, %c0_512] : memref<1x16xf32, #tpu.memory_space<vmem>>, vector<1x16xf32>
    %1070 = arith.mulf %1068, %1069 : vector<1x16xf32>
    %1071 = vector.extract_strided_slice %1059 {offsets = [0, 0], sizes = [1, 16], strides = [1, 1]} : vector<1x48xf32> to vector<1x16xf32>
    %1072 = arith.mulf %1071, %1061 : vector<1x16xf32>
    %1073 = arith.addf %1070, %1072 : vector<1x16xf32>
    %1074 = vector.extract_strided_slice %1051 {offsets = [0, 32], sizes = [1, 16], strides = [1, 1]} : vector<1x48xf32> to vector<1x16xf32>
    %1075 = math.tanh %1067 : vector<1x16xf32>
    %1076 = arith.mulf %1074, %1075 : vector<1x16xf32>
    %1077 = vector.extract_strided_slice %1059 {offsets = [0, 32], sizes = [1, 16], strides = [1, 1]} : vector<1x48xf32> to vector<1x16xf32>
    %1078 = math.tanh %1073 : vector<1x16xf32>
    %1079 = arith.mulf %1077, %1078 : vector<1x16xf32>
    %c0_513 = arith.constant 0 : index
    %c0_514 = arith.constant 0 : index
    %1080 = vector.load %arg14[%c0_513, %c0_514] : memref<1x16xf32, #tpu.memory_space<vmem>>, vector<1x16xf32>
    tpu.vector_store %arg14[%c0_513, %c0_514], %1067 {strides = array<i32>} : memref<1x16xf32, #tpu.memory_space<vmem>>, vector<1x16xf32>,
    %c0_515 = arith.constant 0 : index
    %c0_516 = arith.constant 0 : index
    %1081 = vector.load %arg15[%c0_515, %c0_516] : memref<1x16xf32, #tpu.memory_space<vmem>>, vector<1x16xf32>
    tpu.vector_store %arg15[%c0_515, %c0_516], %1073 {strides = array<i32>} : memref<1x16xf32, #tpu.memory_space<vmem>>, vector<1x16xf32>,
    %c0_517 = arith.constant 0 : index
    %c0_518 = arith.constant 0 : index
    %1082 = vector.load %arg13[%c0_517, %c0_518] : memref<1x32xf32, #tpu.memory_space<vmem>>, vector<1x16xf32>
    tpu.vector_store %arg13[%c0_517, %c0_518], %1076 {strides = array<i32>} : memref<1x32xf32, #tpu.memory_space<vmem>>, vector<1x16xf32>,
    %c0_519 = arith.constant 0 : index
    %c16_520 = arith.constant 16 : index
    %1083 = vector.load %arg13[%c0_519, %c16_520] : memref<1x32xf32, #tpu.memory_space<vmem>>, vector<1x16xf32>
    tpu.vector_store %arg13[%c0_519, %c16_520], %1079 {strides = array<i32>} : memref<1x32xf32, #tpu.memory_space<vmem>>, vector<1x16xf32>,
    %1084 = arith.index_cast %c7_i32_498 : i32 to index
    %c0_521 = arith.constant 0 : index
    %c0_522 = arith.constant 0 : index
    %1085 = vector.load %arg11[%1084, %c0_521, %c0_522] : memref<8x1x16xf32, #tpu.memory_space<vmem>>, vector<1x1x16xf32>
    %1086 = vector.shape_cast %1085 : vector<1x1x16xf32> to vector<1x16xf32>
    %1087 = vector.shape_cast %1076 : vector<1x16xf32> to vector<1x1x16xf32>
    tpu.vector_store %arg11[%1084, %c0_521, %c0_522], %1087 {strides = array<i32>} : memref<8x1x16xf32, #tpu.memory_space<vmem>>, vector<1x1x16xf32>,
    %c7_i32_523 = arith.constant 7 : i32
    %1088 = arith.subi %c7_i32_523, %c7_i32_498 : i32
    %1089 = arith.index_cast %1088 : i32 to index
    %c0_524 = arith.constant 0 : index
    %c0_525 = arith.constant 0 : index
    %1090 = vector.load %arg12[%1089, %c0_524, %c0_525] : memref<8x1x16xf32, #tpu.memory_space<vmem>>, vector<1x1x16xf32>
    %1091 = vector.shape_cast %1090 : vector<1x1x16xf32> to vector<1x16xf32>
    %1092 = vector.shape_cast %1079 : vector<1x16xf32> to vector<1x1x16xf32>
    tpu.vector_store %arg12[%1089, %c0_524, %c0_525], %1092 {strides = array<i32>} : memref<8x1x16xf32, #tpu.memory_space<vmem>>, vector<1x1x16xf32>,
    %c8_i32_526 = arith.constant 8 : i32
    %c0_527 = arith.constant 0 : index
    %c0_528 = arith.constant 0 : index
    %c0_529 = arith.constant 0 : index
    %1093 = vector.load %arg11[%c0_527, %c0_528, %c0_529] : memref<8x1x16xf32, #tpu.memory_space<vmem>>, vector<1x1x16xf32>
    %1094 = vector.shape_cast %1093 : vector<1x1x16xf32> to vector<1x16xf32>
    %c0_530 = arith.constant 0 : index
    %c0_531 = arith.constant 0 : index
    %c0_532 = arith.constant 0 : index
    %1095 = vector.load %arg8[%c0_530, %c0_531, %c0_532] : memref<1x8x32xf32, #tpu.memory_space<vmem>>, vector<1x1x16xf32>
    %1096 = vector.shape_cast %1095 : vector<1x1x16xf32> to vector<1x16xf32>
    %1097 = vector.shape_cast %1094 : vector<1x16xf32> to vector<1x1x16xf32>
    tpu.vector_store %arg8[%c0_530, %c0_531, %c0_532], %1097 {strides = array<i32>} : memref<1x8x32xf32, #tpu.memory_space<vmem>>, vector<1x1x16xf32>,
    %c0_533 = arith.constant 0 : index
    %c0_534 = arith.constant 0 : index
    %c0_535 = arith.constant 0 : index
    %1098 = vector.load %arg12[%c0_533, %c0_534, %c0_535] : memref<8x1x16xf32, #tpu.memory_space<vmem>>, vector<1x1x16xf32>
    %1099 = vector.shape_cast %1098 : vector<1x1x16xf32> to vector<1x16xf32>
    %c0_536 = arith.constant 0 : index
    %c0_537 = arith.constant 0 : index
    %c16_538 = arith.constant 16 : index
    %1100 = vector.load %arg8[%c0_536, %c0_537, %c16_538] : memref<1x8x32xf32, #tpu.memory_space<vmem>>, vector<1x1x16xf32>
    %1101 = vector.shape_cast %1100 : vector<1x1x16xf32> to vector<1x16xf32>
    %1102 = vector.shape_cast %1099 : vector<1x16xf32> to vector<1x1x16xf32>
    tpu.vector_store %arg8[%c0_536, %c0_537, %c16_538], %1102 {strides = array<i32>} : memref<1x8x32xf32, #tpu.memory_space<vmem>>, vector<1x1x16xf32>,
    %c1_539 = arith.constant 1 : index
    %c0_540 = arith.constant 0 : index
    %c0_541 = arith.constant 0 : index
    %1103 = vector.load %arg11[%c1_539, %c0_540, %c0_541] : memref<8x1x16xf32, #tpu.memory_space<vmem>>, vector<1x1x16xf32>
    %1104 = vector.shape_cast %1103 : vector<1x1x16xf32> to vector<1x16xf32>
    %c0_542 = arith.constant 0 : index
    %c1_543 = arith.constant 1 : index
    %c0_544 = arith.constant 0 : index
    %1105 = vector.load %arg8[%c0_542, %c1_543, %c0_544] : memref<1x8x32xf32, #tpu.memory_space<vmem>>, vector<1x1x16xf32>
    %1106 = vector.shape_cast %1105 : vector<1x1x16xf32> to vector<1x16xf32>
    %1107 = vector.shape_cast %1104 : vector<1x16xf32> to vector<1x1x16xf32>
    tpu.vector_store %arg8[%c0_542, %c1_543, %c0_544], %1107 {strides = array<i32>} : memref<1x8x32xf32, #tpu.memory_space<vmem>>, vector<1x1x16xf32>,
    %c1_545 = arith.constant 1 : index
    %c0_546 = arith.constant 0 : index
    %c0_547 = arith.constant 0 : index
    %1108 = vector.load %arg12[%c1_545, %c0_546, %c0_547] : memref<8x1x16xf32, #tpu.memory_space<vmem>>, vector<1x1x16xf32>
    %1109 = vector.shape_cast %1108 : vector<1x1x16xf32> to vector<1x16xf32>
    %c0_548 = arith.constant 0 : index
    %c1_549 = arith.constant 1 : index
    %c16_550 = arith.constant 16 : index
    %1110 = vector.load %arg8[%c0_548, %c1_549, %c16_550] : memref<1x8x32xf32, #tpu.memory_space<vmem>>, vector<1x1x16xf32>
    %1111 = vector.shape_cast %1110 : vector<1x1x16xf32> to vector<1x16xf32>
    %1112 = vector.shape_cast %1109 : vector<1x16xf32> to vector<1x1x16xf32>
    tpu.vector_store %arg8[%c0_548, %c1_549, %c16_550], %1112 {strides = array<i32>} : memref<1x8x32xf32, #tpu.memory_space<vmem>>, vector<1x1x16xf32>,
    %c2_551 = arith.constant 2 : index
    %c0_552 = arith.constant 0 : index
    %c0_553 = arith.constant 0 : index
    %1113 = vector.load %arg11[%c2_551, %c0_552, %c0_553] : memref<8x1x16xf32, #tpu.memory_space<vmem>>, vector<1x1x16xf32>
    %1114 = vector.shape_cast %1113 : vector<1x1x16xf32> to vector<1x16xf32>
    %c0_554 = arith.constant 0 : index
    %c2_555 = arith.constant 2 : index
    %c0_556 = arith.constant 0 : index
    %1115 = vector.load %arg8[%c0_554, %c2_555, %c0_556] : memref<1x8x32xf32, #tpu.memory_space<vmem>>, vector<1x1x16xf32>
    %1116 = vector.shape_cast %1115 : vector<1x1x16xf32> to vector<1x16xf32>
    %1117 = vector.shape_cast %1114 : vector<1x16xf32> to vector<1x1x16xf32>
    tpu.vector_store %arg8[%c0_554, %c2_555, %c0_556], %1117 {strides = array<i32>} : memref<1x8x32xf32, #tpu.memory_space<vmem>>, vector<1x1x16xf32>,
    %c2_557 = arith.constant 2 : index
    %c0_558 = arith.constant 0 : index
    %c0_559 = arith.constant 0 : index
    %1118 = vector.load %arg12[%c2_557, %c0_558, %c0_559] : memref<8x1x16xf32, #tpu.memory_space<vmem>>, vector<1x1x16xf32>
    %1119 = vector.shape_cast %1118 : vector<1x1x16xf32> to vector<1x16xf32>
    %c0_560 = arith.constant 0 : index
    %c2_561 = arith.constant 2 : index
    %c16_562 = arith.constant 16 : index
    %1120 = vector.load %arg8[%c0_560, %c2_561, %c16_562] : memref<1x8x32xf32, #tpu.memory_space<vmem>>, vector<1x1x16xf32>
    %1121 = vector.shape_cast %1120 : vector<1x1x16xf32> to vector<1x16xf32>
    %1122 = vector.shape_cast %1119 : vector<1x16xf32> to vector<1x1x16xf32>
    tpu.vector_store %arg8[%c0_560, %c2_561, %c16_562], %1122 {strides = array<i32>} : memref<1x8x32xf32, #tpu.memory_space<vmem>>, vector<1x1x16xf32>,
    %c3_563 = arith.constant 3 : index
    %c0_564 = arith.constant 0 : index
    %c0_565 = arith.constant 0 : index
    %1123 = vector.load %arg11[%c3_563, %c0_564, %c0_565] : memref<8x1x16xf32, #tpu.memory_space<vmem>>, vector<1x1x16xf32>
    %1124 = vector.shape_cast %1123 : vector<1x1x16xf32> to vector<1x16xf32>
    %c0_566 = arith.constant 0 : index
    %c3_567 = arith.constant 3 : index
    %c0_568 = arith.constant 0 : index
    %1125 = vector.load %arg8[%c0_566, %c3_567, %c0_568] : memref<1x8x32xf32, #tpu.memory_space<vmem>>, vector<1x1x16xf32>
    %1126 = vector.shape_cast %1125 : vector<1x1x16xf32> to vector<1x16xf32>
    %1127 = vector.shape_cast %1124 : vector<1x16xf32> to vector<1x1x16xf32>
    tpu.vector_store %arg8[%c0_566, %c3_567, %c0_568], %1127 {strides = array<i32>} : memref<1x8x32xf32, #tpu.memory_space<vmem>>, vector<1x1x16xf32>,
    %c3_569 = arith.constant 3 : index
    %c0_570 = arith.constant 0 : index
    %c0_571 = arith.constant 0 : index
    %1128 = vector.load %arg12[%c3_569, %c0_570, %c0_571] : memref<8x1x16xf32, #tpu.memory_space<vmem>>, vector<1x1x16xf32>
    %1129 = vector.shape_cast %1128 : vector<1x1x16xf32> to vector<1x16xf32>
    %c0_572 = arith.constant 0 : index
    %c3_573 = arith.constant 3 : index
    %c16_574 = arith.constant 16 : index
    %1130 = vector.load %arg8[%c0_572, %c3_573, %c16_574] : memref<1x8x32xf32, #tpu.memory_space<vmem>>, vector<1x1x16xf32>
    %1131 = vector.shape_cast %1130 : vector<1x1x16xf32> to vector<1x16xf32>
    %1132 = vector.shape_cast %1129 : vector<1x16xf32> to vector<1x1x16xf32>
    tpu.vector_store %arg8[%c0_572, %c3_573, %c16_574], %1132 {strides = array<i32>} : memref<1x8x32xf32, #tpu.memory_space<vmem>>, vector<1x1x16xf32>,
    %c4_575 = arith.constant 4 : index
    %c0_576 = arith.constant 0 : index
    %c0_577 = arith.constant 0 : index
    %1133 = vector.load %arg11[%c4_575, %c0_576, %c0_577] : memref<8x1x16xf32, #tpu.memory_space<vmem>>, vector<1x1x16xf32>
    %1134 = vector.shape_cast %1133 : vector<1x1x16xf32> to vector<1x16xf32>
    %c0_578 = arith.constant 0 : index
    %c4_579 = arith.constant 4 : index
    %c0_580 = arith.constant 0 : index
    %1135 = vector.load %arg8[%c0_578, %c4_579, %c0_580] : memref<1x8x32xf32, #tpu.memory_space<vmem>>, vector<1x1x16xf32>
    %1136 = vector.shape_cast %1135 : vector<1x1x16xf32> to vector<1x16xf32>
    %1137 = vector.shape_cast %1134 : vector<1x16xf32> to vector<1x1x16xf32>
    tpu.vector_store %arg8[%c0_578, %c4_579, %c0_580], %1137 {strides = array<i32>} : memref<1x8x32xf32, #tpu.memory_space<vmem>>, vector<1x1x16xf32>,
    %c4_581 = arith.constant 4 : index
    %c0_582 = arith.constant 0 : index
    %c0_583 = arith.constant 0 : index
    %1138 = vector.load %arg12[%c4_581, %c0_582, %c0_583] : memref<8x1x16xf32, #tpu.memory_space<vmem>>, vector<1x1x16xf32>
    %1139 = vector.shape_cast %1138 : vector<1x1x16xf32> to vector<1x16xf32>
    %c0_584 = arith.constant 0 : index
    %c4_585 = arith.constant 4 : index
    %c16_586 = arith.constant 16 : index
    %1140 = vector.load %arg8[%c0_584, %c4_585, %c16_586] : memref<1x8x32xf32, #tpu.memory_space<vmem>>, vector<1x1x16xf32>
    %1141 = vector.shape_cast %1140 : vector<1x1x16xf32> to vector<1x16xf32>
    %1142 = vector.shape_cast %1139 : vector<1x16xf32> to vector<1x1x16xf32>
    tpu.vector_store %arg8[%c0_584, %c4_585, %c16_586], %1142 {strides = array<i32>} : memref<1x8x32xf32, #tpu.memory_space<vmem>>, vector<1x1x16xf32>,
    %c5_587 = arith.constant 5 : index
    %c0_588 = arith.constant 0 : index
    %c0_589 = arith.constant 0 : index
    %1143 = vector.load %arg11[%c5_587, %c0_588, %c0_589] : memref<8x1x16xf32, #tpu.memory_space<vmem>>, vector<1x1x16xf32>
    %1144 = vector.shape_cast %1143 : vector<1x1x16xf32> to vector<1x16xf32>
    %c0_590 = arith.constant 0 : index
    %c5_591 = arith.constant 5 : index
    %c0_592 = arith.constant 0 : index
    %1145 = vector.load %arg8[%c0_590, %c5_591, %c0_592] : memref<1x8x32xf32, #tpu.memory_space<vmem>>, vector<1x1x16xf32>
    %1146 = vector.shape_cast %1145 : vector<1x1x16xf32> to vector<1x16xf32>
    %1147 = vector.shape_cast %1144 : vector<1x16xf32> to vector<1x1x16xf32>
    tpu.vector_store %arg8[%c0_590, %c5_591, %c0_592], %1147 {strides = array<i32>} : memref<1x8x32xf32, #tpu.memory_space<vmem>>, vector<1x1x16xf32>,
    %c5_593 = arith.constant 5 : index
    %c0_594 = arith.constant 0 : index
    %c0_595 = arith.constant 0 : index
    %1148 = vector.load %arg12[%c5_593, %c0_594, %c0_595] : memref<8x1x16xf32, #tpu.memory_space<vmem>>, vector<1x1x16xf32>
    %1149 = vector.shape_cast %1148 : vector<1x1x16xf32> to vector<1x16xf32>
    %c0_596 = arith.constant 0 : index
    %c5_597 = arith.constant 5 : index
    %c16_598 = arith.constant 16 : index
    %1150 = vector.load %arg8[%c0_596, %c5_597, %c16_598] : memref<1x8x32xf32, #tpu.memory_space<vmem>>, vector<1x1x16xf32>
    %1151 = vector.shape_cast %1150 : vector<1x1x16xf32> to vector<1x16xf32>
    %1152 = vector.shape_cast %1149 : vector<1x16xf32> to vector<1x1x16xf32>
    tpu.vector_store %arg8[%c0_596, %c5_597, %c16_598], %1152 {strides = array<i32>} : memref<1x8x32xf32, #tpu.memory_space<vmem>>, vector<1x1x16xf32>,
    %c6_599 = arith.constant 6 : index
    %c0_600 = arith.constant 0 : index
    %c0_601 = arith.constant 0 : index
    %1153 = vector.load %arg11[%c6_599, %c0_600, %c0_601] : memref<8x1x16xf32, #tpu.memory_space<vmem>>, vector<1x1x16xf32>
    %1154 = vector.shape_cast %1153 : vector<1x1x16xf32> to vector<1x16xf32>
    %c0_602 = arith.constant 0 : index
    %c6_603 = arith.constant 6 : index
    %c0_604 = arith.constant 0 : index
    %1155 = vector.load %arg8[%c0_602, %c6_603, %c0_604] : memref<1x8x32xf32, #tpu.memory_space<vmem>>, vector<1x1x16xf32>
    %1156 = vector.shape_cast %1155 : vector<1x1x16xf32> to vector<1x16xf32>
    %1157 = vector.shape_cast %1154 : vector<1x16xf32> to vector<1x1x16xf32>
    tpu.vector_store %arg8[%c0_602, %c6_603, %c0_604], %1157 {strides = array<i32>} : memref<1x8x32xf32, #tpu.memory_space<vmem>>, vector<1x1x16xf32>,
    %c6_605 = arith.constant 6 : index
    %c0_606 = arith.constant 0 : index
    %c0_607 = arith.constant 0 : index
    %1158 = vector.load %arg12[%c6_605, %c0_606, %c0_607] : memref<8x1x16xf32, #tpu.memory_space<vmem>>, vector<1x1x16xf32>
    %1159 = vector.shape_cast %1158 : vector<1x1x16xf32> to vector<1x16xf32>
    %c0_608 = arith.constant 0 : index
    %c6_609 = arith.constant 6 : index
    %c16_610 = arith.constant 16 : index
    %1160 = vector.load %arg8[%c0_608, %c6_609, %c16_610] : memref<1x8x32xf32, #tpu.memory_space<vmem>>, vector<1x1x16xf32>
    %1161 = vector.shape_cast %1160 : vector<1x1x16xf32> to vector<1x16xf32>
    %1162 = vector.shape_cast %1159 : vector<1x16xf32> to vector<1x1x16xf32>
    tpu.vector_store %arg8[%c0_608, %c6_609, %c16_610], %1162 {strides = array<i32>} : memref<1x8x32xf32, #tpu.memory_space<vmem>>, vector<1x1x16xf32>,
    %c7_611 = arith.constant 7 : index
    %c0_612 = arith.constant 0 : index
    %c0_613 = arith.constant 0 : index
    %1163 = vector.load %arg11[%c7_611, %c0_612, %c0_613] : memref<8x1x16xf32, #tpu.memory_space<vmem>>, vector<1x1x16xf32>
    %1164 = vector.shape_cast %1163 : vector<1x1x16xf32> to vector<1x16xf32>
    %c0_614 = arith.constant 0 : index
    %c7_615 = arith.constant 7 : index
    %c0_616 = arith.constant 0 : index
    %1165 = vector.load %arg8[%c0_614, %c7_615, %c0_616] : memref<1x8x32xf32, #tpu.memory_space<vmem>>, vector<1x1x16xf32>
    %1166 = vector.shape_cast %1165 : vector<1x1x16xf32> to vector<1x16xf32>
    %1167 = vector.shape_cast %1164 : vector<1x16xf32> to vector<1x1x16xf32>
    tpu.vector_store %arg8[%c0_614, %c7_615, %c0_616], %1167 {strides = array<i32>} : memref<1x8x32xf32, #tpu.memory_space<vmem>>, vector<1x1x16xf32>,
    %c7_617 = arith.constant 7 : index
    %c0_618 = arith.constant 0 : index
    %c0_619 = arith.constant 0 : index
    %1168 = vector.load %arg12[%c7_617, %c0_618, %c0_619] : memref<8x1x16xf32, #tpu.memory_space<vmem>>, vector<1x1x16xf32>
    %1169 = vector.shape_cast %1168 : vector<1x1x16xf32> to vector<1x16xf32>
    %c0_620 = arith.constant 0 : index
    %c7_621 = arith.constant 7 : index
    %c16_622 = arith.constant 16 : index
    %1170 = vector.load %arg8[%c0_620, %c7_621, %c16_622] : memref<1x8x32xf32, #tpu.memory_space<vmem>>, vector<1x1x16xf32>
    %1171 = vector.shape_cast %1170 : vector<1x1x16xf32> to vector<1x16xf32>
    %1172 = vector.shape_cast %1169 : vector<1x16xf32> to vector<1x1x16xf32>
    tpu.vector_store %arg8[%c0_620, %c7_621, %c16_622], %1172 {strides = array<i32>} : memref<1x8x32xf32, #tpu.memory_space<vmem>>, vector<1x1x16xf32>,
    return
  }
  func.func @transform_0(%arg0: i32) -> (i32, i32, i32) {
    %c0_i32 = arith.constant 0 : i32
    %c0_i32_0 = arith.constant 0 : i32
    %c0_i32_1 = arith.constant 0 : i32
    return %arg0, %c0_i32, %c0_i32_0 : i32, i32, i32
  }
  func.func @transform_1(%arg0: i32) -> (i32, i32) {
    %c0_i32 = arith.constant 0 : i32
    %c0_i32_0 = arith.constant 0 : i32
    %c0_i32_1 = arith.constant 0 : i32
    return %c0_i32, %c0_i32_0 : i32, i32
  }
  func.func @transform_2(%arg0: i32) -> (i32, i32) {
    %c0_i32 = arith.constant 0 : i32
    %c0_i32_0 = arith.constant 0 : i32
    %c0_i32_1 = arith.constant 0 : i32
    return %c0_i32, %c0_i32_0 : i32, i32
  }
  func.func @transform_3(%arg0: i32) -> (i32, i32) {
    %c0_i32 = arith.constant 0 : i32
    %c0_i32_0 = arith.constant 0 : i32
    %c0_i32_1 = arith.constant 0 : i32
    return %c0_i32, %c0_i32_0 : i32, i32
  }
  func.func @transform_4(%arg0: i32) -> (i32, i32) {
    %c0_i32 = arith.constant 0 : i32
    %c0_i32_0 = arith.constant 0 : i32
    %c0_i32_1 = arith.constant 0 : i32
    return %c0_i32, %c0_i32_0 : i32, i32
  }
  func.func @transform_5(%arg0: i32) -> (i32, i32) {
    %c0_i32 = arith.constant 0 : i32
    %c0_i32_0 = arith.constant 0 : i32
    %c0_i32_1 = arith.constant 0 : i32
    return %c0_i32, %c0_i32_0 : i32, i32
  }
  func.func @transform_6(%arg0: i32) -> (i32, i32) {
    %c0_i32 = arith.constant 0 : i32
    %c0_i32_0 = arith.constant 0 : i32
    %c0_i32_1 = arith.constant 0 : i32
    return %c0_i32, %c0_i32_0 : i32, i32
  }
  func.func @transform_7(%arg0: i32) -> (i32, i32, i32) {
    %c0_i32 = arith.constant 0 : i32
    %c0_i32_0 = arith.constant 0 : i32
    %c0_i32_1 = arith.constant 0 : i32
    return %arg0, %c0_i32, %c0_i32_0 : i32, i32, i32
  }
}

</mosaic_0001>

<llo_original>
// kernel: forward.3
$region0: #{forward.3}
  #allocation0 [shape = 'u32[]', space=smem, size = 0x4, offset = 0x4, fixed_abs, tag = 'smem constant byte address 0x4 - core index']
  #allocation1 [shape = 'u32[144,128]{1,0:T(1,128)}', space=vmem, size = 0x12000, scoped, tag = 'internal scratch']
  %s0 = inlined_call_operand.vmem [shape: f32[2,8,32], index: 0, kind: input, shape index: {}]
  %s1 = inlined_call_operand.vmem [shape: bf16[2,32,96], index: 1, kind: input, shape index: {}]
  %s2 = inlined_call_operand.vmem [shape: f32[2,1,96], index: 2, kind: input, shape index: {}]
  %s3 = inlined_call_operand.vmem [shape: bf16[2,32,32], index: 3, kind: input, shape index: {}]
  %s4 = inlined_call_operand.vmem [shape: f32[2,1,32], index: 4, kind: input, shape index: {}]
  %s5 = inlined_call_operand.vmem [shape: f32[2,1,32], index: 5, kind: input, shape index: {}]
  %s6 = inlined_call_operand.vmem [shape: f32[2,1,32], index: 6, kind: input, shape index: {}]
  %s7 = inlined_call_operand.vmem [shape: bf16[2,32,64], index: 7, kind: input, shape index: {}]
  %s8 = inlined_call_operand.vmem [shape: f32[2,1,64], index: 8, kind: input, shape index: {}]
  %s9 = inlined_call_operand.vmem [shape: bf16[2,64,32], index: 9, kind: input, shape index: {}]
  %s10 = inlined_call_operand.vmem [shape: f32[2,1,32], index: 10, kind: input, shape index: {}]
  %s11 = inlined_call_operand.vmem [shape: f32[2,1,32], index: 11, kind: input, shape index: {}]
  %s12 = inlined_call_operand.vmem [shape: f32[2,1,32], index: 12, kind: input, shape index: {}]
  %s13 = inlined_call_operand.vmem [shape: bf16[32,4], index: 13, kind: input, shape index: {}]
  %s14 = inlined_call_operand.vmem [shape: f32[1,4], index: 14, kind: input, shape index: {}]
  %s15 = inlined_call_operand.hbm [shape: f32[2,1,4], index: 15, kind: output, shape index: {}]
  %s16 = sld [smem:[#allocation0]]
  $region93: #{forward.3} parent=0
    _
  %s18 = ssub.s32 1, %s16
  %s19 = scalar_select 0, %s18, %s16
  $region1: #{forward.3} parent=0
    #allocation2 [shape = 'u8[1024]{0}', space=vmem, size = 0x400, scoped, tag = 'output window, operand 0']
    #allocation3 [shape = 's32[2]{0}', space=sflag, size = 0x8, scoped, tag = 'scoped memory for forward.3']
    %20 = vsyncpa [#allocation3], 0
    %s21 = scalar_lea.sflag [#allocation3], 1
    %22 = vsyncpa %s21, 0
    loop: start=0, step=1, limit=4
    $region2: #{forward.3} parent=1 // loop_pre_header
      _
    $region3: #{forward.3} parent=1 // loop_header
      %s24 = sphi 0, %s28
      %p25 = scmp.ge.s32.totalorder %s24, 4
      %s34 = sphi 0, %s36
      %s37 = sphi 0, %s34
      %s38 = sphi 0, %s37
      %s54 = sphi 0, %s38
      %s58 = sphi 0, %s58
      %s60 = sphi 0, %s58
      %s61 = sphi 0, %s60
      %s75 = sphi 0, %s61
      %s79 = sphi 0, %s79
      %s81 = sphi 0, %s79
      %s82 = sphi 0, %s81
      %s96 = sphi 0, %s82
      %s100 = sphi 0, %s100
      %s102 = sphi 0, %s100
      %s103 = sphi 0, %s102
      %s117 = sphi 0, %s103
      %s121 = sphi 0, %s121
      %s123 = sphi 0, %s121
      %s124 = sphi 0, %s123
      %s138 = sphi 0, %s124
      %s142 = sphi 0, %s142
      %s144 = sphi 0, %s142
      %s145 = sphi 0, %s144
      %s159 = sphi 0, %s145
      %s163 = sphi 0, %s163
      %s165 = sphi 0, %s163
      %s166 = sphi 0, %s165
      %s180 = sphi 0, %s166
      %s184 = sphi 0, %s184
      %s186 = sphi 0, %s184
      %s187 = sphi 0, %s186
      %s201 = sphi 0, %s187
      %s205 = sphi 0, %s205
      %s207 = sphi 0, %s205
      %s208 = sphi 0, %s207
      %s222 = sphi 0, %s208
      %s226 = sphi 0, %s226
      %s228 = sphi 0, %s226
      %s229 = sphi 0, %s228
      %s243 = sphi 0, %s229
      %s247 = sphi 0, %s247
      %s249 = sphi 0, %s247
      %s250 = sphi 0, %s249
      %s264 = sphi 0, %s250
      %s268 = sphi 0, %s268
      %s270 = sphi 0, %s268
      %s271 = sphi 0, %s270
      %s285 = sphi 0, %s271
      %s289 = sphi 0, %s289
      %s291 = sphi 0, %s289
      %s292 = sphi 0, %s291
      %s306 = sphi 0, %s292
      %s310 = sphi 0, %s310
      %s312 = sphi 0, %s310
      %s313 = sphi 0, %s312
      %s327 = sphi 0, %s313
      %s331 = sphi 0, %s331
      %s333 = sphi 0, %s331
      %s334 = sphi 0, %s333
      %s348 = sphi 0, %s334
      %s354 = sphi 0, %s356
      %s357 = sphi 0, %s354
      %s358 = sphi 0, %s357
      %s374 = sphi 0, %s358
    $region4: #{forward.3} parent=1 // loop_header_branch
      %27 = sbr.rel (%p25) target = $region8
    $region5: #{forward.3} parent=1 // loop_body
      %s29 = ssub.s32 %s24, 1
      %s30 = ssub.s32 %s24, 2
      %s31 = sadd.s32 %s24, 1
      %s32 = ssub.s32 %s24, %s31
      %p33 = scmp.eq.s32.totalorder %s32, 0
      %s35 = sadd.s32 %s34, 1
      %s36 = scalar_select %p33, %s34, %s35
      %p39 = pneg %p33
      %p40 = scmp.eq.s32.totalorder %s24, 1
      %p41 = por %p39, %p40
      %p42 = scmp.ne.s32.totalorder %s34, %s37
      %p43 = scmp.eq.s32.totalorder %s24, 0
      %p44 = por %p42, %p43
      %p45 = scmp.ne.s32.totalorder %s34, %s37
      %p46 = scmp.eq.s32.totalorder %s29, 1
      %p47 = por %p45, %p46
      %p48 = scmp.ne.s32.totalorder %s37, %s38
      %p49 = scmp.eq.s32.totalorder %s29, 0
      %p50 = por %p48, %p49
      %p51 = scmp.ne.s32.totalorder %s37, %s38
      %p52 = scmp.eq.s32.totalorder %s30, 1
      %p53 = por %p51, %p52
      %p55 = scmp.ne.s32.totalorder %s38, %s54
      %p56 = scmp.eq.s32.totalorder %s30, 0
      %p57 = por %p55, %p56
      %s59 = sadd.s32 %s58, 1
      %p62 = scmp.eq.s32.totalorder %s24, 1
      %p63 = scmp.ne.s32.totalorder %s58, %s60
      %p64 = scmp.eq.s32.totalorder %s24, 0
      %p65 = por %p63, %p64
      %p66 = scmp.ne.s32.totalorder %s58, %s60
      %p67 = scmp.eq.s32.totalorder %s29, 1
      %p68 = por %p66, %p67
      %p69 = scmp.ne.s32.totalorder %s60, %s61
      %p70 = scmp.eq.s32.totalorder %s29, 0
      %p71 = por %p69, %p70
      %p72 = scmp.ne.s32.totalorder %s60, %s61
      %p73 = scmp.eq.s32.totalorder %s30, 1
      %p74 = por %p72, %p73
      %p76 = scmp.ne.s32.totalorder %s61, %s75
      %p77 = scmp.eq.s32.totalorder %s30, 0
      %p78 = por %p76, %p77
      %s80 = sadd.s32 %s79, 1
      %p83 = scmp.eq.s32.totalorder %s24, 1
      %p84 = scmp.ne.s32.totalorder %s79, %s81
      %p85 = scmp.eq.s32.totalorder %s24, 0
      %p86 = por %p84, %p85
      %p87 = scmp.ne.s32.totalorder %s79, %s81
      %p88 = scmp.eq.s32.totalorder %s29, 1
      %p89 = por %p87, %p88
      %p90 = scmp.ne.s32.totalorder %s81, %s82
      %p91 = scmp.eq.s32.totalorder %s29, 0
      %p92 = por %p90, %p91
      %p93 = scmp.ne.s32.totalorder %s81, %s82
      %p94 = scmp.eq.s32.totalorder %s30, 1
      %p95 = por %p93, %p94
      %p97 = scmp.ne.s32.totalorder %s82, %s96
      %p98 = scmp.eq.s32.totalorder %s30, 0
      %p99 = por %p97, %p98
      %s101 = sadd.s32 %s100, 1
      %p104 = scmp.eq.s32.totalorder %s24, 1
      %p105 = scmp.ne.s32.totalorder %s100, %s102
      %p106 = scmp.eq.s32.totalorder %s24, 0
      %p107 = por %p105, %p106
      %p108 = scmp.ne.s32.totalorder %s100, %s102
      %p109 = scmp.eq.s32.totalorder %s29, 1
      %p110 = por %p108, %p109
      %p111 = scmp.ne.s32.totalorder %s102, %s103
      %p112 = scmp.eq.s32.totalorder %s29, 0
      %p113 = por %p111, %p112
      %p114 = scmp.ne.s32.totalorder %s102, %s103
      %p115 = scmp.eq.s32.totalorder %s30, 1
      %p116 = por %p114, %p115
      %p118 = scmp.ne.s32.totalorder %s103, %s117
      %p119 = scmp.eq.s32.totalorder %s30, 0
      %p120 = por %p118, %p119
      %s122 = sadd.s32 %s121, 1
      %p125 = scmp.eq.s32.totalorder %s24, 1
      %p126 = scmp.ne.s32.totalorder %s121, %s123
      %p127 = scmp.eq.s32.totalorder %s24, 0
      %p128 = por %p126, %p127
      %p129 = scmp.ne.s32.totalorder %s121, %s123
      %p130 = scmp.eq.s32.totalorder %s29, 1
      %p131 = por %p129, %p130
      %p132 = scmp.ne.s32.totalorder %s123, %s124
      %p133 = scmp.eq.s32.totalorder %s29, 0
      %p134 = por %p132, %p133
      %p135 = scmp.ne.s32.totalorder %s123, %s124
      %p136 = scmp.eq.s32.totalorder %s30, 1
      %p137 = por %p135, %p136
      %p139 = scmp.ne.s32.totalorder %s124, %s138
      %p140 = scmp.eq.s32.totalorder %s30, 0
      %p141 = por %p139, %p140
      %s143 = sadd.s32 %s142, 1
      %p146 = scmp.eq.s32.totalorder %s24, 1
      %p147 = scmp.ne.s32.totalorder %s142, %s144
      %p148 = scmp.eq.s32.totalorder %s24, 0
      %p149 = por %p147, %p148
      %p150 = scmp.ne.s32.totalorder %s142, %s144
      %p151 = scmp.eq.s32.totalorder %s29, 1
      %p152 = por %p150, %p151
      %p153 = scmp.ne.s32.totalorder %s144, %s145
      %p154 = scmp.eq.s32.totalorder %s29, 0
      %p155 = por %p153, %p154
      %p156 = scmp.ne.s32.totalorder %s144, %s145
      %p157 = scmp.eq.s32.totalorder %s30, 1
      %p158 = por %p156, %p157
      %p160 = scmp.ne.s32.totalorder %s145, %s159
      %p161 = scmp.eq.s32.totalorder %s30, 0
      %p162 = por %p160, %p161
      %s164 = sadd.s32 %s163, 1
      %p167 = scmp.eq.s32.totalorder %s24, 1
      %p168 = scmp.ne.s32.totalorder %s163, %s165
      %p169 = scmp.eq.s32.totalorder %s24, 0
      %p170 = por %p168, %p169
      %p171 = scmp.ne.s32.totalorder %s163, %s165
      %p172 = scmp.eq.s32.totalorder %s29, 1
      %p173 = por %p171, %p172
      %p174 = scmp.ne.s32.totalorder %s165, %s166
      %p175 = scmp.eq.s32.totalorder %s29, 0
      %p176 = por %p174, %p175
      %p177 = scmp.ne.s32.totalorder %s165, %s166
      %p178 = scmp.eq.s32.totalorder %s30, 1
      %p179 = por %p177, %p178
      %p181 = scmp.ne.s32.totalorder %s166, %s180
      %p182 = scmp.eq.s32.totalorder %s30, 0
      %p183 = por %p181, %p182
      %s185 = sadd.s32 %s184, 1
      %p188 = scmp.eq.s32.totalorder %s24, 1
      %p189 = scmp.ne.s32.totalorder %s184, %s186
      %p190 = scmp.eq.s32.totalorder %s24, 0
      %p191 = por %p189, %p190
      %p192 = scmp.ne.s32.totalorder %s184, %s186
      %p193 = scmp.eq.s32.totalorder %s29, 1
      %p194 = por %p192, %p193
      %p195 = scmp.ne.s32.totalorder %s186, %s187
      %p196 = scmp.eq.s32.totalorder %s29, 0
      %p197 = por %p195, %p196
      %p198 = scmp.ne.s32.totalorder %s186, %s187
      %p199 = scmp.eq.s32.totalorder %s30, 1
      %p200 = por %p198, %p199
      %p202 = scmp.ne.s32.totalorder %s187, %s201
      %p203 = scmp.eq.s32.totalorder %s30, 0
      %p204 = por %p202, %p203
      %s206 = sadd.s32 %s205, 1
      %p209 = scmp.eq.s32.totalorder %s24, 1
      %p210 = scmp.ne.s32.totalorder %s205, %s207
      %p211 = scmp.eq.s32.totalorder %s24, 0
      %p212 = por %p210, %p211
      %p213 = scmp.ne.s32.totalorder %s205, %s207
      %p214 = scmp.eq.s32.totalorder %s29, 1
      %p215 = por %p213, %p214
      %p216 = scmp.ne.s32.totalorder %s207, %s208
      %p217 = scmp.eq.s32.totalorder %s29, 0
      %p218 = por %p216, %p217
      %p219 = scmp.ne.s32.totalorder %s207, %s208
      %p220 = scmp.eq.s32.totalorder %s30, 1
      %p221 = por %p219, %p220
      %p223 = scmp.ne.s32.totalorder %s208, %s222
      %p224 = scmp.eq.s32.totalorder %s30, 0
      %p225 = por %p223, %p224
      %s227 = sadd.s32 %s226, 1
      %p230 = scmp.eq.s32.totalorder %s24, 1
      %p231 = scmp.ne.s32.totalorder %s226, %s228
      %p232 = scmp.eq.s32.totalorder %s24, 0
      %p233 = por %p231, %p232
      %p234 = scmp.ne.s32.totalorder %s226, %s228
      %p235 = scmp.eq.s32.totalorder %s29, 1
      %p236 = por %p234, %p235
      %p237 = scmp.ne.s32.totalorder %s228, %s229
      %p238 = scmp.eq.s32.totalorder %s29, 0
      %p239 = por %p237, %p238
      %p240 = scmp.ne.s32.totalorder %s228, %s229
      %p241 = scmp.eq.s32.totalorder %s30, 1
      %p242 = por %p240, %p241
      %p244 = scmp.ne.s32.totalorder %s229, %s243
      %p245 = scmp.eq.s32.totalorder %s30, 0
      %p246 = por %p244, %p245
      %s248 = sadd.s32 %s247, 1
      %p251 = scmp.eq.s32.totalorder %s24, 1
      %p252 = scmp.ne.s32.totalorder %s247, %s249
      %p253 = scmp.eq.s32.totalorder %s24, 0
      %p254 = por %p252, %p253
      %p255 = scmp.ne.s32.totalorder %s247, %s249
      %p256 = scmp.eq.s32.totalorder %s29, 1
      %p257 = por %p255, %p256
      %p258 = scmp.ne.s32.totalorder %s249, %s250
      %p259 = scmp.eq.s32.totalorder %s29, 0
      %p260 = por %p258, %p259
      %p261 = scmp.ne.s32.totalorder %s249, %s250
      %p262 = scmp.eq.s32.totalorder %s30, 1
      %p263 = por %p261, %p262
      %p265 = scmp.ne.s32.totalorder %s250, %s264
      %p266 = scmp.eq.s32.totalorder %s30, 0
      %p267 = por %p265, %p266
      %s269 = sadd.s32 %s268, 1
      %p272 = scmp.eq.s32.totalorder %s24, 1
      %p273 = scmp.ne.s32.totalorder %s268, %s270
      %p274 = scmp.eq.s32.totalorder %s24, 0
      %p275 = por %p273, %p274
      %p276 = scmp.ne.s32.totalorder %s268, %s270
      %p277 = scmp.eq.s32.totalorder %s29, 1
      %p278 = por %p276, %p277
      %p279 = scmp.ne.s32.totalorder %s270, %s271
      %p280 = scmp.eq.s32.totalorder %s29, 0
      %p281 = por %p279, %p280
      %p282 = scmp.ne.s32.totalorder %s270, %s271
      %p283 = scmp.eq.s32.totalorder %s30, 1
      %p284 = por %p282, %p283
      %p286 = scmp.ne.s32.totalorder %s271, %s285
      %p287 = scmp.eq.s32.totalorder %s30, 0
      %p288 = por %p286, %p287
      %s290 = sadd.s32 %s289, 1
      %p293 = scmp.eq.s32.totalorder %s24, 1
      %p294 = scmp.ne.s32.totalorder %s289, %s291
      %p295 = scmp.eq.s32.totalorder %s24, 0
      %p296 = por %p294, %p295
      %p297 = scmp.ne.s32.totalorder %s289, %s291
      %p298 = scmp.eq.s32.totalorder %s29, 1
      %p299 = por %p297, %p298
      %p300 = scmp.ne.s32.totalorder %s291, %s292
      %p301 = scmp.eq.s32.totalorder %s29, 0
      %p302 = por %p300, %p301
      %p303 = scmp.ne.s32.totalorder %s291, %s292
      %p304 = scmp.eq.s32.totalorder %s30, 1
      %p305 = por %p303, %p304
      %p307 = scmp.ne.s32.totalorder %s292, %s306
      %p308 = scmp.eq.s32.totalorder %s30, 0
      %p309 = por %p307, %p308
      %s311 = sadd.s32 %s310, 1
      %p314 = scmp.eq.s32.totalorder %s24, 1
      %p315 = scmp.ne.s32.totalorder %s310, %s312
      %p316 = scmp.eq.s32.totalorder %s24, 0
      %p317 = por %p315, %p316
      %p318 = scmp.ne.s32.totalorder %s310, %s312
      %p319 = scmp.eq.s32.totalorder %s29, 1
      %p320 = por %p318, %p319
      %p321 = scmp.ne.s32.totalorder %s312, %s313
      %p322 = scmp.eq.s32.totalorder %s29, 0
      %p323 = por %p321, %p322
      %p324 = scmp.ne.s32.totalorder %s312, %s313
      %p325 = scmp.eq.s32.totalorder %s30, 1
      %p326 = por %p324, %p325
      %p328 = scmp.ne.s32.totalorder %s313, %s327
      %p329 = scmp.eq.s32.totalorder %s30, 0
      %p330 = por %p328, %p329
      %s332 = sadd.s32 %s331, 1
      %p335 = scmp.eq.s32.totalorder %s24, 1
      %p336 = scmp.ne.s32.totalorder %s331, %s333
      %p337 = scmp.eq.s32.totalorder %s24, 0
      %p338 = por %p336, %p337
      %p339 = scmp.ne.s32.totalorder %s331, %s333
      %p340 = scmp.eq.s32.totalorder %s29, 1
      %p341 = por %p339, %p340
      %p342 = scmp.ne.s32.totalorder %s333, %s334
      %p343 = scmp.eq.s32.totalorder %s29, 0
      %p344 = por %p342, %p343
      %p345 = scmp.ne.s32.totalorder %s333, %s334
      %p346 = scmp.eq.s32.totalorder %s30, 1
      %p347 = por %p345, %p346
      %p349 = scmp.ne.s32.totalorder %s334, %s348
      %p350 = scmp.eq.s32.totalorder %s30, 0
      %p351 = por %p349, %p350
      %s352 = ssub.s32 %s24, %s31
      %p353 = scmp.eq.s32.totalorder %s352, 0
      %s355 = sadd.s32 %s354, 1
      %s356 = scalar_select %p353, %s354, %s355
      %p359 = pneg %p353
      %p360 = scmp.eq.s32.totalorder %s24, 1
      %p361 = por %p359, %p360
      %p362 = scmp.ne.s32.totalorder %s354, %s357
      %p363 = scmp.eq.s32.totalorder %s24, 0
      %p364 = por %p362, %p363
      %p365 = scmp.ne.s32.totalorder %s354, %s357
      %p366 = scmp.eq.s32.totalorder %s29, 1
      %p367 = por %p365, %p366
      %p368 = scmp.ne.s32.totalorder %s357, %s358
      %p369 = scmp.eq.s32.totalorder %s29, 0
      %p370 = por %p368, %p369
      %p371 = scmp.ne.s32.totalorder %s357, %s358
      %p372 = scmp.eq.s32.totalorder %s30, 1
      %p373 = por %p371, %p372
      %p375 = scmp.ne.s32.totalorder %s358, %s374
      %p376 = scmp.eq.s32.totalorder %s30, 0
      %p377 = por %p375, %p376
      %p378 = scmp.le.s32.totalorder 1, %s24
      %p379 = scmp.lt.s32.totalorder %s24, 3
      %p380 = pnand %p378, %p379
      %p381 = pneg %p380
      // Predicated region
      $region9: #{forward.3} parent=5 // pred_check
        _
      $region10: #{forward.3} parent=5 // pred_check_branch
        %383 = sbr.rel (%p380) target = $region12
      $region11: #{forward.3} parent=5 // pred_region
        %s384 = ssub.s32 %s24, 1
        // Predicated region
        $region13: #{forward.3} parent=11 // pred_check
          %p385 = pneg %p71
        $region14: #{forward.3} parent=11 // pred_check_branch
          %387 = sbr.rel (%p385) target = $region16
        $region15: #{forward.3} parent=11 // pred_region
          _
        $region16: #{forward.3} parent=11 // pred_fallthru
          _
        // Predicated region
        $region17: #{forward.3} parent=11 // pred_check
          %p388 = pneg %p92
        $region18: #{forward.3} parent=11 // pred_check_branch
          %390 = sbr.rel (%p388) target = $region20
        $region19: #{forward.3} parent=11 // pred_region
          _
        $region20: #{forward.3} parent=11 // pred_fallthru
          _
        // Predicated region
        $region21: #{forward.3} parent=11 // pred_check
          %p391 = pneg %p113
        $region22: #{forward.3} parent=11 // pred_check_branch
          %393 = sbr.rel (%p391) target = $region24
        $region23: #{forward.3} parent=11 // pred_region
          _
        $region24: #{forward.3} parent=11 // pred_fallthru
          _
        // Predicated region
        $region25: #{forward.3} parent=11 // pred_check
          %p394 = pneg %p134
        $region26: #{forward.3} parent=11 // pred_check_branch
          %396 = sbr.rel (%p394) target = $region28
        $region27: #{forward.3} parent=11 // pred_region
          _
        $region28: #{forward.3} parent=11 // pred_fallthru
          _
        // Predicated region
        $region29: #{forward.3} parent=11 // pred_check
          %p397 = pneg %p155
        $region30: #{forward.3} parent=11 // pred_check_branch
          %399 = sbr.rel (%p397) target = $region32
        $region31: #{forward.3} parent=11 // pred_region
          _
        $region32: #{forward.3} parent=11 // pred_fallthru
          _
        // Predicated region
        $region33: #{forward.3} parent=11 // pred_check
          %p400 = pneg %p176
        $region34: #{forward.3} parent=11 // pred_check_branch
          %402 = sbr.rel (%p400) target = $region36
        $region35: #{forward.3} parent=11 // pred_region
          _
        $region36: #{forward.3} parent=11 // pred_fallthru
          _
        // Predicated region
        $region37: #{forward.3} parent=11 // pred_check
          %p403 = pneg %p197
        $region38: #{forward.3} parent=11 // pred_check_branch
          %405 = sbr.rel (%p403) target = $region40
        $region39: #{forward.3} parent=11 // pred_region
          _
        $region40: #{forward.3} parent=11 // pred_fallthru
          _
        // Predicated region
        $region41: #{forward.3} parent=11 // pred_check
          %p406 = pneg %p218
        $region42: #{forward.3} parent=11 // pred_check_branch
          %408 = sbr.rel (%p406) target = $region44
        $region43: #{forward.3} parent=11 // pred_region
          _
        $region44: #{forward.3} parent=11 // pred_fallthru
          _
        // Predicated region
        $region45: #{forward.3} parent=11 // pred_check
          %p409 = pneg %p239
        $region46: #{forward.3} parent=11 // pred_check_branch
          %411 = sbr.rel (%p409) target = $region48
        $region47: #{forward.3} parent=11 // pred_region
          _
        $region48: #{forward.3} parent=11 // pred_fallthru
          _
        // Predicated region
        $region49: #{forward.3} parent=11 // pred_check
          %p412 = pneg %p260
        $region50: #{forward.3} parent=11 // pred_check_branch
          %414 = sbr.rel (%p412) target = $region52
        $region51: #{forward.3} parent=11 // pred_region
          _
        $region52: #{forward.3} parent=11 // pred_fallthru
          _
        // Predicated region
        $region53: #{forward.3} parent=11 // pred_check
          %p415 = pneg %p281
        $region54: #{forward.3} parent=11 // pred_check_branch
          %417 = sbr.rel (%p415) target = $region56
        $region55: #{forward.3} parent=11 // pred_region
          _
        $region56: #{forward.3} parent=11 // pred_fallthru
          _
        // Predicated region
        $region57: #{forward.3} parent=11 // pred_check
          %p418 = pneg %p302
        $region58: #{forward.3} parent=11 // pred_check_branch
          %420 = sbr.rel (%p418) target = $region60
        $region59: #{forward.3} parent=11 // pred_region
          _
        $region60: #{forward.3} parent=11 // pred_fallthru
          _
        // Predicated region
        $region61: #{forward.3} parent=11 // pred_check
          %p421 = pneg %p323
        $region62: #{forward.3} parent=11 // pred_check_branch
          %423 = sbr.rel (%p421) target = $region64
        $region63: #{forward.3} parent=11 // pred_region
          _
        $region64: #{forward.3} parent=11 // pred_fallthru
          _
        // Predicated region
        $region65: #{forward.3} parent=11 // pred_check
          %p424 = pneg %p344
        $region66: #{forward.3} parent=11 // pred_check_branch
          %426 = sbr.rel (%p424) target = $region68
        $region67: #{forward.3} parent=11 // pred_region
          _
        $region68: #{forward.3} parent=11 // pred_fallthru
          _
      $region12: #{forward.3} parent=5 // pred_fallthru
        _
      %p427 = scmp.lt.s32.totalorder %s24, 2
      // Predicated region
      $region69: #{forward.3} parent=5 // pred_check
        %p428 = pneg %p427
      $region70: #{forward.3} parent=5 // pred_check_branch
        %430 = sbr.rel (%p428) target = $region72
      $region71: #{forward.3} parent=5 // pred_region
        // Predicated region
        $region73: #{forward.3} parent=71 // pred_check
          %p431 = pneg %p44
        $region74: #{forward.3} parent=71 // pred_check_branch
          %433 = sbr.rel (%p431) target = $region76
        $region75: #{forward.3} parent=71 // pred_region
          %p434 = scmp.lt.s32.totalorder %s24, 1
          %s435 = scalar_select %p434, %s24, 1
          %s436 = smul.addr %s435, 8
          %s437 = scalar_lea.vmem %s0, %s436
        $region76: #{forward.3} parent=71 // pred_fallthru
          _
      $region72: #{forward.3} parent=5 // pred_fallthru
        _
      %p438 = scmp.le.s32.totalorder 1, %s24
      %p439 = scmp.lt.s32.totalorder %s24, 3
      %p440 = pnand %p438, %p439
      %p441 = pneg %p440
      // Predicated region
      $region77: #{forward.3} parent=5 // pred_check
        _
      $region78: #{forward.3} parent=5 // pred_check_branch
        %443 = sbr.rel (%p440) target = $region80
      $region79: #{forward.3} parent=5 // pred_region
        %s444 = ssub.s32 %s24, 1
        %p445 = scmp.lt.s32.totalorder %s29, 1
        %s446 = scalar_select %p445, %s29, 1
        %s447 = smul.addr %s446, 8
        %s448 = scalar_lea.vmem %s0, %s447
        %p449 = pneg %p50
        %p450 = pneg %p47
        %p451 = pneg %p71
        %p452 = pneg %p68
        %p453 = pneg %p92
        %p454 = pneg %p89
        %p455 = pneg %p113
        %p456 = pneg %p110
        %p457 = pneg %p134
        %p458 = pneg %p131
        %p459 = pneg %p155
        %p460 = pneg %p152
        %p461 = pneg %p176
        %p462 = pneg %p173
        %p463 = pneg %p197
        %p464 = pneg %p194
        %p465 = pneg %p218
        %p466 = pneg %p215
        %p467 = pneg %p239
        %p468 = pneg %p236
        %p469 = pneg %p260
        %p470 = pneg %p257
        %p471 = pneg %p281
        %p472 = pneg %p278
        %p473 = pneg %p302
        %p474 = pneg %p299
        %p475 = pneg %p323
        %p476 = pneg %p320
        %p477 = pneg %p344
        %p478 = pneg %p341
        %p479 = pneg %p370
        %p480 = pneg %p367
        %s481 = sand.u32 %s357, 1
        %s482 = scalar_lea.sflag [#allocation3], %s481
        %s483 = sand.u32 %s357, 1
        %s484 = scalar_lea.vmem [#allocation2], %s483
        %p485 = scmp.lt.s32.totalorder %s29, 1
        %s486 = scalar_select %p485, %s29, 1
        %s487 = smul.addr %s486, 8
        %s488 = scalar_lea.vmem %s0, %s487
        %v490 = vld [vmem:[%s488] sm:$0xff]
        %v491 = vld [vmem:[%s1] sm:$0xf]
        %v492 = vld [vmem:[%s1 + $0x4] sm:$0xf]
        %v493 = vld [vmem:[%s1 + $0x8] sm:$0xf]
        %v494 = vld [vmem:[%s1 + $0xc] sm:$0xf]
        %v495 = vld [vmem:[%s2] sm:$0x1]
        %v496 = vpack.c.bf16 %v490, %v490
        %v498 = vlaneseq
        %v499 = vshrl.u32 %v498, 7
        %v500 = vsub.s32 0, %v499
        %v501 = vrot.slane %v495, %v500
        %v507 = vunpack.c.l.b16 %v491
        %v508 = vunpack.c.l.b16 %v492
        %v509 = vunpack.c.l.b16 %v493
        %v510 = vunpack.c.l.b16 %v494
        %v511 = vpack.c.b16 %v508, %v507
        %v512 = vpack.c.b16 %v510, %v509
        %vm515 = vcmask 261120
        %v517 = vsel %vm515, %v496, 0
        %519 = vmatprep.subr.bf16.mxu0 0
        %520 = vmatpush1.bf16.msra.mxu0 %v511
        %521 = vmatprep.subr.bf16.mxu0 0
        %522 = vmatpush1.bf16.msra.mxu0 %v512
        %523 = vmatprep.subr.bf16.mxu0 0
        %524 = vmatpush1.bf16.msra.mxu0 0
        %525 = vmatprep.subr.bf16.mxu0 0
        %526 = vmatpush1.bf16.msra.mxu0 0
        %527 = vmatprep.subr.bf16.mxu0 0
        %528 = vmatpush1.bf16.msra.mxu0 0
        %529 = vmatprep.subr.bf16.mxu0 0
        %530 = vmatpush1.bf16.msra.mxu0 0
        %531 = vmatprep.subr.bf16.mxu0 0
        %532 = vmatpush1.bf16.msra.mxu0 0
        %533 = vmatprep.subr.bf16.mxu0 0
        %534 = vmatpush1.bf16.msra.mxu0 0
        %535 = vmatprep.subr.bf16.mxu0 0
        %536 = vmatpush1.bf16.msra.mxu0 0
        %537 = vmatprep.subr.bf16.mxu0 0
        %538 = vmatpush1.bf16.msra.mxu0 0
        %539 = vmatprep.subr.bf16.mxu0 0
        %540 = vmatpush1.bf16.msra.mxu0 0
        %541 = vmatprep.subr.bf16.mxu0 0
        %542 = vmatpush1.bf16.msra.mxu0 0
        %543 = vmatprep.subr.bf16.mxu0 0
        %544 = vmatpush1.bf16.msra.mxu0 0
        %545 = vmatprep.subr.bf16.mxu0 0
        %546 = vmatpush1.bf16.msra.mxu0 0
        %547 = vmatprep.subr.bf16.mxu0 0
        %548 = vmatpush1.bf16.msra.mxu0 0
        %549 = vmatprep.subr.bf16.mxu0 0
        %550 = vmatpush1.bf16.msra.mxu0 0
        %551 = vmatprep.mubr.bf16.mxu0 0
        %552 = vmatmul.mubr.bf16.gmra.mrb[0].mxu0 %v517
        %v553 = vpop.f32.mrb[0].mxu0
        %v554 = vadd.f32 %v501, %v553
        %v555 = vpop.f32.mrb[0].mxu0
        %v556 = vpop.f32.mrb[0].mxu0
        %v557 = vpop.f32.mrb[0].mxu0
        %558 = vdwg.mxu0
        %v559 = vmul.f32 %v554, 0.25
        %v560 = vpack.c.bf16 %v559, %v559
        %v561 = vpack.c.bf16 %v554, %v554
        %563 = vrot.lane.b32.xlu0 %v561, 96
        %v564 = vpop.permute.xlu0 %563
        %vm565 = vcmask 130048
        %v567 = vsel %vm565, %v560, 0
        %v570 = vsel %vm565, %v564, 0
        %572 = vmatprep.subr.bf16.mxu0 0
        %573 = vmatpush1.bf16.xpose.msra.mxu0 %v570
        %574 = vmatprep.subr.bf16.mxu0 0
        %575 = vmatpush1.bf16.xpose.msra.mxu0 0
        %576 = vmatprep.subr.bf16.mxu0 0
        %577 = vmatpush1.bf16.xpose.msra.mxu0 0
        %578 = vmatprep.subr.bf16.mxu0 0
        %579 = vmatpush1.bf16.xpose.msra.mxu0 0
        %580 = vmatprep.subr.bf16.mxu0 0
        %581 = vmatpush1.bf16.xpose.msra.mxu0 0
        %582 = vmatprep.subr.bf16.mxu0 0
        %583 = vmatpush1.bf16.xpose.msra.mxu0 0
        %584 = vmatprep.subr.bf16.mxu0 0
        %585 = vmatpush1.bf16.xpose.msra.mxu0 0
        %586 = vmatprep.subr.bf16.mxu0 0
        %587 = vmatpush1.bf16.xpose.msra.mxu0 0
        %588 = vmatprep.subr.bf16.mxu0 0
        %589 = vmatpush1.bf16.xpose.msra.mxu0 0
        %590 = vmatprep.subr.bf16.mxu0 0
        %591 = vmatpush1.bf16.xpose.msra.mxu0 0
        %592 = vmatprep.subr.bf16.mxu0 0
        %593 = vmatpush1.bf16.xpose.msra.mxu0 0
        %594 = vmatprep.subr.bf16.mxu0 0
        %595 = vmatpush1.bf16.xpose.msra.mxu0 0
        %596 = vmatprep.subr.bf16.mxu0 0
        %597 = vmatpush1.bf16.xpose.msra.mxu0 0
        %598 = vmatprep.subr.bf16.mxu0 0
        %599 = vmatpush1.bf16.xpose.msra.mxu0 0
        %600 = vmatprep.subr.bf16.mxu0 0
        %601 = vmatpush1.bf16.xpose.msra.mxu0 0
        %602 = vmatprep.subr.bf16.mxu0 0
        %603 = vmatpush1.bf16.xpose.msra.mxu0 0
        %604 = vmatprep.mubr.bf16.mxu0 0
        %605 = vmatmul.mubr.bf16.gmra.mrb[0].mxu0 %v567
        %v606 = vpop.f32.mrb[0].mxu0
        %v607 = vadd.f32 0.0, %v606
        %v608 = vpop.f32.mrb[0].mxu0
        %v609 = vpop.f32.mrb[0].mxu0
        %v610 = vpop.f32.mrb[0].mxu0
        %611 = vdwg.mxu0
        %vm612 = vcmask 64512
        %v613 = vsel %vm612, %v607, -inf
        %614 = vmax.xlane.f32.xlu0 %v613
        %v615 = vpop.xlane.xlu0 %614
        %v616 = vsub.f32 %v607, %v615
        %v617 = vmul.f32 %v616, 1.442695
        %v618 = vpow.pop %v617
        %v619 = vsel %vm612, %v618, 0.0
        %620 = vadd.xlane.f32.xlu0 %v619
        %v621 = vpop.xlane.xlu0 %620
        %v622 = vrcp.pop %v621
        %v623 = vmul.f32 %v618, %v622
        %v624 = vpack.c.bf16 %v623, %v623
        %625 = vrot.lane.b32.xlu0 %v561, 64
        %v626 = vpop.permute.xlu0 %625
        %v628 = vsel %vm612, %v624, 0
        %vm630 = vcmask 1043456
        %v632 = vsel %vm630, %v626, 0
        %634 = vmatprep.subr.bf16.mxu0 0
        %635 = vmatpush1.bf16.msra.mxu0 %v632
        %636 = vmatprep.subr.bf16.mxu0 0
        %637 = vmatpush1.bf16.msra.mxu0 0
        %638 = vmatprep.subr.bf16.mxu0 0
        %639 = vmatpush1.bf16.msra.mxu0 0
        %640 = vmatprep.subr.bf16.mxu0 0
        %641 = vmatpush1.bf16.msra.mxu0 0
        %642 = vmatprep.subr.bf16.mxu0 0
        %643 = vmatpush1.bf16.msra.mxu0 0
        %644 = vmatprep.subr.bf16.mxu0 0
        %645 = vmatpush1.bf16.msra.mxu0 0
        %646 = vmatprep.subr.bf16.mxu0 0
        %647 = vmatpush1.bf16.msra.mxu0 0
        %648 = vmatprep.subr.bf16.mxu0 0
        %649 = vmatpush1.bf16.msra.mxu0 0
        %650 = vmatprep.subr.bf16.mxu0 0
        %651 = vmatpush1.bf16.msra.mxu0 0
        %652 = vmatprep.subr.bf16.mxu0 0
        %653 = vmatpush1.bf16.msra.mxu0 0
        %654 = vmatprep.subr.bf16.mxu0 0
        %655 = vmatpush1.bf16.msra.mxu0 0
        %656 = vmatprep.subr.bf16.mxu0 0
        %657 = vmatpush1.bf16.msra.mxu0 0
        %658 = vmatprep.subr.bf16.mxu0 0
        %659 = vmatpush1.bf16.msra.mxu0 0
        %660 = vmatprep.subr.bf16.mxu0 0
        %661 = vmatpush1.bf16.msra.mxu0 0
        %662 = vmatprep.subr.bf16.mxu0 0
        %663 = vmatpush1.bf16.msra.mxu0 0
        %664 = vmatprep.subr.bf16.mxu0 0
        %665 = vmatpush1.bf16.msra.mxu0 0
        %666 = vmatprep.mubr.bf16.mxu0 0
        %667 = vmatmul.mubr.bf16.gmra.mrb[0].mxu0 %v628
        %v668 = vpop.f32.mrb[0].mxu0
        %v669 = vadd.f32 0.0, %v668
        %v670 = vpop.f32.mrb[0].mxu0
        %v671 = vpop.f32.mrb[0].mxu0
        %v672 = vpop.f32.mrb[0].mxu0
        %673 = vdwg.mxu0
        %675 = vrot.lane.b32.xlu0 %v560, 112
        %v676 = vpop.permute.xlu0 %675
        %677 = vrot.lane.b32.xlu0 %v561, 80
        %v678 = vpop.permute.xlu0 %677
        %v680 = vsel %vm565, %v676, 0
        %v683 = vsel %vm565, %v678, 0
        %685 = vmatprep.subr.bf16.mxu0 0
        %686 = vmatpush1.bf16.xpose.msra.mxu0 %v683
        %687 = vmatprep.subr.bf16.mxu0 0
        %688 = vmatpush1.bf16.xpose.msra.mxu0 0
        %689 = vmatprep.subr.bf16.mxu0 0
        %690 = vmatpush1.bf16.xpose.msra.mxu0 0
        %691 = vmatprep.subr.bf16.mxu0 0
        %692 = vmatpush1.bf16.xpose.msra.mxu0 0
        %693 = vmatprep.subr.bf16.mxu0 0
        %694 = vmatpush1.bf16.xpose.msra.mxu0 0
        %695 = vmatprep.subr.bf16.mxu0 0
        %696 = vmatpush1.bf16.xpose.msra.mxu0 0
        %697 = vmatprep.subr.bf16.mxu0 0
        %698 = vmatpush1.bf16.xpose.msra.mxu0 0
        %699 = vmatprep.subr.bf16.mxu0 0
        %700 = vmatpush1.bf16.xpose.msra.mxu0 0
        %701 = vmatprep.subr.bf16.mxu0 0
        %702 = vmatpush1.bf16.xpose.msra.mxu0 0
        %703 = vmatprep.subr.bf16.mxu0 0
        %704 = vmatpush1.bf16.xpose.msra.mxu0 0
        %705 = vmatprep.subr.bf16.mxu0 0
        %706 = vmatpush1.bf16.xpose.msra.mxu0 0
        %707 = vmatprep.subr.bf16.mxu0 0
        %708 = vmatpush1.bf16.xpose.msra.mxu0 0
        %709 = vmatprep.subr.bf16.mxu0 0
        %710 = vmatpush1.bf16.xpose.msra.mxu0 0
        %711 = vmatprep.subr.bf16.mxu0 0
        %712 = vmatpush1.bf16.xpose.msra.mxu0 0
        %713 = vmatprep.subr.bf16.mxu0 0
        %714 = vmatpush1.bf16.xpose.msra.mxu0 0
        %715 = vmatprep.subr.bf16.mxu0 0
        %716 = vmatpush1.bf16.xpose.msra.mxu0 0
        %717 = vmatprep.mubr.bf16.mxu0 0
        %718 = vmatmul.mubr.bf16.gmra.mrb[0].mxu0 %v680
        %v719 = vpop.f32.mrb[0].mxu0
        %v720 = vadd.f32 0.0, %v719
        %v721 = vpop.f32.mrb[0].mxu0
        %v722 = vpop.f32.mrb[0].mxu0
        %v723 = vpop.f32.mrb[0].mxu0
        %724 = vdwg.mxu0
        %v725 = vsel %vm612, %v720, -inf
        %726 = vmax.xlane.f32.xlu0 %v725
        %v727 = vpop.xlane.xlu0 %726
        %v728 = vsub.f32 %v720, %v727
        %v729 = vmul.f32 %v728, 1.442695
        %v730 = vpow.pop %v729
        %v731 = vsel %vm612, %v730, 0.0
        %732 = vadd.xlane.f32.xlu0 %v731
        %v733 = vpop.xlane.xlu0 %732
        %v734 = vrcp.pop %v733
        %v735 = vmul.f32 %v730, %v734
        %v736 = vpack.c.bf16 %v735, %v735
        %737 = vrot.lane.b32.xlu0 %v561, 48
        %v738 = vpop.permute.xlu0 %737
        %v740 = vsel %vm612, %v736, 0
        %v743 = vsel %vm630, %v738, 0
        %745 = vmatprep.subr.bf16.mxu0 0
        %746 = vmatpush1.bf16.msra.mxu0 %v743
        %747 = vmatprep.subr.bf16.mxu0 0
        %748 = vmatpush1.bf16.msra.mxu0 0
        %749 = vmatprep.subr.bf16.mxu0 0
        %750 = vmatpush1.bf16.msra.mxu0 0
        %751 = vmatprep.subr.bf16.mxu0 0
        %752 = vmatpush1.bf16.msra.mxu0 0
        %753 = vmatprep.subr.bf16.mxu0 0
        %754 = vmatpush1.bf16.msra.mxu0 0
        %755 = vmatprep.subr.bf16.mxu0 0
        %756 = vmatpush1.bf16.msra.mxu0 0
        %757 = vmatprep.subr.bf16.mxu0 0
        %758 = vmatpush1.bf16.msra.mxu0 0
        %759 = vmatprep.subr.bf16.mxu0 0
        %760 = vmatpush1.bf16.msra.mxu0 0
        %761 = vmatprep.subr.bf16.mxu0 0
        %762 = vmatpush1.bf16.msra.mxu0 0
        %763 = vmatprep.subr.bf16.mxu0 0
        %764 = vmatpush1.bf16.msra.mxu0 0
        %765 = vmatprep.subr.bf16.mxu0 0
        %766 = vmatpush1.bf16.msra.mxu0 0
        %767 = vmatprep.subr.bf16.mxu0 0
        %768 = vmatpush1.bf16.msra.mxu0 0
        %769 = vmatprep.subr.bf16.mxu0 0
        %770 = vmatpush1.bf16.msra.mxu0 0
        %771 = vmatprep.subr.bf16.mxu0 0
        %772 = vmatpush1.bf16.msra.mxu0 0
        %773 = vmatprep.subr.bf16.mxu0 0
        %774 = vmatpush1.bf16.msra.mxu0 0
        %775 = vmatprep.subr.bf16.mxu0 0
        %776 = vmatpush1.bf16.msra.mxu0 0
        %777 = vmatprep.mubr.bf16.mxu0 0
        %778 = vmatmul.mubr.bf16.gmra.mrb[0].mxu0 %v740
        %v779 = vpop.f32.mrb[0].mxu0
        %v780 = vadd.f32 0.0, %v779
        %v781 = vpop.f32.mrb[0].mxu0
        %v782 = vpop.f32.mrb[0].mxu0
        %v783 = vpop.f32.mrb[0].mxu0
        %784 = vdwg.mxu0
        %786 = vrot.lane.b32.xlu0 %v780, 16
        %v787 = vpop.permute.xlu0 %786
        %v789 = vsel %vm565, %v669, %v787
        %v790 = vpack.c.bf16 %v789, %v789
        %v791 = vld [vmem:[%s3] sm:$0xf]
        %v792 = vld [vmem:[%s3 + $0x4] sm:$0xf]
        %v793 = vld [vmem:[%s3 + $0x8] sm:$0xf]
        %v794 = vld [vmem:[%s3 + $0xc] sm:$0xf]
        %v795 = vld [vmem:[%s4] sm:$0x1]
        %v797 = vlaneseq
        %v798 = vshrl.u32 %v797, 7
        %v799 = vsub.s32 0, %v798
        %v800 = vrot.slane %v795, %v799
        %v806 = vunpack.c.l.b16 %v791
        %v807 = vunpack.c.l.b16 %v792
        %v808 = vunpack.c.l.b16 %v793
        %v809 = vunpack.c.l.b16 %v794
        %v810 = vpack.c.b16 %v807, %v806
        %v811 = vpack.c.b16 %v809, %v808
        %v815 = vsel %vm515, %v790, 0
        %817 = vmatprep.subr.bf16.mxu0 0
        %818 = vmatpush1.bf16.msra.mxu0 %v810
        %819 = vmatprep.subr.bf16.mxu0 0
        %820 = vmatpush1.bf16.msra.mxu0 %v811
        %821 = vmatprep.subr.bf16.mxu0 0
        %822 = vmatpush1.bf16.msra.mxu0 0
        %823 = vmatprep.subr.bf16.mxu0 0
        %824 = vmatpush1.bf16.msra.mxu0 0
        %825 = vmatprep.subr.bf16.mxu0 0
        %826 = vmatpush1.bf16.msra.mxu0 0
        %827 = vmatprep.subr.bf16.mxu0 0
        %828 = vmatpush1.bf16.msra.mxu0 0
        %829 = vmatprep.subr.bf16.mxu0 0
        %830 = vmatpush1.bf16.msra.mxu0 0
        %831 = vmatprep.subr.bf16.mxu0 0
        %832 = vmatpush1.bf16.msra.mxu0 0
        %833 = vmatprep.subr.bf16.mxu0 0
        %834 = vmatpush1.bf16.msra.mxu0 0
        %835 = vmatprep.subr.bf16.mxu0 0
        %836 = vmatpush1.bf16.msra.mxu0 0
        %837 = vmatprep.subr.bf16.mxu0 0
        %838 = vmatpush1.bf16.msra.mxu0 0
        %839 = vmatprep.subr.bf16.mxu0 0
        %840 = vmatpush1.bf16.msra.mxu0 0
        %841 = vmatprep.subr.bf16.mxu0 0
        %842 = vmatpush1.bf16.msra.mxu0 0
        %843 = vmatprep.subr.bf16.mxu0 0
        %844 = vmatpush1.bf16.msra.mxu0 0
        %845 = vmatprep.subr.bf16.mxu0 0
        %846 = vmatpush1.bf16.msra.mxu0 0
        %847 = vmatprep.subr.bf16.mxu0 0
        %848 = vmatpush1.bf16.msra.mxu0 0
        %849 = vmatprep.mubr.bf16.mxu0 0
        %850 = vmatmul.mubr.bf16.gmra.mrb[0].mxu0 %v815
        %v851 = vpop.f32.mrb[0].mxu0
        %v852 = vadd.f32 %v800, %v851
        %v853 = vpop.f32.mrb[0].mxu0
        %v854 = vpop.f32.mrb[0].mxu0
        %v855 = vpop.f32.mrb[0].mxu0
        %856 = vdwg.mxu0
        %v857 = vadd.f32 %v490, %v852
        %v858 = vld [vmem:[%s5] sm:$0x1]
        %v859 = vld [vmem:[%s6] sm:$0x1]
        %v860 = vsel %vm515, %v857, 0.0
        %861 = vadd.xlane.f32.xlu0 %v860
        %v862 = vpop.xlane.xlu0 %861
        %v863 = vrcp.pop 32.0
        %v864 = vmul.f32 %v862, %v863
        %v865 = vmul.f32 %v857, %v857
        %v866 = vsel %vm515, %v865, 0.0
        %867 = vadd.xlane.f32.xlu0 %v866
        %v868 = vpop.xlane.xlu0 %867
        %v869 = vmul.f32 %v868, %v863
        %v870 = vmul.f32 %v864, %v864
        %v871 = vsub.f32 %v869, %v870
        %v872 = vsub.f32 %v857, %v864
        %v873 = vadd.f32 %v871, 1e-05
        %v874 = vrsqrt.pop %v873
        %v875 = vmul.f32 %v872, %v874
        %v877 = vlaneseq
        %v878 = vshrl.u32 %v877, 7
        %v879 = vsub.s32 0, %v878
        %v880 = vrot.slane %v858, %v879
        %v882 = vmul.f32 %v875, %v880
        %v884 = vlaneseq
        %v885 = vshrl.u32 %v884, 7
        %v886 = vsub.s32 0, %v885
        %v887 = vrot.slane %v859, %v886
        %v889 = vadd.f32 %v882, %v887
        %v890 = vpack.c.bf16 %v889, %v889
        %v891 = vld [vmem:[%s7] sm:$0xf]
        %v892 = vld [vmem:[%s7 + $0x4] sm:$0xf]
        %v893 = vld [vmem:[%s7 + $0x8] sm:$0xf]
        %v894 = vld [vmem:[%s7 + $0xc] sm:$0xf]
        %v895 = vld [vmem:[%s8] sm:$0x1]
        %v897 = vlaneseq
        %v898 = vshrl.u32 %v897, 7
        %v899 = vsub.s32 0, %v898
        %v900 = vrot.slane %v895, %v899
        %v906 = vunpack.c.l.b16 %v891
        %v907 = vunpack.c.l.b16 %v892
        %v908 = vunpack.c.l.b16 %v893
        %v909 = vunpack.c.l.b16 %v894
        %v910 = vpack.c.b16 %v907, %v906
        %v911 = vpack.c.b16 %v909, %v908
        %v915 = vsel %vm515, %v890, 0
        %917 = vmatprep.subr.bf16.mxu0 0
        %918 = vmatpush1.bf16.msra.mxu0 %v910
        %919 = vmatprep.subr.bf16.mxu0 0
        %920 = vmatpush1.bf16.msra.mxu0 %v911
        %921 = vmatprep.subr.bf16.mxu0 0
        %922 = vmatpush1.bf16.msra.mxu0 0
        %923 = vmatprep.subr.bf16.mxu0 0
        %924 = vmatpush1.bf16.msra.mxu0 0
        %925 = vmatprep.subr.bf16.mxu0 0
        %926 = vmatpush1.bf16.msra.mxu0 0
        %927 = vmatprep.subr.bf16.mxu0 0
        %928 = vmatpush1.bf16.msra.mxu0 0
        %929 = vmatprep.subr.bf16.mxu0 0
        %930 = vmatpush1.bf16.msra.mxu0 0
        %931 = vmatprep.subr.bf16.mxu0 0
        %932 = vmatpush1.bf16.msra.mxu0 0
        %933 = vmatprep.subr.bf16.mxu0 0
        %934 = vmatpush1.bf16.msra.mxu0 0
        %935 = vmatprep.subr.bf16.mxu0 0
        %936 = vmatpush1.bf16.msra.mxu0 0
        %937 = vmatprep.subr.bf16.mxu0 0
        %938 = vmatpush1.bf16.msra.mxu0 0
        %939 = vmatprep.subr.bf16.mxu0 0
        %940 = vmatpush1.bf16.msra.mxu0 0
        %941 = vmatprep.subr.bf16.mxu0 0
        %942 = vmatpush1.bf16.msra.mxu0 0
        %943 = vmatprep.subr.bf16.mxu0 0
        %944 = vmatpush1.bf16.msra.mxu0 0
        %945 = vmatprep.subr.bf16.mxu0 0
        %946 = vmatpush1.bf16.msra.mxu0 0
        %947 = vmatprep.subr.bf16.mxu0 0
        %948 = vmatpush1.bf16.msra.mxu0 0
        %949 = vmatprep.mubr.bf16.mxu0 0
        %950 = vmatmul.mubr.bf16.gmra.mrb[0].mxu0 %v915
        %v951 = vpop.f32.mrb[0].mxu0
        %v952 = vadd.f32 %v900, %v951
        %v953 = vpop.f32.mrb[0].mxu0
        %v954 = vpop.f32.mrb[0].mxu0
        %v955 = vpop.f32.mrb[0].mxu0
        %956 = vdwg.mxu0
        %v957 = vmax.f32 %v952, 0.0
        %v958 = vpack.c.bf16 %v957, %v957
        %v959 = vld [vmem:[%s9] sm:$0xf]
        %v960 = vld [vmem:[%s9 + $0x4] sm:$0xf]
        %v961 = vld [vmem:[%s9 + $0x8] sm:$0xf]
        %v962 = vld [vmem:[%s9 + $0xc] sm:$0xf]
        %v963 = vld [vmem:[%s9 + $0x10] sm:$0xf]
        %v964 = vld [vmem:[%s9 + $0x14] sm:$0xf]
        %v965 = vld [vmem:[%s9 + $0x18] sm:$0xf]
        %v966 = vld [vmem:[%s9 + $0x1c] sm:$0xf]
        %v967 = vld [vmem:[%s10] sm:$0x1]
        %v969 = vlaneseq
        %v970 = vshrl.u32 %v969, 7
        %v971 = vsub.s32 0, %v970
        %v972 = vrot.slane %v967, %v971
        %v982 = vunpack.c.l.b16 %v959
        %v983 = vunpack.c.l.b16 %v960
        %v984 = vunpack.c.l.b16 %v961
        %v985 = vunpack.c.l.b16 %v962
        %v986 = vunpack.c.l.b16 %v963
        %v987 = vunpack.c.l.b16 %v964
        %v988 = vunpack.c.l.b16 %v965
        %v989 = vunpack.c.l.b16 %v966
        %v990 = vpack.c.b16 %v983, %v982
        %v991 = vpack.c.b16 %v985, %v984
        %v992 = vpack.c.b16 %v987, %v986
        %v993 = vpack.c.b16 %v989, %v988
        %vm998 = vcmask 523264
        %v1000 = vsel %vm998, %v958, 0
        %1002 = vmatprep.subr.bf16.mxu0 0
        %1003 = vmatpush1.bf16.msra.mxu0 %v990
        %1004 = vmatprep.subr.bf16.mxu0 0
        %1005 = vmatpush1.bf16.msra.mxu0 %v991
        %1006 = vmatprep.subr.bf16.mxu0 0
        %1007 = vmatpush1.bf16.msra.mxu0 %v992
        %1008 = vmatprep.subr.bf16.mxu0 0
        %1009 = vmatpush1.bf16.msra.mxu0 %v993
        %1010 = vmatprep.subr.bf16.mxu0 0
        %1011 = vmatpush1.bf16.msra.mxu0 0
        %1012 = vmatprep.subr.bf16.mxu0 0
        %1013 = vmatpush1.bf16.msra.mxu0 0
        %1014 = vmatprep.subr.bf16.mxu0 0
        %1015 = vmatpush1.bf16.msra.mxu0 0
        %1016 = vmatprep.subr.bf16.mxu0 0
        %1017 = vmatpush1.bf16.msra.mxu0 0
        %1018 = vmatprep.subr.bf16.mxu0 0
        %1019 = vmatpush1.bf16.msra.mxu0 0
        %1020 = vmatprep.subr.bf16.mxu0 0
        %1021 = vmatpush1.bf16.msra.mxu0 0
        %1022 = vmatprep.subr.bf16.mxu0 0
        %1023 = vmatpush1.bf16.msra.mxu0 0
        %1024 = vmatprep.subr.bf16.mxu0 0
        %1025 = vmatpush1.bf16.msra.mxu0 0
        %1026 = vmatprep.subr.bf16.mxu0 0
        %1027 = vmatpush1.bf16.msra.mxu0 0
        %1028 = vmatprep.subr.bf16.mxu0 0
        %1029 = vmatpush1.bf16.msra.mxu0 0
        %1030 = vmatprep.subr.bf16.mxu0 0
        %1031 = vmatpush1.bf16.msra.mxu0 0
        %1032 = vmatprep.subr.bf16.mxu0 0
        %1033 = vmatpush1.bf16.msra.mxu0 0
        %1034 = vmatprep.mubr.bf16.mxu0 0
        %1035 = vmatmul.mubr.bf16.gmra.mrb[0].mxu0 %v1000
        %v1036 = vpop.f32.mrb[0].mxu0
        %v1037 = vadd.f32 %v972, %v1036
        %v1038 = vpop.f32.mrb[0].mxu0
        %v1039 = vpop.f32.mrb[0].mxu0
        %v1040 = vpop.f32.mrb[0].mxu0
        %1041 = vdwg.mxu0
        %v1042 = vadd.f32 %v889, %v1037
        %v1043 = vld [vmem:[%s11] sm:$0x1]
        %v1044 = vld [vmem:[%s12] sm:$0x1]
        %v1045 = vsel %vm515, %v1042, 0.0
        %1046 = vadd.xlane.f32.xlu0 %v1045
        %v1047 = vpop.xlane.xlu0 %1046
        %v1048 = vmul.f32 %v1047, %v863
        %v1049 = vmul.f32 %v1042, %v1042
        %v1050 = vsel %vm515, %v1049, 0.0
        %1051 = vadd.xlane.f32.xlu0 %v1050
        %v1052 = vpop.xlane.xlu0 %1051
        %v1053 = vmul.f32 %v1052, %v863
        %v1054 = vmul.f32 %v1048, %v1048
        %v1055 = vsub.f32 %v1053, %v1054
        %v1056 = vsub.f32 %v1042, %v1048
        %v1057 = vadd.f32 %v1055, 1e-05
        %v1058 = vrsqrt.pop %v1057
        %v1059 = vmul.f32 %v1056, %v1058
        %v1061 = vlaneseq
        %v1062 = vshrl.u32 %v1061, 7
        %v1063 = vsub.s32 0, %v1062
        %v1064 = vrot.slane %v1043, %v1063
        %v1066 = vmul.f32 %v1059, %v1064
        %v1068 = vlaneseq
        %v1069 = vshrl.u32 %v1068, 7
        %v1070 = vsub.s32 0, %v1069
        %v1071 = vrot.slane %v1044, %v1070
        %v1073 = vadd.f32 %v1066, %v1071
        %s1074 = scalar_lea.vmem %s1, 16
        %v1075 = vld [vmem:[%s1074] sm:$0xf]
        %v1076 = vld [vmem:[%s1074 + $0x4] sm:$0xf]
        %v1077 = vld [vmem:[%s1074 + $0x8] sm:$0xf]
        %v1078 = vld [vmem:[%s1074 + $0xc] sm:$0xf]
        %s1079 = scalar_lea.vmem %s2, 1
        %v1080 = vld [vmem:[%s1079] sm:$0x1]
        %v1081 = vpack.c.bf16 %v1073, %v1073
        %v1083 = vshrl.u32 %v1081, 16
        %v1085 = vrot.slane %v1083, 3
        %v1090 = vunpack.c.l.b16 %v1075
        %v1091 = vunpack.c.l.b16 %v1076
        %v1092 = vunpack.c.l.b16 %v1077
        %v1093 = vunpack.c.l.b16 %v1078
        %v1094 = vpack.c.b16 %v1091, %v1090
        %v1095 = vpack.c.b16 %v1093, %v1092
        %v1099 = vsel %vm515, %v1085, 0
        %1101 = vmatprep.subr.bf16.mxu0 0
        %1102 = vmatpush1.bf16.msra.mxu0 %v1094
        %1103 = vmatprep.subr.bf16.mxu0 0
        %1104 = vmatpush1.bf16.msra.mxu0 %v1095
        %1105 = vmatprep.subr.bf16.mxu0 0
        %1106 = vmatpush1.bf16.msra.mxu0 0
        %1107 = vmatprep.subr.bf16.mxu0 0
        %1108 = vmatpush1.bf16.msra.mxu0 0
        %1109 = vmatprep.subr.bf16.mxu0 0
        %1110 = vmatpush1.bf16.msra.mxu0 0
        %1111 = vmatprep.subr.bf16.mxu0 0
        %1112 = vmatpush1.bf16.msra.mxu0 0
        %1113 = vmatprep.subr.bf16.mxu0 0
        %1114 = vmatpush1.bf16.msra.mxu0 0
        %1115 = vmatprep.subr.bf16.mxu0 0
        %1116 = vmatpush1.bf16.msra.mxu0 0
        %1117 = vmatprep.subr.bf16.mxu0 0
        %1118 = vmatpush1.bf16.msra.mxu0 0
        %1119 = vmatprep.subr.bf16.mxu0 0
        %1120 = vmatpush1.bf16.msra.mxu0 0
        %1121 = vmatprep.subr.bf16.mxu0 0
        %1122 = vmatpush1.bf16.msra.mxu0 0
        %1123 = vmatprep.subr.bf16.mxu0 0
        %1124 = vmatpush1.bf16.msra.mxu0 0
        %1125 = vmatprep.subr.bf16.mxu0 0
        %1126 = vmatpush1.bf16.msra.mxu0 0
        %1127 = vmatprep.subr.bf16.mxu0 0
        %1128 = vmatpush1.bf16.msra.mxu0 0
        %1129 = vmatprep.subr.bf16.mxu0 0
        %1130 = vmatpush1.bf16.msra.mxu0 0
        %1131 = vmatprep.subr.bf16.mxu0 0
        %1132 = vmatpush1.bf16.msra.mxu0 0
        %1133 = vmatprep.mubr.bf16.mxu0 0
        %1134 = vmatmul.mubr.bf16.gmra.mrb[0].mxu0 %v1099
        %v1135 = vpop.f32.mrb[0].mxu0
        %v1136 = vadd.f32 %v1080, %v1135
        %v1137 = vpop.f32.mrb[0].mxu0
        %v1138 = vpop.f32.mrb[0].mxu0
        %v1139 = vpop.f32.mrb[0].mxu0
        %1140 = vdwg.mxu0
        %v1142 = vlaneseq
        %v1143 = vshrl.u32 %v1142, 7
        %v1144 = vsub.s32 0, %v1143
        %v1145 = vrot.slane %v1080, %v1144
        %1146 = vrot.lane.b32.xlu0 %v1094, 96
        %v1147 = vpop.permute.xlu0 %1146
        %1148 = vrot.lane.b32.xlu0 %v1095, 96
        %v1149 = vpop.permute.xlu0 %1148
        %1152 = vrot.lane.b32.xlu0 %v1145, 96
        %v1153 = vpop.permute.xlu0 %1152
        %v1155 = vsel %vm515, %v1081, 0
        %1157 = vmatprep.subr.bf16.mxu0 0
        %1158 = vmatpush1.bf16.msra.mxu0 %v1147
        %1159 = vmatprep.subr.bf16.mxu0 0
        %1160 = vmatpush1.bf16.msra.mxu0 %v1149
        %1161 = vmatprep.subr.bf16.mxu0 0
        %1162 = vmatpush1.bf16.msra.mxu0 0
        %1163 = vmatprep.subr.bf16.mxu0 0
        %1164 = vmatpush1.bf16.msra.mxu0 0
        %1165 = vmatprep.subr.bf16.mxu0 0
        %1166 = vmatpush1.bf16.msra.mxu0 0
        %1167 = vmatprep.subr.bf16.mxu0 0
        %1168 = vmatpush1.bf16.msra.mxu0 0
        %1169 = vmatprep.subr.bf16.mxu0 0
        %1170 = vmatpush1.bf16.msra.mxu0 0
        %1171 = vmatprep.subr.bf16.mxu0 0
        %1172 = vmatpush1.bf16.msra.mxu0 0
        %1173 = vmatprep.subr.bf16.mxu0 0
        %1174 = vmatpush1.bf16.msra.mxu0 0
        %1175 = vmatprep.subr.bf16.mxu0 0
        %1176 = vmatpush1.bf16.msra.mxu0 0
        %1177 = vmatprep.subr.bf16.mxu0 0
        %1178 = vmatpush1.bf16.msra.mxu0 0
        %1179 = vmatprep.subr.bf16.mxu0 0
        %1180 = vmatpush1.bf16.msra.mxu0 0
        %1181 = vmatprep.subr.bf16.mxu0 0
        %1182 = vmatpush1.bf16.msra.mxu0 0
        %1183 = vmatprep.subr.bf16.mxu0 0
        %1184 = vmatpush1.bf16.msra.mxu0 0
        %1185 = vmatprep.subr.bf16.mxu0 0
        %1186 = vmatpush1.bf16.msra.mxu0 0
        %1187 = vmatprep.subr.bf16.mxu0 0
        %1188 = vmatpush1.bf16.msra.mxu0 0
        %1189 = vmatprep.mubr.bf16.mxu0 0
        %1190 = vmatmul.mubr.bf16.gmra.mrb[0].mxu0 %v1155
        %v1191 = vpop.f32.mrb[0].mxu0
        %v1192 = vadd.f32 %v1153, %v1191
        %v1193 = vpop.f32.mrb[0].mxu0
        %v1194 = vpop.f32.mrb[0].mxu0
        %v1195 = vpop.f32.mrb[0].mxu0
        %1196 = vdwg.mxu0
        %v1197 = vmul.f32 %v1136, 0.25
        %v1198 = vpack.c.bf16 %v1197, %v1197
        %v1199 = vpack.c.bf16 %v1192, %v1192
        %v1201 = vsel %vm565, %v1198, 0
        %v1204 = vsel %vm565, %v1199, 0
        %1206 = vmatprep.subr.bf16.mxu0 0
        %1207 = vmatpush1.bf16.xpose.msra.mxu0 %v1204
        %1208 = vmatprep.subr.bf16.mxu0 0
        %1209 = vmatpush1.bf16.xpose.msra.mxu0 0
        %1210 = vmatprep.subr.bf16.mxu0 0
        %1211 = vmatpush1.bf16.xpose.msra.mxu0 0
        %1212 = vmatprep.subr.bf16.mxu0 0
        %1213 = vmatpush1.bf16.xpose.msra.mxu0 0
        %1214 = vmatprep.subr.bf16.mxu0 0
        %1215 = vmatpush1.bf16.xpose.msra.mxu0 0
        %1216 = vmatprep.subr.bf16.mxu0 0
        %1217 = vmatpush1.bf16.xpose.msra.mxu0 0
        %1218 = vmatprep.subr.bf16.mxu0 0
        %1219 = vmatpush1.bf16.xpose.msra.mxu0 0
        %1220 = vmatprep.subr.bf16.mxu0 0
        %1221 = vmatpush1.bf16.xpose.msra.mxu0 0
        %1222 = vmatprep.subr.bf16.mxu0 0
        %1223 = vmatpush1.bf16.xpose.msra.mxu0 0
        %1224 = vmatprep.subr.bf16.mxu0 0
        %1225 = vmatpush1.bf16.xpose.msra.mxu0 0
        %1226 = vmatprep.subr.bf16.mxu0 0
        %1227 = vmatpush1.bf16.xpose.msra.mxu0 0
        %1228 = vmatprep.subr.bf16.mxu0 0
        %1229 = vmatpush1.bf16.xpose.msra.mxu0 0
        %1230 = vmatprep.subr.bf16.mxu0 0
        %1231 = vmatpush1.bf16.xpose.msra.mxu0 0
        %1232 = vmatprep.subr.bf16.mxu0 0
        %1233 = vmatpush1.bf16.xpose.msra.mxu0 0
        %1234 = vmatprep.subr.bf16.mxu0 0
        %1235 = vmatpush1.bf16.xpose.msra.mxu0 0
        %1236 = vmatprep.subr.bf16.mxu0 0
        %1237 = vmatpush1.bf16.xpose.msra.mxu0 0
        %1238 = vmatprep.mubr.bf16.mxu0 0
        %1239 = vmatmul.mubr.bf16.gmra.mrb[0].mxu0 %v1201
        %v1240 = vpop.f32.mrb[0].mxu0
        %v1241 = vadd.f32 0.0, %v1240
        %v1242 = vpop.f32.mrb[0].mxu0
        %v1243 = vpop.f32.mrb[0].mxu0
        %v1244 = vpop.f32.mrb[0].mxu0
        %1245 = vdwg.mxu0
        %vm1246 = vcmask 57344
        %v1247 = vsel %vm1246, %v1241, -inf
        %1248 = vmax.xlane.f32.xlu0 %v1247
        %v1249 = vpop.xlane.xlu0 %1248
        %v1250 = vsub.f32 %v1241, %v1249
        %v1251 = vmul.f32 %v1250, 1.442695
        %v1252 = vpow.pop %v1251
        %v1253 = vsel %vm1246, %v1252, 0.0
        %1254 = vadd.xlane.f32.xlu0 %v1253
        %v1255 = vpop.xlane.xlu0 %1254
        %v1256 = vrcp.pop %v1255
        %v1257 = vmul.f32 %v1252, %v1256
        %v1258 = vpack.c.bf16 %v1257, %v1257
        %1260 = vrot.lane.b32.xlu0 %v1199, 96
        %v1261 = vpop.permute.xlu0 %1260
        %v1263 = vsel %vm612, %v1258, 0
        %v1266 = vsel %vm630, %v1261, 0
        %1268 = vmatprep.subr.bf16.mxu0 0
        %1269 = vmatpush1.bf16.msra.mxu0 %v1266
        %1270 = vmatprep.subr.bf16.mxu0 0
        %1271 = vmatpush1.bf16.msra.mxu0 0
        %1272 = vmatprep.subr.bf16.mxu0 0
        %1273 = vmatpush1.bf16.msra.mxu0 0
        %1274 = vmatprep.subr.bf16.mxu0 0
        %1275 = vmatpush1.bf16.msra.mxu0 0
        %1276 = vmatprep.subr.bf16.mxu0 0
        %1277 = vmatpush1.bf16.msra.mxu0 0
        %1278 = vmatprep.subr.bf16.mxu0 0
        %1279 = vmatpush1.bf16.msra.mxu0 0
        %1280 = vmatprep.subr.bf16.mxu0 0
        %1281 = vmatpush1.bf16.msra.mxu0 0
        %1282 = vmatprep.subr.bf16.mxu0 0
        %1283 = vmatpush1.bf16.msra.mxu0 0
        %1284 = vmatprep.subr.bf16.mxu0 0
        %1285 = vmatpush1.bf16.msra.mxu0 0
        %1286 = vmatprep.subr.bf16.mxu0 0
        %1287 = vmatpush1.bf16.msra.mxu0 0
        %1288 = vmatprep.subr.bf16.mxu0 0
        %1289 = vmatpush1.bf16.msra.mxu0 0
        %1290 = vmatprep.subr.bf16.mxu0 0
        %1291 = vmatpush1.bf16.msra.mxu0 0
        %1292 = vmatprep.subr.bf16.mxu0 0
        %1293 = vmatpush1.bf16.msra.mxu0 0
        %1294 = vmatprep.subr.bf16.mxu0 0
        %1295 = vmatpush1.bf16.msra.mxu0 0
        %1296 = vmatprep.subr.bf16.mxu0 0
        %1297 = vmatpush1.bf16.msra.mxu0 0
        %1298 = vmatprep.subr.bf16.mxu0 0
        %1299 = vmatpush1.bf16.msra.mxu0 0
        %1300 = vmatprep.mubr.bf16.mxu0 0
        %1301 = vmatmul.mubr.bf16.gmra.mrb[0].mxu0 %v1263
        %v1302 = vpop.f32.mrb[0].mxu0
        %v1303 = vadd.f32 0.0, %v1302
        %v1304 = vpop.f32.mrb[0].mxu0
        %v1305 = vpop.f32.mrb[0].mxu0
        %v1306 = vpop.f32.mrb[0].mxu0
        %1307 = vdwg.mxu0
        %1309 = vrot.lane.b32.xlu0 %v1198, 112
        %v1310 = vpop.permute.xlu0 %1309
        %1311 = vrot.lane.b32.xlu0 %v1199, 112
        %v1312 = vpop.permute.xlu0 %1311
        %v1314 = vsel %vm565, %v1310, 0
        %v1317 = vsel %vm565, %v1312, 0
        %1319 = vmatprep.subr.bf16.mxu0 0
        %1320 = vmatpush1.bf16.xpose.msra.mxu0 %v1317
        %1321 = vmatprep.subr.bf16.mxu0 0
        %1322 = vmatpush1.bf16.xpose.msra.mxu0 0
        %1323 = vmatprep.subr.bf16.mxu0 0
        %1324 = vmatpush1.bf16.xpose.msra.mxu0 0
        %1325 = vmatprep.subr.bf16.mxu0 0
        %1326 = vmatpush1.bf16.xpose.msra.mxu0 0
        %1327 = vmatprep.subr.bf16.mxu0 0
        %1328 = vmatpush1.bf16.xpose.msra.mxu0 0
        %1329 = vmatprep.subr.bf16.mxu0 0
        %1330 = vmatpush1.bf16.xpose.msra.mxu0 0
        %1331 = vmatprep.subr.bf16.mxu0 0
        %1332 = vmatpush1.bf16.xpose.msra.mxu0 0
        %1333 = vmatprep.subr.bf16.mxu0 0
        %1334 = vmatpush1.bf16.xpose.msra.mxu0 0
        %1335 = vmatprep.subr.bf16.mxu0 0
        %1336 = vmatpush1.bf16.xpose.msra.mxu0 0
        %1337 = vmatprep.subr.bf16.mxu0 0
        %1338 = vmatpush1.bf16.xpose.msra.mxu0 0
        %1339 = vmatprep.subr.bf16.mxu0 0
        %1340 = vmatpush1.bf16.xpose.msra.mxu0 0
        %1341 = vmatprep.subr.bf16.mxu0 0
        %1342 = vmatpush1.bf16.xpose.msra.mxu0 0
        %1343 = vmatprep.subr.bf16.mxu0 0
        %1344 = vmatpush1.bf16.xpose.msra.mxu0 0
        %1345 = vmatprep.subr.bf16.mxu0 0
        %1346 = vmatpush1.bf16.xpose.msra.mxu0 0
        %1347 = vmatprep.subr.bf16.mxu0 0
        %1348 = vmatpush1.bf16.xpose.msra.mxu0 0
        %1349 = vmatprep.subr.bf16.mxu0 0
        %1350 = vmatpush1.bf16.xpose.msra.mxu0 0
        %1351 = vmatprep.mubr.bf16.mxu0 0
        %1352 = vmatmul.mubr.bf16.gmra.mrb[0].mxu0 %v1314
        %v1353 = vpop.f32.mrb[0].mxu0
        %v1354 = vadd.f32 0.0, %v1353
        %v1355 = vpop.f32.mrb[0].mxu0
        %v1356 = vpop.f32.mrb[0].mxu0
        %v1357 = vpop.f32.mrb[0].mxu0
        %1358 = vdwg.mxu0
        %v1359 = vsel %vm1246, %v1354, -inf
        %1360 = vmax.xlane.f32.xlu0 %v1359
        %v1361 = vpop.xlane.xlu0 %1360
        %v1362 = vsub.f32 %v1354, %v1361
        %v1363 = vmul.f32 %v1362, 1.442695
        %v1364 = vpow.pop %v1363
        %v1365 = vsel %vm1246, %v1364, 0.0
        %1366 = vadd.xlane.f32.xlu0 %v1365
        %v1367 = vpop.xlane.xlu0 %1366
        %v1368 = vrcp.pop %v1367
        %v1369 = vmul.f32 %v1364, %v1368
        %v1370 = vpack.c.bf16 %v1369, %v1369
        %1371 = vrot.lane.b32.xlu0 %v1199, 80
        %v1372 = vpop.permute.xlu0 %1371
        %v1374 = vsel %vm612, %v1370, 0
        %v1377 = vsel %vm630, %v1372, 0
        %1379 = vmatprep.subr.bf16.mxu0 0
        %1380 = vmatpush1.bf16.msra.mxu0 %v1377
        %1381 = vmatprep.subr.bf16.mxu0 0
        %1382 = vmatpush1.bf16.msra.mxu0 0
        %1383 = vmatprep.subr.bf16.mxu0 0
        %1384 = vmatpush1.bf16.msra.mxu0 0
        %1385 = vmatprep.subr.bf16.mxu0 0
        %1386 = vmatpush1.bf16.msra.mxu0 0
        %1387 = vmatprep.subr.bf16.mxu0 0
        %1388 = vmatpush1.bf16.msra.mxu0 0
        %1389 = vmatprep.subr.bf16.mxu0 0
        %1390 = vmatpush1.bf16.msra.mxu0 0
        %1391 = vmatprep.subr.bf16.mxu0 0
        %1392 = vmatpush1.bf16.msra.mxu0 0
        %1393 = vmatprep.subr.bf16.mxu0 0
        %1394 = vmatpush1.bf16.msra.mxu0 0
        %1395 = vmatprep.subr.bf16.mxu0 0
        %1396 = vmatpush1.bf16.msra.mxu0 0
        %1397 = vmatprep.subr.bf16.mxu0 0
        %1398 = vmatpush1.bf16.msra.mxu0 0
        %1399 = vmatprep.subr.bf16.mxu0 0
        %1400 = vmatpush1.bf16.msra.mxu0 0
        %1401 = vmatprep.subr.bf16.mxu0 0
        %1402 = vmatpush1.bf16.msra.mxu0 0
        %1403 = vmatprep.subr.bf16.mxu0 0
        %1404 = vmatpush1.bf16.msra.mxu0 0
        %1405 = vmatprep.subr.bf16.mxu0 0
        %1406 = vmatpush1.bf16.msra.mxu0 0
        %1407 = vmatprep.subr.bf16.mxu0 0
        %1408 = vmatpush1.bf16.msra.mxu0 0
        %1409 = vmatprep.subr.bf16.mxu0 0
        %1410 = vmatpush1.bf16.msra.mxu0 0
        %1411 = vmatprep.mubr.bf16.mxu0 0
        %1412 = vmatmul.mubr.bf16.gmra.mrb[0].mxu0 %v1374
        %v1413 = vpop.f32.mrb[0].mxu0
        %v1414 = vadd.f32 0.0, %v1413
        %v1415 = vpop.f32.mrb[0].mxu0
        %v1416 = vpop.f32.mrb[0].mxu0
        %v1417 = vpop.f32.mrb[0].mxu0
        %1418 = vdwg.mxu0
        %1420 = vrot.lane.b32.xlu0 %v1414, 16
        %v1421 = vpop.permute.xlu0 %1420
        %v1423 = vsel %vm565, %v1303, %v1421
        %v1424 = vpack.c.bf16 %v1423, %v1423
        %s1425 = scalar_lea.vmem %s3, 16
        %v1426 = vld [vmem:[%s1425] sm:$0xf]
        %v1427 = vld [vmem:[%s1425 + $0x4] sm:$0xf]
        %v1428 = vld [vmem:[%s1425 + $0x8] sm:$0xf]
        %v1429 = vld [vmem:[%s1425 + $0xc] sm:$0xf]
        %s1430 = scalar_lea.vmem %s4, 1
        %v1431 = vld [vmem:[%s1430] sm:$0x1]
        %v1436 = vunpack.c.l.b16 %v1426
        %v1437 = vunpack.c.l.b16 %v1427
        %v1438 = vunpack.c.l.b16 %v1428
        %v1439 = vunpack.c.l.b16 %v1429
        %v1440 = vpack.c.b16 %v1437, %v1436
        %v1441 = vpack.c.b16 %v1439, %v1438
        %v1445 = vsel %vm515, %v1424, 0
        %1447 = vmatprep.subr.bf16.mxu0 0
        %1448 = vmatpush1.bf16.msra.mxu0 %v1440
        %1449 = vmatprep.subr.bf16.mxu0 0
        %1450 = vmatpush1.bf16.msra.mxu0 %v1441
        %1451 = vmatprep.subr.bf16.mxu0 0
        %1452 = vmatpush1.bf16.msra.mxu0 0
        %1453 = vmatprep.subr.bf16.mxu0 0
        %1454 = vmatpush1.bf16.msra.mxu0 0
        %1455 = vmatprep.subr.bf16.mxu0 0
        %1456 = vmatpush1.bf16.msra.mxu0 0
        %1457 = vmatprep.subr.bf16.mxu0 0
        %1458 = vmatpush1.bf16.msra.mxu0 0
        %1459 = vmatprep.subr.bf16.mxu0 0
        %1460 = vmatpush1.bf16.msra.mxu0 0
        %1461 = vmatprep.subr.bf16.mxu0 0
        %1462 = vmatpush1.bf16.msra.mxu0 0
        %1463 = vmatprep.subr.bf16.mxu0 0
        %1464 = vmatpush1.bf16.msra.mxu0 0
        %1465 = vmatprep.subr.bf16.mxu0 0
        %1466 = vmatpush1.bf16.msra.mxu0 0
        %1467 = vmatprep.subr.bf16.mxu0 0
        %1468 = vmatpush1.bf16.msra.mxu0 0
        %1469 = vmatprep.subr.bf16.mxu0 0
        %1470 = vmatpush1.bf16.msra.mxu0 0
        %1471 = vmatprep.subr.bf16.mxu0 0
        %1472 = vmatpush1.bf16.msra.mxu0 0
        %1473 = vmatprep.subr.bf16.mxu0 0
        %1474 = vmatpush1.bf16.msra.mxu0 0
        %1475 = vmatprep.subr.bf16.mxu0 0
        %1476 = vmatpush1.bf16.msra.mxu0 0
        %1477 = vmatprep.subr.bf16.mxu0 0
        %1478 = vmatpush1.bf16.msra.mxu0 0
        %1479 = vmatprep.mubr.bf16.mxu0 0
        %1480 = vmatmul.mubr.bf16.gmra.mrb[0].mxu0 %v1445
        %v1481 = vpop.f32.mrb[0].mxu0
        %v1482 = vadd.f32 %v1431, %v1481
        %v1483 = vpop.f32.mrb[0].mxu0
        %v1484 = vpop.f32.mrb[0].mxu0
        %v1485 = vpop.f32.mrb[0].mxu0
        %1486 = vdwg.mxu0
        %v1488 = vrot.slane %v1482, 1
        %v1490 = vadd.f32 %v1073, %v1488
        %s1491 = scalar_lea.vmem %s5, 1
        %v1492 = vld [vmem:[%s1491] sm:$0x1]
        %s1493 = scalar_lea.vmem %s6, 1
        %v1494 = vld [vmem:[%s1493] sm:$0x1]
        %vm1495 = vcmask 261127
        %v1496 = vsel %vm1495, %v1490, 0.0
        %1497 = vadd.xlane.f32.xlu0 %v1496
        %v1498 = vpop.xlane.xlu0 %1497
        %v1499 = vmul.f32 %v1498, %v863
        %v1500 = vmul.f32 %v1490, %v1490
        %v1501 = vsel %vm1495, %v1500, 0.0
        %1502 = vadd.xlane.f32.xlu0 %v1501
        %v1503 = vpop.xlane.xlu0 %1502
        %v1504 = vmul.f32 %v1503, %v863
        %v1505 = vmul.f32 %v1499, %v1499
        %v1506 = vsub.f32 %v1504, %v1505
        %v1507 = vsub.f32 %v1490, %v1499
        %v1508 = vadd.f32 %v1506, 1e-05
        %v1509 = vrsqrt.pop %v1508
        %v1510 = vmul.f32 %v1507, %v1509
        %v1512 = vlaneseq
        %v1513 = vshrl.u32 %v1512, 7
        %v1514 = vsub.s32 0, %v1513
        %v1515 = vrot.slane %v1492, %v1514
        %v1517 = vmul.f32 %v1510, %v1515
        %v1519 = vlaneseq
        %v1520 = vshrl.u32 %v1519, 7
        %v1521 = vsub.s32 0, %v1520
        %v1522 = vrot.slane %v1494, %v1521
        %v1524 = vadd.f32 %v1517, %v1522
        %v1525 = vpack.c.bf16 %v1524, %v1524
        %s1526 = scalar_lea.vmem %s7, 16
        %v1527 = vld [vmem:[%s1526] sm:$0xf]
        %v1528 = vld [vmem:[%s1526 + $0x4] sm:$0xf]
        %v1529 = vld [vmem:[%s1526 + $0x8] sm:$0xf]
        %v1530 = vld [vmem:[%s1526 + $0xc] sm:$0xf]
        %s1531 = scalar_lea.vmem %s8, 1
        %v1532 = vld [vmem:[%s1531] sm:$0x1]
        %v1534 = vshrl.u32 %v1525, 16
        %v1536 = vrot.slane %v1534, 3
        %v1541 = vunpack.c.l.b16 %v1527
        %v1542 = vunpack.c.l.b16 %v1528
        %v1543 = vunpack.c.l.b16 %v1529
        %v1544 = vunpack.c.l.b16 %v1530
        %v1545 = vpack.c.b16 %v1542, %v1541
        %v1546 = vpack.c.b16 %v1544, %v1543
        %v1550 = vsel %vm515, %v1536, 0
        %1552 = vmatprep.subr.bf16.mxu0 0
        %1553 = vmatpush1.bf16.msra.mxu0 %v1545
        %1554 = vmatprep.subr.bf16.mxu0 0
        %1555 = vmatpush1.bf16.msra.mxu0 %v1546
        %1556 = vmatprep.subr.bf16.mxu0 0
        %1557 = vmatpush1.bf16.msra.mxu0 0
        %1558 = vmatprep.subr.bf16.mxu0 0
        %1559 = vmatpush1.bf16.msra.mxu0 0
        %1560 = vmatprep.subr.bf16.mxu0 0
        %1561 = vmatpush1.bf16.msra.mxu0 0
        %1562 = vmatprep.subr.bf16.mxu0 0
        %1563 = vmatpush1.bf16.msra.mxu0 0
        %1564 = vmatprep.subr.bf16.mxu0 0
        %1565 = vmatpush1.bf16.msra.mxu0 0
        %1566 = vmatprep.subr.bf16.mxu0 0
        %1567 = vmatpush1.bf16.msra.mxu0 0
        %1568 = vmatprep.subr.bf16.mxu0 0
        %1569 = vmatpush1.bf16.msra.mxu0 0
        %1570 = vmatprep.subr.bf16.mxu0 0
        %1571 = vmatpush1.bf16.msra.mxu0 0
        %1572 = vmatprep.subr.bf16.mxu0 0
        %1573 = vmatpush1.bf16.msra.mxu0 0
        %1574 = vmatprep.subr.bf16.mxu0 0
        %1575 = vmatpush1.bf16.msra.mxu0 0
        %1576 = vmatprep.subr.bf16.mxu0 0
        %1577 = vmatpush1.bf16.msra.mxu0 0
        %1578 = vmatprep.subr.bf16.mxu0 0
        %1579 = vmatpush1.bf16.msra.mxu0 0
        %1580 = vmatprep.subr.bf16.mxu0 0
        %1581 = vmatpush1.bf16.msra.mxu0 0
        %1582 = vmatprep.subr.bf16.mxu0 0
        %1583 = vmatpush1.bf16.msra.mxu0 0
        %1584 = vmatprep.mubr.bf16.mxu0 0
        %1585 = vmatmul.mubr.bf16.gmra.mrb[0].mxu0 %v1550
        %v1586 = vpop.f32.mrb[0].mxu0
        %v1587 = vadd.f32 %v1532, %v1586
        %v1588 = vpop.f32.mrb[0].mxu0
        %v1589 = vpop.f32.mrb[0].mxu0
        %v1590 = vpop.f32.mrb[0].mxu0
        %1591 = vdwg.mxu0
        %v1592 = vmax.f32 %v1587, 0.0
        %v1593 = vpack.c.bf16 %v1592, %v1592
        %s1594 = scalar_lea.vmem %s9, 32
        %v1595 = vld [vmem:[%s1594] sm:$0xf]
        %v1596 = vld [vmem:[%s1594 + $0x4] sm:$0xf]
        %v1597 = vld [vmem:[%s1594 + $0x8] sm:$0xf]
        %v1598 = vld [vmem:[%s1594 + $0xc] sm:$0xf]
        %v1599 = vld [vmem:[%s1594 + $0x10] sm:$0xf]
        %v1600 = vld [vmem:[%s1594 + $0x14] sm:$0xf]
        %v1601 = vld [vmem:[%s1594 + $0x18] sm:$0xf]
        %v1602 = vld [vmem:[%s1594 + $0x1c] sm:$0xf]
        %s1603 = scalar_lea.vmem %s10, 1
        %v1604 = vld [vmem:[%s1603] sm:$0x1]
        %v1613 = vunpack.c.l.b16 %v1595
        %v1614 = vunpack.c.l.b16 %v1596
        %v1615 = vunpack.c.l.b16 %v1597
        %v1616 = vunpack.c.l.b16 %v1598
        %v1617 = vunpack.c.l.b16 %v1599
        %v1618 = vunpack.c.l.b16 %v1600
        %v1619 = vunpack.c.l.b16 %v1601
        %v1620 = vunpack.c.l.b16 %v1602
        %v1621 = vpack.c.b16 %v1614, %v1613
        %v1622 = vpack.c.b16 %v1616, %v1615
        %v1623 = vpack.c.b16 %v1618, %v1617
        %v1624 = vpack.c.b16 %v1620, %v1619
        %v1630 = vsel %vm998, %v1593, 0
        %1632 = vmatprep.subr.bf16.mxu0 0
        %1633 = vmatpush1.bf16.msra.mxu0 %v1621
        %1634 = vmatprep.subr.bf16.mxu0 0
        %1635 = vmatpush1.bf16.msra.mxu0 %v1622
        %1636 = vmatprep.subr.bf16.mxu0 0
        %1637 = vmatpush1.bf16.msra.mxu0 %v1623
        %1638 = vmatprep.subr.bf16.mxu0 0
        %1639 = vmatpush1.bf16.msra.mxu0 %v1624
        %1640 = vmatprep.subr.bf16.mxu0 0
        %1641 = vmatpush1.bf16.msra.mxu0 0
        %1642 = vmatprep.subr.bf16.mxu0 0
        %1643 = vmatpush1.bf16.msra.mxu0 0
        %1644 = vmatprep.subr.bf16.mxu0 0
        %1645 = vmatpush1.bf16.msra.mxu0 0
        %1646 = vmatprep.subr.bf16.mxu0 0
        %1647 = vmatpush1.bf16.msra.mxu0 0
        %1648 = vmatprep.subr.bf16.mxu0 0
        %1649 = vmatpush1.bf16.msra.mxu0 0
        %1650 = vmatprep.subr.bf16.mxu0 0
        %1651 = vmatpush1.bf16.msra.mxu0 0
        %1652 = vmatprep.subr.bf16.mxu0 0
        %1653 = vmatpush1.bf16.msra.mxu0 0
        %1654 = vmatprep.subr.bf16.mxu0 0
        %1655 = vmatpush1.bf16.msra.mxu0 0
        %1656 = vmatprep.subr.bf16.mxu0 0
        %1657 = vmatpush1.bf16.msra.mxu0 0
        %1658 = vmatprep.subr.bf16.mxu0 0
        %1659 = vmatpush1.bf16.msra.mxu0 0
        %1660 = vmatprep.subr.bf16.mxu0 0
        %1661 = vmatpush1.bf16.msra.mxu0 0
        %1662 = vmatprep.subr.bf16.mxu0 0
        %1663 = vmatpush1.bf16.msra.mxu0 0
        %1664 = vmatprep.mubr.bf16.mxu0 0
        %1665 = vmatmul.mubr.bf16.gmra.mrb[0].mxu0 %v1630
        %v1666 = vpop.f32.mrb[0].mxu0
        %v1667 = vadd.f32 %v1604, %v1666
        %v1668 = vpop.f32.mrb[0].mxu0
        %v1669 = vpop.f32.mrb[0].mxu0
        %v1670 = vpop.f32.mrb[0].mxu0
        %1671 = vdwg.mxu0
        %v1673 = vrot.slane %v1667, 1
        %v1675 = vadd.f32 %v1524, %v1673
        %s1676 = scalar_lea.vmem %s11, 1
        %v1677 = vld [vmem:[%s1676] sm:$0x1]
        %s1678 = scalar_lea.vmem %s12, 1
        %v1679 = vld [vmem:[%s1678] sm:$0x1]
        %v1680 = vsel %vm1495, %v1675, 0.0
        %1681 = vadd.xlane.f32.xlu0 %v1680
        %v1682 = vpop.xlane.xlu0 %1681
        %v1683 = vmul.f32 %v1682, %v863
        %v1684 = vmul.f32 %v1675, %v1675
        %v1685 = vsel %vm1495, %v1684, 0.0
        %1686 = vadd.xlane.f32.xlu0 %v1685
        %v1687 = vpop.xlane.xlu0 %1686
        %v1688 = vmul.f32 %v1687, %v863
        %v1689 = vmul.f32 %v1683, %v1683
        %v1690 = vsub.f32 %v1688, %v1689
        %v1691 = vsub.f32 %v1675, %v1683
        %v1692 = vadd.f32 %v1690, 1e-05
        %v1693 = vrsqrt.pop %v1692
        %v1694 = vmul.f32 %v1691, %v1693
        %v1696 = vlaneseq
        %v1697 = vshrl.u32 %v1696, 7
        %v1698 = vsub.s32 0, %v1697
        %v1699 = vrot.slane %v1677, %v1698
        %v1701 = vmul.f32 %v1694, %v1699
        %v1703 = vlaneseq
        %v1704 = vshrl.u32 %v1703, 7
        %v1705 = vsub.s32 0, %v1704
        %v1706 = vrot.slane %v1679, %v1705
        %v1708 = vadd.f32 %v1701, %v1706
        %v1709 = vpack.c.bf16 %v1708, %v1708
        %v1710 = vld [vmem:[%s13] sm:$0xf]
        %v1711 = vld [vmem:[%s13 + $0x4] sm:$0xf]
        %v1712 = vld [vmem:[%s13 + $0x8] sm:$0xf]
        %v1713 = vld [vmem:[%s13 + $0xc] sm:$0xf]
        %v1714 = vld [vmem:[%s14] sm:$0x1]
        %v1716 = vshrl.u32 %v1709, 16
        %v1718 = vrot.slane %v1716, 3
        %v1723 = vunpack.c.l.b16 %v1710
        %v1724 = vunpack.c.l.b16 %v1711
        %v1725 = vunpack.c.l.b16 %v1712
        %v1726 = vunpack.c.l.b16 %v1713
        %v1727 = vpack.c.b16 %v1724, %v1723
        %v1728 = vpack.c.b16 %v1726, %v1725
        %v1732 = vsel %vm515, %v1718, 0
        %1734 = vmatprep.subr.bf16.mxu0 0
        %1735 = vmatpush1.bf16.msra.mxu0 %v1727
        %1736 = vmatprep.subr.bf16.mxu0 0
        %1737 = vmatpush1.bf16.msra.mxu0 %v1728
        %1738 = vmatprep.subr.bf16.mxu0 0
        %1739 = vmatpush1.bf16.msra.mxu0 0
        %1740 = vmatprep.subr.bf16.mxu0 0
        %1741 = vmatpush1.bf16.msra.mxu0 0
        %1742 = vmatprep.subr.bf16.mxu0 0
        %1743 = vmatpush1.bf16.msra.mxu0 0
        %1744 = vmatprep.subr.bf16.mxu0 0
        %1745 = vmatpush1.bf16.msra.mxu0 0
        %1746 = vmatprep.subr.bf16.mxu0 0
        %1747 = vmatpush1.bf16.msra.mxu0 0
        %1748 = vmatprep.subr.bf16.mxu0 0
        %1749 = vmatpush1.bf16.msra.mxu0 0
        %1750 = vmatprep.subr.bf16.mxu0 0
        %1751 = vmatpush1.bf16.msra.mxu0 0
        %1752 = vmatprep.subr.bf16.mxu0 0
        %1753 = vmatpush1.bf16.msra.mxu0 0
        %1754 = vmatprep.subr.bf16.mxu0 0
        %1755 = vmatpush1.bf16.msra.mxu0 0
        %1756 = vmatprep.subr.bf16.mxu0 0
        %1757 = vmatpush1.bf16.msra.mxu0 0
        %1758 = vmatprep.subr.bf16.mxu0 0
        %1759 = vmatpush1.bf16.msra.mxu0 0
        %1760 = vmatprep.subr.bf16.mxu0 0
        %1761 = vmatpush1.bf16.msra.mxu0 0
        %1762 = vmatprep.subr.bf16.mxu0 0
        %1763 = vmatpush1.bf16.msra.mxu0 0
        %1764 = vmatprep.subr.bf16.mxu0 0
        %1765 = vmatpush1.bf16.msra.mxu0 0
        %1766 = vmatprep.mubr.bf16.mxu0 0
        %1767 = vmatmul.mubr.bf16.gmra.mrb[0].mxu0 %v1732
        %v1768 = vpop.f32.mrb[0].mxu0
        %v1769 = vadd.f32 %v1714, %v1768
        %v1770 = vpop.f32.mrb[0].mxu0
        %v1771 = vpop.f32.mrb[0].mxu0
        %v1772 = vpop.f32.mrb[0].mxu0
        %1773 = vdwg.mxu0
        %vm1774 = vcmask 24576
        %1775 = vst.msk [vmem:[%s484] sm:$0x1] %vm1774, %v1769
        %s1776 = sand.u32 %s357, 1
        %s1777 = scalar_lea.sflag [#allocation3], %s1776
        %s1778 = sand.u32 %s357, 1
        %s1779 = scalar_lea.vmem [#allocation2], %s1778
        // Predicated region
        $region81: #{forward.3} parent=79 // pred_check
          %p1780 = pneg %p367
        $region82: #{forward.3} parent=79 // pred_check_branch
          %1782 = sbr.rel (%p1780) target = $region84
        $region83: #{forward.3} parent=79 // pred_region
          %s1784 = ssub.s32 16, 16
          %1785 = vsyncadd %s1777, %s1784
          %s1786 = smul.addr %s29, 16
          %s1787 = scalar_lea.hbm %s15, %s1786
          %s1789 = sshll.u32 %s1779, 4
          %s1790 = int_to_ptr.vmem [resolvable:$true] %s1789
          %1792 = dma.vmem_to_hbm [thread:$0]  %s1790, 16, %s1787, %s1777
        $region84: #{forward.3} parent=79 // pred_fallthru
          _
      $region80: #{forward.3} parent=5 // pred_fallthru
        _
      %p1793 = scmp.le.s32.totalorder 2, %s24
      // Predicated region
      $region85: #{forward.3} parent=5 // pred_check
        %p1794 = pneg %p1793
      $region86: #{forward.3} parent=5 // pred_check_branch
        %1796 = sbr.rel (%p1794) target = $region88
      $region87: #{forward.3} parent=5 // pred_region
        %s1797 = ssub.s32 %s24, 2
        // Predicated region
        $region89: #{forward.3} parent=87 // pred_check
          %p1798 = pneg %p373
        $region90: #{forward.3} parent=87 // pred_check_branch
          %1800 = sbr.rel (%p1798) target = $region92
        $region91: #{forward.3} parent=87 // pred_region
          %s1801 = sand.u32 %s358, 1
          %s1802 = scalar_lea.sflag [#allocation3], %s1801
          %s1803 = sand.u32 %s358, 1
          %s1804 = scalar_lea.vmem [#allocation2], %s1803
          %1805 = dma.done %s1802, 16
        $region92: #{forward.3} parent=87 // pred_fallthru
          _
      $region88: #{forward.3} parent=5 // pred_fallthru
        _
    $region6: #{forward.3} parent=1 // loop_footer
      %s28 = sadd.s32 1, %s24
    $region7: #{forward.3} parent=1 // loop_footer_branch
      %23 = sbr.rel target = $region3
    $region8: #{forward.3} parent=1 // loop_exit
      _
    %1806 = vsyncpa [#allocation3], 1
    %s1807 = scalar_lea.sflag [#allocation3], 1
    %1808 = vsyncpa %s1807, 1

// kernel: forward.2
$region0: #{forward.2}
  #allocation0 [shape = 'u32[]', space=smem, size = 0x4, offset = 0x4, fixed_abs, tag = 'smem constant byte address 0x4 - core index']
  #allocation1 [shape = 'u32[144,128]{1,0:T(1,128)}', space=vmem, size = 0x12000, scoped, tag = 'internal scratch']
  #allocation2 [shape = 'bf16[8,1,8]{2,1,0:T(2,128)(2,1)}', space=vmem, size = 0x1000, scoped, tag = 'scratch operand']
  #allocation3 [shape = 'f32[8,1,128]{2,1,0:T(1,128)}', space=vmem, size = 0x1000, scoped, tag = 'scratch operand']
  #allocation4 [shape = 'f32[8,1,16]{2,1,0:T(1,128)}', space=vmem, size = 0x1000, scoped, tag = 'scratch operand']
  #allocation5 [shape = 'f32[8,1,16]{2,1,0:T(1,128)}', space=vmem, size = 0x1000, scoped, tag = 'scratch operand']
  #allocation6 [shape = 'f32[1,32]{1,0:T(1,128)}', space=vmem, size = 0x200, scoped, tag = 'scratch operand']
  #allocation7 [shape = 'f32[1,16]{1,0:T(1,128)}', space=vmem, size = 0x200, scoped, tag = 'scratch operand']
  #allocation8 [shape = 'f32[1,16]{1,0:T(1,128)}', space=vmem, size = 0x200, scoped, tag = 'scratch operand']
  %s0 = inlined_call_operand.hbm [shape: f32[2,8,8], index: 0, kind: input, shape index: {}]
  %s1 = inlined_call_operand.vmem [shape: bf16[8,128], index: 1, kind: input, shape index: {}]
  %s2 = inlined_call_operand.hbm [shape: bf16[32,128], index: 2, kind: input, shape index: {}]
  %s3 = inlined_call_operand.vmem [shape: f32[1,128], index: 3, kind: input, shape index: {}]
  %s4 = inlined_call_operand.vmem [shape: bf16[32,128], index: 4, kind: input, shape index: {}]
  %s5 = inlined_call_operand.hbm [shape: bf16[32,128], index: 5, kind: input, shape index: {}]
  %s6 = inlined_call_operand.vmem [shape: f32[1,128], index: 6, kind: input, shape index: {}]
  %s7 = inlined_call_operand.vmem [shape: f32[2,8,32], index: 7, kind: output, shape index: {}]
  %s8 = sld [smem:[#allocation0]]
  $region73: #{forward.2} parent=0
    _
  %s10 = ssub.s32 1, %s8
  %s11 = scalar_select 0, %s10, %s8
  $region1: #{forward.2} parent=0
    #allocation9 [shape = 'u8[8192]{0}', space=vmem, size = 0x2000, scoped, tag = 'input window, operand 0']
    #allocation10 [shape = 's32[2]{0}', space=sflag, size = 0x8, scoped, tag = 'scoped memory for forward.2']
    #allocation11 [shape = 'u8[8192]{0}', space=vmem, size = 0x2000, scoped, tag = 'input window, operand 2, single buffered']
    #allocation12 [shape = 's32[1]{0}', space=sflag, size = 0x4, scoped, tag = 'scoped memory for forward.2']
    #allocation13 [shape = 'u8[8192]{0}', space=vmem, size = 0x2000, scoped, tag = 'input window, operand 5, single buffered']
    %12 = vsyncpa [#allocation10], 0
    %s13 = scalar_lea.sflag [#allocation10], 1
    %14 = vsyncpa %s13, 0
    %15 = vsyncpa [#allocation12], 0
    loop: start=0, step=1, limit=4
    $region2: #{forward.2} parent=1 // loop_pre_header
      _
    $region3: #{forward.2} parent=1 // loop_header
      %s17 = sphi 0, %s21
      %p18 = scmp.ge.s32.totalorder %s17, 4
      %s27 = sphi 0, %s29
      %s30 = sphi 0, %s27
      %s31 = sphi 0, %s30
      %s47 = sphi 0, %s31
      %s51 = sphi 0, %s51
      %s53 = sphi 0, %s51
      %s54 = sphi 0, %s53
      %s68 = sphi 0, %s54
      %s72 = sphi 0, %s72
      %s74 = sphi 0, %s72
      %s75 = sphi 0, %s74
      %s89 = sphi 0, %s75
      %s93 = sphi 0, %s93
      %s95 = sphi 0, %s93
      %s96 = sphi 0, %s95
      %s110 = sphi 0, %s96
      %s114 = sphi 0, %s114
      %s116 = sphi 0, %s114
      %s117 = sphi 0, %s116
      %s131 = sphi 0, %s117
      %s135 = sphi 0, %s135
      %s137 = sphi 0, %s135
      %s138 = sphi 0, %s137
      %s152 = sphi 0, %s138
      %s156 = sphi 0, %s156
      %s158 = sphi 0, %s156
      %s159 = sphi 0, %s158
      %s173 = sphi 0, %s159
      %s179 = sphi 0, %s181
      %s182 = sphi 0, %s179
      %s183 = sphi 0, %s182
      %s199 = sphi 0, %s183
    $region4: #{forward.2} parent=1 // loop_header_branch
      %20 = sbr.rel (%p18) target = $region8
    $region5: #{forward.2} parent=1 // loop_body
      %s22 = ssub.s32 %s17, 1
      %s23 = ssub.s32 %s17, 2
      %s24 = sadd.s32 %s17, 1
      %s25 = ssub.s32 %s17, %s24
      %p26 = scmp.eq.s32.totalorder %s25, 0
      %s28 = sadd.s32 %s27, 1
      %s29 = scalar_select %p26, %s27, %s28
      %p32 = pneg %p26
      %p33 = scmp.eq.s32.totalorder %s17, 1
      %p34 = por %p32, %p33
      %p35 = scmp.ne.s32.totalorder %s27, %s30
      %p36 = scmp.eq.s32.totalorder %s17, 0
      %p37 = por %p35, %p36
      %p38 = scmp.ne.s32.totalorder %s27, %s30
      %p39 = scmp.eq.s32.totalorder %s22, 1
      %p40 = por %p38, %p39
      %p41 = scmp.ne.s32.totalorder %s30, %s31
      %p42 = scmp.eq.s32.totalorder %s22, 0
      %p43 = por %p41, %p42
      %p44 = scmp.ne.s32.totalorder %s30, %s31
      %p45 = scmp.eq.s32.totalorder %s23, 1
      %p46 = por %p44, %p45
      %p48 = scmp.ne.s32.totalorder %s31, %s47
      %p49 = scmp.eq.s32.totalorder %s23, 0
      %p50 = por %p48, %p49
      %s52 = sadd.s32 %s51, 1
      %p55 = scmp.eq.s32.totalorder %s17, 1
      %p56 = scmp.ne.s32.totalorder %s51, %s53
      %p57 = scmp.eq.s32.totalorder %s17, 0
      %p58 = por %p56, %p57
      %p59 = scmp.ne.s32.totalorder %s51, %s53
      %p60 = scmp.eq.s32.totalorder %s22, 1
      %p61 = por %p59, %p60
      %p62 = scmp.ne.s32.totalorder %s53, %s54
      %p63 = scmp.eq.s32.totalorder %s22, 0
      %p64 = por %p62, %p63
      %p65 = scmp.ne.s32.totalorder %s53, %s54
      %p66 = scmp.eq.s32.totalorder %s23, 1
      %p67 = por %p65, %p66
      %p69 = scmp.ne.s32.totalorder %s54, %s68
      %p70 = scmp.eq.s32.totalorder %s23, 0
      %p71 = por %p69, %p70
      %s73 = sadd.s32 %s72, 1
      %p76 = scmp.eq.s32.totalorder %s17, 1
      %p77 = scmp.ne.s32.totalorder %s72, %s74
      %p78 = scmp.eq.s32.totalorder %s17, 0
      %p79 = por %p77, %p78
      %p80 = scmp.ne.s32.totalorder %s72, %s74
      %p81 = scmp.eq.s32.totalorder %s22, 1
      %p82 = por %p80, %p81
      %p83 = scmp.ne.s32.totalorder %s74, %s75
      %p84 = scmp.eq.s32.totalorder %s22, 0
      %p85 = por %p83, %p84
      %p86 = scmp.ne.s32.totalorder %s74, %s75
      %p87 = scmp.eq.s32.totalorder %s23, 1
      %p88 = por %p86, %p87
      %p90 = scmp.ne.s32.totalorder %s75, %s89
      %p91 = scmp.eq.s32.totalorder %s23, 0
      %p92 = por %p90, %p91
      %s94 = sadd.s32 %s93, 1
      %p97 = scmp.eq.s32.totalorder %s17, 1
      %p98 = scmp.ne.s32.totalorder %s93, %s95
      %p99 = scmp.eq.s32.totalorder %s17, 0
      %p100 = por %p98, %p99
      %p101 = scmp.ne.s32.totalorder %s93, %s95
      %p102 = scmp.eq.s32.totalorder %s22, 1
      %p103 = por %p101, %p102
      %p104 = scmp.ne.s32.totalorder %s95, %s96
      %p105 = scmp.eq.s32.totalorder %s22, 0
      %p106 = por %p104, %p105
      %p107 = scmp.ne.s32.totalorder %s95, %s96
      %p108 = scmp.eq.s32.totalorder %s23, 1
      %p109 = por %p107, %p108
      %p111 = scmp.ne.s32.totalorder %s96, %s110
      %p112 = scmp.eq.s32.totalorder %s23, 0
      %p113 = por %p111, %p112
      %s115 = sadd.s32 %s114, 1
      %p118 = scmp.eq.s32.totalorder %s17, 1
      %p119 = scmp.ne.s32.totalorder %s114, %s116
      %p120 = scmp.eq.s32.totalorder %s17, 0
      %p121 = por %p119, %p120
      %p122 = scmp.ne.s32.totalorder %s114, %s116
      %p123 = scmp.eq.s32.totalorder %s22, 1
      %p124 = por %p122, %p123
      %p125 = scmp.ne.s32.totalorder %s116, %s117
      %p126 = scmp.eq.s32.totalorder %s22, 0
      %p127 = por %p125, %p126
      %p128 = scmp.ne.s32.totalorder %s116, %s117
      %p129 = scmp.eq.s32.totalorder %s23, 1
      %p130 = por %p128, %p129
      %p132 = scmp.ne.s32.totalorder %s117, %s131
      %p133 = scmp.eq.s32.totalorder %s23, 0
      %p134 = por %p132, %p133
      %s136 = sadd.s32 %s135, 1
      %p139 = scmp.eq.s32.totalorder %s17, 1
      %p140 = scmp.ne.s32.totalorder %s135, %s137
      %p141 = scmp.eq.s32.totalorder %s17, 0
      %p142 = por %p140, %p141
      %p143 = scmp.ne.s32.totalorder %s135, %s137
      %p144 = scmp.eq.s32.totalorder %s22, 1
      %p145 = por %p143, %p144
      %p146 = scmp.ne.s32.totalorder %s137, %s138
      %p147 = scmp.eq.s32.totalorder %s22, 0
      %p148 = por %p146, %p147
      %p149 = scmp.ne.s32.totalorder %s137, %s138
      %p150 = scmp.eq.s32.totalorder %s23, 1
      %p151 = por %p149, %p150
      %p153 = scmp.ne.s32.totalorder %s138, %s152
      %p154 = scmp.eq.s32.totalorder %s23, 0
      %p155 = por %p153, %p154
      %s157 = sadd.s32 %s156, 1
      %p160 = scmp.eq.s32.totalorder %s17, 1
      %p161 = scmp.ne.s32.totalorder %s156, %s158
      %p162 = scmp.eq.s32.totalorder %s17, 0
      %p163 = por %p161, %p162
      %p164 = scmp.ne.s32.totalorder %s156, %s158
      %p165 = scmp.eq.s32.totalorder %s22, 1
      %p166 = por %p164, %p165
      %p167 = scmp.ne.s32.totalorder %s158, %s159
      %p168 = scmp.eq.s32.totalorder %s22, 0
      %p169 = por %p167, %p168
      %p170 = scmp.ne.s32.totalorder %s158, %s159
      %p171 = scmp.eq.s32.totalorder %s23, 1
      %p172 = por %p170, %p171
      %p174 = scmp.ne.s32.totalorder %s159, %s173
      %p175 = scmp.eq.s32.totalorder %s23, 0
      %p176 = por %p174, %p175
      %s177 = ssub.s32 %s17, %s24
      %p178 = scmp.eq.s32.totalorder %s177, 0
      %s180 = sadd.s32 %s179, 1
      %s181 = scalar_select %p178, %s179, %s180
      %p184 = pneg %p178
      %p185 = scmp.eq.s32.totalorder %s17, 1
      %p186 = por %p184, %p185
      %p187 = scmp.ne.s32.totalorder %s179, %s182
      %p188 = scmp.eq.s32.totalorder %s17, 0
      %p189 = por %p187, %p188
      %p190 = scmp.ne.s32.totalorder %s179, %s182
      %p191 = scmp.eq.s32.totalorder %s22, 1
      %p192 = por %p190, %p191
      %p193 = scmp.ne.s32.totalorder %s182, %s183
      %p194 = scmp.eq.s32.totalorder %s22, 0
      %p195 = por %p193, %p194
      %p196 = scmp.ne.s32.totalorder %s182, %s183
      %p197 = scmp.eq.s32.totalorder %s23, 1
      %p198 = por %p196, %p197
      %p200 = scmp.ne.s32.totalorder %s183, %s199
      %p201 = scmp.eq.s32.totalorder %s23, 0
      %p202 = por %p200, %p201
      %p203 = scmp.le.s32.totalorder 1, %s17
      %p204 = scmp.lt.s32.totalorder %s17, 3
      %p205 = pnand %p203, %p204
      %p206 = pneg %p205
      // Predicated region
      $region9: #{forward.2} parent=5 // pred_check
        _
      $region10: #{forward.2} parent=5 // pred_check_branch
        %208 = sbr.rel (%p205) target = $region12
      $region11: #{forward.2} parent=5 // pred_region
        %s209 = ssub.s32 %s17, 1
        // Predicated region
        $region13: #{forward.2} parent=11 // pred_check
          %p210 = pneg %p64
        $region14: #{forward.2} parent=11 // pred_check_branch
          %212 = sbr.rel (%p210) target = $region16
        $region15: #{forward.2} parent=11 // pred_region
          _
        $region16: #{forward.2} parent=11 // pred_fallthru
          _
        // Predicated region
        $region17: #{forward.2} parent=11 // pred_check
          %p213 = pneg %p85
        $region18: #{forward.2} parent=11 // pred_check_branch
          %215 = sbr.rel (%p213) target = $region20
        $region19: #{forward.2} parent=11 // pred_region
          %s217 = ssub.s32 256, 256
          %218 = vsyncadd [#allocation12], %s217
          %s219 = sshll.u32 [#allocation11], 4
          %s220 = int_to_ptr.vmem [resolvable:$true] %s219
          %225 = dma.hbm_to_vmem [thread:$0]  %s2, 256, %s220, [#allocation12], 64, 64, 4
        $region20: #{forward.2} parent=11 // pred_fallthru
          _
        // Predicated region
        $region21: #{forward.2} parent=11 // pred_check
          %p226 = pneg %p106
        $region22: #{forward.2} parent=11 // pred_check_branch
          %228 = sbr.rel (%p226) target = $region24
        $region23: #{forward.2} parent=11 // pred_region
          _
        $region24: #{forward.2} parent=11 // pred_fallthru
          _
        // Predicated region
        $region25: #{forward.2} parent=11 // pred_check
          %p229 = pneg %p127
        $region26: #{forward.2} parent=11 // pred_check_branch
          %231 = sbr.rel (%p229) target = $region28
        $region27: #{forward.2} parent=11 // pred_region
          _
        $region28: #{forward.2} parent=11 // pred_fallthru
          _
        // Predicated region
        $region29: #{forward.2} parent=11 // pred_check
          %p232 = pneg %p148
        $region30: #{forward.2} parent=11 // pred_check_branch
          %234 = sbr.rel (%p232) target = $region32
        $region31: #{forward.2} parent=11 // pred_region
          %s236 = ssub.s32 256, 256
          %237 = vsyncadd [#allocation12], %s236
          %s238 = sshll.u32 [#allocation13], 4
          %s239 = int_to_ptr.vmem [resolvable:$true] %s238
          %244 = dma.hbm_to_vmem [thread:$0]  %s5, 256, %s239, [#allocation12], 64, 64, 4
        $region32: #{forward.2} parent=11 // pred_fallthru
          _
        // Predicated region
        $region33: #{forward.2} parent=11 // pred_check
          %p245 = pneg %p169
        $region34: #{forward.2} parent=11 // pred_check_branch
          %247 = sbr.rel (%p245) target = $region36
        $region35: #{forward.2} parent=11 // pred_region
          _
        $region36: #{forward.2} parent=11 // pred_fallthru
          _
      $region12: #{forward.2} parent=5 // pred_fallthru
        _
      %p248 = scmp.lt.s32.totalorder %s17, 2
      // Predicated region
      $region37: #{forward.2} parent=5 // pred_check
        %p249 = pneg %p248
      $region38: #{forward.2} parent=5 // pred_check_branch
        %251 = sbr.rel (%p249) target = $region40
      $region39: #{forward.2} parent=5 // pred_region
        // Predicated region
        $region41: #{forward.2} parent=39 // pred_check
          %p252 = pneg %p37
        $region42: #{forward.2} parent=39 // pred_check_branch
          %254 = sbr.rel (%p252) target = $region44
        $region43: #{forward.2} parent=39 // pred_region
          %s255 = sand.u32 %s27, 1
          %s256 = scalar_lea.sflag [#allocation10], %s255
          %s257 = sand.u32 %s27, 1
          %s258 = smul.addr %s257, 8
          %s259 = scalar_lea.vmem [#allocation9], %s258
          %s261 = ssub.s32 128, 128
          %262 = vsyncadd %s256, %s261
          %s263 = smul.addr %s17, 128
          %s264 = scalar_lea.hbm %s0, %s263
          %s266 = sshll.u32 %s259, 4
          %s267 = int_to_ptr.vmem [resolvable:$true] %s266
          %269 = dma.hbm_to_vmem [thread:$0]  %s264, 128, %s267, %s256
        $region44: #{forward.2} parent=39 // pred_fallthru
          _
      $region40: #{forward.2} parent=5 // pred_fallthru
        _
      %p270 = scmp.le.s32.totalorder 1, %s17
      %p271 = scmp.lt.s32.totalorder %s17, 3
      %p272 = pnand %p270, %p271
      %p273 = pneg %p272
      // Predicated region
      $region45: #{forward.2} parent=5 // pred_check
        _
      $region46: #{forward.2} parent=5 // pred_check_branch
        %275 = sbr.rel (%p272) target = $region48
      $region47: #{forward.2} parent=5 // pred_region
        %s276 = ssub.s32 %s17, 1
        %s277 = sand.u32 %s30, 1
        %s278 = scalar_lea.sflag [#allocation10], %s277
        %s279 = sand.u32 %s30, 1
        %s280 = smul.addr %s279, 8
        %s281 = scalar_lea.vmem [#allocation9], %s280
        // Predicated region
        $region49: #{forward.2} parent=47 // pred_check
          %p282 = pneg %p43
        $region50: #{forward.2} parent=47 // pred_check_branch
          %284 = sbr.rel (%p282) target = $region52
        $region51: #{forward.2} parent=47 // pred_region
          %285 = dma.done %s278, 128
        $region52: #{forward.2} parent=47 // pred_fallthru
          _
        // Predicated region
        $region53: #{forward.2} parent=47 // pred_check
          %p286 = pneg %p85
        $region54: #{forward.2} parent=47 // pred_check_branch
          %288 = sbr.rel (%p286) target = $region56
        $region55: #{forward.2} parent=47 // pred_region
          %289 = dma.done [#allocation12], 256
        $region56: #{forward.2} parent=47 // pred_fallthru
          _
        // Predicated region
        $region57: #{forward.2} parent=47 // pred_check
          %p290 = pneg %p148
        $region58: #{forward.2} parent=47 // pred_check_branch
          %292 = sbr.rel (%p290) target = $region60
        $region59: #{forward.2} parent=47 // pred_region
          %293 = dma.done [#allocation12], 256
        $region60: #{forward.2} parent=47 // pred_fallthru
          _
        %s294 = sand.u32 %s30, 1
        %s295 = scalar_lea.sflag [#allocation10], %s294
        %s296 = sand.u32 %s30, 1
        %s297 = smul.addr %s296, 8
        %s298 = scalar_lea.vmem [#allocation9], %s297
        %p299 = pneg %p43
        %p300 = pneg %p40
        %p301 = pneg %p64
        %p302 = pneg %p61
        %p303 = pneg %p85
        %p304 = pneg %p82
        %p305 = pneg %p106
        %p306 = pneg %p103
        %p307 = pneg %p127
        %p308 = pneg %p124
        %p309 = pneg %p148
        %p310 = pneg %p145
        %p311 = pneg %p169
        %p312 = pneg %p166
        %p313 = pneg %p195
        %p314 = pneg %p192
        %p315 = scmp.lt.s32.totalorder %s22, 1
        %s316 = scalar_select %p315, %s22, 1
        %s317 = smul.addr %s316, 8
        %s318 = scalar_lea.vmem %s7, %s317
        %p319 = scmp.lt.s32.totalorder %s22, 1
        %s320 = scalar_select %p319, %s22, 1
        %s321 = smul.addr %s320, 8
        %s322 = scalar_lea.vmem %s7, %s321
        %v324 = vld [vmem:[%s281] sm:$0x1]
        %v325 = vpack.c.bf16 %v324, %v324
        %vm326 = vcmask 57344
        %vm327 = vsmask.f32 256
        %vm328 = vmand %vm326, %vm327
        %v329 = vld [vmem:[#allocation2] sm:$0x1]
        %v330 = vsel %vm328, %v325, %v329
        %331 = vst [vmem:[#allocation2] sm:$0x1] %v330
        %v332 = vld [vmem:[%s281 + $0x1] sm:$0x1]
        %v333 = vpack.c.bf16 %v332, %v332
        %s334 = scalar_lea.vmem [#allocation2], 1
        %v335 = vld [vmem:[%s334] sm:$0x1]
        %v336 = vsel %vm328, %v333, %v335
        %337 = vst [vmem:[%s334] sm:$0x1] %v336
        %v338 = vld [vmem:[%s281 + $0x2] sm:$0x1]
        %v339 = vpack.c.bf16 %v338, %v338
        %s340 = scalar_lea.vmem [#allocation2], 2
        %v341 = vld [vmem:[%s340] sm:$0x1]
        %v342 = vsel %vm328, %v339, %v341
        %343 = vst [vmem:[%s340] sm:$0x1] %v342
        %v344 = vld [vmem:[%s281 + $0x3] sm:$0x1]
        %v345 = vpack.c.bf16 %v344, %v344
        %s346 = scalar_lea.vmem [#allocation2], 3
        %v347 = vld [vmem:[%s346] sm:$0x1]
        %v348 = vsel %vm328, %v345, %v347
        %349 = vst [vmem:[%s346] sm:$0x1] %v348
        %v350 = vld [vmem:[%s281 + $0x4] sm:$0x1]
        %v351 = vpack.c.bf16 %v350, %v350
        %s352 = scalar_lea.vmem [#allocation2], 4
        %v353 = vld [vmem:[%s352] sm:$0x1]
        %v354 = vsel %vm328, %v351, %v353
        %355 = vst [vmem:[%s352] sm:$0x1] %v354
        %v356 = vld [vmem:[%s281 + $0x5] sm:$0x1]
        %v357 = vpack.c.bf16 %v356, %v356
        %s358 = scalar_lea.vmem [#allocation2], 5
        %v359 = vld [vmem:[%s358] sm:$0x1]
        %v360 = vsel %vm328, %v357, %v359
        %361 = vst [vmem:[%s358] sm:$0x1] %v360
        %v362 = vld [vmem:[%s281 + $0x6] sm:$0x1]
        %v363 = vpack.c.bf16 %v362, %v362
        %s364 = scalar_lea.vmem [#allocation2], 6
        %v365 = vld [vmem:[%s364] sm:$0x1]
        %v366 = vsel %vm328, %v363, %v365
        %367 = vst [vmem:[%s364] sm:$0x1] %v366
        %v368 = vld [vmem:[%s281 + $0x7] sm:$0x1]
        %v369 = vpack.c.bf16 %v368, %v368
        %s370 = scalar_lea.vmem [#allocation2], 7
        %v371 = vld [vmem:[%s370] sm:$0x1]
        %v372 = vsel %vm328, %v369, %v371
        %373 = vst [vmem:[%s370] sm:$0x1] %v372
        %v374 = vld [vmem:[#allocation2] sm:$0x1]
        %v375 = vld [vmem:[#allocation2 + $0x1] sm:$0x1]
        %v376 = vld [vmem:[#allocation2 + $0x2] sm:$0x1]
        %v377 = vld [vmem:[#allocation2 + $0x3] sm:$0x1]
        %v378 = vld [vmem:[#allocation2 + $0x4] sm:$0x1]
        %v379 = vld [vmem:[#allocation2 + $0x5] sm:$0x1]
        %v380 = vld [vmem:[#allocation2 + $0x6] sm:$0x1]
        %v381 = vld [vmem:[#allocation2 + $0x7] sm:$0x1]
        %v382 = vld [vmem:[%s1] sm:$0xf]
        %v383 = vld [vmem:[%s3] sm:$0x1]
        %v393 = vunpack.c.l.s4 1966171168
        %v394 = vunpack.c.0.s8 %v393
        %v395 = vlaneseq
        %v396 = vshrl.u32 %v395, 7
        %v397 = vsub.s32 %v394, %v396
        %v398 = vrot.slane %v374, %v397
        %v400 = vunpack.c.l.s4 1966171168
        %v401 = vunpack.c.0.s8 %v400
        %v402 = vlaneseq
        %v403 = vshrl.u32 %v402, 7
        %v404 = vsub.s32 %v401, %v403
        %v405 = vrot.slane %v398, %v404
        %v407 = vunpack.c.l.s4 1966171168
        %v408 = vunpack.c.0.s8 %v407
        %v409 = vlaneseq
        %v410 = vshrl.u32 %v409, 7
        %v411 = vsub.s32 %v408, %v410
        %v412 = vrot.slane %v375, %v411
        %v414 = vunpack.c.l.s4 1966171168
        %v415 = vunpack.c.0.s8 %v414
        %v416 = vlaneseq
        %v417 = vshrl.u32 %v416, 7
        %v418 = vsub.s32 %v415, %v417
        %v419 = vrot.slane %v412, %v418
        %v421 = vunpack.c.l.s4 1966171168
        %v422 = vunpack.c.0.s8 %v421
        %v423 = vlaneseq
        %v424 = vshrl.u32 %v423, 7
        %v425 = vsub.s32 %v422, %v424
        %v426 = vrot.slane %v376, %v425
        %v428 = vunpack.c.l.s4 1966171168
        %v429 = vunpack.c.0.s8 %v428
        %v430 = vlaneseq
        %v431 = vshrl.u32 %v430, 7
        %v432 = vsub.s32 %v429, %v431
        %v433 = vrot.slane %v426, %v432
        %v435 = vunpack.c.l.s4 1966171168
        %v436 = vunpack.c.0.s8 %v435
        %v437 = vlaneseq
        %v438 = vshrl.u32 %v437, 7
        %v439 = vsub.s32 %v436, %v438
        %v440 = vrot.slane %v377, %v439
        %v442 = vunpack.c.l.s4 1966171168
        %v443 = vunpack.c.0.s8 %v442
        %v444 = vlaneseq
        %v445 = vshrl.u32 %v444, 7
        %v446 = vsub.s32 %v443, %v445
        %v447 = vrot.slane %v440, %v446
        %v449 = vunpack.c.l.s4 1966171168
        %v450 = vunpack.c.0.s8 %v449
        %v451 = vlaneseq
        %v452 = vshrl.u32 %v451, 7
        %v453 = vsub.s32 %v450, %v452
        %v454 = vrot.slane %v378, %v453
        %v456 = vunpack.c.l.s4 1966171168
        %v457 = vunpack.c.0.s8 %v456
        %v458 = vlaneseq
        %v459 = vshrl.u32 %v458, 7
        %v460 = vsub.s32 %v457, %v459
        %v461 = vrot.slane %v454, %v460
        %v463 = vunpack.c.l.s4 1966171168
        %v464 = vunpack.c.0.s8 %v463
        %v465 = vlaneseq
        %v466 = vshrl.u32 %v465, 7
        %v467 = vsub.s32 %v464, %v466
        %v468 = vrot.slane %v379, %v467
        %v470 = vunpack.c.l.s4 1966171168
        %v471 = vunpack.c.0.s8 %v470
        %v472 = vlaneseq
        %v473 = vshrl.u32 %v472, 7
        %v474 = vsub.s32 %v471, %v473
        %v475 = vrot.slane %v468, %v474
        %v477 = vunpack.c.l.s4 1966171168
        %v478 = vunpack.c.0.s8 %v477
        %v479 = vlaneseq
        %v480 = vshrl.u32 %v479, 7
        %v481 = vsub.s32 %v478, %v480
        %v482 = vrot.slane %v380, %v481
        %v484 = vunpack.c.l.s4 1966171168
        %v485 = vunpack.c.0.s8 %v484
        %v486 = vlaneseq
        %v487 = vshrl.u32 %v486, 7
        %v488 = vsub.s32 %v485, %v487
        %v489 = vrot.slane %v482, %v488
        %v491 = vunpack.c.l.s4 1966171168
        %v492 = vunpack.c.0.s8 %v491
        %v493 = vlaneseq
        %v494 = vshrl.u32 %v493, 7
        %v495 = vsub.s32 %v492, %v494
        %v496 = vrot.slane %v381, %v495
        %v498 = vunpack.c.l.s4 1966171168
        %v499 = vunpack.c.0.s8 %v498
        %v500 = vlaneseq
        %v501 = vshrl.u32 %v500, 7
        %v502 = vsub.s32 %v499, %v501
        %v503 = vrot.slane %v496, %v502
        %v504 = vunpack.c.l.b16 %v405
        %v505 = vunpack.c.l.b16 %v419
        %v506 = vunpack.c.l.b16 %v433
        %v507 = vunpack.c.l.b16 %v447
        %v508 = vunpack.c.l.b16 %v461
        %v509 = vunpack.c.l.b16 %v475
        %v510 = vunpack.c.l.b16 %v489
        %v511 = vunpack.c.l.b16 %v503
        %v512 = vrot.slane %v505, 7
        %vm513 = vcmask 1041409
        %v514 = vsel %vm513, %v512, %v504
        %v515 = vrot.slane %v506, 6
        %vm516 = vcmask 1042434
        %v517 = vsel %vm516, %v515, %v514
        %v518 = vrot.slane %v507, 5
        %vm519 = vcmask 1043459
        %v520 = vsel %vm519, %v518, %v517
        %v521 = vrot.slane %v508, 4
        %vm522 = vcmask 1044484
        %v523 = vsel %vm522, %v521, %v520
        %v524 = vrot.slane %v509, 3
        %vm525 = vcmask 1045509
        %v526 = vsel %vm525, %v524, %v523
        %v527 = vrot.slane %v510, 2
        %vm528 = vcmask 1046534
        %v529 = vsel %vm528, %v527, %v526
        %v530 = vrot.slane %v511, 1
        %vm531 = vcmask 1047559
        %v532 = vsel %vm531, %v530, %v529
        %v533 = vpack.c.b16 %v532, %v532
        %v535 = vcombine.low %v383, %v383
        %v537 = vunpack.c.l.s4 1966171168
        %v538 = vunpack.c.0.s8 %v537
        %v539 = vlaneseq
        %v540 = vshrl.u32 %v539, 7
        %v541 = vsub.s32 %v538, %v540
        %v542 = vrot.slane %v535, %v541
        %v543 = vcombine.low %v542, %v542
        %v545 = vunpack.c.l.s4 1966171168
        %v546 = vunpack.c.0.s8 %v545
        %v547 = vlaneseq
        %v548 = vshrl.u32 %v547, 7
        %v549 = vsub.s32 %v546, %v548
        %v550 = vrot.slane %v543, %v549
        %v551 = vcombine.low %v550, %v550
        %vm553 = vcmask 64512
        %v555 = vsel %vm553, %v533, 0
        %vm557 = vcmask 1043456
        %v559 = vsel %vm557, %v382, 0
        %561 = vmatprep.subr.bf16.mxu0 0
        %562 = vmatpush1.bf16.msra.mxu0 %v559
        %563 = vmatprep.subr.bf16.mxu0 0
        %564 = vmatpush1.bf16.msra.mxu0 0
        %565 = vmatprep.subr.bf16.mxu0 0
        %566 = vmatpush1.bf16.msra.mxu0 0
        %567 = vmatprep.subr.bf16.mxu0 0
        %568 = vmatpush1.bf16.msra.mxu0 0
        %569 = vmatprep.subr.bf16.mxu0 0
        %570 = vmatpush1.bf16.msra.mxu0 0
        %571 = vmatprep.subr.bf16.mxu0 0
        %572 = vmatpush1.bf16.msra.mxu0 0
        %573 = vmatprep.subr.bf16.mxu0 0
        %574 = vmatpush1.bf16.msra.mxu0 0
        %575 = vmatprep.subr.bf16.mxu0 0
        %576 = vmatpush1.bf16.msra.mxu0 0
        %577 = vmatprep.subr.bf16.mxu0 0
        %578 = vmatpush1.bf16.msra.mxu0 0
        %579 = vmatprep.subr.bf16.mxu0 0
        %580 = vmatpush1.bf16.msra.mxu0 0
        %581 = vmatprep.subr.bf16.mxu0 0
        %582 = vmatpush1.bf16.msra.mxu0 0
        %583 = vmatprep.subr.bf16.mxu0 0
        %584 = vmatpush1.bf16.msra.mxu0 0
        %585 = vmatprep.subr.bf16.mxu0 0
        %586 = vmatpush1.bf16.msra.mxu0 0
        %587 = vmatprep.subr.bf16.mxu0 0
        %588 = vmatpush1.bf16.msra.mxu0 0
        %589 = vmatprep.subr.bf16.mxu0 0
        %590 = vmatpush1.bf16.msra.mxu0 0
        %591 = vmatprep.subr.bf16.mxu0 0
        %592 = vmatpush1.bf16.msra.mxu0 0
        %593 = vmatprep.mubr.bf16.mxu0 0
        %594 = vmatmul.mubr.bf16.gmra.mrb[0].mxu0 %v555
        %v595 = vpop.f32.mrb[0].mxu0
        %v596 = vadd.f32 %v551, %v595
        %v597 = vpop.f32.mrb[0].mxu0
        %v598 = vpop.f32.mrb[0].mxu0
        %v599 = vpop.f32.mrb[0].mxu0
        %600 = vdwg.mxu0
        %v602 = vcombine.high %v596, %v596
        %v604 = vunpack.c.l.s4 1966171168
        %v605 = vunpack.c.0.s8 %v604
        %v606 = vlaneseq
        %v607 = vshrl.u32 %v606, 7
        %v608 = vsub.s32 %v605, %v607
        %v609 = vrot.slane %v596, %v608
        %v611 = vunpack.c.l.s4 1966171168
        %v612 = vunpack.c.0.s8 %v611
        %v613 = vlaneseq
        %v614 = vshrl.u32 %v613, 7
        %v615 = vsub.s32 %v612, %v614
        %v616 = vrot.slane %v602, %v615
        %v617 = vcombine.high %v609, %v609
        %v618 = vcombine.high %v616, %v616
        %v620 = vunpack.c.l.s4 1966171168
        %v621 = vunpack.c.0.s8 %v620
        %v622 = vlaneseq
        %v623 = vshrl.u32 %v622, 7
        %v624 = vsub.s32 %v621, %v623
        %v625 = vrot.slane %v609, %v624
        %v627 = vunpack.c.l.s4 1966171168
        %v628 = vunpack.c.0.s8 %v627
        %v629 = vlaneseq
        %v630 = vshrl.u32 %v629, 7
        %v631 = vsub.s32 %v628, %v630
        %v632 = vrot.slane %v616, %v631
        %v634 = vunpack.c.l.s4 1966171168
        %v635 = vunpack.c.0.s8 %v634
        %v636 = vlaneseq
        %v637 = vshrl.u32 %v636, 7
        %v638 = vsub.s32 %v635, %v637
        %v639 = vrot.slane %v617, %v638
        %v641 = vunpack.c.l.s4 1966171168
        %v642 = vunpack.c.0.s8 %v641
        %v643 = vlaneseq
        %v644 = vshrl.u32 %v643, 7
        %v645 = vsub.s32 %v642, %v644
        %v646 = vrot.slane %v618, %v645
        %v647 = vcombine.high %v625, %v625
        %v648 = vcombine.high %v632, %v632
        %v649 = vcombine.high %v639, %v639
        %v650 = vcombine.high %v646, %v646
        %659 = vst [vmem:[#allocation3] sm:$0x1] %v625
        %660 = vst [vmem:[#allocation3 + $0x1] sm:$0x1] %v639
        %661 = vst [vmem:[#allocation3 + $0x2] sm:$0x1] %v647
        %662 = vst [vmem:[#allocation3 + $0x3] sm:$0x1] %v649
        %663 = vst [vmem:[#allocation3 + $0x4] sm:$0x1] %v632
        %664 = vst [vmem:[#allocation3 + $0x5] sm:$0x1] %v646
        %665 = vst [vmem:[#allocation3 + $0x6] sm:$0x1] %v648
        %666 = vst [vmem:[#allocation3 + $0x7] sm:$0x1] %v650
        %v667 = vld [vmem:[#allocation11] sm:$0xf]
        %v668 = vld [vmem:[#allocation11 + $0x4] sm:$0xf]
        %v669 = vld [vmem:[#allocation11 + $0x8] sm:$0xf]
        %v670 = vld [vmem:[#allocation11 + $0xc] sm:$0xf]
        %vm671 = vcmask 253952
        %672 = vst.msk [vmem:[#allocation6] sm:$0x1] %vm671, 0.0
        %vm673 = vcmask 122880
        %674 = vst.msk [vmem:[#allocation7] sm:$0x1] %vm673, 0.0
        %675 = vst.msk [vmem:[#allocation8] sm:$0x1] %vm673, 0.0
        %v676 = vld [vmem:[#allocation6] sm:$0x1]
        %v677 = vpack.c.bf16 %v676, %v676
        %v682 = vunpack.c.l.b16 %v667
        %v683 = vunpack.c.l.b16 %v668
        %v684 = vunpack.c.l.b16 %v669
        %v685 = vunpack.c.l.b16 %v670
        %v686 = vpack.c.b16 %v683, %v682
        %v687 = vpack.c.b16 %v685, %v684
        %vm690 = vcmask 261120
        %v692 = vsel %vm690, %v677, 0
        %694 = vmatprep.subr.bf16.mxu0 0
        %695 = vmatpush1.bf16.msra.mxu0 %v686
        %696 = vmatprep.subr.bf16.mxu0 0
        %697 = vmatpush1.bf16.msra.mxu0 %v687
        %698 = vmatprep.subr.bf16.mxu0 0
        %699 = vmatpush1.bf16.msra.mxu0 0
        %700 = vmatprep.subr.bf16.mxu0 0
        %701 = vmatpush1.bf16.msra.mxu0 0
        %702 = vmatprep.subr.bf16.mxu0 0
        %703 = vmatpush1.bf16.msra.mxu0 0
        %704 = vmatprep.subr.bf16.mxu0 0
        %705 = vmatpush1.bf16.msra.mxu0 0
        %706 = vmatprep.subr.bf16.mxu0 0
        %707 = vmatpush1.bf16.msra.mxu0 0
        %708 = vmatprep.subr.bf16.mxu0 0
        %709 = vmatpush1.bf16.msra.mxu0 0
        %710 = vmatprep.subr.bf16.mxu0 0
        %711 = vmatpush1.bf16.msra.mxu0 0
        %712 = vmatprep.subr.bf16.mxu0 0
        %713 = vmatpush1.bf16.msra.mxu0 0
        %714 = vmatprep.subr.bf16.mxu0 0
        %715 = vmatpush1.bf16.msra.mxu0 0
        %716 = vmatprep.subr.bf16.mxu0 0
        %717 = vmatpush1.bf16.msra.mxu0 0
        %718 = vmatprep.subr.bf16.mxu0 0
        %719 = vmatpush1.bf16.msra.mxu0 0
        %720 = vmatprep.subr.bf16.mxu0 0
        %721 = vmatpush1.bf16.msra.mxu0 0
        %722 = vmatprep.subr.bf16.mxu0 0
        %723 = vmatpush1.bf16.msra.mxu0 0
        %724 = vmatprep.subr.bf16.mxu0 0
        %725 = vmatpush1.bf16.msra.mxu0 0
        %726 = vmatprep.mubr.bf16.mxu0 0
        %727 = vmatmul.mubr.bf16.gmra.mrb[0].mxu0 %v692
        %v728 = vpop.f32.mrb[0].mxu0
        %v729 = vadd.f32 0.0, %v728
        %v730 = vpop.f32.mrb[0].mxu0
        %v731 = vpop.f32.mrb[0].mxu0
        %v732 = vpop.f32.mrb[0].mxu0
        %733 = vdwg.mxu0
        %v734 = vld [vmem:[#allocation3] sm:$0x1]
        %v735 = vadd.f32 %v729, %v734
        %s736 = scalar_lea.vmem [#allocation3], 7
        %v737 = vld [vmem:[%s736] sm:$0x1]
        %v738 = vadd.f32 %v729, %v737
        %v739 = vxor.u32 %v735, 2147483648
        %v740 = vmul.f32 %v739, 1.442695
        %v741 = vpow.pop %v740
        %v742 = vadd.f32 %v741, 1.0
        %v743 = vrcp.pop %v742
        %v744 = vmul.f32 1.0, %v743
        %v745 = vtanh.pop %v735
        %v746 = vxor.u32 %v738, 2147483648
        %v747 = vmul.f32 %v746, 1.442695
        %v748 = vpow.pop %v747
        %v749 = vadd.f32 %v748, 1.0
        %v750 = vrcp.pop %v749
        %v751 = vmul.f32 1.0, %v750
        %v752 = vtanh.pop %v738
        %v753 = vld [vmem:[#allocation7] sm:$0x1]
        %v755 = vlaneseq
        %v756 = vshrl.u32 %v755, 7
        %v757 = vsub.s32 0, %v756
        %v758 = vrot.slane %v753, %v757
        %759 = vrot.lane.b32.xlu0 %v758, 16
        %v760 = vpop.permute.xlu0 %759
        %v762 = vmul.f32 %v744, %v760
        %764 = vrot.lane.b32.xlu0 %v745, 80
        %v765 = vpop.permute.xlu0 %764
        %v767 = vmul.f32 %v744, %v765
        %769 = vrot.lane.b32.xlu0 %v767, 16
        %v770 = vpop.permute.xlu0 %769
        %v772 = vadd.f32 %v762, %v770
        %v773 = vld [vmem:[#allocation8] sm:$0x1]
        %v775 = vlaneseq
        %v776 = vshrl.u32 %v775, 7
        %v777 = vsub.s32 0, %v776
        %v778 = vrot.slane %v773, %v777
        %779 = vrot.lane.b32.xlu0 %v778, 80
        %v780 = vpop.permute.xlu0 %779
        %v782 = vmul.f32 %v751, %v780
        %784 = vrot.lane.b32.xlu0 %v752, 80
        %v785 = vpop.permute.xlu0 %784
        %v787 = vmul.f32 %v751, %v785
        %789 = vrot.lane.b32.xlu0 %v787, 16
        %v790 = vpop.permute.xlu0 %789
        %v792 = vadd.f32 %v782, %v790
        %v793 = vtanh.pop %v772
        %795 = vrot.lane.b32.xlu0 %v793, 16
        %v796 = vpop.permute.xlu0 %795
        %v798 = vmul.f32 %v744, %v796
        %v799 = vtanh.pop %v792
        %801 = vrot.lane.b32.xlu0 %v799, 16
        %v802 = vpop.permute.xlu0 %801
        %v804 = vmul.f32 %v751, %v802
        %806 = vrot.lane.b32.xlu0 %v772, 112
        %v807 = vpop.permute.xlu0 %806
        %809 = vst.msk [vmem:[#allocation7] sm:$0x1] %vm673, %v807
        %811 = vrot.lane.b32.xlu0 %v792, 48
        %v812 = vpop.permute.xlu0 %811
        %814 = vst.msk [vmem:[#allocation8] sm:$0x1] %vm673, %v812
        %816 = vrot.lane.b32.xlu0 %v798, 96
        %v817 = vpop.permute.xlu0 %816
        %819 = vst.msk [vmem:[#allocation6] sm:$0x1] %vm673, %v817
        %821 = vrot.lane.b32.xlu0 %v804, 48
        %v822 = vpop.permute.xlu0 %821
        %vm824 = vcmask 254080
        %825 = vst.msk [vmem:[#allocation6] sm:$0x1] %vm824, %v822
        %826 = vst.msk [vmem:[#allocation4] sm:$0x1] %vm673, %v817
        %827 = vrot.lane.b32.xlu0 %v804, 32
        %v828 = vpop.permute.xlu0 %827
        %s830 = scalar_lea.vmem [#allocation5], 7
        %831 = vst.msk [vmem:[%s830] sm:$0x1] %vm673, %v828
        %v832 = vld [vmem:[#allocation6] sm:$0x1]
        %v833 = vpack.c.bf16 %v832, %v832
        %v835 = vsel %vm690, %v833, 0
        %837 = vmatprep.subr.bf16.mxu0 0
        %838 = vmatpush1.bf16.msra.mxu0 %v686
        %839 = vmatprep.subr.bf16.mxu0 0
        %840 = vmatpush1.bf16.msra.mxu0 %v687
        %841 = vmatprep.subr.bf16.mxu0 0
        %842 = vmatpush1.bf16.msra.mxu0 0
        %843 = vmatprep.subr.bf16.mxu0 0
        %844 = vmatpush1.bf16.msra.mxu0 0
        %845 = vmatprep.subr.bf16.mxu0 0
        %846 = vmatpush1.bf16.msra.mxu0 0
        %847 = vmatprep.subr.bf16.mxu0 0
        %848 = vmatpush1.bf16.msra.mxu0 0
        %849 = vmatprep.subr.bf16.mxu0 0
        %850 = vmatpush1.bf16.msra.mxu0 0
        %851 = vmatprep.subr.bf16.mxu0 0
        %852 = vmatpush1.bf16.msra.mxu0 0
        %853 = vmatprep.subr.bf16.mxu0 0
        %854 = vmatpush1.bf16.msra.mxu0 0
        %855 = vmatprep.subr.bf16.mxu0 0
        %856 = vmatpush1.bf16.msra.mxu0 0
        %857 = vmatprep.subr.bf16.mxu0 0
        %858 = vmatpush1.bf16.msra.mxu0 0
        %859 = vmatprep.subr.bf16.mxu0 0
        %860 = vmatpush1.bf16.msra.mxu0 0
        %861 = vmatprep.subr.bf16.mxu0 0
        %862 = vmatpush1.bf16.msra.mxu0 0
        %863 = vmatprep.subr.bf16.mxu0 0
        %864 = vmatpush1.bf16.msra.mxu0 0
        %865 = vmatprep.subr.bf16.mxu0 0
        %866 = vmatpush1.bf16.msra.mxu0 0
        %867 = vmatprep.subr.bf16.mxu0 0
        %868 = vmatpush1.bf16.msra.mxu0 0
        %869 = vmatprep.mubr.bf16.mxu0 0
        %870 = vmatmul.mubr.bf16.gmra.mrb[0].mxu0 %v835
        %v871 = vpop.f32.mrb[0].mxu0
        %v872 = vadd.f32 0.0, %v871
        %v873 = vpop.f32.mrb[0].mxu0
        %v874 = vpop.f32.mrb[0].mxu0
        %v875 = vpop.f32.mrb[0].mxu0
        %876 = vdwg.mxu0
        %s877 = scalar_lea.vmem [#allocation3], 1
        %v878 = vld [vmem:[%s877] sm:$0x1]
        %v879 = vadd.f32 %v872, %v878
        %s880 = scalar_lea.vmem [#allocation3], 6
        %v881 = vld [vmem:[%s880] sm:$0x1]
        %v882 = vadd.f32 %v872, %v881
        %v883 = vxor.u32 %v879, 2147483648
        %v884 = vmul.f32 %v883, 1.442695
        %v885 = vpow.pop %v884
        %v886 = vadd.f32 %v885, 1.0
        %v887 = vrcp.pop %v886
        %v888 = vmul.f32 1.0, %v887
        %v889 = vtanh.pop %v879
        %v890 = vxor.u32 %v882, 2147483648
        %v891 = vmul.f32 %v890, 1.442695
        %v892 = vpow.pop %v891
        %v893 = vadd.f32 %v892, 1.0
        %v894 = vrcp.pop %v893
        %v895 = vmul.f32 1.0, %v894
        %v896 = vtanh.pop %v882
        %v897 = vld [vmem:[#allocation7] sm:$0x1]
        %v899 = vlaneseq
        %v900 = vshrl.u32 %v899, 7
        %v901 = vsub.s32 0, %v900
        %v902 = vrot.slane %v897, %v901
        %903 = vrot.lane.b32.xlu0 %v902, 16
        %v904 = vpop.permute.xlu0 %903
        %v906 = vmul.f32 %v888, %v904
        %908 = vrot.lane.b32.xlu0 %v889, 80
        %v909 = vpop.permute.xlu0 %908
        %v911 = vmul.f32 %v888, %v909
        %913 = vrot.lane.b32.xlu0 %v911, 16
        %v914 = vpop.permute.xlu0 %913
        %v916 = vadd.f32 %v906, %v914
        %v917 = vld [vmem:[#allocation8] sm:$0x1]
        %v919 = vlaneseq
        %v920 = vshrl.u32 %v919, 7
        %v921 = vsub.s32 0, %v920
        %v922 = vrot.slane %v917, %v921
        %923 = vrot.lane.b32.xlu0 %v922, 80
        %v924 = vpop.permute.xlu0 %923
        %v926 = vmul.f32 %v895, %v924
        %928 = vrot.lane.b32.xlu0 %v896, 80
        %v929 = vpop.permute.xlu0 %928
        %v931 = vmul.f32 %v895, %v929
        %933 = vrot.lane.b32.xlu0 %v931, 16
        %v934 = vpop.permute.xlu0 %933
        %v936 = vadd.f32 %v926, %v934
        %v937 = vtanh.pop %v916
        %939 = vrot.lane.b32.xlu0 %v937, 16
        %v940 = vpop.permute.xlu0 %939
        %v942 = vmul.f32 %v888, %v940
        %v943 = vtanh.pop %v936
        %945 = vrot.lane.b32.xlu0 %v943, 16
        %v946 = vpop.permute.xlu0 %945
        %v948 = vmul.f32 %v895, %v946
        %950 = vrot.lane.b32.xlu0 %v916, 112
        %v951 = vpop.permute.xlu0 %950
        %953 = vst.msk [vmem:[#allocation7] sm:$0x1] %vm673, %v951
        %955 = vrot.lane.b32.xlu0 %v936, 48
        %v956 = vpop.permute.xlu0 %955
        %958 = vst.msk [vmem:[#allocation8] sm:$0x1] %vm673, %v956
        %960 = vrot.lane.b32.xlu0 %v942, 96
        %v961 = vpop.permute.xlu0 %960
        %963 = vst.msk [vmem:[#allocation6] sm:$0x1] %vm673, %v961
        %965 = vrot.lane.b32.xlu0 %v948, 48
        %v966 = vpop.permute.xlu0 %965
        %968 = vst.msk [vmem:[#allocation6] sm:$0x1] %vm824, %v966
        %s969 = scalar_lea.vmem [#allocation4], 1
        %970 = vst.msk [vmem:[%s969] sm:$0x1] %vm673, %v961
        %971 = vrot.lane.b32.xlu0 %v948, 32
        %v972 = vpop.permute.xlu0 %971
        %s974 = scalar_lea.vmem [#allocation5], 6
        %975 = vst.msk [vmem:[%s974] sm:$0x1] %vm673, %v972
        %v976 = vld [vmem:[#allocation6] sm:$0x1]
        %v977 = vpack.c.bf16 %v976, %v976
        %v979 = vsel %vm690, %v977, 0
        %981 = vmatprep.subr.bf16.mxu0 0
        %982 = vmatpush1.bf16.msra.mxu0 %v686
        %983 = vmatprep.subr.bf16.mxu0 0
        %984 = vmatpush1.bf16.msra.mxu0 %v687
        %985 = vmatprep.subr.bf16.mxu0 0
        %986 = vmatpush1.bf16.msra.mxu0 0
        %987 = vmatprep.subr.bf16.mxu0 0
        %988 = vmatpush1.bf16.msra.mxu0 0
        %989 = vmatprep.subr.bf16.mxu0 0
        %990 = vmatpush1.bf16.msra.mxu0 0
        %991 = vmatprep.subr.bf16.mxu0 0
        %992 = vmatpush1.bf16.msra.mxu0 0
        %993 = vmatprep.subr.bf16.mxu0 0
        %994 = vmatpush1.bf16.msra.mxu0 0
        %995 = vmatprep.subr.bf16.mxu0 0
        %996 = vmatpush1.bf16.msra.mxu0 0
        %997 = vmatprep.subr.bf16.mxu0 0
        %998 = vmatpush1.bf16.msra.mxu0 0
        %999 = vmatprep.subr.bf16.mxu0 0
        %1000 = vmatpush1.bf16.msra.mxu0 0
        %1001 = vmatprep.subr.bf16.mxu0 0
        %1002 = vmatpush1.bf16.msra.mxu0 0
        %1003 = vmatprep.subr.bf16.mxu0 0
        %1004 = vmatpush1.bf16.msra.mxu0 0
        %1005 = vmatprep.subr.bf16.mxu0 0
        %1006 = vmatpush1.bf16.msra.mxu0 0
        %1007 = vmatprep.subr.bf16.mxu0 0
        %1008 = vmatpush1.bf16.msra.mxu0 0
        %1009 = vmatprep.subr.bf16.mxu0 0
        %1010 = vmatpush1.bf16.msra.mxu0 0
        %1011 = vmatprep.subr.bf16.mxu0 0
        %1012 = vmatpush1.bf16.msra.mxu0 0
        %1013 = vmatprep.mubr.bf16.mxu0 0
        %1014 = vmatmul.mubr.bf16.gmra.mrb[0].mxu0 %v979
        %v1015 = vpop.f32.mrb[0].mxu0
        %v1016 = vadd.f32 0.0, %v1015
        %v1017 = vpop.f32.mrb[0].mxu0
        %v1018 = vpop.f32.mrb[0].mxu0
        %v1019 = vpop.f32.mrb[0].mxu0
        %1020 = vdwg.mxu0
        %s1021 = scalar_lea.vmem [#allocation3], 2
        %v1022 = vld [vmem:[%s1021] sm:$0x1]
        %v1023 = vadd.f32 %v1016, %v1022
        %s1024 = scalar_lea.vmem [#allocation3], 5
        %v1025 = vld [vmem:[%s1024] sm:$0x1]
        %v1026 = vadd.f32 %v1016, %v1025
        %v1027 = vxor.u32 %v1023, 2147483648
        %v1028 = vmul.f32 %v1027, 1.442695
        %v1029 = vpow.pop %v1028
        %v1030 = vadd.f32 %v1029, 1.0
        %v1031 = vrcp.pop %v1030
        %v1032 = vmul.f32 1.0, %v1031
        %v1033 = vtanh.pop %v1023
        %v1034 = vxor.u32 %v1026, 2147483648
        %v1035 = vmul.f32 %v1034, 1.442695
        %v1036 = vpow.pop %v1035
        %v1037 = vadd.f32 %v1036, 1.0
        %v1038 = vrcp.pop %v1037
        %v1039 = vmul.f32 1.0, %v1038
        %v1040 = vtanh.pop %v1026
        %v1041 = vld [vmem:[#allocation7] sm:$0x1]
        %v1043 = vlaneseq
        %v1044 = vshrl.u32 %v1043, 7
        %v1045 = vsub.s32 0, %v1044
        %v1046 = vrot.slane %v1041, %v1045
        %1047 = vrot.lane.b32.xlu0 %v1046, 16
        %v1048 = vpop.permute.xlu0 %1047
        %v1050 = vmul.f32 %v1032, %v1048
        %1052 = vrot.lane.b32.xlu0 %v1033, 80
        %v1053 = vpop.permute.xlu0 %1052
        %v1055 = vmul.f32 %v1032, %v1053
        %1057 = vrot.lane.b32.xlu0 %v1055, 16
        %v1058 = vpop.permute.xlu0 %1057
        %v1060 = vadd.f32 %v1050, %v1058
        %v1061 = vld [vmem:[#allocation8] sm:$0x1]
        %v1063 = vlaneseq
        %v1064 = vshrl.u32 %v1063, 7
        %v1065 = vsub.s32 0, %v1064
        %v1066 = vrot.slane %v1061, %v1065
        %1067 = vrot.lane.b32.xlu0 %v1066, 80
        %v1068 = vpop.permute.xlu0 %1067
        %v1070 = vmul.f32 %v1039, %v1068
        %1072 = vrot.lane.b32.xlu0 %v1040, 80
        %v1073 = vpop.permute.xlu0 %1072
        %v1075 = vmul.f32 %v1039, %v1073
        %1077 = vrot.lane.b32.xlu0 %v1075, 16
        %v1078 = vpop.permute.xlu0 %1077
        %v1080 = vadd.f32 %v1070, %v1078
        %v1081 = vtanh.pop %v1060
        %1083 = vrot.lane.b32.xlu0 %v1081, 16
        %v1084 = vpop.permute.xlu0 %1083
        %v1086 = vmul.f32 %v1032, %v1084
        %v1087 = vtanh.pop %v1080
        %1089 = vrot.lane.b32.xlu0 %v1087, 16
        %v1090 = vpop.permute.xlu0 %1089
        %v1092 = vmul.f32 %v1039, %v1090
        %1094 = vrot.lane.b32.xlu0 %v1060, 112
        %v1095 = vpop.permute.xlu0 %1094
        %1097 = vst.msk [vmem:[#allocation7] sm:$0x1] %vm673, %v1095
        %1099 = vrot.lane.b32.xlu0 %v1080, 48
        %v1100 = vpop.permute.xlu0 %1099
        %1102 = vst.msk [vmem:[#allocation8] sm:$0x1] %vm673, %v1100
        %1104 = vrot.lane.b32.xlu0 %v1086, 96
        %v1105 = vpop.permute.xlu0 %1104
        %1107 = vst.msk [vmem:[#allocation6] sm:$0x1] %vm673, %v1105
        %1109 = vrot.lane.b32.xlu0 %v1092, 48
        %v1110 = vpop.permute.xlu0 %1109
        %1112 = vst.msk [vmem:[#allocation6] sm:$0x1] %vm824, %v1110
        %s1113 = scalar_lea.vmem [#allocation4], 2
        %1114 = vst.msk [vmem:[%s1113] sm:$0x1] %vm673, %v1105
        %1115 = vrot.lane.b32.xlu0 %v1092, 32
        %v1116 = vpop.permute.xlu0 %1115
        %s1118 = scalar_lea.vmem [#allocation5], 5
        %1119 = vst.msk [vmem:[%s1118] sm:$0x1] %vm673, %v1116
        %v1120 = vld [vmem:[#allocation6] sm:$0x1]
        %v1121 = vpack.c.bf16 %v1120, %v1120
        %v1123 = vsel %vm690, %v1121, 0
        %1125 = vmatprep.subr.bf16.mxu0 0
        %1126 = vmatpush1.bf16.msra.mxu0 %v686
        %1127 = vmatprep.subr.bf16.mxu0 0
        %1128 = vmatpush1.bf16.msra.mxu0 %v687
        %1129 = vmatprep.subr.bf16.mxu0 0
        %1130 = vmatpush1.bf16.msra.mxu0 0
        %1131 = vmatprep.subr.bf16.mxu0 0
        %1132 = vmatpush1.bf16.msra.mxu0 0
        %1133 = vmatprep.subr.bf16.mxu0 0
        %1134 = vmatpush1.bf16.msra.mxu0 0
        %1135 = vmatprep.subr.bf16.mxu0 0
        %1136 = vmatpush1.bf16.msra.mxu0 0
        %1137 = vmatprep.subr.bf16.mxu0 0
        %1138 = vmatpush1.bf16.msra.mxu0 0
        %1139 = vmatprep.subr.bf16.mxu0 0
        %1140 = vmatpush1.bf16.msra.mxu0 0
        %1141 = vmatprep.subr.bf16.mxu0 0
        %1142 = vmatpush1.bf16.msra.mxu0 0
        %1143 = vmatprep.subr.bf16.mxu0 0
        %1144 = vmatpush1.bf16.msra.mxu0 0
        %1145 = vmatprep.subr.bf16.mxu0 0
        %1146 = vmatpush1.bf16.msra.mxu0 0
        %1147 = vmatprep.subr.bf16.mxu0 0
        %1148 = vmatpush1.bf16.msra.mxu0 0
        %1149 = vmatprep.subr.bf16.mxu0 0
        %1150 = vmatpush1.bf16.msra.mxu0 0
        %1151 = vmatprep.subr.bf16.mxu0 0
        %1152 = vmatpush1.bf16.msra.mxu0 0
        %1153 = vmatprep.subr.bf16.mxu0 0
        %1154 = vmatpush1.bf16.msra.mxu0 0
        %1155 = vmatprep.subr.bf16.mxu0 0
        %1156 = vmatpush1.bf16.msra.mxu0 0
        %1157 = vmatprep.mubr.bf16.mxu0 0
        %1158 = vmatmul.mubr.bf16.gmra.mrb[0].mxu0 %v1123
        %v1159 = vpop.f32.mrb[0].mxu0
        %v1160 = vadd.f32 0.0, %v1159
        %v1161 = vpop.f32.mrb[0].mxu0
        %v1162 = vpop.f32.mrb[0].mxu0
        %v1163 = vpop.f32.mrb[0].mxu0
        %1164 = vdwg.mxu0
        %s1165 = scalar_lea.vmem [#allocation3], 3
        %v1166 = vld [vmem:[%s1165] sm:$0x1]
        %v1167 = vadd.f32 %v1160, %v1166
        %s1168 = scalar_lea.vmem [#allocation3], 4
        %v1169 = vld [vmem:[%s1168] sm:$0x1]
        %v1170 = vadd.f32 %v1160, %v1169
        %v1171 = vxor.u32 %v1167, 2147483648
        %v1172 = vmul.f32 %v1171, 1.442695
        %v1173 = vpow.pop %v1172
        %v1174 = vadd.f32 %v1173, 1.0
        %v1175 = vrcp.pop %v1174
        %v1176 = vmul.f32 1.0, %v1175
        %v1177 = vtanh.pop %v1167
        %v1178 = vxor.u32 %v1170, 2147483648
        %v1179 = vmul.f32 %v1178, 1.442695
        %v1180 = vpow.pop %v1179
        %v1181 = vadd.f32 %v1180, 1.0
        %v1182 = vrcp.pop %v1181
        %v1183 = vmul.f32 1.0, %v1182
        %v1184 = vtanh.pop %v1170
        %v1185 = vld [vmem:[#allocation7] sm:$0x1]
        %v1187 = vlaneseq
        %v1188 = vshrl.u32 %v1187, 7
        %v1189 = vsub.s32 0, %v1188
        %v1190 = vrot.slane %v1185, %v1189
        %1191 = vrot.lane.b32.xlu0 %v1190, 16
        %v1192 = vpop.permute.xlu0 %1191
        %v1194 = vmul.f32 %v1176, %v1192
        %1196 = vrot.lane.b32.xlu0 %v1177, 80
        %v1197 = vpop.permute.xlu0 %1196
        %v1199 = vmul.f32 %v1176, %v1197
        %1201 = vrot.lane.b32.xlu0 %v1199, 16
        %v1202 = vpop.permute.xlu0 %1201
        %v1204 = vadd.f32 %v1194, %v1202
        %v1205 = vld [vmem:[#allocation8] sm:$0x1]
        %v1207 = vlaneseq
        %v1208 = vshrl.u32 %v1207, 7
        %v1209 = vsub.s32 0, %v1208
        %v1210 = vrot.slane %v1205, %v1209
        %1211 = vrot.lane.b32.xlu0 %v1210, 80
        %v1212 = vpop.permute.xlu0 %1211
        %v1214 = vmul.f32 %v1183, %v1212
        %1216 = vrot.lane.b32.xlu0 %v1184, 80
        %v1217 = vpop.permute.xlu0 %1216
        %v1219 = vmul.f32 %v1183, %v1217
        %1221 = vrot.lane.b32.xlu0 %v1219, 16
        %v1222 = vpop.permute.xlu0 %1221
        %v1224 = vadd.f32 %v1214, %v1222
        %v1225 = vtanh.pop %v1204
        %1227 = vrot.lane.b32.xlu0 %v1225, 16
        %v1228 = vpop.permute.xlu0 %1227
        %v1230 = vmul.f32 %v1176, %v1228
        %v1231 = vtanh.pop %v1224
        %1233 = vrot.lane.b32.xlu0 %v1231, 16
        %v1234 = vpop.permute.xlu0 %1233
        %v1236 = vmul.f32 %v1183, %v1234
        %1238 = vrot.lane.b32.xlu0 %v1204, 112
        %v1239 = vpop.permute.xlu0 %1238
        %1241 = vst.msk [vmem:[#allocation7] sm:$0x1] %vm673, %v1239
        %1243 = vrot.lane.b32.xlu0 %v1224, 48
        %v1244 = vpop.permute.xlu0 %1243
        %1246 = vst.msk [vmem:[#allocation8] sm:$0x1] %vm673, %v1244
        %1248 = vrot.lane.b32.xlu0 %v1230, 96
        %v1249 = vpop.permute.xlu0 %1248
        %1251 = vst.msk [vmem:[#allocation6] sm:$0x1] %vm673, %v1249
        %1253 = vrot.lane.b32.xlu0 %v1236, 48
        %v1254 = vpop.permute.xlu0 %1253
        %1256 = vst.msk [vmem:[#allocation6] sm:$0x1] %vm824, %v1254
        %s1257 = scalar_lea.vmem [#allocation4], 3
        %1258 = vst.msk [vmem:[%s1257] sm:$0x1] %vm673, %v1249
        %1259 = vrot.lane.b32.xlu0 %v1236, 32
        %v1260 = vpop.permute.xlu0 %1259
        %s1262 = scalar_lea.vmem [#allocation5], 4
        %1263 = vst.msk [vmem:[%s1262] sm:$0x1] %vm673, %v1260
        %v1264 = vld [vmem:[#allocation6] sm:$0x1]
        %v1265 = vpack.c.bf16 %v1264, %v1264
        %v1267 = vsel %vm690, %v1265, 0
        %1269 = vmatprep.subr.bf16.mxu0 0
        %1270 = vmatpush1.bf16.msra.mxu0 %v686
        %1271 = vmatprep.subr.bf16.mxu0 0
        %1272 = vmatpush1.bf16.msra.mxu0 %v687
        %1273 = vmatprep.subr.bf16.mxu0 0
        %1274 = vmatpush1.bf16.msra.mxu0 0
        %1275 = vmatprep.subr.bf16.mxu0 0
        %1276 = vmatpush1.bf16.msra.mxu0 0
        %1277 = vmatprep.subr.bf16.mxu0 0
        %1278 = vmatpush1.bf16.msra.mxu0 0
        %1279 = vmatprep.subr.bf16.mxu0 0
        %1280 = vmatpush1.bf16.msra.mxu0 0
        %1281 = vmatprep.subr.bf16.mxu0 0
        %1282 = vmatpush1.bf16.msra.mxu0 0
        %1283 = vmatprep.subr.bf16.mxu0 0
        %1284 = vmatpush1.bf16.msra.mxu0 0
        %1285 = vmatprep.subr.bf16.mxu0 0
        %1286 = vmatpush1.bf16.msra.mxu0 0
        %1287 = vmatprep.subr.bf16.mxu0 0
        %1288 = vmatpush1.bf16.msra.mxu0 0
        %1289 = vmatprep.subr.bf16.mxu0 0
        %1290 = vmatpush1.bf16.msra.mxu0 0
        %1291 = vmatprep.subr.bf16.mxu0 0
        %1292 = vmatpush1.bf16.msra.mxu0 0
        %1293 = vmatprep.subr.bf16.mxu0 0
        %1294 = vmatpush1.bf16.msra.mxu0 0
        %1295 = vmatprep.subr.bf16.mxu0 0
        %1296 = vmatpush1.bf16.msra.mxu0 0
        %1297 = vmatprep.subr.bf16.mxu0 0
        %1298 = vmatpush1.bf16.msra.mxu0 0
        %1299 = vmatprep.subr.bf16.mxu0 0
        %1300 = vmatpush1.bf16.msra.mxu0 0
        %1301 = vmatprep.mubr.bf16.mxu0 0
        %1302 = vmatmul.mubr.bf16.gmra.mrb[0].mxu0 %v1267
        %v1303 = vpop.f32.mrb[0].mxu0
        %v1304 = vadd.f32 0.0, %v1303
        %v1305 = vpop.f32.mrb[0].mxu0
        %v1306 = vpop.f32.mrb[0].mxu0
        %v1307 = vpop.f32.mrb[0].mxu0
        %1308 = vdwg.mxu0
        %v1309 = vld [vmem:[%s1168] sm:$0x1]
        %v1310 = vadd.f32 %v1304, %v1309
        %v1311 = vld [vmem:[%s1165] sm:$0x1]
        %v1312 = vadd.f32 %v1304, %v1311
        %v1313 = vxor.u32 %v1310, 2147483648
        %v1314 = vmul.f32 %v1313, 1.442695
        %v1315 = vpow.pop %v1314
        %v1316 = vadd.f32 %v1315, 1.0
        %v1317 = vrcp.pop %v1316
        %v1318 = vmul.f32 1.0, %v1317
        %v1319 = vtanh.pop %v1310
        %v1320 = vxor.u32 %v1312, 2147483648
        %v1321 = vmul.f32 %v1320, 1.442695
        %v1322 = vpow.pop %v1321
        %v1323 = vadd.f32 %v1322, 1.0
        %v1324 = vrcp.pop %v1323
        %v1325 = vmul.f32 1.0, %v1324
        %v1326 = vtanh.pop %v1312
        %v1327 = vld [vmem:[#allocation7] sm:$0x1]
        %v1329 = vlaneseq
        %v1330 = vshrl.u32 %v1329, 7
        %v1331 = vsub.s32 0, %v1330
        %v1332 = vrot.slane %v1327, %v1331
        %1333 = vrot.lane.b32.xlu0 %v1332, 16
        %v1334 = vpop.permute.xlu0 %1333
        %v1336 = vmul.f32 %v1318, %v1334
        %1338 = vrot.lane.b32.xlu0 %v1319, 80
        %v1339 = vpop.permute.xlu0 %1338
        %v1341 = vmul.f32 %v1318, %v1339
        %1343 = vrot.lane.b32.xlu0 %v1341, 16
        %v1344 = vpop.permute.xlu0 %1343
        %v1346 = vadd.f32 %v1336, %v1344
        %v1347 = vld [vmem:[#allocation8] sm:$0x1]
        %v1349 = vlaneseq
        %v1350 = vshrl.u32 %v1349, 7
        %v1351 = vsub.s32 0, %v1350
        %v1352 = vrot.slane %v1347, %v1351
        %1353 = vrot.lane.b32.xlu0 %v1352, 80
        %v1354 = vpop.permute.xlu0 %1353
        %v1356 = vmul.f32 %v1325, %v1354
        %1358 = vrot.lane.b32.xlu0 %v1326, 80
        %v1359 = vpop.permute.xlu0 %1358
        %v1361 = vmul.f32 %v1325, %v1359
        %1363 = vrot.lane.b32.xlu0 %v1361, 16
        %v1364 = vpop.permute.xlu0 %1363
        %v1366 = vadd.f32 %v1356, %v1364
        %v1367 = vtanh.pop %v1346
        %1369 = vrot.lane.b32.xlu0 %v1367, 16
        %v1370 = vpop.permute.xlu0 %1369
        %v1372 = vmul.f32 %v1318, %v1370
        %v1373 = vtanh.pop %v1366
        %1375 = vrot.lane.b32.xlu0 %v1373, 16
        %v1376 = vpop.permute.xlu0 %1375
        %v1378 = vmul.f32 %v1325, %v1376
        %1380 = vrot.lane.b32.xlu0 %v1346, 112
        %v1381 = vpop.permute.xlu0 %1380
        %1383 = vst.msk [vmem:[#allocation7] sm:$0x1] %vm673, %v1381
        %1385 = vrot.lane.b32.xlu0 %v1366, 48
        %v1386 = vpop.permute.xlu0 %1385
        %1388 = vst.msk [vmem:[#allocation8] sm:$0x1] %vm673, %v1386
        %1390 = vrot.lane.b32.xlu0 %v1372, 96
        %v1391 = vpop.permute.xlu0 %1390
        %1393 = vst.msk [vmem:[#allocation6] sm:$0x1] %vm673, %v1391
        %1395 = vrot.lane.b32.xlu0 %v1378, 48
        %v1396 = vpop.permute.xlu0 %1395
        %1398 = vst.msk [vmem:[#allocation6] sm:$0x1] %vm824, %v1396
        %s1399 = scalar_lea.vmem [#allocation4], 4
        %1400 = vst.msk [vmem:[%s1399] sm:$0x1] %vm673, %v1391
        %1401 = vrot.lane.b32.xlu0 %v1378, 32
        %v1402 = vpop.permute.xlu0 %1401
        %s1404 = scalar_lea.vmem [#allocation5], 3
        %1405 = vst.msk [vmem:[%s1404] sm:$0x1] %vm673, %v1402
        %v1406 = vld [vmem:[#allocation6] sm:$0x1]
        %v1407 = vpack.c.bf16 %v1406, %v1406
        %v1409 = vsel %vm690, %v1407, 0
        %1411 = vmatprep.subr.bf16.mxu0 0
        %1412 = vmatpush1.bf16.msra.mxu0 %v686
        %1413 = vmatprep.subr.bf16.mxu0 0
        %1414 = vmatpush1.bf16.msra.mxu0 %v687
        %1415 = vmatprep.subr.bf16.mxu0 0
        %1416 = vmatpush1.bf16.msra.mxu0 0
        %1417 = vmatprep.subr.bf16.mxu0 0
        %1418 = vmatpush1.bf16.msra.mxu0 0
        %1419 = vmatprep.subr.bf16.mxu0 0
        %1420 = vmatpush1.bf16.msra.mxu0 0
        %1421 = vmatprep.subr.bf16.mxu0 0
        %1422 = vmatpush1.bf16.msra.mxu0 0
        %1423 = vmatprep.subr.bf16.mxu0 0
        %1424 = vmatpush1.bf16.msra.mxu0 0
        %1425 = vmatprep.subr.bf16.mxu0 0
        %1426 = vmatpush1.bf16.msra.mxu0 0
        %1427 = vmatprep.subr.bf16.mxu0 0
        %1428 = vmatpush1.bf16.msra.mxu0 0
        %1429 = vmatprep.subr.bf16.mxu0 0
        %1430 = vmatpush1.bf16.msra.mxu0 0
        %1431 = vmatprep.subr.bf16.mxu0 0
        %1432 = vmatpush1.bf16.msra.mxu0 0
        %1433 = vmatprep.subr.bf16.mxu0 0
        %1434 = vmatpush1.bf16.msra.mxu0 0
        %1435 = vmatprep.subr.bf16.mxu0 0
        %1436 = vmatpush1.bf16.msra.mxu0 0
        %1437 = vmatprep.subr.bf16.mxu0 0
        %1438 = vmatpush1.bf16.msra.mxu0 0
        %1439 = vmatprep.subr.bf16.mxu0 0
        %1440 = vmatpush1.bf16.msra.mxu0 0
        %1441 = vmatprep.subr.bf16.mxu0 0
        %1442 = vmatpush1.bf16.msra.mxu0 0
        %1443 = vmatprep.mubr.bf16.mxu0 0
        %1444 = vmatmul.mubr.bf16.gmra.mrb[0].mxu0 %v1409
        %v1445 = vpop.f32.mrb[0].mxu0
        %v1446 = vadd.f32 0.0, %v1445
        %v1447 = vpop.f32.mrb[0].mxu0
        %v1448 = vpop.f32.mrb[0].mxu0
        %v1449 = vpop.f32.mrb[0].mxu0
        %1450 = vdwg.mxu0
        %v1451 = vld [vmem:[%s1024] sm:$0x1]
        %v1452 = vadd.f32 %v1446, %v1451
        %v1453 = vld [vmem:[%s1021] sm:$0x1]
        %v1454 = vadd.f32 %v1446, %v1453
        %v1455 = vxor.u32 %v1452, 2147483648
        %v1456 = vmul.f32 %v1455, 1.442695
        %v1457 = vpow.pop %v1456
        %v1458 = vadd.f32 %v1457, 1.0
        %v1459 = vrcp.pop %v1458
        %v1460 = vmul.f32 1.0, %v1459
        %v1461 = vtanh.pop %v1452
        %v1462 = vxor.u32 %v1454, 2147483648
        %v1463 = vmul.f32 %v1462, 1.442695
        %v1464 = vpow.pop %v1463
        %v1465 = vadd.f32 %v1464, 1.0
        %v1466 = vrcp.pop %v1465
        %v1467 = vmul.f32 1.0, %v1466
        %v1468 = vtanh.pop %v1454
        %v1469 = vld [vmem:[#allocation7] sm:$0x1]
        %v1471 = vlaneseq
        %v1472 = vshrl.u32 %v1471, 7
        %v1473 = vsub.s32 0, %v1472
        %v1474 = vrot.slane %v1469, %v1473
        %1475 = vrot.lane.b32.xlu0 %v1474, 16
        %v1476 = vpop.permute.xlu0 %1475
        %v1478 = vmul.f32 %v1460, %v1476
        %1480 = vrot.lane.b32.xlu0 %v1461, 80
        %v1481 = vpop.permute.xlu0 %1480
        %v1483 = vmul.f32 %v1460, %v1481
        %1485 = vrot.lane.b32.xlu0 %v1483, 16
        %v1486 = vpop.permute.xlu0 %1485
        %v1488 = vadd.f32 %v1478, %v1486
        %v1489 = vld [vmem:[#allocation8] sm:$0x1]
        %v1491 = vlaneseq
        %v1492 = vshrl.u32 %v1491, 7
        %v1493 = vsub.s32 0, %v1492
        %v1494 = vrot.slane %v1489, %v1493
        %1495 = vrot.lane.b32.xlu0 %v1494, 80
        %v1496 = vpop.permute.xlu0 %1495
        %v1498 = vmul.f32 %v1467, %v1496
        %1500 = vrot.lane.b32.xlu0 %v1468, 80
        %v1501 = vpop.permute.xlu0 %1500
        %v1503 = vmul.f32 %v1467, %v1501
        %1505 = vrot.lane.b32.xlu0 %v1503, 16
        %v1506 = vpop.permute.xlu0 %1505
        %v1508 = vadd.f32 %v1498, %v1506
        %v1509 = vtanh.pop %v1488
        %1511 = vrot.lane.b32.xlu0 %v1509, 16
        %v1512 = vpop.permute.xlu0 %1511
        %v1514 = vmul.f32 %v1460, %v1512
        %v1515 = vtanh.pop %v1508
        %1517 = vrot.lane.b32.xlu0 %v1515, 16
        %v1518 = vpop.permute.xlu0 %1517
        %v1520 = vmul.f32 %v1467, %v1518
        %1522 = vrot.lane.b32.xlu0 %v1488, 112
        %v1523 = vpop.permute.xlu0 %1522
        %1525 = vst.msk [vmem:[#allocation7] sm:$0x1] %vm673, %v1523
        %1527 = vrot.lane.b32.xlu0 %v1508, 48
        %v1528 = vpop.permute.xlu0 %1527
        %1530 = vst.msk [vmem:[#allocation8] sm:$0x1] %vm673, %v1528
        %1532 = vrot.lane.b32.xlu0 %v1514, 96
        %v1533 = vpop.permute.xlu0 %1532
        %1535 = vst.msk [vmem:[#allocation6] sm:$0x1] %vm673, %v1533
        %1537 = vrot.lane.b32.xlu0 %v1520, 48
        %v1538 = vpop.permute.xlu0 %1537
        %1540 = vst.msk [vmem:[#allocation6] sm:$0x1] %vm824, %v1538
        %s1541 = scalar_lea.vmem [#allocation4], 5
        %1542 = vst.msk [vmem:[%s1541] sm:$0x1] %vm673, %v1533
        %1543 = vrot.lane.b32.xlu0 %v1520, 32
        %v1544 = vpop.permute.xlu0 %1543
        %s1546 = scalar_lea.vmem [#allocation5], 2
        %1547 = vst.msk [vmem:[%s1546] sm:$0x1] %vm673, %v1544
        %v1548 = vld [vmem:[#allocation6] sm:$0x1]
        %v1549 = vpack.c.bf16 %v1548, %v1548
        %v1551 = vsel %vm690, %v1549, 0
        %1553 = vmatprep.subr.bf16.mxu0 0
        %1554 = vmatpush1.bf16.msra.mxu0 %v686
        %1555 = vmatprep.subr.bf16.mxu0 0
        %1556 = vmatpush1.bf16.msra.mxu0 %v687
        %1557 = vmatprep.subr.bf16.mxu0 0
        %1558 = vmatpush1.bf16.msra.mxu0 0
        %1559 = vmatprep.subr.bf16.mxu0 0
        %1560 = vmatpush1.bf16.msra.mxu0 0
        %1561 = vmatprep.subr.bf16.mxu0 0
        %1562 = vmatpush1.bf16.msra.mxu0 0
        %1563 = vmatprep.subr.bf16.mxu0 0
        %1564 = vmatpush1.bf16.msra.mxu0 0
        %1565 = vmatprep.subr.bf16.mxu0 0
        %1566 = vmatpush1.bf16.msra.mxu0 0
        %1567 = vmatprep.subr.bf16.mxu0 0
        %1568 = vmatpush1.bf16.msra.mxu0 0
        %1569 = vmatprep.subr.bf16.mxu0 0
        %1570 = vmatpush1.bf16.msra.mxu0 0
        %1571 = vmatprep.subr.bf16.mxu0 0
        %1572 = vmatpush1.bf16.msra.mxu0 0
        %1573 = vmatprep.subr.bf16.mxu0 0
        %1574 = vmatpush1.bf16.msra.mxu0 0
        %1575 = vmatprep.subr.bf16.mxu0 0
        %1576 = vmatpush1.bf16.msra.mxu0 0
        %1577 = vmatprep.subr.bf16.mxu0 0
        %1578 = vmatpush1.bf16.msra.mxu0 0
        %1579 = vmatprep.subr.bf16.mxu0 0
        %1580 = vmatpush1.bf16.msra.mxu0 0
        %1581 = vmatprep.subr.bf16.mxu0 0
        %1582 = vmatpush1.bf16.msra.mxu0 0
        %1583 = vmatprep.subr.bf16.mxu0 0
        %1584 = vmatpush1.bf16.msra.mxu0 0
        %1585 = vmatprep.mubr.bf16.mxu0 0
        %1586 = vmatmul.mubr.bf16.gmra.mrb[0].mxu0 %v1551
        %v1587 = vpop.f32.mrb[0].mxu0
        %v1588 = vadd.f32 0.0, %v1587
        %v1589 = vpop.f32.mrb[0].mxu0
        %v1590 = vpop.f32.mrb[0].mxu0
        %v1591 = vpop.f32.mrb[0].mxu0
        %1592 = vdwg.mxu0
        %v1593 = vld [vmem:[%s880] sm:$0x1]
        %v1594 = vadd.f32 %v1588, %v1593
        %v1595 = vld [vmem:[%s877] sm:$0x1]
        %v1596 = vadd.f32 %v1588, %v1595
        %v1597 = vxor.u32 %v1594, 2147483648
        %v1598 = vmul.f32 %v1597, 1.442695
        %v1599 = vpow.pop %v1598
        %v1600 = vadd.f32 %v1599, 1.0
        %v1601 = vrcp.pop %v1600
        %v1602 = vmul.f32 1.0, %v1601
        %v1603 = vtanh.pop %v1594
        %v1604 = vxor.u32 %v1596, 2147483648
        %v1605 = vmul.f32 %v1604, 1.442695
        %v1606 = vpow.pop %v1605
        %v1607 = vadd.f32 %v1606, 1.0
        %v1608 = vrcp.pop %v1607
        %v1609 = vmul.f32 1.0, %v1608
        %v1610 = vtanh.pop %v1596
        %v1611 = vld [vmem:[#allocation7] sm:$0x1]
        %v1613 = vlaneseq
        %v1614 = vshrl.u32 %v1613, 7
        %v1615 = vsub.s32 0, %v1614
        %v1616 = vrot.slane %v1611, %v1615
        %1617 = vrot.lane.b32.xlu0 %v1616, 16
        %v1618 = vpop.permute.xlu0 %1617
        %v1620 = vmul.f32 %v1602, %v1618
        %1622 = vrot.lane.b32.xlu0 %v1603, 80
        %v1623 = vpop.permute.xlu0 %1622
        %v1625 = vmul.f32 %v1602, %v1623
        %1627 = vrot.lane.b32.xlu0 %v1625, 16
        %v1628 = vpop.permute.xlu0 %1627
        %v1630 = vadd.f32 %v1620, %v1628
        %v1631 = vld [vmem:[#allocation8] sm:$0x1]
        %v1633 = vlaneseq
        %v1634 = vshrl.u32 %v1633, 7
        %v1635 = vsub.s32 0, %v1634
        %v1636 = vrot.slane %v1631, %v1635
        %1637 = vrot.lane.b32.xlu0 %v1636, 80
        %v1638 = vpop.permute.xlu0 %1637
        %v1640 = vmul.f32 %v1609, %v1638
        %1642 = vrot.lane.b32.xlu0 %v1610, 80
        %v1643 = vpop.permute.xlu0 %1642
        %v1645 = vmul.f32 %v1609, %v1643
        %1647 = vrot.lane.b32.xlu0 %v1645, 16
        %v1648 = vpop.permute.xlu0 %1647
        %v1650 = vadd.f32 %v1640, %v1648
        %v1651 = vtanh.pop %v1630
        %1653 = vrot.lane.b32.xlu0 %v1651, 16
        %v1654 = vpop.permute.xlu0 %1653
        %v1656 = vmul.f32 %v1602, %v1654
        %v1657 = vtanh.pop %v1650
        %1659 = vrot.lane.b32.xlu0 %v1657, 16
        %v1660 = vpop.permute.xlu0 %1659
        %v1662 = vmul.f32 %v1609, %v1660
        %1664 = vrot.lane.b32.xlu0 %v1630, 112
        %v1665 = vpop.permute.xlu0 %1664
        %1667 = vst.msk [vmem:[#allocation7] sm:$0x1] %vm673, %v1665
        %1669 = vrot.lane.b32.xlu0 %v1650, 48
        %v1670 = vpop.permute.xlu0 %1669
        %1672 = vst.msk [vmem:[#allocation8] sm:$0x1] %vm673, %v1670
        %1674 = vrot.lane.b32.xlu0 %v1656, 96
        %v1675 = vpop.permute.xlu0 %1674
        %1677 = vst.msk [vmem:[#allocation6] sm:$0x1] %vm673, %v1675
        %1679 = vrot.lane.b32.xlu0 %v1662, 48
        %v1680 = vpop.permute.xlu0 %1679
        %1682 = vst.msk [vmem:[#allocation6] sm:$0x1] %vm824, %v1680
        %s1683 = scalar_lea.vmem [#allocation4], 6
        %1684 = vst.msk [vmem:[%s1683] sm:$0x1] %vm673, %v1675
        %1685 = vrot.lane.b32.xlu0 %v1662, 32
        %v1686 = vpop.permute.xlu0 %1685
        %s1688 = scalar_lea.vmem [#allocation5], 1
        %1689 = vst.msk [vmem:[%s1688] sm:$0x1] %vm673, %v1686
        %v1690 = vld [vmem:[#allocation6] sm:$0x1]
        %v1691 = vpack.c.bf16 %v1690, %v1690
        %v1693 = vsel %vm690, %v1691, 0
        %1695 = vmatprep.subr.bf16.mxu0 0
        %1696 = vmatpush1.bf16.msra.mxu0 %v686
        %1697 = vmatprep.subr.bf16.mxu0 0
        %1698 = vmatpush1.bf16.msra.mxu0 %v687
        %1699 = vmatprep.subr.bf16.mxu0 0
        %1700 = vmatpush1.bf16.msra.mxu0 0
        %1701 = vmatprep.subr.bf16.mxu0 0
        %1702 = vmatpush1.bf16.msra.mxu0 0
        %1703 = vmatprep.subr.bf16.mxu0 0
        %1704 = vmatpush1.bf16.msra.mxu0 0
        %1705 = vmatprep.subr.bf16.mxu0 0
        %1706 = vmatpush1.bf16.msra.mxu0 0
        %1707 = vmatprep.subr.bf16.mxu0 0
        %1708 = vmatpush1.bf16.msra.mxu0 0
        %1709 = vmatprep.subr.bf16.mxu0 0
        %1710 = vmatpush1.bf16.msra.mxu0 0
        %1711 = vmatprep.subr.bf16.mxu0 0
        %1712 = vmatpush1.bf16.msra.mxu0 0
        %1713 = vmatprep.subr.bf16.mxu0 0
        %1714 = vmatpush1.bf16.msra.mxu0 0
        %1715 = vmatprep.subr.bf16.mxu0 0
        %1716 = vmatpush1.bf16.msra.mxu0 0
        %1717 = vmatprep.subr.bf16.mxu0 0
        %1718 = vmatpush1.bf16.msra.mxu0 0
        %1719 = vmatprep.subr.bf16.mxu0 0
        %1720 = vmatpush1.bf16.msra.mxu0 0
        %1721 = vmatprep.subr.bf16.mxu0 0
        %1722 = vmatpush1.bf16.msra.mxu0 0
        %1723 = vmatprep.subr.bf16.mxu0 0
        %1724 = vmatpush1.bf16.msra.mxu0 0
        %1725 = vmatprep.subr.bf16.mxu0 0
        %1726 = vmatpush1.bf16.msra.mxu0 0
        %1727 = vmatprep.mubr.bf16.mxu0 0
        %1728 = vmatmul.mubr.bf16.gmra.mrb[0].mxu0 %v1693
        %v1729 = vpop.f32.mrb[0].mxu0
        %v1730 = vadd.f32 0.0, %v1729
        %v1731 = vpop.f32.mrb[0].mxu0
        %v1732 = vpop.f32.mrb[0].mxu0
        %v1733 = vpop.f32.mrb[0].mxu0
        %1734 = vdwg.mxu0
        %v1735 = vld [vmem:[%s736] sm:$0x1]
        %v1736 = vadd.f32 %v1730, %v1735
        %v1737 = vld [vmem:[#allocation3] sm:$0x1]
        %v1738 = vadd.f32 %v1730, %v1737
        %v1739 = vxor.u32 %v1736, 2147483648
        %v1740 = vmul.f32 %v1739, 1.442695
        %v1741 = vpow.pop %v1740
        %v1742 = vadd.f32 %v1741, 1.0
        %v1743 = vrcp.pop %v1742
        %v1744 = vmul.f32 1.0, %v1743
        %v1745 = vtanh.pop %v1736
        %v1746 = vxor.u32 %v1738, 2147483648
        %v1747 = vmul.f32 %v1746, 1.442695
        %v1748 = vpow.pop %v1747
        %v1749 = vadd.f32 %v1748, 1.0
        %v1750 = vrcp.pop %v1749
        %v1751 = vmul.f32 1.0, %v1750
        %v1752 = vtanh.pop %v1738
        %v1753 = vld [vmem:[#allocation7] sm:$0x1]
        %v1755 = vlaneseq
        %v1756 = vshrl.u32 %v1755, 7
        %v1757 = vsub.s32 0, %v1756
        %v1758 = vrot.slane %v1753, %v1757
        %1759 = vrot.lane.b32.xlu0 %v1758, 16
        %v1760 = vpop.permute.xlu0 %1759
        %v1762 = vmul.f32 %v1744, %v1760
        %1764 = vrot.lane.b32.xlu0 %v1745, 80
        %v1765 = vpop.permute.xlu0 %1764
        %v1767 = vmul.f32 %v1744, %v1765
        %1769 = vrot.lane.b32.xlu0 %v1767, 16
        %v1770 = vpop.permute.xlu0 %1769
        %v1772 = vadd.f32 %v1762, %v1770
        %v1773 = vld [vmem:[#allocation8] sm:$0x1]
        %v1775 = vlaneseq
        %v1776 = vshrl.u32 %v1775, 7
        %v1777 = vsub.s32 0, %v1776
        %v1778 = vrot.slane %v1773, %v1777
        %1779 = vrot.lane.b32.xlu0 %v1778, 80
        %v1780 = vpop.permute.xlu0 %1779
        %v1782 = vmul.f32 %v1751, %v1780
        %1784 = vrot.lane.b32.xlu0 %v1752, 80
        %v1785 = vpop.permute.xlu0 %1784
        %v1787 = vmul.f32 %v1751, %v1785
        %1789 = vrot.lane.b32.xlu0 %v1787, 16
        %v1790 = vpop.permute.xlu0 %1789
        %v1792 = vadd.f32 %v1782, %v1790
        %v1793 = vtanh.pop %v1772
        %1795 = vrot.lane.b32.xlu0 %v1793, 16
        %v1796 = vpop.permute.xlu0 %1795
        %v1798 = vmul.f32 %v1744, %v1796
        %v1799 = vtanh.pop %v1792
        %1801 = vrot.lane.b32.xlu0 %v1799, 16
        %v1802 = vpop.permute.xlu0 %1801
        %v1804 = vmul.f32 %v1751, %v1802
        %1806 = vrot.lane.b32.xlu0 %v1772, 112
        %v1807 = vpop.permute.xlu0 %1806
        %1809 = vst.msk [vmem:[#allocation7] sm:$0x1] %vm673, %v1807
        %1811 = vrot.lane.b32.xlu0 %v1792, 48
        %v1812 = vpop.permute.xlu0 %1811
        %1814 = vst.msk [vmem:[#allocation8] sm:$0x1] %vm673, %v1812
        %1816 = vrot.lane.b32.xlu0 %v1798, 96
        %v1817 = vpop.permute.xlu0 %1816
        %1819 = vst.msk [vmem:[#allocation6] sm:$0x1] %vm673, %v1817
        %1821 = vrot.lane.b32.xlu0 %v1804, 48
        %v1822 = vpop.permute.xlu0 %1821
        %1824 = vst.msk [vmem:[#allocation6] sm:$0x1] %vm824, %v1822
        %s1825 = scalar_lea.vmem [#allocation4], 7
        %1826 = vst.msk [vmem:[%s1825] sm:$0x1] %vm673, %v1817
        %1827 = vrot.lane.b32.xlu0 %v1804, 32
        %v1828 = vpop.permute.xlu0 %1827
        %1830 = vst.msk [vmem:[#allocation5] sm:$0x1] %vm673, %v1828
        %v1831 = vld [vmem:[%s4] sm:$0xf]
        %v1832 = vld [vmem:[%s4 + $0x4] sm:$0xf]
        %v1833 = vld [vmem:[%s4 + $0x8] sm:$0xf]
        %v1834 = vld [vmem:[%s4 + $0xc] sm:$0xf]
        %v1835 = vld [vmem:[#allocation4] sm:$0x1]
        %v1836 = vld [vmem:[#allocation4 + $0x1] sm:$0x1]
        %v1837 = vld [vmem:[#allocation4 + $0x2] sm:$0x1]
        %v1838 = vld [vmem:[#allocation4 + $0x3] sm:$0x1]
        %v1839 = vld [vmem:[#allocation4 + $0x4] sm:$0x1]
        %v1840 = vld [vmem:[#allocation4 + $0x5] sm:$0x1]
        %v1841 = vld [vmem:[#allocation4 + $0x6] sm:$0x1]
        %v1842 = vld [vmem:[#allocation4 + $0x7] sm:$0x1]
        %v1843 = vpack.c.bf16 %v1835, %v1835
        %v1844 = vpack.c.bf16 %v1836, %v1836
        %v1845 = vpack.c.bf16 %v1837, %v1837
        %v1846 = vpack.c.bf16 %v1838, %v1838
        %v1847 = vpack.c.bf16 %v1839, %v1839
        %v1848 = vpack.c.bf16 %v1840, %v1840
        %v1849 = vpack.c.bf16 %v1841, %v1841
        %v1850 = vpack.c.bf16 %v1842, %v1842
        %v1851 = vld [vmem:[#allocation5] sm:$0x1]
        %v1852 = vld [vmem:[#allocation5 + $0x1] sm:$0x1]
        %v1853 = vld [vmem:[#allocation5 + $0x2] sm:$0x1]
        %v1854 = vld [vmem:[#allocation5 + $0x3] sm:$0x1]
        %v1855 = vld [vmem:[#allocation5 + $0x4] sm:$0x1]
        %v1856 = vld [vmem:[#allocation5 + $0x5] sm:$0x1]
        %v1857 = vld [vmem:[#allocation5 + $0x6] sm:$0x1]
        %v1858 = vld [vmem:[#allocation5 + $0x7] sm:$0x1]
        %v1859 = vpack.c.bf16 %v1851, %v1851
        %v1860 = vpack.c.bf16 %v1852, %v1852
        %v1861 = vpack.c.bf16 %v1853, %v1853
        %v1862 = vpack.c.bf16 %v1854, %v1854
        %v1863 = vpack.c.bf16 %v1855, %v1855
        %v1864 = vpack.c.bf16 %v1856, %v1856
        %v1865 = vpack.c.bf16 %v1857, %v1857
        %v1866 = vpack.c.bf16 %v1858, %v1858
        %v1875 = vunpack.c.l.b16 %v1859
        %v1876 = vunpack.c.l.b16 %v1860
        %v1877 = vunpack.c.l.b16 %v1861
        %v1878 = vunpack.c.l.b16 %v1862
        %v1879 = vunpack.c.l.b16 %v1863
        %v1880 = vunpack.c.l.b16 %v1864
        %v1881 = vunpack.c.l.b16 %v1865
        %v1882 = vunpack.c.l.b16 %v1866
        %v1883 = vrot.slane %v1876, 7
        %v1884 = vsel %vm513, %v1883, %v1875
        %v1885 = vrot.slane %v1877, 6
        %v1886 = vsel %vm516, %v1885, %v1884
        %v1887 = vrot.slane %v1878, 5
        %v1888 = vsel %vm519, %v1887, %v1886
        %v1889 = vrot.slane %v1879, 4
        %v1890 = vsel %vm522, %v1889, %v1888
        %v1891 = vrot.slane %v1880, 3
        %v1892 = vsel %vm525, %v1891, %v1890
        %v1893 = vrot.slane %v1881, 2
        %v1894 = vsel %vm528, %v1893, %v1892
        %v1895 = vrot.slane %v1882, 1
        %v1896 = vsel %vm531, %v1895, %v1894
        %v1897 = vpack.c.b16 %v1896, %v1896
        %v1900 = vunpack.c.l.b16 %v1833
        %v1901 = vunpack.c.l.b16 %v1834
        %v1902 = vpack.c.b16 %v1901, %v1900
        %vm1904 = vcmask 130048
        %v1906 = vsel %vm1904, %v1897, 0
        %1908 = vmatprep.subr.bf16.mxu0 0
        %1909 = vmatpush1.bf16.msra.mxu0 %v1902
        %1910 = vmatprep.subr.bf16.mxu0 0
        %1911 = vmatpush1.bf16.msra.mxu0 0
        %1912 = vmatprep.subr.bf16.mxu0 0
        %1913 = vmatpush1.bf16.msra.mxu0 0
        %1914 = vmatprep.subr.bf16.mxu0 0
        %1915 = vmatpush1.bf16.msra.mxu0 0
        %1916 = vmatprep.subr.bf16.mxu0 0
        %1917 = vmatpush1.bf16.msra.mxu0 0
        %1918 = vmatprep.subr.bf16.mxu0 0
        %1919 = vmatpush1.bf16.msra.mxu0 0
        %1920 = vmatprep.subr.bf16.mxu0 0
        %1921 = vmatpush1.bf16.msra.mxu0 0
        %1922 = vmatprep.subr.bf16.mxu0 0
        %1923 = vmatpush1.bf16.msra.mxu0 0
        %1924 = vmatprep.subr.bf16.mxu0 0
        %1925 = vmatpush1.bf16.msra.mxu0 0
        %1926 = vmatprep.subr.bf16.mxu0 0
        %1927 = vmatpush1.bf16.msra.mxu0 0
        %1928 = vmatprep.subr.bf16.mxu0 0
        %1929 = vmatpush1.bf16.msra.mxu0 0
        %1930 = vmatprep.subr.bf16.mxu0 0
        %1931 = vmatpush1.bf16.msra.mxu0 0
        %1932 = vmatprep.subr.bf16.mxu0 0
        %1933 = vmatpush1.bf16.msra.mxu0 0
        %1934 = vmatprep.subr.bf16.mxu0 0
        %1935 = vmatpush1.bf16.msra.mxu0 0
        %1936 = vmatprep.subr.bf16.mxu0 0
        %1937 = vmatpush1.bf16.msra.mxu0 0
        %1938 = vmatprep.subr.bf16.mxu0 0
        %1939 = vmatpush1.bf16.msra.mxu0 0
        %1940 = vmatprep.mubr.bf16.mxu0 0
        %1941 = vmatmul.mubr.bf16.gmra.mrb[0].mxu0 %v1906
        %v1942 = vpop.f32.mrb[0].mxu0
        %v1943 = vadd.f32 0.0, %v1942
        %v1944 = vpop.f32.mrb[0].mxu0
        %v1945 = vpop.f32.mrb[0].mxu0
        %v1946 = vpop.f32.mrb[0].mxu0
        %1947 = vdwg.mxu0
        %v1956 = vunpack.c.l.b16 %v1843
        %v1957 = vunpack.c.l.b16 %v1844
        %v1958 = vunpack.c.l.b16 %v1845
        %v1959 = vunpack.c.l.b16 %v1846
        %v1960 = vunpack.c.l.b16 %v1847
        %v1961 = vunpack.c.l.b16 %v1848
        %v1962 = vunpack.c.l.b16 %v1849
        %v1963 = vunpack.c.l.b16 %v1850
        %v1964 = vrot.slane %v1957, 7
        %v1965 = vsel %vm513, %v1964, %v1956
        %v1966 = vrot.slane %v1958, 6
        %v1967 = vsel %vm516, %v1966, %v1965
        %v1968 = vrot.slane %v1959, 5
        %v1969 = vsel %vm519, %v1968, %v1967
        %v1970 = vrot.slane %v1960, 4
        %v1971 = vsel %vm522, %v1970, %v1969
        %v1972 = vrot.slane %v1961, 3
        %v1973 = vsel %vm525, %v1972, %v1971
        %v1974 = vrot.slane %v1962, 2
        %v1975 = vsel %vm528, %v1974, %v1973
        %v1976 = vrot.slane %v1963, 1
        %v1977 = vsel %vm531, %v1976, %v1975
        %v1978 = vpack.c.b16 %v1977, %v1977
        %v1981 = vunpack.c.l.b16 %v1831
        %v1982 = vunpack.c.l.b16 %v1832
        %v1983 = vpack.c.b16 %v1982, %v1981
        %v1986 = vsel %vm1904, %v1978, 0
        %1988 = vmatprep.subr.bf16.mxu0 0
        %1989 = vmatpush1.bf16.msra.mxu0 %v1983
        %1990 = vmatprep.subr.bf16.mxu0 0
        %1991 = vmatpush1.bf16.msra.mxu0 0
        %1992 = vmatprep.subr.bf16.mxu0 0
        %1993 = vmatpush1.bf16.msra.mxu0 0
        %1994 = vmatprep.subr.bf16.mxu0 0
        %1995 = vmatpush1.bf16.msra.mxu0 0
        %1996 = vmatprep.subr.bf16.mxu0 0
        %1997 = vmatpush1.bf16.msra.mxu0 0
        %1998 = vmatprep.subr.bf16.mxu0 0
        %1999 = vmatpush1.bf16.msra.mxu0 0
        %2000 = vmatprep.subr.bf16.mxu0 0
        %2001 = vmatpush1.bf16.msra.mxu0 0
        %2002 = vmatprep.subr.bf16.mxu0 0
        %2003 = vmatpush1.bf16.msra.mxu0 0
        %2004 = vmatprep.subr.bf16.mxu0 0
        %2005 = vmatpush1.bf16.msra.mxu0 0
        %2006 = vmatprep.subr.bf16.mxu0 0
        %2007 = vmatpush1.bf16.msra.mxu0 0
        %2008 = vmatprep.subr.bf16.mxu0 0
        %2009 = vmatpush1.bf16.msra.mxu0 0
        %2010 = vmatprep.subr.bf16.mxu0 0
        %2011 = vmatpush1.bf16.msra.mxu0 0
        %2012 = vmatprep.subr.bf16.mxu0 0
        %2013 = vmatpush1.bf16.msra.mxu0 0
        %2014 = vmatprep.subr.bf16.mxu0 0
        %2015 = vmatpush1.bf16.msra.mxu0 0
        %2016 = vmatprep.subr.bf16.mxu0 0
        %2017 = vmatpush1.bf16.msra.mxu0 0
        %2018 = vmatprep.subr.bf16.mxu0 0
        %2019 = vmatpush1.bf16.msra.mxu0 0
        %2020 = vmatprep.mubr.bf16.mxu0 0
        %2021 = vmatmul.mubr.bf16.gmra.mrb[0].mxu0 %v1986
        %v2022 = vpop.f32.mrb[0].mxu0
        %v2023 = vadd.f32 %v1943, %v2022
        %v2024 = vpop.f32.mrb[0].mxu0
        %v2025 = vpop.f32.mrb[0].mxu0
        %v2026 = vpop.f32.mrb[0].mxu0
        %2027 = vdwg.mxu0
        %v2029 = vcombine.high %v2023, %v2023
        %v2031 = vunpack.c.l.s4 1966171168
        %v2032 = vunpack.c.0.s8 %v2031
        %v2033 = vlaneseq
        %v2034 = vshrl.u32 %v2033, 7
        %v2035 = vsub.s32 %v2032, %v2034
        %v2036 = vrot.slane %v2023, %v2035
        %v2038 = vunpack.c.l.s4 1966171168
        %v2039 = vunpack.c.0.s8 %v2038
        %v2040 = vlaneseq
        %v2041 = vshrl.u32 %v2040, 7
        %v2042 = vsub.s32 %v2039, %v2041
        %v2043 = vrot.slane %v2029, %v2042
        %v2044 = vcombine.high %v2036, %v2036
        %v2045 = vcombine.high %v2043, %v2043
        %v2047 = vunpack.c.l.s4 1966171168
        %v2048 = vunpack.c.0.s8 %v2047
        %v2049 = vlaneseq
        %v2050 = vshrl.u32 %v2049, 7
        %v2051 = vsub.s32 %v2048, %v2050
        %v2052 = vrot.slane %v2036, %v2051
        %v2054 = vunpack.c.l.s4 1966171168
        %v2055 = vunpack.c.0.s8 %v2054
        %v2056 = vlaneseq
        %v2057 = vshrl.u32 %v2056, 7
        %v2058 = vsub.s32 %v2055, %v2057
        %v2059 = vrot.slane %v2043, %v2058
        %v2061 = vunpack.c.l.s4 1966171168
        %v2062 = vunpack.c.0.s8 %v2061
        %v2063 = vlaneseq
        %v2064 = vshrl.u32 %v2063, 7
        %v2065 = vsub.s32 %v2062, %v2064
        %v2066 = vrot.slane %v2044, %v2065
        %v2068 = vunpack.c.l.s4 1966171168
        %v2069 = vunpack.c.0.s8 %v2068
        %v2070 = vlaneseq
        %v2071 = vshrl.u32 %v2070, 7
        %v2072 = vsub.s32 %v2069, %v2071
        %v2073 = vrot.slane %v2045, %v2072
        %v2074 = vcombine.high %v2052, %v2052
        %v2075 = vcombine.high %v2059, %v2059
        %v2076 = vcombine.high %v2066, %v2066
        %v2077 = vcombine.high %v2073, %v2073
        %v2086 = vld [vmem:[%s6] sm:$0x1]
        %v2087 = vadd.f32 %v2052, %v2086
        %v2088 = vadd.f32 %v2066, %v2086
        %v2089 = vadd.f32 %v2074, %v2086
        %v2090 = vadd.f32 %v2076, %v2086
        %v2091 = vadd.f32 %v2059, %v2086
        %v2092 = vadd.f32 %v2073, %v2086
        %v2093 = vadd.f32 %v2075, %v2086
        %v2094 = vadd.f32 %v2077, %v2086
        %2095 = vst [vmem:[#allocation3] sm:$0x1] %v2087
        %2096 = vst [vmem:[#allocation3 + $0x1] sm:$0x1] %v2088
        %2097 = vst [vmem:[#allocation3 + $0x2] sm:$0x1] %v2089
        %2098 = vst [vmem:[#allocation3 + $0x3] sm:$0x1] %v2090
        %2099 = vst [vmem:[#allocation3 + $0x4] sm:$0x1] %v2091
        %2100 = vst [vmem:[#allocation3 + $0x5] sm:$0x1] %v2092
        %2101 = vst [vmem:[#allocation3 + $0x6] sm:$0x1] %v2093
        %2102 = vst [vmem:[#allocation3 + $0x7] sm:$0x1] %v2094
        %v2103 = vld [vmem:[#allocation13] sm:$0xf]
        %v2104 = vld [vmem:[#allocation13 + $0x4] sm:$0xf]
        %v2105 = vld [vmem:[#allocation13 + $0x8] sm:$0xf]
        %v2106 = vld [vmem:[#allocation13 + $0xc] sm:$0xf]
        %2107 = vst.msk [vmem:[#allocation6] sm:$0x1] %vm671, 0.0
        %2108 = vst.msk [vmem:[#allocation7] sm:$0x1] %vm673, 0.0
        %2109 = vst.msk [vmem:[#allocation8] sm:$0x1] %vm673, 0.0
        %v2110 = vld [vmem:[#allocation6] sm:$0x1]
        %v2111 = vpack.c.bf16 %v2110, %v2110
        %v2116 = vunpack.c.l.b16 %v2103
        %v2117 = vunpack.c.l.b16 %v2104
        %v2118 = vunpack.c.l.b16 %v2105
        %v2119 = vunpack.c.l.b16 %v2106
        %v2120 = vpack.c.b16 %v2117, %v2116
        %v2121 = vpack.c.b16 %v2119, %v2118
        %v2125 = vsel %vm690, %v2111, 0
        %2127 = vmatprep.subr.bf16.mxu0 0
        %2128 = vmatpush1.bf16.msra.mxu0 %v2120
        %2129 = vmatprep.subr.bf16.mxu0 0
        %2130 = vmatpush1.bf16.msra.mxu0 %v2121
        %2131 = vmatprep.subr.bf16.mxu0 0
        %2132 = vmatpush1.bf16.msra.mxu0 0
        %2133 = vmatprep.subr.bf16.mxu0 0
        %2134 = vmatpush1.bf16.msra.mxu0 0
        %2135 = vmatprep.subr.bf16.mxu0 0
        %2136 = vmatpush1.bf16.msra.mxu0 0
        %2137 = vmatprep.subr.bf16.mxu0 0
        %2138 = vmatpush1.bf16.msra.mxu0 0
        %2139 = vmatprep.subr.bf16.mxu0 0
        %2140 = vmatpush1.bf16.msra.mxu0 0
        %2141 = vmatprep.subr.bf16.mxu0 0
        %2142 = vmatpush1.bf16.msra.mxu0 0
        %2143 = vmatprep.subr.bf16.mxu0 0
        %2144 = vmatpush1.bf16.msra.mxu0 0
        %2145 = vmatprep.subr.bf16.mxu0 0
        %2146 = vmatpush1.bf16.msra.mxu0 0
        %2147 = vmatprep.subr.bf16.mxu0 0
        %2148 = vmatpush1.bf16.msra.mxu0 0
        %2149 = vmatprep.subr.bf16.mxu0 0
        %2150 = vmatpush1.bf16.msra.mxu0 0
        %2151 = vmatprep.subr.bf16.mxu0 0
        %2152 = vmatpush1.bf16.msra.mxu0 0
        %2153 = vmatprep.subr.bf16.mxu0 0
        %2154 = vmatpush1.bf16.msra.mxu0 0
        %2155 = vmatprep.subr.bf16.mxu0 0
        %2156 = vmatpush1.bf16.msra.mxu0 0
        %2157 = vmatprep.subr.bf16.mxu0 0
        %2158 = vmatpush1.bf16.msra.mxu0 0
        %2159 = vmatprep.mubr.bf16.mxu0 0
        %2160 = vmatmul.mubr.bf16.gmra.mrb[0].mxu0 %v2125
        %v2161 = vpop.f32.mrb[0].mxu0
        %v2162 = vadd.f32 0.0, %v2161
        %v2163 = vpop.f32.mrb[0].mxu0
        %v2164 = vpop.f32.mrb[0].mxu0
        %v2165 = vpop.f32.mrb[0].mxu0
        %2166 = vdwg.mxu0
        %v2167 = vld [vmem:[#allocation3] sm:$0x1]
        %v2168 = vadd.f32 %v2162, %v2167
        %v2169 = vld [vmem:[%s736] sm:$0x1]
        %v2170 = vadd.f32 %v2162, %v2169
        %v2171 = vxor.u32 %v2168, 2147483648
        %v2172 = vmul.f32 %v2171, 1.442695
        %v2173 = vpow.pop %v2172
        %v2174 = vadd.f32 %v2173, 1.0
        %v2175 = vrcp.pop %v2174
        %v2176 = vmul.f32 1.0, %v2175
        %v2177 = vtanh.pop %v2168
        %v2178 = vxor.u32 %v2170, 2147483648
        %v2179 = vmul.f32 %v2178, 1.442695
        %v2180 = vpow.pop %v2179
        %v2181 = vadd.f32 %v2180, 1.0
        %v2182 = vrcp.pop %v2181
        %v2183 = vmul.f32 1.0, %v2182
        %v2184 = vtanh.pop %v2170
        %v2185 = vld [vmem:[#allocation7] sm:$0x1]
        %v2187 = vlaneseq
        %v2188 = vshrl.u32 %v2187, 7
        %v2189 = vsub.s32 0, %v2188
        %v2190 = vrot.slane %v2185, %v2189
        %2191 = vrot.lane.b32.xlu0 %v2190, 16
        %v2192 = vpop.permute.xlu0 %2191
        %v2194 = vmul.f32 %v2176, %v2192
        %2196 = vrot.lane.b32.xlu0 %v2177, 80
        %v2197 = vpop.permute.xlu0 %2196
        %v2199 = vmul.f32 %v2176, %v2197
        %2201 = vrot.lane.b32.xlu0 %v2199, 16
        %v2202 = vpop.permute.xlu0 %2201
        %v2204 = vadd.f32 %v2194, %v2202
        %v2205 = vld [vmem:[#allocation8] sm:$0x1]
        %v2207 = vlaneseq
        %v2208 = vshrl.u32 %v2207, 7
        %v2209 = vsub.s32 0, %v2208
        %v2210 = vrot.slane %v2205, %v2209
        %2211 = vrot.lane.b32.xlu0 %v2210, 80
        %v2212 = vpop.permute.xlu0 %2211
        %v2214 = vmul.f32 %v2183, %v2212
        %2216 = vrot.lane.b32.xlu0 %v2184, 80
        %v2217 = vpop.permute.xlu0 %2216
        %v2219 = vmul.f32 %v2183, %v2217
        %2221 = vrot.lane.b32.xlu0 %v2219, 16
        %v2222 = vpop.permute.xlu0 %2221
        %v2224 = vadd.f32 %v2214, %v2222
        %v2225 = vtanh.pop %v2204
        %2227 = vrot.lane.b32.xlu0 %v2225, 16
        %v2228 = vpop.permute.xlu0 %2227
        %v2230 = vmul.f32 %v2176, %v2228
        %v2231 = vtanh.pop %v2224
        %2233 = vrot.lane.b32.xlu0 %v2231, 16
        %v2234 = vpop.permute.xlu0 %2233
        %v2236 = vmul.f32 %v2183, %v2234
        %2238 = vrot.lane.b32.xlu0 %v2204, 112
        %v2239 = vpop.permute.xlu0 %2238
        %2241 = vst.msk [vmem:[#allocation7] sm:$0x1] %vm673, %v2239
        %2243 = vrot.lane.b32.xlu0 %v2224, 48
        %v2244 = vpop.permute.xlu0 %2243
        %2246 = vst.msk [vmem:[#allocation8] sm:$0x1] %vm673, %v2244
        %2248 = vrot.lane.b32.xlu0 %v2230, 96
        %v2249 = vpop.permute.xlu0 %2248
        %2251 = vst.msk [vmem:[#allocation6] sm:$0x1] %vm673, %v2249
        %2253 = vrot.lane.b32.xlu0 %v2236, 48
        %v2254 = vpop.permute.xlu0 %2253
        %2256 = vst.msk [vmem:[#allocation6] sm:$0x1] %vm824, %v2254
        %2257 = vst.msk [vmem:[#allocation4] sm:$0x1] %vm673, %v2249
        %2258 = vrot.lane.b32.xlu0 %v2236, 32
        %v2259 = vpop.permute.xlu0 %2258
        %2261 = vst.msk [vmem:[%s830] sm:$0x1] %vm673, %v2259
        %v2262 = vld [vmem:[#allocation6] sm:$0x1]
        %v2263 = vpack.c.bf16 %v2262, %v2262
        %v2265 = vsel %vm690, %v2263, 0
        %2267 = vmatprep.subr.bf16.mxu0 0
        %2268 = vmatpush1.bf16.msra.mxu0 %v2120
        %2269 = vmatprep.subr.bf16.mxu0 0
        %2270 = vmatpush1.bf16.msra.mxu0 %v2121
        %2271 = vmatprep.subr.bf16.mxu0 0
        %2272 = vmatpush1.bf16.msra.mxu0 0
        %2273 = vmatprep.subr.bf16.mxu0 0
        %2274 = vmatpush1.bf16.msra.mxu0 0
        %2275 = vmatprep.subr.bf16.mxu0 0
        %2276 = vmatpush1.bf16.msra.mxu0 0
        %2277 = vmatprep.subr.bf16.mxu0 0
        %2278 = vmatpush1.bf16.msra.mxu0 0
        %2279 = vmatprep.subr.bf16.mxu0 0
        %2280 = vmatpush1.bf16.msra.mxu0 0
        %2281 = vmatprep.subr.bf16.mxu0 0
        %2282 = vmatpush1.bf16.msra.mxu0 0
        %2283 = vmatprep.subr.bf16.mxu0 0
        %2284 = vmatpush1.bf16.msra.mxu0 0
        %2285 = vmatprep.subr.bf16.mxu0 0
        %2286 = vmatpush1.bf16.msra.mxu0 0
        %2287 = vmatprep.subr.bf16.mxu0 0
        %2288 = vmatpush1.bf16.msra.mxu0 0
        %2289 = vmatprep.subr.bf16.mxu0 0
        %2290 = vmatpush1.bf16.msra.mxu0 0
        %2291 = vmatprep.subr.bf16.mxu0 0
        %2292 = vmatpush1.bf16.msra.mxu0 0
        %2293 = vmatprep.subr.bf16.mxu0 0
        %2294 = vmatpush1.bf16.msra.mxu0 0
        %2295 = vmatprep.subr.bf16.mxu0 0
        %2296 = vmatpush1.bf16.msra.mxu0 0
        %2297 = vmatprep.subr.bf16.mxu0 0
        %2298 = vmatpush1.bf16.msra.mxu0 0
        %2299 = vmatprep.mubr.bf16.mxu0 0
        %2300 = vmatmul.mubr.bf16.gmra.mrb[0].mxu0 %v2265
        %v2301 = vpop.f32.mrb[0].mxu0
        %v2302 = vadd.f32 0.0, %v2301
        %v2303 = vpop.f32.mrb[0].mxu0
        %v2304 = vpop.f32.mrb[0].mxu0
        %v2305 = vpop.f32.mrb[0].mxu0
        %2306 = vdwg.mxu0
        %v2307 = vld [vmem:[%s877] sm:$0x1]
        %v2308 = vadd.f32 %v2302, %v2307
        %v2309 = vld [vmem:[%s880] sm:$0x1]
        %v2310 = vadd.f32 %v2302, %v2309
        %v2311 = vxor.u32 %v2308, 2147483648
        %v2312 = vmul.f32 %v2311, 1.442695
        %v2313 = vpow.pop %v2312
        %v2314 = vadd.f32 %v2313, 1.0
        %v2315 = vrcp.pop %v2314
        %v2316 = vmul.f32 1.0, %v2315
        %v2317 = vtanh.pop %v2308
        %v2318 = vxor.u32 %v2310, 2147483648
        %v2319 = vmul.f32 %v2318, 1.442695
        %v2320 = vpow.pop %v2319
        %v2321 = vadd.f32 %v2320, 1.0
        %v2322 = vrcp.pop %v2321
        %v2323 = vmul.f32 1.0, %v2322
        %v2324 = vtanh.pop %v2310
        %v2325 = vld [vmem:[#allocation7] sm:$0x1]
        %v2327 = vlaneseq
        %v2328 = vshrl.u32 %v2327, 7
        %v2329 = vsub.s32 0, %v2328
        %v2330 = vrot.slane %v2325, %v2329
        %2331 = vrot.lane.b32.xlu0 %v2330, 16
        %v2332 = vpop.permute.xlu0 %2331
        %v2334 = vmul.f32 %v2316, %v2332
        %2336 = vrot.lane.b32.xlu0 %v2317, 80
        %v2337 = vpop.permute.xlu0 %2336
        %v2339 = vmul.f32 %v2316, %v2337
        %2341 = vrot.lane.b32.xlu0 %v2339, 16
        %v2342 = vpop.permute.xlu0 %2341
        %v2344 = vadd.f32 %v2334, %v2342
        %v2345 = vld [vmem:[#allocation8] sm:$0x1]
        %v2347 = vlaneseq
        %v2348 = vshrl.u32 %v2347, 7
        %v2349 = vsub.s32 0, %v2348
        %v2350 = vrot.slane %v2345, %v2349
        %2351 = vrot.lane.b32.xlu0 %v2350, 80
        %v2352 = vpop.permute.xlu0 %2351
        %v2354 = vmul.f32 %v2323, %v2352
        %2356 = vrot.lane.b32.xlu0 %v2324, 80
        %v2357 = vpop.permute.xlu0 %2356
        %v2359 = vmul.f32 %v2323, %v2357
        %2361 = vrot.lane.b32.xlu0 %v2359, 16
        %v2362 = vpop.permute.xlu0 %2361
        %v2364 = vadd.f32 %v2354, %v2362
        %v2365 = vtanh.pop %v2344
        %2367 = vrot.lane.b32.xlu0 %v2365, 16
        %v2368 = vpop.permute.xlu0 %2367
        %v2370 = vmul.f32 %v2316, %v2368
        %v2371 = vtanh.pop %v2364
        %2373 = vrot.lane.b32.xlu0 %v2371, 16
        %v2374 = vpop.permute.xlu0 %2373
        %v2376 = vmul.f32 %v2323, %v2374
        %2378 = vrot.lane.b32.xlu0 %v2344, 112
        %v2379 = vpop.permute.xlu0 %2378
        %2381 = vst.msk [vmem:[#allocation7] sm:$0x1] %vm673, %v2379
        %2383 = vrot.lane.b32.xlu0 %v2364, 48
        %v2384 = vpop.permute.xlu0 %2383
        %2386 = vst.msk [vmem:[#allocation8] sm:$0x1] %vm673, %v2384
        %2388 = vrot.lane.b32.xlu0 %v2370, 96
        %v2389 = vpop.permute.xlu0 %2388
        %2391 = vst.msk [vmem:[#allocation6] sm:$0x1] %vm673, %v2389
        %2393 = vrot.lane.b32.xlu0 %v2376, 48
        %v2394 = vpop.permute.xlu0 %2393
        %2396 = vst.msk [vmem:[#allocation6] sm:$0x1] %vm824, %v2394
        %2397 = vst.msk [vmem:[%s969] sm:$0x1] %vm673, %v2389
        %2398 = vrot.lane.b32.xlu0 %v2376, 32
        %v2399 = vpop.permute.xlu0 %2398
        %2401 = vst.msk [vmem:[%s974] sm:$0x1] %vm673, %v2399
        %v2402 = vld [vmem:[#allocation6] sm:$0x1]
        %v2403 = vpack.c.bf16 %v2402, %v2402
        %v2405 = vsel %vm690, %v2403, 0
        %2407 = vmatprep.subr.bf16.mxu0 0
        %2408 = vmatpush1.bf16.msra.mxu0 %v2120
        %2409 = vmatprep.subr.bf16.mxu0 0
        %2410 = vmatpush1.bf16.msra.mxu0 %v2121
        %2411 = vmatprep.subr.bf16.mxu0 0
        %2412 = vmatpush1.bf16.msra.mxu0 0
        %2413 = vmatprep.subr.bf16.mxu0 0
        %2414 = vmatpush1.bf16.msra.mxu0 0
        %2415 = vmatprep.subr.bf16.mxu0 0
        %2416 = vmatpush1.bf16.msra.mxu0 0
        %2417 = vmatprep.subr.bf16.mxu0 0
        %2418 = vmatpush1.bf16.msra.mxu0 0
        %2419 = vmatprep.subr.bf16.mxu0 0
        %2420 = vmatpush1.bf16.msra.mxu0 0
        %2421 = vmatprep.subr.bf16.mxu0 0
        %2422 = vmatpush1.bf16.msra.mxu0 0
        %2423 = vmatprep.subr.bf16.mxu0 0
        %2424 = vmatpush1.bf16.msra.mxu0 0
        %2425 = vmatprep.subr.bf16.mxu0 0
        %2426 = vmatpush1.bf16.msra.mxu0 0
        %2427 = vmatprep.subr.bf16.mxu0 0
        %2428 = vmatpush1.bf16.msra.mxu0 0
        %2429 = vmatprep.subr.bf16.mxu0 0
        %2430 = vmatpush1.bf16.msra.mxu0 0
        %2431 = vmatprep.subr.bf16.mxu0 0
        %2432 = vmatpush1.bf16.msra.mxu0 0
        %2433 = vmatprep.subr.bf16.mxu0 0
        %2434 = vmatpush1.bf16.msra.mxu0 0
        %2435 = vmatprep.subr.bf16.mxu0 0
        %2436 = vmatpush1.bf16.msra.mxu0 0
        %2437 = vmatprep.subr.bf16.mxu0 0
        %2438 = vmatpush1.bf16.msra.mxu0 0
        %2439 = vmatprep.mubr.bf16.mxu0 0
        %2440 = vmatmul.mubr.bf16.gmra.mrb[0].mxu0 %v2405
        %v2441 = vpop.f32.mrb[0].mxu0
        %v2442 = vadd.f32 0.0, %v2441
        %v2443 = vpop.f32.mrb[0].mxu0
        %v2444 = vpop.f32.mrb[0].mxu0
        %v2445 = vpop.f32.mrb[0].mxu0
        %2446 = vdwg.mxu0
        %v2447 = vld [vmem:[%s1021] sm:$0x1]
        %v2448 = vadd.f32 %v2442, %v2447
        %v2449 = vld [vmem:[%s1024] sm:$0x1]
        %v2450 = vadd.f32 %v2442, %v2449
        %v2451 = vxor.u32 %v2448, 2147483648
        %v2452 = vmul.f32 %v2451, 1.442695
        %v2453 = vpow.pop %v2452
        %v2454 = vadd.f32 %v2453, 1.0
        %v2455 = vrcp.pop %v2454
        %v2456 = vmul.f32 1.0, %v2455
        %v2457 = vtanh.pop %v2448
        %v2458 = vxor.u32 %v2450, 2147483648
        %v2459 = vmul.f32 %v2458, 1.442695
        %v2460 = vpow.pop %v2459
        %v2461 = vadd.f32 %v2460, 1.0
        %v2462 = vrcp.pop %v2461
        %v2463 = vmul.f32 1.0, %v2462
        %v2464 = vtanh.pop %v2450
        %v2465 = vld [vmem:[#allocation7] sm:$0x1]
        %v2467 = vlaneseq
        %v2468 = vshrl.u32 %v2467, 7
        %v2469 = vsub.s32 0, %v2468
        %v2470 = vrot.slane %v2465, %v2469
        %2471 = vrot.lane.b32.xlu0 %v2470, 16
        %v2472 = vpop.permute.xlu0 %2471
        %v2474 = vmul.f32 %v2456, %v2472
        %2476 = vrot.lane.b32.xlu0 %v2457, 80
        %v2477 = vpop.permute.xlu0 %2476
        %v2479 = vmul.f32 %v2456, %v2477
        %2481 = vrot.lane.b32.xlu0 %v2479, 16
        %v2482 = vpop.permute.xlu0 %2481
        %v2484 = vadd.f32 %v2474, %v2482
        %v2485 = vld [vmem:[#allocation8] sm:$0x1]
        %v2487 = vlaneseq
        %v2488 = vshrl.u32 %v2487, 7
        %v2489 = vsub.s32 0, %v2488
        %v2490 = vrot.slane %v2485, %v2489
        %2491 = vrot.lane.b32.xlu0 %v2490, 80
        %v2492 = vpop.permute.xlu0 %2491
        %v2494 = vmul.f32 %v2463, %v2492
        %2496 = vrot.lane.b32.xlu0 %v2464, 80
        %v2497 = vpop.permute.xlu0 %2496
        %v2499 = vmul.f32 %v2463, %v2497
        %2501 = vrot.lane.b32.xlu0 %v2499, 16
        %v2502 = vpop.permute.xlu0 %2501
        %v2504 = vadd.f32 %v2494, %v2502
        %v2505 = vtanh.pop %v2484
        %2507 = vrot.lane.b32.xlu0 %v2505, 16
        %v2508 = vpop.permute.xlu0 %2507
        %v2510 = vmul.f32 %v2456, %v2508
        %v2511 = vtanh.pop %v2504
        %2513 = vrot.lane.b32.xlu0 %v2511, 16
        %v2514 = vpop.permute.xlu0 %2513
        %v2516 = vmul.f32 %v2463, %v2514
        %2518 = vrot.lane.b32.xlu0 %v2484, 112
        %v2519 = vpop.permute.xlu0 %2518
        %2521 = vst.msk [vmem:[#allocation7] sm:$0x1] %vm673, %v2519
        %2523 = vrot.lane.b32.xlu0 %v2504, 48
        %v2524 = vpop.permute.xlu0 %2523
        %2526 = vst.msk [vmem:[#allocation8] sm:$0x1] %vm673, %v2524
        %2528 = vrot.lane.b32.xlu0 %v2510, 96
        %v2529 = vpop.permute.xlu0 %2528
        %2531 = vst.msk [vmem:[#allocation6] sm:$0x1] %vm673, %v2529
        %2533 = vrot.lane.b32.xlu0 %v2516, 48
        %v2534 = vpop.permute.xlu0 %2533
        %2536 = vst.msk [vmem:[#allocation6] sm:$0x1] %vm824, %v2534
        %2537 = vst.msk [vmem:[%s1113] sm:$0x1] %vm673, %v2529
        %2538 = vrot.lane.b32.xlu0 %v2516, 32
        %v2539 = vpop.permute.xlu0 %2538
        %2541 = vst.msk [vmem:[%s1118] sm:$0x1] %vm673, %v2539
        %v2542 = vld [vmem:[#allocation6] sm:$0x1]
        %v2543 = vpack.c.bf16 %v2542, %v2542
        %v2545 = vsel %vm690, %v2543, 0
        %2547 = vmatprep.subr.bf16.mxu0 0
        %2548 = vmatpush1.bf16.msra.mxu0 %v2120
        %2549 = vmatprep.subr.bf16.mxu0 0
        %2550 = vmatpush1.bf16.msra.mxu0 %v2121
        %2551 = vmatprep.subr.bf16.mxu0 0
        %2552 = vmatpush1.bf16.msra.mxu0 0
        %2553 = vmatprep.subr.bf16.mxu0 0
        %2554 = vmatpush1.bf16.msra.mxu0 0
        %2555 = vmatprep.subr.bf16.mxu0 0
        %2556 = vmatpush1.bf16.msra.mxu0 0
        %2557 = vmatprep.subr.bf16.mxu0 0
        %2558 = vmatpush1.bf16.msra.mxu0 0
        %2559 = vmatprep.subr.bf16.mxu0 0
        %2560 = vmatpush1.bf16.msra.mxu0 0
        %2561 = vmatprep.subr.bf16.mxu0 0
        %2562 = vmatpush1.bf16.msra.mxu0 0
        %2563 = vmatprep.subr.bf16.mxu0 0
        %2564 = vmatpush1.bf16.msra.mxu0 0
        %2565 = vmatprep.subr.bf16.mxu0 0
        %2566 = vmatpush1.bf16.msra.mxu0 0
        %2567 = vmatprep.subr.bf16.mxu0 0
        %2568 = vmatpush1.bf16.msra.mxu0 0
        %2569 = vmatprep.subr.bf16.mxu0 0
        %2570 = vmatpush1.bf16.msra.mxu0 0
        %2571 = vmatprep.subr.bf16.mxu0 0
        %2572 = vmatpush1.bf16.msra.mxu0 0
        %2573 = vmatprep.subr.bf16.mxu0 0
        %2574 = vmatpush1.bf16.msra.mxu0 0
        %2575 = vmatprep.subr.bf16.mxu0 0
        %2576 = vmatpush1.bf16.msra.mxu0 0
        %2577 = vmatprep.subr.bf16.mxu0 0
        %2578 = vmatpush1.bf16.msra.mxu0 0
        %2579 = vmatprep.mubr.bf16.mxu0 0
        %2580 = vmatmul.mubr.bf16.gmra.mrb[0].mxu0 %v2545
        %v2581 = vpop.f32.mrb[0].mxu0
        %v2582 = vadd.f32 0.0, %v2581
        %v2583 = vpop.f32.mrb[0].mxu0
        %v2584 = vpop.f32.mrb[0].mxu0
        %v2585 = vpop.f32.mrb[0].mxu0
        %2586 = vdwg.mxu0
        %v2587 = vld [vmem:[%s1165] sm:$0x1]
        %v2588 = vadd.f32 %v2582, %v2587
        %v2589 = vld [vmem:[%s1168] sm:$0x1]
        %v2590 = vadd.f32 %v2582, %v2589
        %v2591 = vxor.u32 %v2588, 2147483648
        %v2592 = vmul.f32 %v2591, 1.442695
        %v2593 = vpow.pop %v2592
        %v2594 = vadd.f32 %v2593, 1.0
        %v2595 = vrcp.pop %v2594
        %v2596 = vmul.f32 1.0, %v2595
        %v2597 = vtanh.pop %v2588
        %v2598 = vxor.u32 %v2590, 2147483648
        %v2599 = vmul.f32 %v2598, 1.442695
        %v2600 = vpow.pop %v2599
        %v2601 = vadd.f32 %v2600, 1.0
        %v2602 = vrcp.pop %v2601
        %v2603 = vmul.f32 1.0, %v2602
        %v2604 = vtanh.pop %v2590
        %v2605 = vld [vmem:[#allocation7] sm:$0x1]
        %v2607 = vlaneseq
        %v2608 = vshrl.u32 %v2607, 7
        %v2609 = vsub.s32 0, %v2608
        %v2610 = vrot.slane %v2605, %v2609
        %2611 = vrot.lane.b32.xlu0 %v2610, 16
        %v2612 = vpop.permute.xlu0 %2611
        %v2614 = vmul.f32 %v2596, %v2612
        %2616 = vrot.lane.b32.xlu0 %v2597, 80
        %v2617 = vpop.permute.xlu0 %2616
        %v2619 = vmul.f32 %v2596, %v2617
        %2621 = vrot.lane.b32.xlu0 %v2619, 16
        %v2622 = vpop.permute.xlu0 %2621
        %v2624 = vadd.f32 %v2614, %v2622
        %v2625 = vld [vmem:[#allocation8] sm:$0x1]
        %v2627 = vlaneseq
        %v2628 = vshrl.u32 %v2627, 7
        %v2629 = vsub.s32 0, %v2628
        %v2630 = vrot.slane %v2625, %v2629
        %2631 = vrot.lane.b32.xlu0 %v2630, 80
        %v2632 = vpop.permute.xlu0 %2631
        %v2634 = vmul.f32 %v2603, %v2632
        %2636 = vrot.lane.b32.xlu0 %v2604, 80
        %v2637 = vpop.permute.xlu0 %2636
        %v2639 = vmul.f32 %v2603, %v2637
        %2641 = vrot.lane.b32.xlu0 %v2639, 16
        %v2642 = vpop.permute.xlu0 %2641
        %v2644 = vadd.f32 %v2634, %v2642
        %v2645 = vtanh.pop %v2624
        %2647 = vrot.lane.b32.xlu0 %v2645, 16
        %v2648 = vpop.permute.xlu0 %2647
        %v2650 = vmul.f32 %v2596, %v2648
        %v2651 = vtanh.pop %v2644
        %2653 = vrot.lane.b32.xlu0 %v2651, 16
        %v2654 = vpop.permute.xlu0 %2653
        %v2656 = vmul.f32 %v2603, %v2654
        %2658 = vrot.lane.b32.xlu0 %v2624, 112
        %v2659 = vpop.permute.xlu0 %2658
        %2661 = vst.msk [vmem:[#allocation7] sm:$0x1] %vm673, %v2659
        %2663 = vrot.lane.b32.xlu0 %v2644, 48
        %v2664 = vpop.permute.xlu0 %2663
        %2666 = vst.msk [vmem:[#allocation8] sm:$0x1] %vm673, %v2664
        %2668 = vrot.lane.b32.xlu0 %v2650, 96
        %v2669 = vpop.permute.xlu0 %2668
        %2671 = vst.msk [vmem:[#allocation6] sm:$0x1] %vm673, %v2669
        %2673 = vrot.lane.b32.xlu0 %v2656, 48
        %v2674 = vpop.permute.xlu0 %2673
        %2676 = vst.msk [vmem:[#allocation6] sm:$0x1] %vm824, %v2674
        %2677 = vst.msk [vmem:[%s1257] sm:$0x1] %vm673, %v2669
        %2678 = vrot.lane.b32.xlu0 %v2656, 32
        %v2679 = vpop.permute.xlu0 %2678
        %2681 = vst.msk [vmem:[%s1262] sm:$0x1] %vm673, %v2679
        %v2682 = vld [vmem:[#allocation6] sm:$0x1]
        %v2683 = vpack.c.bf16 %v2682, %v2682
        %v2685 = vsel %vm690, %v2683, 0
        %2687 = vmatprep.subr.bf16.mxu0 0
        %2688 = vmatpush1.bf16.msra.mxu0 %v2120
        %2689 = vmatprep.subr.bf16.mxu0 0
        %2690 = vmatpush1.bf16.msra.mxu0 %v2121
        %2691 = vmatprep.subr.bf16.mxu0 0
        %2692 = vmatpush1.bf16.msra.mxu0 0
        %2693 = vmatprep.subr.bf16.mxu0 0
        %2694 = vmatpush1.bf16.msra.mxu0 0
        %2695 = vmatprep.subr.bf16.mxu0 0
        %2696 = vmatpush1.bf16.msra.mxu0 0
        %2697 = vmatprep.subr.bf16.mxu0 0
        %2698 = vmatpush1.bf16.msra.mxu0 0
        %2699 = vmatprep.subr.bf16.mxu0 0
        %2700 = vmatpush1.bf16.msra.mxu0 0
        %2701 = vmatprep.subr.bf16.mxu0 0
        %2702 = vmatpush1.bf16.msra.mxu0 0
        %2703 = vmatprep.subr.bf16.mxu0 0
        %2704 = vmatpush1.bf16.msra.mxu0 0
        %2705 = vmatprep.subr.bf16.mxu0 0
        %2706 = vmatpush1.bf16.msra.mxu0 0
        %2707 = vmatprep.subr.bf16.mxu0 0
        %2708 = vmatpush1.bf16.msra.mxu0 0
        %2709 = vmatprep.subr.bf16.mxu0 0
        %2710 = vmatpush1.bf16.msra.mxu0 0
        %2711 = vmatprep.subr.bf16.mxu0 0
        %2712 = vmatpush1.bf16.msra.mxu0 0
        %2713 = vmatprep.subr.bf16.mxu0 0
        %2714 = vmatpush1.bf16.msra.mxu0 0
        %2715 = vmatprep.subr.bf16.mxu0 0
        %2716 = vmatpush1.bf16.msra.mxu0 0
        %2717 = vmatprep.subr.bf16.mxu0 0
        %2718 = vmatpush1.bf16.msra.mxu0 0
        %2719 = vmatprep.mubr.bf16.mxu0 0
        %2720 = vmatmul.mubr.bf16.gmra.mrb[0].mxu0 %v2685
        %v2721 = vpop.f32.mrb[0].mxu0
        %v2722 = vadd.f32 0.0, %v2721
        %v2723 = vpop.f32.mrb[0].mxu0
        %v2724 = vpop.f32.mrb[0].mxu0
        %v2725 = vpop.f32.mrb[0].mxu0
        %2726 = vdwg.mxu0
        %v2727 = vld [vmem:[%s1168] sm:$0x1]
        %v2728 = vadd.f32 %v2722, %v2727
        %v2729 = vld [vmem:[%s1165] sm:$0x1]
        %v2730 = vadd.f32 %v2722, %v2729
        %v2731 = vxor.u32 %v2728, 2147483648
        %v2732 = vmul.f32 %v2731, 1.442695
        %v2733 = vpow.pop %v2732
        %v2734 = vadd.f32 %v2733, 1.0
        %v2735 = vrcp.pop %v2734
        %v2736 = vmul.f32 1.0, %v2735
        %v2737 = vtanh.pop %v2728
        %v2738 = vxor.u32 %v2730, 2147483648
        %v2739 = vmul.f32 %v2738, 1.442695
        %v2740 = vpow.pop %v2739
        %v2741 = vadd.f32 %v2740, 1.0
        %v2742 = vrcp.pop %v2741
        %v2743 = vmul.f32 1.0, %v2742
        %v2744 = vtanh.pop %v2730
        %v2745 = vld [vmem:[#allocation7] sm:$0x1]
        %v2747 = vlaneseq
        %v2748 = vshrl.u32 %v2747, 7
        %v2749 = vsub.s32 0, %v2748
        %v2750 = vrot.slane %v2745, %v2749
        %2751 = vrot.lane.b32.xlu0 %v2750, 16
        %v2752 = vpop.permute.xlu0 %2751
        %v2754 = vmul.f32 %v2736, %v2752
        %2756 = vrot.lane.b32.xlu0 %v2737, 80
        %v2757 = vpop.permute.xlu0 %2756
        %v2759 = vmul.f32 %v2736, %v2757
        %2761 = vrot.lane.b32.xlu0 %v2759, 16
        %v2762 = vpop.permute.xlu0 %2761
        %v2764 = vadd.f32 %v2754, %v2762
        %v2765 = vld [vmem:[#allocation8] sm:$0x1]
        %v2767 = vlaneseq
        %v2768 = vshrl.u32 %v2767, 7
        %v2769 = vsub.s32 0, %v2768
        %v2770 = vrot.slane %v2765, %v2769
        %2771 = vrot.lane.b32.xlu0 %v2770, 80
        %v2772 = vpop.permute.xlu0 %2771
        %v2774 = vmul.f32 %v2743, %v2772
        %2776 = vrot.lane.b32.xlu0 %v2744, 80
        %v2777 = vpop.permute.xlu0 %2776
        %v2779 = vmul.f32 %v2743, %v2777
        %2781 = vrot.lane.b32.xlu0 %v2779, 16
        %v2782 = vpop.permute.xlu0 %2781
        %v2784 = vadd.f32 %v2774, %v2782
        %v2785 = vtanh.pop %v2764
        %2787 = vrot.lane.b32.xlu0 %v2785, 16
        %v2788 = vpop.permute.xlu0 %2787
        %v2790 = vmul.f32 %v2736, %v2788
        %v2791 = vtanh.pop %v2784
        %2793 = vrot.lane.b32.xlu0 %v2791, 16
        %v2794 = vpop.permute.xlu0 %2793
        %v2796 = vmul.f32 %v2743, %v2794
        %2798 = vrot.lane.b32.xlu0 %v2764, 112
        %v2799 = vpop.permute.xlu0 %2798
        %2801 = vst.msk [vmem:[#allocation7] sm:$0x1] %vm673, %v2799
        %2803 = vrot.lane.b32.xlu0 %v2784, 48
        %v2804 = vpop.permute.xlu0 %2803
        %2806 = vst.msk [vmem:[#allocation8] sm:$0x1] %vm673, %v2804
        %2808 = vrot.lane.b32.xlu0 %v2790, 96
        %v2809 = vpop.permute.xlu0 %2808
        %2811 = vst.msk [vmem:[#allocation6] sm:$0x1] %vm673, %v2809
        %2813 = vrot.lane.b32.xlu0 %v2796, 48
        %v2814 = vpop.permute.xlu0 %2813
        %2816 = vst.msk [vmem:[#allocation6] sm:$0x1] %vm824, %v2814
        %2817 = vst.msk [vmem:[%s1399] sm:$0x1] %vm673, %v2809
        %2818 = vrot.lane.b32.xlu0 %v2796, 32
        %v2819 = vpop.permute.xlu0 %2818
        %2821 = vst.msk [vmem:[%s1404] sm:$0x1] %vm673, %v2819
        %v2822 = vld [vmem:[#allocation6] sm:$0x1]
        %v2823 = vpack.c.bf16 %v2822, %v2822
        %v2825 = vsel %vm690, %v2823, 0
        %2827 = vmatprep.subr.bf16.mxu0 0
        %2828 = vmatpush1.bf16.msra.mxu0 %v2120
        %2829 = vmatprep.subr.bf16.mxu0 0
        %2830 = vmatpush1.bf16.msra.mxu0 %v2121
        %2831 = vmatprep.subr.bf16.mxu0 0
        %2832 = vmatpush1.bf16.msra.mxu0 0
        %2833 = vmatprep.subr.bf16.mxu0 0
        %2834 = vmatpush1.bf16.msra.mxu0 0
        %2835 = vmatprep.subr.bf16.mxu0 0
        %2836 = vmatpush1.bf16.msra.mxu0 0
        %2837 = vmatprep.subr.bf16.mxu0 0
        %2838 = vmatpush1.bf16.msra.mxu0 0
        %2839 = vmatprep.subr.bf16.mxu0 0
        %2840 = vmatpush1.bf16.msra.mxu0 0
        %2841 = vmatprep.subr.bf16.mxu0 0
        %2842 = vmatpush1.bf16.msra.mxu0 0
        %2843 = vmatprep.subr.bf16.mxu0 0
        %2844 = vmatpush1.bf16.msra.mxu0 0
        %2845 = vmatprep.subr.bf16.mxu0 0
        %2846 = vmatpush1.bf16.msra.mxu0 0
        %2847 = vmatprep.subr.bf16.mxu0 0
        %2848 = vmatpush1.bf16.msra.mxu0 0
        %2849 = vmatprep.subr.bf16.mxu0 0
        %2850 = vmatpush1.bf16.msra.mxu0 0
        %2851 = vmatprep.subr.bf16.mxu0 0
        %2852 = vmatpush1.bf16.msra.mxu0 0
        %2853 = vmatprep.subr.bf16.mxu0 0
        %2854 = vmatpush1.bf16.msra.mxu0 0
        %2855 = vmatprep.subr.bf16.mxu0 0
        %2856 = vmatpush1.bf16.msra.mxu0 0
        %2857 = vmatprep.subr.bf16.mxu0 0
        %2858 = vmatpush1.bf16.msra.mxu0 0
        %2859 = vmatprep.mubr.bf16.mxu0 0
        %2860 = vmatmul.mubr.bf16.gmra.mrb[0].mxu0 %v2825
        %v2861 = vpop.f32.mrb[0].mxu0
        %v2862 = vadd.f32 0.0, %v2861
        %v2863 = vpop.f32.mrb[0].mxu0
        %v2864 = vpop.f32.mrb[0].mxu0
        %v2865 = vpop.f32.mrb[0].mxu0
        %2866 = vdwg.mxu0
        %v2867 = vld [vmem:[%s1024] sm:$0x1]
        %v2868 = vadd.f32 %v2862, %v2867
        %v2869 = vld [vmem:[%s1021] sm:$0x1]
        %v2870 = vadd.f32 %v2862, %v2869
        %v2871 = vxor.u32 %v2868, 2147483648
        %v2872 = vmul.f32 %v2871, 1.442695
        %v2873 = vpow.pop %v2872
        %v2874 = vadd.f32 %v2873, 1.0
        %v2875 = vrcp.pop %v2874
        %v2876 = vmul.f32 1.0, %v2875
        %v2877 = vtanh.pop %v2868
        %v2878 = vxor.u32 %v2870, 2147483648
        %v2879 = vmul.f32 %v2878, 1.442695
        %v2880 = vpow.pop %v2879
        %v2881 = vadd.f32 %v2880, 1.0
        %v2882 = vrcp.pop %v2881
        %v2883 = vmul.f32 1.0, %v2882
        %v2884 = vtanh.pop %v2870
        %v2885 = vld [vmem:[#allocation7] sm:$0x1]
        %v2887 = vlaneseq
        %v2888 = vshrl.u32 %v2887, 7
        %v2889 = vsub.s32 0, %v2888
        %v2890 = vrot.slane %v2885, %v2889
        %2891 = vrot.lane.b32.xlu0 %v2890, 16
        %v2892 = vpop.permute.xlu0 %2891
        %v2894 = vmul.f32 %v2876, %v2892
        %2896 = vrot.lane.b32.xlu0 %v2877, 80
        %v2897 = vpop.permute.xlu0 %2896
        %v2899 = vmul.f32 %v2876, %v2897
        %2901 = vrot.lane.b32.xlu0 %v2899, 16
        %v2902 = vpop.permute.xlu0 %2901
        %v2904 = vadd.f32 %v2894, %v2902
        %v2905 = vld [vmem:[#allocation8] sm:$0x1]
        %v2907 = vlaneseq
        %v2908 = vshrl.u32 %v2907, 7
        %v2909 = vsub.s32 0, %v2908
        %v2910 = vrot.slane %v2905, %v2909
        %2911 = vrot.lane.b32.xlu0 %v2910, 80
        %v2912 = vpop.permute.xlu0 %2911
        %v2914 = vmul.f32 %v2883, %v2912
        %2916 = vrot.lane.b32.xlu0 %v2884, 80
        %v2917 = vpop.permute.xlu0 %2916
        %v2919 = vmul.f32 %v2883, %v2917
        %2921 = vrot.lane.b32.xlu0 %v2919, 16
        %v2922 = vpop.permute.xlu0 %2921
        %v2924 = vadd.f32 %v2914, %v2922
        %v2925 = vtanh.pop %v2904
        %2927 = vrot.lane.b32.xlu0 %v2925, 16
        %v2928 = vpop.permute.xlu0 %2927
        %v2930 = vmul.f32 %v2876, %v2928
        %v2931 = vtanh.pop %v2924
        %2933 = vrot.lane.b32.xlu0 %v2931, 16
        %v2934 = vpop.permute.xlu0 %2933
        %v2936 = vmul.f32 %v2883, %v2934
        %2938 = vrot.lane.b32.xlu0 %v2904, 112
        %v2939 = vpop.permute.xlu0 %2938
        %2941 = vst.msk [vmem:[#allocation7] sm:$0x1] %vm673, %v2939
        %2943 = vrot.lane.b32.xlu0 %v2924, 48
        %v2944 = vpop.permute.xlu0 %2943
        %2946 = vst.msk [vmem:[#allocation8] sm:$0x1] %vm673, %v2944
        %2948 = vrot.lane.b32.xlu0 %v2930, 96
        %v2949 = vpop.permute.xlu0 %2948
        %2951 = vst.msk [vmem:[#allocation6] sm:$0x1] %vm673, %v2949
        %2953 = vrot.lane.b32.xlu0 %v2936, 48
        %v2954 = vpop.permute.xlu0 %2953
        %2956 = vst.msk [vmem:[#allocation6] sm:$0x1] %vm824, %v2954
        %2957 = vst.msk [vmem:[%s1541] sm:$0x1] %vm673, %v2949
        %2958 = vrot.lane.b32.xlu0 %v2936, 32
        %v2959 = vpop.permute.xlu0 %2958
        %2961 = vst.msk [vmem:[%s1546] sm:$0x1] %vm673, %v2959
        %v2962 = vld [vmem:[#allocation6] sm:$0x1]
        %v2963 = vpack.c.bf16 %v2962, %v2962
        %v2965 = vsel %vm690, %v2963, 0
        %2967 = vmatprep.subr.bf16.mxu0 0
        %2968 = vmatpush1.bf16.msra.mxu0 %v2120
        %2969 = vmatprep.subr.bf16.mxu0 0
        %2970 = vmatpush1.bf16.msra.mxu0 %v2121
        %2971 = vmatprep.subr.bf16.mxu0 0
        %2972 = vmatpush1.bf16.msra.mxu0 0
        %2973 = vmatprep.subr.bf16.mxu0 0
        %2974 = vmatpush1.bf16.msra.mxu0 0
        %2975 = vmatprep.subr.bf16.mxu0 0
        %2976 = vmatpush1.bf16.msra.mxu0 0
        %2977 = vmatprep.subr.bf16.mxu0 0
        %2978 = vmatpush1.bf16.msra.mxu0 0
        %2979 = vmatprep.subr.bf16.mxu0 0
        %2980 = vmatpush1.bf16.msra.mxu0 0
        %2981 = vmatprep.subr.bf16.mxu0 0
        %2982 = vmatpush1.bf16.msra.mxu0 0
        %2983 = vmatprep.subr.bf16.mxu0 0
        %2984 = vmatpush1.bf16.msra.mxu0 0
        %2985 = vmatprep.subr.bf16.mxu0 0
        %2986 = vmatpush1.bf16.msra.mxu0 0
        %2987 = vmatprep.subr.bf16.mxu0 0
        %2988 = vmatpush1.bf16.msra.mxu0 0
        %2989 = vmatprep.subr.bf16.mxu0 0
        %2990 = vmatpush1.bf16.msra.mxu0 0
        %2991 = vmatprep.subr.bf16.mxu0 0
        %2992 = vmatpush1.bf16.msra.mxu0 0
        %2993 = vmatprep.subr.bf16.mxu0 0
        %2994 = vmatpush1.bf16.msra.mxu0 0
        %2995 = vmatprep.subr.bf16.mxu0 0
        %2996 = vmatpush1.bf16.msra.mxu0 0
        %2997 = vmatprep.subr.bf16.mxu0 0
        %2998 = vmatpush1.bf16.msra.mxu0 0
        %2999 = vmatprep.mubr.bf16.mxu0 0
        %3000 = vmatmul.mubr.bf16.gmra.mrb[0].mxu0 %v2965
        %v3001 = vpop.f32.mrb[0].mxu0
        %v3002 = vadd.f32 0.0, %v3001
        %v3003 = vpop.f32.mrb[0].mxu0
        %v3004 = vpop.f32.mrb[0].mxu0
        %v3005 = vpop.f32.mrb[0].mxu0
        %3006 = vdwg.mxu0
        %v3007 = vld [vmem:[%s880] sm:$0x1]
        %v3008 = vadd.f32 %v3002, %v3007
        %v3009 = vld [vmem:[%s877] sm:$0x1]
        %v3010 = vadd.f32 %v3002, %v3009
        %v3011 = vxor.u32 %v3008, 2147483648
        %v3012 = vmul.f32 %v3011, 1.442695
        %v3013 = vpow.pop %v3012
        %v3014 = vadd.f32 %v3013, 1.0
        %v3015 = vrcp.pop %v3014
        %v3016 = vmul.f32 1.0, %v3015
        %v3017 = vtanh.pop %v3008
        %v3018 = vxor.u32 %v3010, 2147483648
        %v3019 = vmul.f32 %v3018, 1.442695
        %v3020 = vpow.pop %v3019
        %v3021 = vadd.f32 %v3020, 1.0
        %v3022 = vrcp.pop %v3021
        %v3023 = vmul.f32 1.0, %v3022
        %v3024 = vtanh.pop %v3010
        %v3025 = vld [vmem:[#allocation7] sm:$0x1]
        %v3027 = vlaneseq
        %v3028 = vshrl.u32 %v3027, 7
        %v3029 = vsub.s32 0, %v3028
        %v3030 = vrot.slane %v3025, %v3029
        %3031 = vrot.lane.b32.xlu0 %v3030, 16
        %v3032 = vpop.permute.xlu0 %3031
        %v3034 = vmul.f32 %v3016, %v3032
        %3036 = vrot.lane.b32.xlu0 %v3017, 80
        %v3037 = vpop.permute.xlu0 %3036
        %v3039 = vmul.f32 %v3016, %v3037
        %3041 = vrot.lane.b32.xlu0 %v3039, 16
        %v3042 = vpop.permute.xlu0 %3041
        %v3044 = vadd.f32 %v3034, %v3042
        %v3045 = vld [vmem:[#allocation8] sm:$0x1]
        %v3047 = vlaneseq
        %v3048 = vshrl.u32 %v3047, 7
        %v3049 = vsub.s32 0, %v3048
        %v3050 = vrot.slane %v3045, %v3049
        %3051 = vrot.lane.b32.xlu0 %v3050, 80
        %v3052 = vpop.permute.xlu0 %3051
        %v3054 = vmul.f32 %v3023, %v3052
        %3056 = vrot.lane.b32.xlu0 %v3024, 80
        %v3057 = vpop.permute.xlu0 %3056
        %v3059 = vmul.f32 %v3023, %v3057
        %3061 = vrot.lane.b32.xlu0 %v3059, 16
        %v3062 = vpop.permute.xlu0 %3061
        %v3064 = vadd.f32 %v3054, %v3062
        %v3065 = vtanh.pop %v3044
        %3067 = vrot.lane.b32.xlu0 %v3065, 16
        %v3068 = vpop.permute.xlu0 %3067
        %v3070 = vmul.f32 %v3016, %v3068
        %v3071 = vtanh.pop %v3064
        %3073 = vrot.lane.b32.xlu0 %v3071, 16
        %v3074 = vpop.permute.xlu0 %3073
        %v3076 = vmul.f32 %v3023, %v3074
        %3078 = vrot.lane.b32.xlu0 %v3044, 112
        %v3079 = vpop.permute.xlu0 %3078
        %3081 = vst.msk [vmem:[#allocation7] sm:$0x1] %vm673, %v3079
        %3083 = vrot.lane.b32.xlu0 %v3064, 48
        %v3084 = vpop.permute.xlu0 %3083
        %3086 = vst.msk [vmem:[#allocation8] sm:$0x1] %vm673, %v3084
        %3088 = vrot.lane.b32.xlu0 %v3070, 96
        %v3089 = vpop.permute.xlu0 %3088
        %3091 = vst.msk [vmem:[#allocation6] sm:$0x1] %vm673, %v3089
        %3093 = vrot.lane.b32.xlu0 %v3076, 48
        %v3094 = vpop.permute.xlu0 %3093
        %3096 = vst.msk [vmem:[#allocation6] sm:$0x1] %vm824, %v3094
        %3097 = vst.msk [vmem:[%s1683] sm:$0x1] %vm673, %v3089
        %3098 = vrot.lane.b32.xlu0 %v3076, 32
        %v3099 = vpop.permute.xlu0 %3098
        %3101 = vst.msk [vmem:[%s1688] sm:$0x1] %vm673, %v3099
        %v3102 = vld [vmem:[#allocation6] sm:$0x1]
        %v3103 = vpack.c.bf16 %v3102, %v3102
        %v3105 = vsel %vm690, %v3103, 0
        %3107 = vmatprep.subr.bf16.mxu0 0
        %3108 = vmatpush1.bf16.msra.mxu0 %v2120
        %3109 = vmatprep.subr.bf16.mxu0 0
        %3110 = vmatpush1.bf16.msra.mxu0 %v2121
        %3111 = vmatprep.subr.bf16.mxu0 0
        %3112 = vmatpush1.bf16.msra.mxu0 0
        %3113 = vmatprep.subr.bf16.mxu0 0
        %3114 = vmatpush1.bf16.msra.mxu0 0
        %3115 = vmatprep.subr.bf16.mxu0 0
        %3116 = vmatpush1.bf16.msra.mxu0 0
        %3117 = vmatprep.subr.bf16.mxu0 0
        %3118 = vmatpush1.bf16.msra.mxu0 0
        %3119 = vmatprep.subr.bf16.mxu0 0
        %3120 = vmatpush1.bf16.msra.mxu0 0
        %3121 = vmatprep.subr.bf16.mxu0 0
        %3122 = vmatpush1.bf16.msra.mxu0 0
        %3123 = vmatprep.subr.bf16.mxu0 0
        %3124 = vmatpush1.bf16.msra.mxu0 0
        %3125 = vmatprep.subr.bf16.mxu0 0
        %3126 = vmatpush1.bf16.msra.mxu0 0
        %3127 = vmatprep.subr.bf16.mxu0 0
        %3128 = vmatpush1.bf16.msra.mxu0 0
        %3129 = vmatprep.subr.bf16.mxu0 0
        %3130 = vmatpush1.bf16.msra.mxu0 0
        %3131 = vmatprep.subr.bf16.mxu0 0
        %3132 = vmatpush1.bf16.msra.mxu0 0
        %3133 = vmatprep.subr.bf16.mxu0 0
        %3134 = vmatpush1.bf16.msra.mxu0 0
        %3135 = vmatprep.subr.bf16.mxu0 0
        %3136 = vmatpush1.bf16.msra.mxu0 0
        %3137 = vmatprep.subr.bf16.mxu0 0
        %3138 = vmatpush1.bf16.msra.mxu0 0
        %3139 = vmatprep.mubr.bf16.mxu0 0
        %3140 = vmatmul.mubr.bf16.gmra.mrb[0].mxu0 %v3105
        %v3141 = vpop.f32.mrb[0].mxu0
        %v3142 = vadd.f32 0.0, %v3141
        %v3143 = vpop.f32.mrb[0].mxu0
        %v3144 = vpop.f32.mrb[0].mxu0
        %v3145 = vpop.f32.mrb[0].mxu0
        %3146 = vdwg.mxu0
        %v3147 = vld [vmem:[%s736] sm:$0x1]
        %v3148 = vadd.f32 %v3142, %v3147
        %v3149 = vld [vmem:[#allocation3] sm:$0x1]
        %v3150 = vadd.f32 %v3142, %v3149
        %v3151 = vxor.u32 %v3148, 2147483648
        %v3152 = vmul.f32 %v3151, 1.442695
        %v3153 = vpow.pop %v3152
        %v3154 = vadd.f32 %v3153, 1.0
        %v3155 = vrcp.pop %v3154
        %v3156 = vmul.f32 1.0, %v3155
        %v3157 = vtanh.pop %v3148
        %v3158 = vxor.u32 %v3150, 2147483648
        %v3159 = vmul.f32 %v3158, 1.442695
        %v3160 = vpow.pop %v3159
        %v3161 = vadd.f32 %v3160, 1.0
        %v3162 = vrcp.pop %v3161
        %v3163 = vmul.f32 1.0, %v3162
        %v3164 = vtanh.pop %v3150
        %v3165 = vld [vmem:[#allocation7] sm:$0x1]
        %v3167 = vlaneseq
        %v3168 = vshrl.u32 %v3167, 7
        %v3169 = vsub.s32 0, %v3168
        %v3170 = vrot.slane %v3165, %v3169
        %3171 = vrot.lane.b32.xlu0 %v3170, 16
        %v3172 = vpop.permute.xlu0 %3171
        %v3174 = vmul.f32 %v3156, %v3172
        %3176 = vrot.lane.b32.xlu0 %v3157, 80
        %v3177 = vpop.permute.xlu0 %3176
        %v3179 = vmul.f32 %v3156, %v3177
        %3181 = vrot.lane.b32.xlu0 %v3179, 16
        %v3182 = vpop.permute.xlu0 %3181
        %v3184 = vadd.f32 %v3174, %v3182
        %v3185 = vld [vmem:[#allocation8] sm:$0x1]
        %v3187 = vlaneseq
        %v3188 = vshrl.u32 %v3187, 7
        %v3189 = vsub.s32 0, %v3188
        %v3190 = vrot.slane %v3185, %v3189
        %3191 = vrot.lane.b32.xlu0 %v3190, 80
        %v3192 = vpop.permute.xlu0 %3191
        %v3194 = vmul.f32 %v3163, %v3192
        %3196 = vrot.lane.b32.xlu0 %v3164, 80
        %v3197 = vpop.permute.xlu0 %3196
        %v3199 = vmul.f32 %v3163, %v3197
        %3201 = vrot.lane.b32.xlu0 %v3199, 16
        %v3202 = vpop.permute.xlu0 %3201
        %v3204 = vadd.f32 %v3194, %v3202
        %v3205 = vtanh.pop %v3184
        %3207 = vrot.lane.b32.xlu0 %v3205, 16
        %v3208 = vpop.permute.xlu0 %3207
        %v3210 = vmul.f32 %v3156, %v3208
        %v3211 = vtanh.pop %v3204
        %3213 = vrot.lane.b32.xlu0 %v3211, 16
        %v3214 = vpop.permute.xlu0 %3213
        %v3216 = vmul.f32 %v3163, %v3214
        %3218 = vrot.lane.b32.xlu0 %v3184, 112
        %v3219 = vpop.permute.xlu0 %3218
        %3221 = vst.msk [vmem:[#allocation7] sm:$0x1] %vm673, %v3219
        %3223 = vrot.lane.b32.xlu0 %v3204, 48
        %v3224 = vpop.permute.xlu0 %3223
        %3226 = vst.msk [vmem:[#allocation8] sm:$0x1] %vm673, %v3224
        %3228 = vrot.lane.b32.xlu0 %v3210, 96
        %v3229 = vpop.permute.xlu0 %3228
        %3231 = vst.msk [vmem:[#allocation6] sm:$0x1] %vm673, %v3229
        %3233 = vrot.lane.b32.xlu0 %v3216, 48
        %v3234 = vpop.permute.xlu0 %3233
        %3236 = vst.msk [vmem:[#allocation6] sm:$0x1] %vm824, %v3234
        %3237 = vst.msk [vmem:[%s1825] sm:$0x1] %vm673, %v3229
        %3238 = vrot.lane.b32.xlu0 %v3216, 32
        %v3239 = vpop.permute.xlu0 %3238
        %3241 = vst.msk [vmem:[#allocation5] sm:$0x1] %vm673, %v3239
        %v3242 = vld [vmem:[#allocation4] sm:$0x1]
        %3243 = vst.msk [vmem:[%s322] sm:$0x1] %vm673, %v3242
        %v3244 = vld [vmem:[#allocation5] sm:$0x1]
        %v3246 = vlaneseq
        %v3247 = vshrl.u32 %v3246, 7
        %v3248 = vsub.s32 0, %v3247
        %v3249 = vrot.slane %v3244, %v3248
        %3250 = vrot.lane.b32.xlu0 %v3249, 16
        %v3251 = vpop.permute.xlu0 %3250
        %3253 = vst.msk [vmem:[%s322] sm:$0x1] %vm824, %v3251
        %v3254 = vld [vmem:[%s969] sm:$0x1]
        %3255 = vst.msk [vmem:[%s322 + $0x1] sm:$0x1] %vm673, %v3254
        %v3256 = vld [vmem:[%s1688] sm:$0x1]
        %v3258 = vlaneseq
        %v3259 = vshrl.u32 %v3258, 7
        %v3260 = vsub.s32 0, %v3259
        %v3261 = vrot.slane %v3256, %v3260
        %3262 = vrot.lane.b32.xlu0 %v3261, 16
        %v3263 = vpop.permute.xlu0 %3262
        %3265 = vst.msk [vmem:[%s322 + $0x1] sm:$0x1] %vm824, %v3263
        %v3266 = vld [vmem:[%s1113] sm:$0x1]
        %3267 = vst.msk [vmem:[%s322 + $0x2] sm:$0x1] %vm673, %v3266
        %v3268 = vld [vmem:[%s1546] sm:$0x1]
        %v3270 = vlaneseq
        %v3271 = vshrl.u32 %v3270, 7
        %v3272 = vsub.s32 0, %v3271
        %v3273 = vrot.slane %v3268, %v3272
        %3274 = vrot.lane.b32.xlu0 %v3273, 16
        %v3275 = vpop.permute.xlu0 %3274
        %3277 = vst.msk [vmem:[%s322 + $0x2] sm:$0x1] %vm824, %v3275
        %v3278 = vld [vmem:[%s1257] sm:$0x1]
        %3279 = vst.msk [vmem:[%s322 + $0x3] sm:$0x1] %vm673, %v3278
        %v3280 = vld [vmem:[%s1404] sm:$0x1]
        %v3282 = vlaneseq
        %v3283 = vshrl.u32 %v3282, 7
        %v3284 = vsub.s32 0, %v3283
        %v3285 = vrot.slane %v3280, %v3284
        %3286 = vrot.lane.b32.xlu0 %v3285, 16
        %v3287 = vpop.permute.xlu0 %3286
        %3289 = vst.msk [vmem:[%s322 + $0x3] sm:$0x1] %vm824, %v3287
        %v3290 = vld [vmem:[%s1399] sm:$0x1]
        %3291 = vst.msk [vmem:[%s322 + $0x4] sm:$0x1] %vm673, %v3290
        %v3292 = vld [vmem:[%s1262] sm:$0x1]
        %v3294 = vlaneseq
        %v3295 = vshrl.u32 %v3294, 7
        %v3296 = vsub.s32 0, %v3295
        %v3297 = vrot.slane %v3292, %v3296
        %3298 = vrot.lane.b32.xlu0 %v3297, 16
        %v3299 = vpop.permute.xlu0 %3298
        %3301 = vst.msk [vmem:[%s322 + $0x4] sm:$0x1] %vm824, %v3299
        %v3302 = vld [vmem:[%s1541] sm:$0x1]
        %3303 = vst.msk [vmem:[%s322 + $0x5] sm:$0x1] %vm673, %v3302
        %v3304 = vld [vmem:[%s1118] sm:$0x1]
        %v3306 = vlaneseq
        %v3307 = vshrl.u32 %v3306, 7
        %v3308 = vsub.s32 0, %v3307
        %v3309 = vrot.slane %v3304, %v3308
        %3310 = vrot.lane.b32.xlu0 %v3309, 16
        %v3311 = vpop.permute.xlu0 %3310
        %3313 = vst.msk [vmem:[%s322 + $0x5] sm:$0x1] %vm824, %v3311
        %v3314 = vld [vmem:[%s1683] sm:$0x1]
        %3315 = vst.msk [vmem:[%s322 + $0x6] sm:$0x1] %vm673, %v3314
        %v3316 = vld [vmem:[%s974] sm:$0x1]
        %v3318 = vlaneseq
        %v3319 = vshrl.u32 %v3318, 7
        %v3320 = vsub.s32 0, %v3319
        %v3321 = vrot.slane %v3316, %v3320
        %3322 = vrot.lane.b32.xlu0 %v3321, 16
        %v3323 = vpop.permute.xlu0 %3322
        %3325 = vst.msk [vmem:[%s322 + $0x6] sm:$0x1] %vm824, %v3323
        %v3326 = vld [vmem:[%s1825] sm:$0x1]
        %3327 = vst.msk [vmem:[%s322 + $0x7] sm:$0x1] %vm673, %v3326
        %v3328 = vld [vmem:[%s830] sm:$0x1]
        %v3330 = vlaneseq
        %v3331 = vshrl.u32 %v3330, 7
        %v3332 = vsub.s32 0, %v3331
        %v3333 = vrot.slane %v3328, %v3332
        %3334 = vrot.lane.b32.xlu0 %v3333, 16
        %v3335 = vpop.permute.xlu0 %3334
        %3337 = vst.msk [vmem:[%s322 + $0x7] sm:$0x1] %vm824, %v3335
        %p3338 = scmp.lt.s32.totalorder %s22, 1
        %s3339 = scalar_select %p3338, %s22, 1
        %s3340 = smul.addr %s3339, 8
        %s3341 = scalar_lea.vmem %s7, %s3340
        // Predicated region
        $region61: #{forward.2} parent=47 // pred_check
          %p3342 = pneg %p192
        $region62: #{forward.2} parent=47 // pred_check_branch
          %3344 = sbr.rel (%p3342) target = $region64
        $region63: #{forward.2} parent=47 // pred_region
          _
        $region64: #{forward.2} parent=47 // pred_fallthru
          _
      $region48: #{forward.2} parent=5 // pred_fallthru
        _
      %p3345 = scmp.le.s32.totalorder 2, %s17
      // Predicated region
      $region65: #{forward.2} parent=5 // pred_check
        %p3346 = pneg %p3345
      $region66: #{forward.2} parent=5 // pred_check_branch
        %3348 = sbr.rel (%p3346) target = $region68
      $region67: #{forward.2} parent=5 // pred_region
        %s3349 = ssub.s32 %s17, 2
        // Predicated region
        $region69: #{forward.2} parent=67 // pred_check
          %p3350 = pneg %p198
        $region70: #{forward.2} parent=67 // pred_check_branch
          %3352 = sbr.rel (%p3350) target = $region72
        $region71: #{forward.2} parent=67 // pred_region
          %p3353 = scmp.lt.s32.totalorder %s23, 1
          %s3354 = scalar_select %p3353, %s23, 1
          %s3355 = smul.addr %s3354, 8
          %s3356 = scalar_lea.vmem %s7, %s3355
        $region72: #{forward.2} parent=67 // pred_fallthru
          _
      $region68: #{forward.2} parent=5 // pred_fallthru
        _
    $region6: #{forward.2} parent=1 // loop_footer
      %s21 = sadd.s32 1, %s17
    $region7: #{forward.2} parent=1 // loop_footer_branch
      %16 = sbr.rel target = $region3
    $region8: #{forward.2} parent=1 // loop_exit
      _
    %3357 = vsyncpa [#allocation10], 1
    %s3358 = scalar_lea.sflag [#allocation10], 1
    %3359 = vsyncpa %s3358, 1
    %3360 = vsyncpa [#allocation12], 1

</llo_original>
